<compile_context>
chip_gen: v7x
topology: tpu7x:2x2x1
jax: 0.10.0
libtpu: 0.0.40
codegen_flags: <defaults>
</compile_context>

<pallas_src>
import jax
import jax.numpy as jnp
from jax.experimental import pallas as pl
from jax.experimental.pallas import tpu as pltpu

LANE = 128


def _round_up(x, m):
    return ((x + m - 1) // m) * m


# ---------------------------------------------------------------------------
# Fused Bottleneck kernel (one grid step = one image of the batch).
#
# conv2's zero-padded input lives in a flat bf16 scratch with row stride
# R = W + 2:
#   [ R+2 zeros | img row 0 (W) | 2 zeros | img row 1 (W) | ... | row H-1 | 0s ]
# Image entry (iy, ix) sits at flat row  base + iy*R + ix  with base = R + 2,
# so the 3x3 tap (ky, kx) of "output row" m = oy*R + ox is the contiguous flat
# row m + ky*R + kx + 1: every tap becomes one contiguous-slice matmul.  The 2
# garbage output columns per image row are dropped at the final store.
# ---------------------------------------------------------------------------
def _make_bottleneck_kernel(h, w):
    r = w + 2                      # flat row stride of the padded image
    base = r + 2                   # flat row of image entry (0, 0)
    m2 = h * r                     # conv2/conv3 matmul M (incl. 2 garbage cols/row)

    def kernel(x_ref, w1_ref, b1_ref, w2_ref, b2_ref, w3_ref, b3_ref,
               o_ref, pad_ref, acc_ref):
        wd = pad_ref.shape[1]      # padded bottleneck width (lane-dense)
        mpad = pad_ref.shape[0]

        # -- re-zero only the 1-pixel halo (cheap; done every step so it is
        #    correct even when the "parallel" batch axis lands on another core)
        pad_ref[pl.ds(0, base), :] = jnp.zeros((base, wd), jnp.bfloat16)
        zpair = jnp.zeros((2, wd), jnp.bfloat16)
        for iy in range(h - 1):                      # gap between rows iy, iy+1
            pad_ref[pl.ds(base + iy * r + w, 2), :] = zpair
        tail = base + (h - 1) * r + w                # after the last image row
        pad_ref[pl.ds(tail, mpad - tail), :] = jnp.zeros((mpad - tail, wd),
                                                         jnp.bfloat16)

        # -- conv1 (1x1) + bn1 + relu (BN scale pre-folded into w1) -----------
        y1 = jnp.dot(x_ref[...], w1_ref[...],
                     preferred_element_type=jnp.float32)
        y1 = jnp.maximum(y1 + b1_ref[...], 0.0).astype(jnp.bfloat16)   # (HW, Wd)

        # scatter the interior rows of the padded image (halo stays zero)
        for iy in range(h):
            pad_ref[pl.ds(base + iy * r, w), :] = y1[iy * w:(iy + 1) * w, :]

        # -- conv2 (3x3, pad=1) as 9 contiguous shifted matmuls ---------------
        for t in range(9):                           # static unroll
            ky, kx = divmod(t, 3)
            win = pad_ref[pl.ds(ky * r + kx + 1, m2), :]               # (M2, Wd) bf16
            d = jnp.dot(win, w2_ref[t], preferred_element_type=jnp.float32)
            if t == 0:
                acc_ref[...] = d
            else:
                acc_ref[...] += d
        y2 = jnp.maximum(acc_ref[...] + b2_ref[...], 0.0).astype(jnp.bfloat16)

        # -- conv3 (1x1) + bn3 + residual add + relu --------------------------
        z = jnp.dot(y2, w3_ref[...], preferred_element_type=jnp.float32)
        z = z + b3_ref[...]                                            # (M2, Co) f32
        for oy in range(h):        # drop the 2 garbage columns per image row
            zi = z[oy * r: oy * r + w, :]
            xi = x_ref[pl.ds(oy * w, w), :]                            # residual (bf16)
            o_ref[pl.ds(oy * w, w), :] = jnp.maximum(zi + xi, 0.0)

    return kernel


# ---------------------------------------------------------------------------
# Wrapper: NCHW in/out, BN-scale folding, channel padding, pallas_call setup.
# ---------------------------------------------------------------------------
def bottleneck_forward(x_nchw, params):
    n, cin, h, w = x_nchw.shape
    width = params["w1"].shape[1]
    cout = params["w3"].shape[1]
    if cin != cout:
        raise ValueError("downsample=None path requires inplanes == planes * 4")

    cp = _round_up(cin, LANE)      # padded in / residual / out channels
    wd = _round_up(width, LANE)    # padded bottleneck width
    cop = _round_up(cout, LANE)
    assert cp == cop

    hw = h * w
    r = w + 2
    m2 = h * r
    mpad = _round_up((h + 2) * r + 4, 8)

    # NCHW -> (N, H*W, C) bf16, channels zero-padded to a lane multiple.
    x = jnp.transpose(x_nchw, (0, 2, 3, 1)).reshape(n, hw, cin)
    x = jnp.pad(x, ((0, 0), (0, 0), (0, cp - cin))).astype(jnp.bfloat16)

    # Fold BN scales into the conv weights (in f32), then pad + cast to bf16;
    # only bias-add + ReLU remain in the kernel epilogues.
    w1p = jnp.pad(params["w1"] * params["s1"],
                  ((0, cp - cin), (0, wd - width))).astype(jnp.bfloat16)
    w2p = jnp.pad(params["w2"] * params["s2"],
                  ((0, 0), (0, wd - width), (0, wd - width))).astype(jnp.bfloat16)
    w3p = jnp.pad(params["w3"] * params["s3"],
                  ((0, wd - width), (0, cop - cout))).astype(jnp.bfloat16)
    b1p = jnp.pad(params["b1"], ((0, 0), (0, wd - width))).astype(jnp.float32)
    b2p = jnp.pad(params["b2"], ((0, 0), (0, wd - width))).astype(jnp.float32)
    b3p = jnp.pad(params["b3"], ((0, 0), (0, cop - cout))).astype(jnp.float32)

    flops = 2 * n * (hw * cp * wd + 9 * m2 * wd * wd + m2 * wd * cop)
    bytes_accessed = (x.size * 2 + n * hw * cop * 4
                      + (w1p.size + w2p.size + w3p.size) * 2
                      + (b1p.size + b2p.size + b3p.size) * 4)

    # Per-step VMEM working set (double-buffered activations + resident
    # weights + scratches + in-kernel temporaries); clamp the scoped limit to
    # ~85% of this chip's physical VMEM instead of a hard-coded 64 MiB.
    weight_bytes = ((w1p.size + w2p.size + w3p.size) * 2
                    + (b1p.size + b2p.size + b3p.size) * 4)
    vmem_est = (2 * hw * cp * 2            # double-buffered bf16 input block
                + 2 * hw * cop * 4         # double-buffered f32 output block
                + 2 * weight_bytes         # resident weights (default dbl-buffer)
                + mpad * wd * 2            # flat padded-image scratch (bf16)
                + m2 * wd * 4              # conv2 accumulator (f32)
                + 4 * m2 * max(wd, cop) * 4)   # in-kernel temporaries
    try:
        vmem_cap = int(pltpu.get_tpu_info().vmem_capacity_bytes)
    except Exception:              # conservative fallback: v7x has the smallest VMEM
        vmem_cap = 64 << 20
    vmem_limit = int(min(max(2 * vmem_est + (4 << 20), 32 << 20),
                         int(0.85 * vmem_cap)))

    out = pl.pallas_call(
        _make_bottleneck_kernel(h, w),
        out_shape=jax.ShapeDtypeStruct((n, hw, cop), jnp.float32),
        grid_spec=pltpu.PrefetchScalarGridSpec(
            num_scalar_prefetch=0,
            grid=(n,),
            in_specs=[
                pl.BlockSpec((None, hw, cp), lambda i: (i, 0, 0)),    # x (one image)
                pl.BlockSpec((cp, wd), lambda i: (0, 0)),             # w1*s1 (resident)
                pl.BlockSpec((1, wd), lambda i: (0, 0)),              # b1
                pl.BlockSpec((9, wd, wd), lambda i: (0, 0, 0)),       # w2*s2 (per-tap)
                pl.BlockSpec((1, wd), lambda i: (0, 0)),              # b2
                pl.BlockSpec((wd, cop), lambda i: (0, 0)),            # w3*s3
                pl.BlockSpec((1, cop), lambda i: (0, 0)),             # b3
            ],
            out_specs=pl.BlockSpec((None, hw, cop), lambda i: (i, 0, 0)),
            scratch_shapes=[
                pltpu.VMEM((mpad, wd), jnp.bfloat16),   # flat zero-padded out1 image
                pltpu.VMEM((m2, wd), jnp.float32),      # conv2 accumulator
            ],
        ),
        compiler_params=pltpu.CompilerParams(
            dimension_semantics=("parallel",),
            vmem_limit_bytes=vmem_limit),
        cost_estimate=pl.CostEstimate(flops=flops, transcendentals=0,
                                      bytes_accessed=bytes_accessed),
    )(x, w1p, b1p, w2p, b2p, w3p, b3p)

    out = out[..., :cout].reshape(n, h, w, cout)      # drop channel padding
    return jnp.transpose(out, (0, 3, 1, 2))           # back to NCHW


# ---------------------------------------------------------------------------
# Deterministic parameter init (matches nn.Module shapes), BN folded (eval).
# ---------------------------------------------------------------------------
def init_params(key, inplanes, planes, base_width=64, groups=1):
    width = int(planes * (base_width / 64.0)) * groups
    cout = planes * 4  # expansion
    ks = jax.random.split(key, 15)

    # raw PyTorch-layout weights (OIHW) for the pure-JAX reference
    w1_t = 0.1 * jax.random.normal(ks[0], (width, inplanes, 1, 1), jnp.float32)
    w2_t = 0.1 * jax.random.normal(ks[1], (width, width, 3, 3), jnp.float32)
    w3_t = 0.1 * jax.random.normal(ks[2], (cout, width, 1, 1), jnp.float32)

    def bn_fold(kg, kb, km, kv, c):
        gamma = 1.0 + 0.1 * jax.random.normal(kg, (c,), jnp.float32)
        beta = 0.1 * jax.random.normal(kb, (c,), jnp.float32)
        mean = 0.1 * jax.random.normal(km, (c,), jnp.float32)
        var = jnp.abs(jax.random.normal(kv, (c,), jnp.float32)) + 0.5
        scale = gamma / jnp.sqrt(var + 1e-5)
        bias = beta - mean * scale
        return scale.reshape(1, c), bias.reshape(1, c)

    s1, b1 = bn_fold(ks[3], ks[4], ks[5], ks[6], width)
    s2, b2 = bn_fold(ks[7], ks[8], ks[9], ks[10], width)
    s3, b3 = bn_fold(ks[11], ks[12], ks[13], ks[14], cout)

    params = {
        "w1": jnp.transpose(w1_t[:, :, 0, 0]),                               # (Cin, width)
        "w2": jnp.transpose(w2_t, (2, 3, 1, 0)).reshape(9, width, width),    # per-tap (Cin, Cout)
        "w3": jnp.transpose(w3_t[:, :, 0, 0]),                               # (width, Cout)
        "s1": s1, "b1": b1, "s2": s2, "b2": b2, "s3": s3, "b3": b3,
    }
    raw = {"w1_t": w1_t, "w2_t": w2_t, "w3_t": w3_t,
           "s1": s1, "b1": b1, "s2": s2, "b2": b2, "s3": s3, "b3": b3}
    return params, raw


# ---------------------------------------------------------------------------
# Pure-JAX reference (same math, lax.conv) for correctness check.
# ---------------------------------------------------------------------------
def reference_forward(x_nchw, raw):
    def bn(y, scale, bias):
        return y * scale.reshape(1, -1, 1, 1) + bias.reshape(1, -1, 1, 1)

    def conv(x, w, pad):
        return jax.lax.conv_general_dilated(
            x, w, (1, 1), pad, dimension_numbers=("NCHW", "OIHW", "NCHW"))

    out = jax.nn.relu(bn(conv(x_nchw, raw["w1_t"], "VALID"), raw["s1"], raw["b1"]))
    out = jax.nn.relu(bn(conv(out, raw["w2_t"], ((1, 1), (1, 1))), raw["s2"], raw["b2"]))
    out = bn(conv(out, raw["w3_t"], "VALID"), raw["s3"], raw["b3"])
    return jax.nn.relu(out + x_nchw)


if __name__ == "__main__":
    key = jax.random.PRNGKey(0)
    kx, kp = jax.random.split(key)

    # inplanes = planes * expansion so the residual add works with downsample=None
    N, H, W = 2, 16, 16
    planes = 4
    inplanes = planes * 4  # 16

    x = jax.random.normal(kx, (N, inplanes, H, W), jnp.float32)
    params, raw = init_params(kp, inplanes, planes)

    fwd = jax.jit(bottleneck_forward)
    out = jax.block_until_ready(fwd(x, params))

    ref = reference_forward(x, raw)
    assert out.shape == (N, planes * 4, H, W), out.shape
    max_err = float(jnp.max(jnp.abs(out - ref)))
    # bf16 activations through HBM + bf16 matmul operands (f32 accumulate).
    assert max_err < 3e-2, f"max abs error {max_err}"

    print("KERNEL_OK")
</pallas_src>

<mosaic_0001>
module attributes {stable_mosaic.version = 11 : i64} {
  func.func @kernel(%arg0: i32, %arg1: memref<1x256x128xbf16, #tpu.memory_space<vmem>>, %arg2: memref<128x128xbf16, #tpu.memory_space<vmem>>, %arg3: memref<1x128xf32, #tpu.memory_space<vmem>>, %arg4: memref<9x128x128xbf16, #tpu.memory_space<vmem>>, %arg5: memref<1x128xf32, #tpu.memory_space<vmem>>, %arg6: memref<128x128xbf16, #tpu.memory_space<vmem>>, %arg7: memref<1x128xf32, #tpu.memory_space<vmem>>, %arg8: memref<1x256x128xf32, #tpu.memory_space<vmem>>, %arg9: memref<328x128xbf16, #tpu.memory_space<vmem>>, %arg10: memref<288x128xf32, #tpu.memory_space<vmem>>) attributes {dimension_semantics = [#tpu.dimension_semantics<parallel>], iteration_bounds = array<i64: 2>, scalar_prefetch = 0 : i64, scratch_operands = 2 : i64, tpu.core_type = #tpu.core_type<tc>, window_params = [{transform_indices = @transform_0, window_bounds = array<i64: 1, 256, 128>}, {pipeline_mode = #tpu.pipeline_mode<synchronous>, transform_indices = @transform_1, window_bounds = array<i64: 128, 128>}, {pipeline_mode = #tpu.pipeline_mode<synchronous>, transform_indices = @transform_2, window_bounds = array<i64: 1, 128>}, {pipeline_mode = #tpu.pipeline_mode<synchronous>, transform_indices = @transform_3, window_bounds = array<i64: 9, 128, 128>}, {pipeline_mode = #tpu.pipeline_mode<synchronous>, transform_indices = @transform_4, window_bounds = array<i64: 1, 128>}, {pipeline_mode = #tpu.pipeline_mode<synchronous>, transform_indices = @transform_5, window_bounds = array<i64: 128, 128>}, {pipeline_mode = #tpu.pipeline_mode<synchronous>, transform_indices = @transform_6, window_bounds = array<i64: 1, 128>}, {transform_indices = @transform_7, window_bounds = array<i64: 1, 256, 128>}]} {
    %cst = arith.constant 0.000000e+00 : bf16
    %0 = vector.broadcast %cst : bf16 to vector<20x128xbf16>
    %c0 = arith.constant 0 : index
    %c0_0 = arith.constant 0 : index
    %1 = vector.load %arg9[%c0, %c0_0] : memref<328x128xbf16, #tpu.memory_space<vmem>>, vector<20x128xbf16>
    tpu.vector_store %arg9[%c0, %c0_0], %0 {strides = array<i32>} : memref<328x128xbf16, #tpu.memory_space<vmem>>, vector<20x128xbf16>,
    %cst_1 = arith.constant 0.000000e+00 : bf16
    %2 = vector.broadcast %cst_1 : bf16 to vector<2x128xbf16>
    %c36 = arith.constant 36 : index
    %c0_2 = arith.constant 0 : index
    %3 = vector.load %arg9[%c36, %c0_2] : memref<328x128xbf16, #tpu.memory_space<vmem>>, vector<2x128xbf16>
    tpu.vector_store %arg9[%c36, %c0_2], %2 {strides = array<i32>} : memref<328x128xbf16, #tpu.memory_space<vmem>>, vector<2x128xbf16>,
    %c54 = arith.constant 54 : index
    %c0_3 = arith.constant 0 : index
    %4 = vector.load %arg9[%c54, %c0_3] : memref<328x128xbf16, #tpu.memory_space<vmem>>, vector<2x128xbf16>
    tpu.vector_store %arg9[%c54, %c0_3], %2 {strides = array<i32>} : memref<328x128xbf16, #tpu.memory_space<vmem>>, vector<2x128xbf16>,
    %c72 = arith.constant 72 : index
    %c0_4 = arith.constant 0 : index
    %5 = vector.load %arg9[%c72, %c0_4] : memref<328x128xbf16, #tpu.memory_space<vmem>>, vector<2x128xbf16>
    tpu.vector_store %arg9[%c72, %c0_4], %2 {strides = array<i32>} : memref<328x128xbf16, #tpu.memory_space<vmem>>, vector<2x128xbf16>,
    %c90 = arith.constant 90 : index
    %c0_5 = arith.constant 0 : index
    %6 = vector.load %arg9[%c90, %c0_5] : memref<328x128xbf16, #tpu.memory_space<vmem>>, vector<2x128xbf16>
    tpu.vector_store %arg9[%c90, %c0_5], %2 {strides = array<i32>} : memref<328x128xbf16, #tpu.memory_space<vmem>>, vector<2x128xbf16>,
    %c108 = arith.constant 108 : index
    %c0_6 = arith.constant 0 : index
    %7 = vector.load %arg9[%c108, %c0_6] : memref<328x128xbf16, #tpu.memory_space<vmem>>, vector<2x128xbf16>
    tpu.vector_store %arg9[%c108, %c0_6], %2 {strides = array<i32>} : memref<328x128xbf16, #tpu.memory_space<vmem>>, vector<2x128xbf16>,
    %c126 = arith.constant 126 : index
    %c0_7 = arith.constant 0 : index
    %8 = vector.load %arg9[%c126, %c0_7] : memref<328x128xbf16, #tpu.memory_space<vmem>>, vector<2x128xbf16>
    tpu.vector_store %arg9[%c126, %c0_7], %2 {strides = array<i32>} : memref<328x128xbf16, #tpu.memory_space<vmem>>, vector<2x128xbf16>,
    %c144 = arith.constant 144 : index
    %c0_8 = arith.constant 0 : index
    %9 = vector.load %arg9[%c144, %c0_8] : memref<328x128xbf16, #tpu.memory_space<vmem>>, vector<2x128xbf16>
    tpu.vector_store %arg9[%c144, %c0_8], %2 {strides = array<i32>} : memref<328x128xbf16, #tpu.memory_space<vmem>>, vector<2x128xbf16>,
    %c162 = arith.constant 162 : index
    %c0_9 = arith.constant 0 : index
    %10 = vector.load %arg9[%c162, %c0_9] : memref<328x128xbf16, #tpu.memory_space<vmem>>, vector<2x128xbf16>
    tpu.vector_store %arg9[%c162, %c0_9], %2 {strides = array<i32>} : memref<328x128xbf16, #tpu.memory_space<vmem>>, vector<2x128xbf16>,
    %c180 = arith.constant 180 : index
    %c0_10 = arith.constant 0 : index
    %11 = vector.load %arg9[%c180, %c0_10] : memref<328x128xbf16, #tpu.memory_space<vmem>>, vector<2x128xbf16>
    tpu.vector_store %arg9[%c180, %c0_10], %2 {strides = array<i32>} : memref<328x128xbf16, #tpu.memory_space<vmem>>, vector<2x128xbf16>,
    %c198 = arith.constant 198 : index
    %c0_11 = arith.constant 0 : index
    %12 = vector.load %arg9[%c198, %c0_11] : memref<328x128xbf16, #tpu.memory_space<vmem>>, vector<2x128xbf16>
    tpu.vector_store %arg9[%c198, %c0_11], %2 {strides = array<i32>} : memref<328x128xbf16, #tpu.memory_space<vmem>>, vector<2x128xbf16>,
    %c216 = arith.constant 216 : index
    %c0_12 = arith.constant 0 : index
    %13 = vector.load %arg9[%c216, %c0_12] : memref<328x128xbf16, #tpu.memory_space<vmem>>, vector<2x128xbf16>
    tpu.vector_store %arg9[%c216, %c0_12], %2 {strides = array<i32>} : memref<328x128xbf16, #tpu.memory_space<vmem>>, vector<2x128xbf16>,
    %c234 = arith.constant 234 : index
    %c0_13 = arith.constant 0 : index
    %14 = vector.load %arg9[%c234, %c0_13] : memref<328x128xbf16, #tpu.memory_space<vmem>>, vector<2x128xbf16>
    tpu.vector_store %arg9[%c234, %c0_13], %2 {strides = array<i32>} : memref<328x128xbf16, #tpu.memory_space<vmem>>, vector<2x128xbf16>,
    %c252 = arith.constant 252 : index
    %c0_14 = arith.constant 0 : index
    %15 = vector.load %arg9[%c252, %c0_14] : memref<328x128xbf16, #tpu.memory_space<vmem>>, vector<2x128xbf16>
    tpu.vector_store %arg9[%c252, %c0_14], %2 {strides = array<i32>} : memref<328x128xbf16, #tpu.memory_space<vmem>>, vector<2x128xbf16>,
    %c270 = arith.constant 270 : index
    %c0_15 = arith.constant 0 : index
    %16 = vector.load %arg9[%c270, %c0_15] : memref<328x128xbf16, #tpu.memory_space<vmem>>, vector<2x128xbf16>
    tpu.vector_store %arg9[%c270, %c0_15], %2 {strides = array<i32>} : memref<328x128xbf16, #tpu.memory_space<vmem>>, vector<2x128xbf16>,
    %c288 = arith.constant 288 : index
    %c0_16 = arith.constant 0 : index
    %17 = vector.load %arg9[%c288, %c0_16] : memref<328x128xbf16, #tpu.memory_space<vmem>>, vector<2x128xbf16>
    tpu.vector_store %arg9[%c288, %c0_16], %2 {strides = array<i32>} : memref<328x128xbf16, #tpu.memory_space<vmem>>, vector<2x128xbf16>,
    %cst_17 = arith.constant 0.000000e+00 : bf16
    %18 = vector.broadcast %cst_17 : bf16 to vector<22x128xbf16>
    %c306 = arith.constant 306 : index
    %c0_18 = arith.constant 0 : index
    %19 = vector.load %arg9[%c306, %c0_18] : memref<328x128xbf16, #tpu.memory_space<vmem>>, vector<22x128xbf16>
    tpu.vector_store %arg9[%c306, %c0_18], %18 {strides = array<i32>} : memref<328x128xbf16, #tpu.memory_space<vmem>>, vector<22x128xbf16>,
    %c0_19 = arith.constant 0 : index
    %c0_20 = arith.constant 0 : index
    %c0_21 = arith.constant 0 : index
    %20 = vector.load %arg1[%c0_19, %c0_20, %c0_21] : memref<1x256x128xbf16, #tpu.memory_space<vmem>>, vector<1x256x128xbf16>
    %21 = vector.shape_cast %20 : vector<1x256x128xbf16> to vector<256x128xbf16>
    %c0_22 = arith.constant 0 : index
    %c0_23 = arith.constant 0 : index
    %22 = vector.load %arg2[%c0_22, %c0_23] : memref<128x128xbf16, #tpu.memory_space<vmem>>, vector<128x128xbf16>
    %cst_24 = arith.constant dense<0.000000e+00> : vector<256x128xf32>
    %23 = tpu.matmul %21, %22, %cst_24 {dimension_numbers = #tpu.dot_dimension_numbers<[1], [0], [0], [1], [0, 0, 1, 1], [], []>} : vector<256x128xbf16>, vector<128x128xbf16>, vector<256x128xf32> -> vector<256x128xf32>
    %c0_25 = arith.constant 0 : index
    %c0_26 = arith.constant 0 : index
    %24 = vector.load %arg3[%c0_25, %c0_26] : memref<1x128xf32, #tpu.memory_space<vmem>>, vector<1x128xf32>
    %25 = vector.broadcast %24 : vector<1x128xf32> to vector<256x128xf32>
    %26 = arith.addf %23, %25 : vector<256x128xf32>
    %cst_27 = arith.constant 0.000000e+00 : f32
    %27 = vector.broadcast %cst_27 : f32 to vector<256x128xf32>
    %28 = arith.maximumf %26, %27 : vector<256x128xf32>
    %29 = arith.truncf %28 : vector<256x128xf32> to vector<256x128xbf16>
    %30 = vector.extract_strided_slice %29 {offsets = [0, 0], sizes = [16, 128], strides = [1, 1]} : vector<256x128xbf16> to vector<16x128xbf16>
    %c20 = arith.constant 20 : index
    %c0_28 = arith.constant 0 : index
    %31 = vector.load %arg9[%c20, %c0_28] : memref<328x128xbf16, #tpu.memory_space<vmem>>, vector<16x128xbf16>
    tpu.vector_store %arg9[%c20, %c0_28], %30 {strides = array<i32>} : memref<328x128xbf16, #tpu.memory_space<vmem>>, vector<16x128xbf16>,
    %32 = vector.extract_strided_slice %29 {offsets = [16, 0], sizes = [16, 128], strides = [1, 1]} : vector<256x128xbf16> to vector<16x128xbf16>
    %c38 = arith.constant 38 : index
    %c0_29 = arith.constant 0 : index
    %33 = vector.load %arg9[%c38, %c0_29] : memref<328x128xbf16, #tpu.memory_space<vmem>>, vector<16x128xbf16>
    tpu.vector_store %arg9[%c38, %c0_29], %32 {strides = array<i32>} : memref<328x128xbf16, #tpu.memory_space<vmem>>, vector<16x128xbf16>,
    %34 = vector.extract_strided_slice %29 {offsets = [32, 0], sizes = [16, 128], strides = [1, 1]} : vector<256x128xbf16> to vector<16x128xbf16>
    %c56 = arith.constant 56 : index
    %c0_30 = arith.constant 0 : index
    %35 = vector.load %arg9[%c56, %c0_30] : memref<328x128xbf16, #tpu.memory_space<vmem>>, vector<16x128xbf16>
    tpu.vector_store %arg9[%c56, %c0_30], %34 {strides = array<i32>} : memref<328x128xbf16, #tpu.memory_space<vmem>>, vector<16x128xbf16>,
    %36 = vector.extract_strided_slice %29 {offsets = [48, 0], sizes = [16, 128], strides = [1, 1]} : vector<256x128xbf16> to vector<16x128xbf16>
    %c74 = arith.constant 74 : index
    %c0_31 = arith.constant 0 : index
    %37 = vector.load %arg9[%c74, %c0_31] : memref<328x128xbf16, #tpu.memory_space<vmem>>, vector<16x128xbf16>
    tpu.vector_store %arg9[%c74, %c0_31], %36 {strides = array<i32>} : memref<328x128xbf16, #tpu.memory_space<vmem>>, vector<16x128xbf16>,
    %38 = vector.extract_strided_slice %29 {offsets = [64, 0], sizes = [16, 128], strides = [1, 1]} : vector<256x128xbf16> to vector<16x128xbf16>
    %c92 = arith.constant 92 : index
    %c0_32 = arith.constant 0 : index
    %39 = vector.load %arg9[%c92, %c0_32] : memref<328x128xbf16, #tpu.memory_space<vmem>>, vector<16x128xbf16>
    tpu.vector_store %arg9[%c92, %c0_32], %38 {strides = array<i32>} : memref<328x128xbf16, #tpu.memory_space<vmem>>, vector<16x128xbf16>,
    %40 = vector.extract_strided_slice %29 {offsets = [80, 0], sizes = [16, 128], strides = [1, 1]} : vector<256x128xbf16> to vector<16x128xbf16>
    %c110 = arith.constant 110 : index
    %c0_33 = arith.constant 0 : index
    %41 = vector.load %arg9[%c110, %c0_33] : memref<328x128xbf16, #tpu.memory_space<vmem>>, vector<16x128xbf16>
    tpu.vector_store %arg9[%c110, %c0_33], %40 {strides = array<i32>} : memref<328x128xbf16, #tpu.memory_space<vmem>>, vector<16x128xbf16>,
    %42 = vector.extract_strided_slice %29 {offsets = [96, 0], sizes = [16, 128], strides = [1, 1]} : vector<256x128xbf16> to vector<16x128xbf16>
    %c128 = arith.constant 128 : index
    %c0_34 = arith.constant 0 : index
    %43 = vector.load %arg9[%c128, %c0_34] : memref<328x128xbf16, #tpu.memory_space<vmem>>, vector<16x128xbf16>
    tpu.vector_store %arg9[%c128, %c0_34], %42 {strides = array<i32>} : memref<328x128xbf16, #tpu.memory_space<vmem>>, vector<16x128xbf16>,
    %44 = vector.extract_strided_slice %29 {offsets = [112, 0], sizes = [16, 128], strides = [1, 1]} : vector<256x128xbf16> to vector<16x128xbf16>
    %c146 = arith.constant 146 : index
    %c0_35 = arith.constant 0 : index
    %45 = vector.load %arg9[%c146, %c0_35] : memref<328x128xbf16, #tpu.memory_space<vmem>>, vector<16x128xbf16>
    tpu.vector_store %arg9[%c146, %c0_35], %44 {strides = array<i32>} : memref<328x128xbf16, #tpu.memory_space<vmem>>, vector<16x128xbf16>,
    %46 = vector.extract_strided_slice %29 {offsets = [128, 0], sizes = [16, 128], strides = [1, 1]} : vector<256x128xbf16> to vector<16x128xbf16>
    %c164 = arith.constant 164 : index
    %c0_36 = arith.constant 0 : index
    %47 = vector.load %arg9[%c164, %c0_36] : memref<328x128xbf16, #tpu.memory_space<vmem>>, vector<16x128xbf16>
    tpu.vector_store %arg9[%c164, %c0_36], %46 {strides = array<i32>} : memref<328x128xbf16, #tpu.memory_space<vmem>>, vector<16x128xbf16>,
    %48 = vector.extract_strided_slice %29 {offsets = [144, 0], sizes = [16, 128], strides = [1, 1]} : vector<256x128xbf16> to vector<16x128xbf16>
    %c182 = arith.constant 182 : index
    %c0_37 = arith.constant 0 : index
    %49 = vector.load %arg9[%c182, %c0_37] : memref<328x128xbf16, #tpu.memory_space<vmem>>, vector<16x128xbf16>
    tpu.vector_store %arg9[%c182, %c0_37], %48 {strides = array<i32>} : memref<328x128xbf16, #tpu.memory_space<vmem>>, vector<16x128xbf16>,
    %50 = vector.extract_strided_slice %29 {offsets = [160, 0], sizes = [16, 128], strides = [1, 1]} : vector<256x128xbf16> to vector<16x128xbf16>
    %c200 = arith.constant 200 : index
    %c0_38 = arith.constant 0 : index
    %51 = vector.load %arg9[%c200, %c0_38] : memref<328x128xbf16, #tpu.memory_space<vmem>>, vector<16x128xbf16>
    tpu.vector_store %arg9[%c200, %c0_38], %50 {strides = array<i32>} : memref<328x128xbf16, #tpu.memory_space<vmem>>, vector<16x128xbf16>,
    %52 = vector.extract_strided_slice %29 {offsets = [176, 0], sizes = [16, 128], strides = [1, 1]} : vector<256x128xbf16> to vector<16x128xbf16>
    %c218 = arith.constant 218 : index
    %c0_39 = arith.constant 0 : index
    %53 = vector.load %arg9[%c218, %c0_39] : memref<328x128xbf16, #tpu.memory_space<vmem>>, vector<16x128xbf16>
    tpu.vector_store %arg9[%c218, %c0_39], %52 {strides = array<i32>} : memref<328x128xbf16, #tpu.memory_space<vmem>>, vector<16x128xbf16>,
    %54 = vector.extract_strided_slice %29 {offsets = [192, 0], sizes = [16, 128], strides = [1, 1]} : vector<256x128xbf16> to vector<16x128xbf16>
    %c236 = arith.constant 236 : index
    %c0_40 = arith.constant 0 : index
    %55 = vector.load %arg9[%c236, %c0_40] : memref<328x128xbf16, #tpu.memory_space<vmem>>, vector<16x128xbf16>
    tpu.vector_store %arg9[%c236, %c0_40], %54 {strides = array<i32>} : memref<328x128xbf16, #tpu.memory_space<vmem>>, vector<16x128xbf16>,
    %56 = vector.extract_strided_slice %29 {offsets = [208, 0], sizes = [16, 128], strides = [1, 1]} : vector<256x128xbf16> to vector<16x128xbf16>
    %c254 = arith.constant 254 : index
    %c0_41 = arith.constant 0 : index
    %57 = vector.load %arg9[%c254, %c0_41] : memref<328x128xbf16, #tpu.memory_space<vmem>>, vector<16x128xbf16>
    tpu.vector_store %arg9[%c254, %c0_41], %56 {strides = array<i32>} : memref<328x128xbf16, #tpu.memory_space<vmem>>, vector<16x128xbf16>,
    %58 = vector.extract_strided_slice %29 {offsets = [224, 0], sizes = [16, 128], strides = [1, 1]} : vector<256x128xbf16> to vector<16x128xbf16>
    %c272 = arith.constant 272 : index
    %c0_42 = arith.constant 0 : index
    %59 = vector.load %arg9[%c272, %c0_42] : memref<328x128xbf16, #tpu.memory_space<vmem>>, vector<16x128xbf16>
    tpu.vector_store %arg9[%c272, %c0_42], %58 {strides = array<i32>} : memref<328x128xbf16, #tpu.memory_space<vmem>>, vector<16x128xbf16>,
    %60 = vector.extract_strided_slice %29 {offsets = [240, 0], sizes = [16, 128], strides = [1, 1]} : vector<256x128xbf16> to vector<16x128xbf16>
    %c290 = arith.constant 290 : index
    %c0_43 = arith.constant 0 : index
    %61 = vector.load %arg9[%c290, %c0_43] : memref<328x128xbf16, #tpu.memory_space<vmem>>, vector<16x128xbf16>
    tpu.vector_store %arg9[%c290, %c0_43], %60 {strides = array<i32>} : memref<328x128xbf16, #tpu.memory_space<vmem>>, vector<16x128xbf16>,
    %c1 = arith.constant 1 : index
    %c0_44 = arith.constant 0 : index
    %62 = vector.load %arg9[%c1, %c0_44] : memref<328x128xbf16, #tpu.memory_space<vmem>>, vector<288x128xbf16>
    %c0_45 = arith.constant 0 : index
    %c0_46 = arith.constant 0 : index
    %c0_47 = arith.constant 0 : index
    %63 = vector.load %arg4[%c0_45, %c0_46, %c0_47] : memref<9x128x128xbf16, #tpu.memory_space<vmem>>, vector<1x128x128xbf16>
    %64 = vector.shape_cast %63 : vector<1x128x128xbf16> to vector<128x128xbf16>
    %cst_48 = arith.constant dense<0.000000e+00> : vector<288x128xf32>
    %65 = tpu.matmul %62, %64, %cst_48 {dimension_numbers = #tpu.dot_dimension_numbers<[1], [0], [0], [1], [0, 0, 1, 1], [], []>} : vector<288x128xbf16>, vector<128x128xbf16>, vector<288x128xf32> -> vector<288x128xf32>
    %c0_49 = arith.constant 0 : index
    %c0_50 = arith.constant 0 : index
    %66 = vector.load %arg10[%c0_49, %c0_50] : memref<288x128xf32, #tpu.memory_space<vmem>>, vector<288x128xf32>
    tpu.vector_store %arg10[%c0_49, %c0_50], %65 {strides = array<i32>} : memref<288x128xf32, #tpu.memory_space<vmem>>, vector<288x128xf32>,
    %c2 = arith.constant 2 : index
    %c0_51 = arith.constant 0 : index
    %67 = vector.load %arg9[%c2, %c0_51] : memref<328x128xbf16, #tpu.memory_space<vmem>>, vector<288x128xbf16>
    %c1_52 = arith.constant 1 : index
    %c0_53 = arith.constant 0 : index
    %c0_54 = arith.constant 0 : index
    %68 = vector.load %arg4[%c1_52, %c0_53, %c0_54] : memref<9x128x128xbf16, #tpu.memory_space<vmem>>, vector<1x128x128xbf16>
    %69 = vector.shape_cast %68 : vector<1x128x128xbf16> to vector<128x128xbf16>
    %cst_55 = arith.constant dense<0.000000e+00> : vector<288x128xf32>
    %70 = tpu.matmul %67, %69, %cst_55 {dimension_numbers = #tpu.dot_dimension_numbers<[1], [0], [0], [1], [0, 0, 1, 1], [], []>} : vector<288x128xbf16>, vector<128x128xbf16>, vector<288x128xf32> -> vector<288x128xf32>
    %c0_56 = arith.constant 0 : index
    %c0_57 = arith.constant 0 : index
    %71 = vector.load %arg10[%c0_56, %c0_57] : memref<288x128xf32, #tpu.memory_space<vmem>>, vector<288x128xf32>
    %72 = arith.addf %71, %70 : vector<288x128xf32>
    %c0_58 = arith.constant 0 : index
    %c0_59 = arith.constant 0 : index
    %73 = vector.load %arg10[%c0_58, %c0_59] : memref<288x128xf32, #tpu.memory_space<vmem>>, vector<288x128xf32>
    tpu.vector_store %arg10[%c0_58, %c0_59], %72 {strides = array<i32>} : memref<288x128xf32, #tpu.memory_space<vmem>>, vector<288x128xf32>,
    %c3 = arith.constant 3 : index
    %c0_60 = arith.constant 0 : index
    %74 = vector.load %arg9[%c3, %c0_60] : memref<328x128xbf16, #tpu.memory_space<vmem>>, vector<288x128xbf16>
    %c2_61 = arith.constant 2 : index
    %c0_62 = arith.constant 0 : index
    %c0_63 = arith.constant 0 : index
    %75 = vector.load %arg4[%c2_61, %c0_62, %c0_63] : memref<9x128x128xbf16, #tpu.memory_space<vmem>>, vector<1x128x128xbf16>
    %76 = vector.shape_cast %75 : vector<1x128x128xbf16> to vector<128x128xbf16>
    %cst_64 = arith.constant dense<0.000000e+00> : vector<288x128xf32>
    %77 = tpu.matmul %74, %76, %cst_64 {dimension_numbers = #tpu.dot_dimension_numbers<[1], [0], [0], [1], [0, 0, 1, 1], [], []>} : vector<288x128xbf16>, vector<128x128xbf16>, vector<288x128xf32> -> vector<288x128xf32>
    %c0_65 = arith.constant 0 : index
    %c0_66 = arith.constant 0 : index
    %78 = vector.load %arg10[%c0_65, %c0_66] : memref<288x128xf32, #tpu.memory_space<vmem>>, vector<288x128xf32>
    %79 = arith.addf %78, %77 : vector<288x128xf32>
    %c0_67 = arith.constant 0 : index
    %c0_68 = arith.constant 0 : index
    %80 = vector.load %arg10[%c0_67, %c0_68] : memref<288x128xf32, #tpu.memory_space<vmem>>, vector<288x128xf32>
    tpu.vector_store %arg10[%c0_67, %c0_68], %79 {strides = array<i32>} : memref<288x128xf32, #tpu.memory_space<vmem>>, vector<288x128xf32>,
    %c19 = arith.constant 19 : index
    %c0_69 = arith.constant 0 : index
    %81 = vector.load %arg9[%c19, %c0_69] : memref<328x128xbf16, #tpu.memory_space<vmem>>, vector<288x128xbf16>
    %c3_70 = arith.constant 3 : index
    %c0_71 = arith.constant 0 : index
    %c0_72 = arith.constant 0 : index
    %82 = vector.load %arg4[%c3_70, %c0_71, %c0_72] : memref<9x128x128xbf16, #tpu.memory_space<vmem>>, vector<1x128x128xbf16>
    %83 = vector.shape_cast %82 : vector<1x128x128xbf16> to vector<128x128xbf16>
    %cst_73 = arith.constant dense<0.000000e+00> : vector<288x128xf32>
    %84 = tpu.matmul %81, %83, %cst_73 {dimension_numbers = #tpu.dot_dimension_numbers<[1], [0], [0], [1], [0, 0, 1, 1], [], []>} : vector<288x128xbf16>, vector<128x128xbf16>, vector<288x128xf32> -> vector<288x128xf32>
    %c0_74 = arith.constant 0 : index
    %c0_75 = arith.constant 0 : index
    %85 = vector.load %arg10[%c0_74, %c0_75] : memref<288x128xf32, #tpu.memory_space<vmem>>, vector<288x128xf32>
    %86 = arith.addf %85, %84 : vector<288x128xf32>
    %c0_76 = arith.constant 0 : index
    %c0_77 = arith.constant 0 : index
    %87 = vector.load %arg10[%c0_76, %c0_77] : memref<288x128xf32, #tpu.memory_space<vmem>>, vector<288x128xf32>
    tpu.vector_store %arg10[%c0_76, %c0_77], %86 {strides = array<i32>} : memref<288x128xf32, #tpu.memory_space<vmem>>, vector<288x128xf32>,
    %c20_78 = arith.constant 20 : index
    %c0_79 = arith.constant 0 : index
    %88 = vector.load %arg9[%c20_78, %c0_79] : memref<328x128xbf16, #tpu.memory_space<vmem>>, vector<288x128xbf16>
    %c4 = arith.constant 4 : index
    %c0_80 = arith.constant 0 : index
    %c0_81 = arith.constant 0 : index
    %89 = vector.load %arg4[%c4, %c0_80, %c0_81] : memref<9x128x128xbf16, #tpu.memory_space<vmem>>, vector<1x128x128xbf16>
    %90 = vector.shape_cast %89 : vector<1x128x128xbf16> to vector<128x128xbf16>
    %cst_82 = arith.constant dense<0.000000e+00> : vector<288x128xf32>
    %91 = tpu.matmul %88, %90, %cst_82 {dimension_numbers = #tpu.dot_dimension_numbers<[1], [0], [0], [1], [0, 0, 1, 1], [], []>} : vector<288x128xbf16>, vector<128x128xbf16>, vector<288x128xf32> -> vector<288x128xf32>
    %c0_83 = arith.constant 0 : index
    %c0_84 = arith.constant 0 : index
    %92 = vector.load %arg10[%c0_83, %c0_84] : memref<288x128xf32, #tpu.memory_space<vmem>>, vector<288x128xf32>
    %93 = arith.addf %92, %91 : vector<288x128xf32>
    %c0_85 = arith.constant 0 : index
    %c0_86 = arith.constant 0 : index
    %94 = vector.load %arg10[%c0_85, %c0_86] : memref<288x128xf32, #tpu.memory_space<vmem>>, vector<288x128xf32>
    tpu.vector_store %arg10[%c0_85, %c0_86], %93 {strides = array<i32>} : memref<288x128xf32, #tpu.memory_space<vmem>>, vector<288x128xf32>,
    %c21 = arith.constant 21 : index
    %c0_87 = arith.constant 0 : index
    %95 = vector.load %arg9[%c21, %c0_87] : memref<328x128xbf16, #tpu.memory_space<vmem>>, vector<288x128xbf16>
    %c5 = arith.constant 5 : index
    %c0_88 = arith.constant 0 : index
    %c0_89 = arith.constant 0 : index
    %96 = vector.load %arg4[%c5, %c0_88, %c0_89] : memref<9x128x128xbf16, #tpu.memory_space<vmem>>, vector<1x128x128xbf16>
    %97 = vector.shape_cast %96 : vector<1x128x128xbf16> to vector<128x128xbf16>
    %cst_90 = arith.constant dense<0.000000e+00> : vector<288x128xf32>
    %98 = tpu.matmul %95, %97, %cst_90 {dimension_numbers = #tpu.dot_dimension_numbers<[1], [0], [0], [1], [0, 0, 1, 1], [], []>} : vector<288x128xbf16>, vector<128x128xbf16>, vector<288x128xf32> -> vector<288x128xf32>
    %c0_91 = arith.constant 0 : index
    %c0_92 = arith.constant 0 : index
    %99 = vector.load %arg10[%c0_91, %c0_92] : memref<288x128xf32, #tpu.memory_space<vmem>>, vector<288x128xf32>
    %100 = arith.addf %99, %98 : vector<288x128xf32>
    %c0_93 = arith.constant 0 : index
    %c0_94 = arith.constant 0 : index
    %101 = vector.load %arg10[%c0_93, %c0_94] : memref<288x128xf32, #tpu.memory_space<vmem>>, vector<288x128xf32>
    tpu.vector_store %arg10[%c0_93, %c0_94], %100 {strides = array<i32>} : memref<288x128xf32, #tpu.memory_space<vmem>>, vector<288x128xf32>,
    %c37 = arith.constant 37 : index
    %c0_95 = arith.constant 0 : index
    %102 = vector.load %arg9[%c37, %c0_95] : memref<328x128xbf16, #tpu.memory_space<vmem>>, vector<288x128xbf16>
    %c6 = arith.constant 6 : index
    %c0_96 = arith.constant 0 : index
    %c0_97 = arith.constant 0 : index
    %103 = vector.load %arg4[%c6, %c0_96, %c0_97] : memref<9x128x128xbf16, #tpu.memory_space<vmem>>, vector<1x128x128xbf16>
    %104 = vector.shape_cast %103 : vector<1x128x128xbf16> to vector<128x128xbf16>
    %cst_98 = arith.constant dense<0.000000e+00> : vector<288x128xf32>
    %105 = tpu.matmul %102, %104, %cst_98 {dimension_numbers = #tpu.dot_dimension_numbers<[1], [0], [0], [1], [0, 0, 1, 1], [], []>} : vector<288x128xbf16>, vector<128x128xbf16>, vector<288x128xf32> -> vector<288x128xf32>
    %c0_99 = arith.constant 0 : index
    %c0_100 = arith.constant 0 : index
    %106 = vector.load %arg10[%c0_99, %c0_100] : memref<288x128xf32, #tpu.memory_space<vmem>>, vector<288x128xf32>
    %107 = arith.addf %106, %105 : vector<288x128xf32>
    %c0_101 = arith.constant 0 : index
    %c0_102 = arith.constant 0 : index
    %108 = vector.load %arg10[%c0_101, %c0_102] : memref<288x128xf32, #tpu.memory_space<vmem>>, vector<288x128xf32>
    tpu.vector_store %arg10[%c0_101, %c0_102], %107 {strides = array<i32>} : memref<288x128xf32, #tpu.memory_space<vmem>>, vector<288x128xf32>,
    %c38_103 = arith.constant 38 : index
    %c0_104 = arith.constant 0 : index
    %109 = vector.load %arg9[%c38_103, %c0_104] : memref<328x128xbf16, #tpu.memory_space<vmem>>, vector<288x128xbf16>
    %c7 = arith.constant 7 : index
    %c0_105 = arith.constant 0 : index
    %c0_106 = arith.constant 0 : index
    %110 = vector.load %arg4[%c7, %c0_105, %c0_106] : memref<9x128x128xbf16, #tpu.memory_space<vmem>>, vector<1x128x128xbf16>
    %111 = vector.shape_cast %110 : vector<1x128x128xbf16> to vector<128x128xbf16>
    %cst_107 = arith.constant dense<0.000000e+00> : vector<288x128xf32>
    %112 = tpu.matmul %109, %111, %cst_107 {dimension_numbers = #tpu.dot_dimension_numbers<[1], [0], [0], [1], [0, 0, 1, 1], [], []>} : vector<288x128xbf16>, vector<128x128xbf16>, vector<288x128xf32> -> vector<288x128xf32>
    %c0_108 = arith.constant 0 : index
    %c0_109 = arith.constant 0 : index
    %113 = vector.load %arg10[%c0_108, %c0_109] : memref<288x128xf32, #tpu.memory_space<vmem>>, vector<288x128xf32>
    %114 = arith.addf %113, %112 : vector<288x128xf32>
    %c0_110 = arith.constant 0 : index
    %c0_111 = arith.constant 0 : index
    %115 = vector.load %arg10[%c0_110, %c0_111] : memref<288x128xf32, #tpu.memory_space<vmem>>, vector<288x128xf32>
    tpu.vector_store %arg10[%c0_110, %c0_111], %114 {strides = array<i32>} : memref<288x128xf32, #tpu.memory_space<vmem>>, vector<288x128xf32>,
    %c39 = arith.constant 39 : index
    %c0_112 = arith.constant 0 : index
    %116 = vector.load %arg9[%c39, %c0_112] : memref<328x128xbf16, #tpu.memory_space<vmem>>, vector<288x128xbf16>
    %c8 = arith.constant 8 : index
    %c0_113 = arith.constant 0 : index
    %c0_114 = arith.constant 0 : index
    %117 = vector.load %arg4[%c8, %c0_113, %c0_114] : memref<9x128x128xbf16, #tpu.memory_space<vmem>>, vector<1x128x128xbf16>
    %118 = vector.shape_cast %117 : vector<1x128x128xbf16> to vector<128x128xbf16>
    %cst_115 = arith.constant dense<0.000000e+00> : vector<288x128xf32>
    %119 = tpu.matmul %116, %118, %cst_115 {dimension_numbers = #tpu.dot_dimension_numbers<[1], [0], [0], [1], [0, 0, 1, 1], [], []>} : vector<288x128xbf16>, vector<128x128xbf16>, vector<288x128xf32> -> vector<288x128xf32>
    %c0_116 = arith.constant 0 : index
    %c0_117 = arith.constant 0 : index
    %120 = vector.load %arg10[%c0_116, %c0_117] : memref<288x128xf32, #tpu.memory_space<vmem>>, vector<288x128xf32>
    %121 = arith.addf %120, %119 : vector<288x128xf32>
    %c0_118 = arith.constant 0 : index
    %c0_119 = arith.constant 0 : index
    %122 = vector.load %arg10[%c0_118, %c0_119] : memref<288x128xf32, #tpu.memory_space<vmem>>, vector<288x128xf32>
    tpu.vector_store %arg10[%c0_118, %c0_119], %121 {strides = array<i32>} : memref<288x128xf32, #tpu.memory_space<vmem>>, vector<288x128xf32>,
    %c0_120 = arith.constant 0 : index
    %c0_121 = arith.constant 0 : index
    %123 = vector.load %arg10[%c0_120, %c0_121] : memref<288x128xf32, #tpu.memory_space<vmem>>, vector<288x128xf32>
    %c0_122 = arith.constant 0 : index
    %c0_123 = arith.constant 0 : index
    %124 = vector.load %arg5[%c0_122, %c0_123] : memref<1x128xf32, #tpu.memory_space<vmem>>, vector<1x128xf32>
    %125 = vector.broadcast %124 : vector<1x128xf32> to vector<288x128xf32>
    %126 = arith.addf %123, %125 : vector<288x128xf32>
    %cst_124 = arith.constant 0.000000e+00 : f32
    %127 = vector.broadcast %cst_124 : f32 to vector<288x128xf32>
    %128 = arith.maximumf %126, %127 : vector<288x128xf32>
    %129 = arith.truncf %128 : vector<288x128xf32> to vector<288x128xbf16>
    %c0_125 = arith.constant 0 : index
    %c0_126 = arith.constant 0 : index
    %130 = vector.load %arg6[%c0_125, %c0_126] : memref<128x128xbf16, #tpu.memory_space<vmem>>, vector<128x128xbf16>
    %cst_127 = arith.constant dense<0.000000e+00> : vector<288x128xf32>
    %131 = tpu.matmul %129, %130, %cst_127 {dimension_numbers = #tpu.dot_dimension_numbers<[1], [0], [0], [1], [0, 0, 1, 1], [], []>} : vector<288x128xbf16>, vector<128x128xbf16>, vector<288x128xf32> -> vector<288x128xf32>
    %c0_128 = arith.constant 0 : index
    %c0_129 = arith.constant 0 : index
    %132 = vector.load %arg7[%c0_128, %c0_129] : memref<1x128xf32, #tpu.memory_space<vmem>>, vector<1x128xf32>
    %133 = vector.broadcast %132 : vector<1x128xf32> to vector<288x128xf32>
    %134 = arith.addf %131, %133 : vector<288x128xf32>
    %135 = vector.extract_strided_slice %134 {offsets = [0, 0], sizes = [16, 128], strides = [1, 1]} : vector<288x128xf32> to vector<16x128xf32>
    %c0_130 = arith.constant 0 : index
    %c0_131 = arith.constant 0 : index
    %c0_132 = arith.constant 0 : index
    %136 = vector.load %arg1[%c0_130, %c0_131, %c0_132] : memref<1x256x128xbf16, #tpu.memory_space<vmem>>, vector<1x16x128xbf16>
    %137 = vector.shape_cast %136 : vector<1x16x128xbf16> to vector<16x128xbf16>
    %138 = arith.extf %137 : vector<16x128xbf16> to vector<16x128xf32>
    %139 = arith.addf %135, %138 : vector<16x128xf32>
    %cst_133 = arith.constant 0.000000e+00 : f32
    %140 = vector.broadcast %cst_133 : f32 to vector<16x128xf32>
    %141 = arith.maximumf %139, %140 : vector<16x128xf32>
    %c0_134 = arith.constant 0 : index
    %c0_135 = arith.constant 0 : index
    %c0_136 = arith.constant 0 : index
    %142 = vector.load %arg8[%c0_134, %c0_135, %c0_136] : memref<1x256x128xf32, #tpu.memory_space<vmem>>, vector<1x16x128xf32>
    %143 = vector.shape_cast %142 : vector<1x16x128xf32> to vector<16x128xf32>
    %144 = vector.shape_cast %141 : vector<16x128xf32> to vector<1x16x128xf32>
    tpu.vector_store %arg8[%c0_134, %c0_135, %c0_136], %144 {strides = array<i32>} : memref<1x256x128xf32, #tpu.memory_space<vmem>>, vector<1x16x128xf32>,
    %145 = vector.extract_strided_slice %134 {offsets = [18, 0], sizes = [16, 128], strides = [1, 1]} : vector<288x128xf32> to vector<16x128xf32>
    %c0_137 = arith.constant 0 : index
    %c16 = arith.constant 16 : index
    %c0_138 = arith.constant 0 : index
    %146 = vector.load %arg1[%c0_137, %c16, %c0_138] : memref<1x256x128xbf16, #tpu.memory_space<vmem>>, vector<1x16x128xbf16>
    %147 = vector.shape_cast %146 : vector<1x16x128xbf16> to vector<16x128xbf16>
    %148 = arith.extf %147 : vector<16x128xbf16> to vector<16x128xf32>
    %149 = arith.addf %145, %148 : vector<16x128xf32>
    %cst_139 = arith.constant 0.000000e+00 : f32
    %150 = vector.broadcast %cst_139 : f32 to vector<16x128xf32>
    %151 = arith.maximumf %149, %150 : vector<16x128xf32>
    %c0_140 = arith.constant 0 : index
    %c16_141 = arith.constant 16 : index
    %c0_142 = arith.constant 0 : index
    %152 = vector.load %arg8[%c0_140, %c16_141, %c0_142] : memref<1x256x128xf32, #tpu.memory_space<vmem>>, vector<1x16x128xf32>
    %153 = vector.shape_cast %152 : vector<1x16x128xf32> to vector<16x128xf32>
    %154 = vector.shape_cast %151 : vector<16x128xf32> to vector<1x16x128xf32>
    tpu.vector_store %arg8[%c0_140, %c16_141, %c0_142], %154 {strides = array<i32>} : memref<1x256x128xf32, #tpu.memory_space<vmem>>, vector<1x16x128xf32>,
    %155 = vector.extract_strided_slice %134 {offsets = [36, 0], sizes = [16, 128], strides = [1, 1]} : vector<288x128xf32> to vector<16x128xf32>
    %c0_143 = arith.constant 0 : index
    %c32 = arith.constant 32 : index
    %c0_144 = arith.constant 0 : index
    %156 = vector.load %arg1[%c0_143, %c32, %c0_144] : memref<1x256x128xbf16, #tpu.memory_space<vmem>>, vector<1x16x128xbf16>
    %157 = vector.shape_cast %156 : vector<1x16x128xbf16> to vector<16x128xbf16>
    %158 = arith.extf %157 : vector<16x128xbf16> to vector<16x128xf32>
    %159 = arith.addf %155, %158 : vector<16x128xf32>
    %cst_145 = arith.constant 0.000000e+00 : f32
    %160 = vector.broadcast %cst_145 : f32 to vector<16x128xf32>
    %161 = arith.maximumf %159, %160 : vector<16x128xf32>
    %c0_146 = arith.constant 0 : index
    %c32_147 = arith.constant 32 : index
    %c0_148 = arith.constant 0 : index
    %162 = vector.load %arg8[%c0_146, %c32_147, %c0_148] : memref<1x256x128xf32, #tpu.memory_space<vmem>>, vector<1x16x128xf32>
    %163 = vector.shape_cast %162 : vector<1x16x128xf32> to vector<16x128xf32>
    %164 = vector.shape_cast %161 : vector<16x128xf32> to vector<1x16x128xf32>
    tpu.vector_store %arg8[%c0_146, %c32_147, %c0_148], %164 {strides = array<i32>} : memref<1x256x128xf32, #tpu.memory_space<vmem>>, vector<1x16x128xf32>,
    %165 = vector.extract_strided_slice %134 {offsets = [54, 0], sizes = [16, 128], strides = [1, 1]} : vector<288x128xf32> to vector<16x128xf32>
    %c0_149 = arith.constant 0 : index
    %c48 = arith.constant 48 : index
    %c0_150 = arith.constant 0 : index
    %166 = vector.load %arg1[%c0_149, %c48, %c0_150] : memref<1x256x128xbf16, #tpu.memory_space<vmem>>, vector<1x16x128xbf16>
    %167 = vector.shape_cast %166 : vector<1x16x128xbf16> to vector<16x128xbf16>
    %168 = arith.extf %167 : vector<16x128xbf16> to vector<16x128xf32>
    %169 = arith.addf %165, %168 : vector<16x128xf32>
    %cst_151 = arith.constant 0.000000e+00 : f32
    %170 = vector.broadcast %cst_151 : f32 to vector<16x128xf32>
    %171 = arith.maximumf %169, %170 : vector<16x128xf32>
    %c0_152 = arith.constant 0 : index
    %c48_153 = arith.constant 48 : index
    %c0_154 = arith.constant 0 : index
    %172 = vector.load %arg8[%c0_152, %c48_153, %c0_154] : memref<1x256x128xf32, #tpu.memory_space<vmem>>, vector<1x16x128xf32>
    %173 = vector.shape_cast %172 : vector<1x16x128xf32> to vector<16x128xf32>
    %174 = vector.shape_cast %171 : vector<16x128xf32> to vector<1x16x128xf32>
    tpu.vector_store %arg8[%c0_152, %c48_153, %c0_154], %174 {strides = array<i32>} : memref<1x256x128xf32, #tpu.memory_space<vmem>>, vector<1x16x128xf32>,
    %175 = vector.extract_strided_slice %134 {offsets = [72, 0], sizes = [16, 128], strides = [1, 1]} : vector<288x128xf32> to vector<16x128xf32>
    %c0_155 = arith.constant 0 : index
    %c64 = arith.constant 64 : index
    %c0_156 = arith.constant 0 : index
    %176 = vector.load %arg1[%c0_155, %c64, %c0_156] : memref<1x256x128xbf16, #tpu.memory_space<vmem>>, vector<1x16x128xbf16>
    %177 = vector.shape_cast %176 : vector<1x16x128xbf16> to vector<16x128xbf16>
    %178 = arith.extf %177 : vector<16x128xbf16> to vector<16x128xf32>
    %179 = arith.addf %175, %178 : vector<16x128xf32>
    %cst_157 = arith.constant 0.000000e+00 : f32
    %180 = vector.broadcast %cst_157 : f32 to vector<16x128xf32>
    %181 = arith.maximumf %179, %180 : vector<16x128xf32>
    %c0_158 = arith.constant 0 : index
    %c64_159 = arith.constant 64 : index
    %c0_160 = arith.constant 0 : index
    %182 = vector.load %arg8[%c0_158, %c64_159, %c0_160] : memref<1x256x128xf32, #tpu.memory_space<vmem>>, vector<1x16x128xf32>
    %183 = vector.shape_cast %182 : vector<1x16x128xf32> to vector<16x128xf32>
    %184 = vector.shape_cast %181 : vector<16x128xf32> to vector<1x16x128xf32>
    tpu.vector_store %arg8[%c0_158, %c64_159, %c0_160], %184 {strides = array<i32>} : memref<1x256x128xf32, #tpu.memory_space<vmem>>, vector<1x16x128xf32>,
    %185 = vector.extract_strided_slice %134 {offsets = [90, 0], sizes = [16, 128], strides = [1, 1]} : vector<288x128xf32> to vector<16x128xf32>
    %c0_161 = arith.constant 0 : index
    %c80 = arith.constant 80 : index
    %c0_162 = arith.constant 0 : index
    %186 = vector.load %arg1[%c0_161, %c80, %c0_162] : memref<1x256x128xbf16, #tpu.memory_space<vmem>>, vector<1x16x128xbf16>
    %187 = vector.shape_cast %186 : vector<1x16x128xbf16> to vector<16x128xbf16>
    %188 = arith.extf %187 : vector<16x128xbf16> to vector<16x128xf32>
    %189 = arith.addf %185, %188 : vector<16x128xf32>
    %cst_163 = arith.constant 0.000000e+00 : f32
    %190 = vector.broadcast %cst_163 : f32 to vector<16x128xf32>
    %191 = arith.maximumf %189, %190 : vector<16x128xf32>
    %c0_164 = arith.constant 0 : index
    %c80_165 = arith.constant 80 : index
    %c0_166 = arith.constant 0 : index
    %192 = vector.load %arg8[%c0_164, %c80_165, %c0_166] : memref<1x256x128xf32, #tpu.memory_space<vmem>>, vector<1x16x128xf32>
    %193 = vector.shape_cast %192 : vector<1x16x128xf32> to vector<16x128xf32>
    %194 = vector.shape_cast %191 : vector<16x128xf32> to vector<1x16x128xf32>
    tpu.vector_store %arg8[%c0_164, %c80_165, %c0_166], %194 {strides = array<i32>} : memref<1x256x128xf32, #tpu.memory_space<vmem>>, vector<1x16x128xf32>,
    %195 = vector.extract_strided_slice %134 {offsets = [108, 0], sizes = [16, 128], strides = [1, 1]} : vector<288x128xf32> to vector<16x128xf32>
    %c0_167 = arith.constant 0 : index
    %c96 = arith.constant 96 : index
    %c0_168 = arith.constant 0 : index
    %196 = vector.load %arg1[%c0_167, %c96, %c0_168] : memref<1x256x128xbf16, #tpu.memory_space<vmem>>, vector<1x16x128xbf16>
    %197 = vector.shape_cast %196 : vector<1x16x128xbf16> to vector<16x128xbf16>
    %198 = arith.extf %197 : vector<16x128xbf16> to vector<16x128xf32>
    %199 = arith.addf %195, %198 : vector<16x128xf32>
    %cst_169 = arith.constant 0.000000e+00 : f32
    %200 = vector.broadcast %cst_169 : f32 to vector<16x128xf32>
    %201 = arith.maximumf %199, %200 : vector<16x128xf32>
    %c0_170 = arith.constant 0 : index
    %c96_171 = arith.constant 96 : index
    %c0_172 = arith.constant 0 : index
    %202 = vector.load %arg8[%c0_170, %c96_171, %c0_172] : memref<1x256x128xf32, #tpu.memory_space<vmem>>, vector<1x16x128xf32>
    %203 = vector.shape_cast %202 : vector<1x16x128xf32> to vector<16x128xf32>
    %204 = vector.shape_cast %201 : vector<16x128xf32> to vector<1x16x128xf32>
    tpu.vector_store %arg8[%c0_170, %c96_171, %c0_172], %204 {strides = array<i32>} : memref<1x256x128xf32, #tpu.memory_space<vmem>>, vector<1x16x128xf32>,
    %205 = vector.extract_strided_slice %134 {offsets = [126, 0], sizes = [16, 128], strides = [1, 1]} : vector<288x128xf32> to vector<16x128xf32>
    %c0_173 = arith.constant 0 : index
    %c112 = arith.constant 112 : index
    %c0_174 = arith.constant 0 : index
    %206 = vector.load %arg1[%c0_173, %c112, %c0_174] : memref<1x256x128xbf16, #tpu.memory_space<vmem>>, vector<1x16x128xbf16>
    %207 = vector.shape_cast %206 : vector<1x16x128xbf16> to vector<16x128xbf16>
    %208 = arith.extf %207 : vector<16x128xbf16> to vector<16x128xf32>
    %209 = arith.addf %205, %208 : vector<16x128xf32>
    %cst_175 = arith.constant 0.000000e+00 : f32
    %210 = vector.broadcast %cst_175 : f32 to vector<16x128xf32>
    %211 = arith.maximumf %209, %210 : vector<16x128xf32>
    %c0_176 = arith.constant 0 : index
    %c112_177 = arith.constant 112 : index
    %c0_178 = arith.constant 0 : index
    %212 = vector.load %arg8[%c0_176, %c112_177, %c0_178] : memref<1x256x128xf32, #tpu.memory_space<vmem>>, vector<1x16x128xf32>
    %213 = vector.shape_cast %212 : vector<1x16x128xf32> to vector<16x128xf32>
    %214 = vector.shape_cast %211 : vector<16x128xf32> to vector<1x16x128xf32>
    tpu.vector_store %arg8[%c0_176, %c112_177, %c0_178], %214 {strides = array<i32>} : memref<1x256x128xf32, #tpu.memory_space<vmem>>, vector<1x16x128xf32>,
    %215 = vector.extract_strided_slice %134 {offsets = [144, 0], sizes = [16, 128], strides = [1, 1]} : vector<288x128xf32> to vector<16x128xf32>
    %c0_179 = arith.constant 0 : index
    %c128_180 = arith.constant 128 : index
    %c0_181 = arith.constant 0 : index
    %216 = vector.load %arg1[%c0_179, %c128_180, %c0_181] : memref<1x256x128xbf16, #tpu.memory_space<vmem>>, vector<1x16x128xbf16>
    %217 = vector.shape_cast %216 : vector<1x16x128xbf16> to vector<16x128xbf16>
    %218 = arith.extf %217 : vector<16x128xbf16> to vector<16x128xf32>
    %219 = arith.addf %215, %218 : vector<16x128xf32>
    %cst_182 = arith.constant 0.000000e+00 : f32
    %220 = vector.broadcast %cst_182 : f32 to vector<16x128xf32>
    %221 = arith.maximumf %219, %220 : vector<16x128xf32>
    %c0_183 = arith.constant 0 : index
    %c128_184 = arith.constant 128 : index
    %c0_185 = arith.constant 0 : index
    %222 = vector.load %arg8[%c0_183, %c128_184, %c0_185] : memref<1x256x128xf32, #tpu.memory_space<vmem>>, vector<1x16x128xf32>
    %223 = vector.shape_cast %222 : vector<1x16x128xf32> to vector<16x128xf32>
    %224 = vector.shape_cast %221 : vector<16x128xf32> to vector<1x16x128xf32>
    tpu.vector_store %arg8[%c0_183, %c128_184, %c0_185], %224 {strides = array<i32>} : memref<1x256x128xf32, #tpu.memory_space<vmem>>, vector<1x16x128xf32>,
    %225 = vector.extract_strided_slice %134 {offsets = [162, 0], sizes = [16, 128], strides = [1, 1]} : vector<288x128xf32> to vector<16x128xf32>
    %c0_186 = arith.constant 0 : index
    %c144_187 = arith.constant 144 : index
    %c0_188 = arith.constant 0 : index
    %226 = vector.load %arg1[%c0_186, %c144_187, %c0_188] : memref<1x256x128xbf16, #tpu.memory_space<vmem>>, vector<1x16x128xbf16>
    %227 = vector.shape_cast %226 : vector<1x16x128xbf16> to vector<16x128xbf16>
    %228 = arith.extf %227 : vector<16x128xbf16> to vector<16x128xf32>
    %229 = arith.addf %225, %228 : vector<16x128xf32>
    %cst_189 = arith.constant 0.000000e+00 : f32
    %230 = vector.broadcast %cst_189 : f32 to vector<16x128xf32>
    %231 = arith.maximumf %229, %230 : vector<16x128xf32>
    %c0_190 = arith.constant 0 : index
    %c144_191 = arith.constant 144 : index
    %c0_192 = arith.constant 0 : index
    %232 = vector.load %arg8[%c0_190, %c144_191, %c0_192] : memref<1x256x128xf32, #tpu.memory_space<vmem>>, vector<1x16x128xf32>
    %233 = vector.shape_cast %232 : vector<1x16x128xf32> to vector<16x128xf32>
    %234 = vector.shape_cast %231 : vector<16x128xf32> to vector<1x16x128xf32>
    tpu.vector_store %arg8[%c0_190, %c144_191, %c0_192], %234 {strides = array<i32>} : memref<1x256x128xf32, #tpu.memory_space<vmem>>, vector<1x16x128xf32>,
    %235 = vector.extract_strided_slice %134 {offsets = [180, 0], sizes = [16, 128], strides = [1, 1]} : vector<288x128xf32> to vector<16x128xf32>
    %c0_193 = arith.constant 0 : index
    %c160 = arith.constant 160 : index
    %c0_194 = arith.constant 0 : index
    %236 = vector.load %arg1[%c0_193, %c160, %c0_194] : memref<1x256x128xbf16, #tpu.memory_space<vmem>>, vector<1x16x128xbf16>
    %237 = vector.shape_cast %236 : vector<1x16x128xbf16> to vector<16x128xbf16>
    %238 = arith.extf %237 : vector<16x128xbf16> to vector<16x128xf32>
    %239 = arith.addf %235, %238 : vector<16x128xf32>
    %cst_195 = arith.constant 0.000000e+00 : f32
    %240 = vector.broadcast %cst_195 : f32 to vector<16x128xf32>
    %241 = arith.maximumf %239, %240 : vector<16x128xf32>
    %c0_196 = arith.constant 0 : index
    %c160_197 = arith.constant 160 : index
    %c0_198 = arith.constant 0 : index
    %242 = vector.load %arg8[%c0_196, %c160_197, %c0_198] : memref<1x256x128xf32, #tpu.memory_space<vmem>>, vector<1x16x128xf32>
    %243 = vector.shape_cast %242 : vector<1x16x128xf32> to vector<16x128xf32>
    %244 = vector.shape_cast %241 : vector<16x128xf32> to vector<1x16x128xf32>
    tpu.vector_store %arg8[%c0_196, %c160_197, %c0_198], %244 {strides = array<i32>} : memref<1x256x128xf32, #tpu.memory_space<vmem>>, vector<1x16x128xf32>,
    %245 = vector.extract_strided_slice %134 {offsets = [198, 0], sizes = [16, 128], strides = [1, 1]} : vector<288x128xf32> to vector<16x128xf32>
    %c0_199 = arith.constant 0 : index
    %c176 = arith.constant 176 : index
    %c0_200 = arith.constant 0 : index
    %246 = vector.load %arg1[%c0_199, %c176, %c0_200] : memref<1x256x128xbf16, #tpu.memory_space<vmem>>, vector<1x16x128xbf16>
    %247 = vector.shape_cast %246 : vector<1x16x128xbf16> to vector<16x128xbf16>
    %248 = arith.extf %247 : vector<16x128xbf16> to vector<16x128xf32>
    %249 = arith.addf %245, %248 : vector<16x128xf32>
    %cst_201 = arith.constant 0.000000e+00 : f32
    %250 = vector.broadcast %cst_201 : f32 to vector<16x128xf32>
    %251 = arith.maximumf %249, %250 : vector<16x128xf32>
    %c0_202 = arith.constant 0 : index
    %c176_203 = arith.constant 176 : index
    %c0_204 = arith.constant 0 : index
    %252 = vector.load %arg8[%c0_202, %c176_203, %c0_204] : memref<1x256x128xf32, #tpu.memory_space<vmem>>, vector<1x16x128xf32>
    %253 = vector.shape_cast %252 : vector<1x16x128xf32> to vector<16x128xf32>
    %254 = vector.shape_cast %251 : vector<16x128xf32> to vector<1x16x128xf32>
    tpu.vector_store %arg8[%c0_202, %c176_203, %c0_204], %254 {strides = array<i32>} : memref<1x256x128xf32, #tpu.memory_space<vmem>>, vector<1x16x128xf32>,
    %255 = vector.extract_strided_slice %134 {offsets = [216, 0], sizes = [16, 128], strides = [1, 1]} : vector<288x128xf32> to vector<16x128xf32>
    %c0_205 = arith.constant 0 : index
    %c192 = arith.constant 192 : index
    %c0_206 = arith.constant 0 : index
    %256 = vector.load %arg1[%c0_205, %c192, %c0_206] : memref<1x256x128xbf16, #tpu.memory_space<vmem>>, vector<1x16x128xbf16>
    %257 = vector.shape_cast %256 : vector<1x16x128xbf16> to vector<16x128xbf16>
    %258 = arith.extf %257 : vector<16x128xbf16> to vector<16x128xf32>
    %259 = arith.addf %255, %258 : vector<16x128xf32>
    %cst_207 = arith.constant 0.000000e+00 : f32
    %260 = vector.broadcast %cst_207 : f32 to vector<16x128xf32>
    %261 = arith.maximumf %259, %260 : vector<16x128xf32>
    %c0_208 = arith.constant 0 : index
    %c192_209 = arith.constant 192 : index
    %c0_210 = arith.constant 0 : index
    %262 = vector.load %arg8[%c0_208, %c192_209, %c0_210] : memref<1x256x128xf32, #tpu.memory_space<vmem>>, vector<1x16x128xf32>
    %263 = vector.shape_cast %262 : vector<1x16x128xf32> to vector<16x128xf32>
    %264 = vector.shape_cast %261 : vector<16x128xf32> to vector<1x16x128xf32>
    tpu.vector_store %arg8[%c0_208, %c192_209, %c0_210], %264 {strides = array<i32>} : memref<1x256x128xf32, #tpu.memory_space<vmem>>, vector<1x16x128xf32>,
    %265 = vector.extract_strided_slice %134 {offsets = [234, 0], sizes = [16, 128], strides = [1, 1]} : vector<288x128xf32> to vector<16x128xf32>
    %c0_211 = arith.constant 0 : index
    %c208 = arith.constant 208 : index
    %c0_212 = arith.constant 0 : index
    %266 = vector.load %arg1[%c0_211, %c208, %c0_212] : memref<1x256x128xbf16, #tpu.memory_space<vmem>>, vector<1x16x128xbf16>
    %267 = vector.shape_cast %266 : vector<1x16x128xbf16> to vector<16x128xbf16>
    %268 = arith.extf %267 : vector<16x128xbf16> to vector<16x128xf32>
    %269 = arith.addf %265, %268 : vector<16x128xf32>
    %cst_213 = arith.constant 0.000000e+00 : f32
    %270 = vector.broadcast %cst_213 : f32 to vector<16x128xf32>
    %271 = arith.maximumf %269, %270 : vector<16x128xf32>
    %c0_214 = arith.constant 0 : index
    %c208_215 = arith.constant 208 : index
    %c0_216 = arith.constant 0 : index
    %272 = vector.load %arg8[%c0_214, %c208_215, %c0_216] : memref<1x256x128xf32, #tpu.memory_space<vmem>>, vector<1x16x128xf32>
    %273 = vector.shape_cast %272 : vector<1x16x128xf32> to vector<16x128xf32>
    %274 = vector.shape_cast %271 : vector<16x128xf32> to vector<1x16x128xf32>
    tpu.vector_store %arg8[%c0_214, %c208_215, %c0_216], %274 {strides = array<i32>} : memref<1x256x128xf32, #tpu.memory_space<vmem>>, vector<1x16x128xf32>,
    %275 = vector.extract_strided_slice %134 {offsets = [252, 0], sizes = [16, 128], strides = [1, 1]} : vector<288x128xf32> to vector<16x128xf32>
    %c0_217 = arith.constant 0 : index
    %c224 = arith.constant 224 : index
    %c0_218 = arith.constant 0 : index
    %276 = vector.load %arg1[%c0_217, %c224, %c0_218] : memref<1x256x128xbf16, #tpu.memory_space<vmem>>, vector<1x16x128xbf16>
    %277 = vector.shape_cast %276 : vector<1x16x128xbf16> to vector<16x128xbf16>
    %278 = arith.extf %277 : vector<16x128xbf16> to vector<16x128xf32>
    %279 = arith.addf %275, %278 : vector<16x128xf32>
    %cst_219 = arith.constant 0.000000e+00 : f32
    %280 = vector.broadcast %cst_219 : f32 to vector<16x128xf32>
    %281 = arith.maximumf %279, %280 : vector<16x128xf32>
    %c0_220 = arith.constant 0 : index
    %c224_221 = arith.constant 224 : index
    %c0_222 = arith.constant 0 : index
    %282 = vector.load %arg8[%c0_220, %c224_221, %c0_222] : memref<1x256x128xf32, #tpu.memory_space<vmem>>, vector<1x16x128xf32>
    %283 = vector.shape_cast %282 : vector<1x16x128xf32> to vector<16x128xf32>
    %284 = vector.shape_cast %281 : vector<16x128xf32> to vector<1x16x128xf32>
    tpu.vector_store %arg8[%c0_220, %c224_221, %c0_222], %284 {strides = array<i32>} : memref<1x256x128xf32, #tpu.memory_space<vmem>>, vector<1x16x128xf32>,
    %285 = vector.extract_strided_slice %134 {offsets = [270, 0], sizes = [16, 128], strides = [1, 1]} : vector<288x128xf32> to vector<16x128xf32>
    %c0_223 = arith.constant 0 : index
    %c240 = arith.constant 240 : index
    %c0_224 = arith.constant 0 : index
    %286 = vector.load %arg1[%c0_223, %c240, %c0_224] : memref<1x256x128xbf16, #tpu.memory_space<vmem>>, vector<1x16x128xbf16>
    %287 = vector.shape_cast %286 : vector<1x16x128xbf16> to vector<16x128xbf16>
    %288 = arith.extf %287 : vector<16x128xbf16> to vector<16x128xf32>
    %289 = arith.addf %285, %288 : vector<16x128xf32>
    %cst_225 = arith.constant 0.000000e+00 : f32
    %290 = vector.broadcast %cst_225 : f32 to vector<16x128xf32>
    %291 = arith.maximumf %289, %290 : vector<16x128xf32>
    %c0_226 = arith.constant 0 : index
    %c240_227 = arith.constant 240 : index
    %c0_228 = arith.constant 0 : index
    %292 = vector.load %arg8[%c0_226, %c240_227, %c0_228] : memref<1x256x128xf32, #tpu.memory_space<vmem>>, vector<1x16x128xf32>
    %293 = vector.shape_cast %292 : vector<1x16x128xf32> to vector<16x128xf32>
    %294 = vector.shape_cast %291 : vector<16x128xf32> to vector<1x16x128xf32>
    tpu.vector_store %arg8[%c0_226, %c240_227, %c0_228], %294 {strides = array<i32>} : memref<1x256x128xf32, #tpu.memory_space<vmem>>, vector<1x16x128xf32>,
    return
  }
  func.func @transform_0(%arg0: i32) -> (i32, i32, i32) {
    %c0_i32 = arith.constant 0 : i32
    %c0_i32_0 = arith.constant 0 : i32
    %c0_i32_1 = arith.constant 0 : i32
    return %arg0, %c0_i32, %c0_i32_0 : i32, i32, i32
  }
  func.func @transform_1(%arg0: i32) -> (i32, i32) {
    %c0_i32 = arith.constant 0 : i32
    %c0_i32_0 = arith.constant 0 : i32
    %c0_i32_1 = arith.constant 0 : i32
    return %c0_i32, %c0_i32_0 : i32, i32
  }
  func.func @transform_2(%arg0: i32) -> (i32, i32) {
    %c0_i32 = arith.constant 0 : i32
    %c0_i32_0 = arith.constant 0 : i32
    %c0_i32_1 = arith.constant 0 : i32
    return %c0_i32, %c0_i32_0 : i32, i32
  }
  func.func @transform_3(%arg0: i32) -> (i32, i32, i32) {
    %c0_i32 = arith.constant 0 : i32
    %c0_i32_0 = arith.constant 0 : i32
    %c0_i32_1 = arith.constant 0 : i32
    %c0_i32_2 = arith.constant 0 : i32
    return %c0_i32, %c0_i32_0, %c0_i32_1 : i32, i32, i32
  }
  func.func @transform_4(%arg0: i32) -> (i32, i32) {
    %c0_i32 = arith.constant 0 : i32
    %c0_i32_0 = arith.constant 0 : i32
    %c0_i32_1 = arith.constant 0 : i32
    return %c0_i32, %c0_i32_0 : i32, i32
  }
  func.func @transform_5(%arg0: i32) -> (i32, i32) {
    %c0_i32 = arith.constant 0 : i32
    %c0_i32_0 = arith.constant 0 : i32
    %c0_i32_1 = arith.constant 0 : i32
    return %c0_i32, %c0_i32_0 : i32, i32
  }
  func.func @transform_6(%arg0: i32) -> (i32, i32) {
    %c0_i32 = arith.constant 0 : i32
    %c0_i32_0 = arith.constant 0 : i32
    %c0_i32_1 = arith.constant 0 : i32
    return %c0_i32, %c0_i32_0 : i32, i32
  }
  func.func @transform_7(%arg0: i32) -> (i32, i32, i32) {
    %c0_i32 = arith.constant 0 : i32
    %c0_i32_0 = arith.constant 0 : i32
    %c0_i32_1 = arith.constant 0 : i32
    return %arg0, %c0_i32, %c0_i32_0 : i32, i32, i32
  }
}

</mosaic_0001>

<llo_original>
// kernel: bottleneck_forward.1
$region0: #{bottleneck_forward.1}
  #allocation0 [shape = 'u32[]', space=smem, size = 0x4, offset = 0x4, fixed_abs, tag = 'smem constant byte address 0x4 - core index']
  #allocation1 [shape = 'u32[144,128]{1,0:T(1,128)}', space=vmem, size = 0x12000, scoped, tag = 'internal scratch']
  #allocation2 [shape = 'bf16[328,128]{1,0:T(8,128)(2,1)}', space=vmem, size = 0x14800, scoped, tag = 'scratch operand']
  #allocation3 [shape = 'f32[288,128]{1,0:T(8,128)}', space=vmem, size = 0x24000, scoped, tag = 'scratch operand']
  %s0 = inlined_call_operand.vmem [shape: bf16[2,256,128], index: 0, kind: input, shape index: {}]
  %s1 = inlined_call_operand.vmem [shape: bf16[128,128], index: 1, kind: input, shape index: {}]
  %s2 = inlined_call_operand.vmem [shape: f32[1,128], index: 2, kind: input, shape index: {}]
  %s3 = inlined_call_operand.vmem [shape: bf16[9,128,128], index: 3, kind: input, shape index: {}]
  %s4 = inlined_call_operand.vmem [shape: f32[1,128], index: 4, kind: input, shape index: {}]
  %s5 = inlined_call_operand.vmem [shape: bf16[128,128], index: 5, kind: input, shape index: {}]
  %s6 = inlined_call_operand.vmem [shape: f32[1,128], index: 6, kind: input, shape index: {}]
  %s7 = inlined_call_operand.vmem [shape: f32[2,256,128], index: 7, kind: output, shape index: {}]
  %s8 = sld [smem:[#allocation0]]
  $region61: #{bottleneck_forward.1} parent=0
    _
  %s10 = ssub.s32 1, %s8
  %s11 = scalar_select 0, %s10, %s8
  loop: start=0, step=1, limit=4
  $region2: #{bottleneck_forward.1} parent=0 // loop_pre_header
    _
  $region3: #{bottleneck_forward.1} parent=0 // loop_header
    %s13 = sphi 0, %s17
    %p14 = scmp.ge.s32.totalorder %s13, 4
    %s23 = sphi 0, %s25
    %s26 = sphi 0, %s23
    %s27 = sphi 0, %s26
    %s43 = sphi 0, %s27
    %s47 = sphi 0, %s47
    %s49 = sphi 0, %s47
    %s50 = sphi 0, %s49
    %s64 = sphi 0, %s50
    %s68 = sphi 0, %s68
    %s70 = sphi 0, %s68
    %s71 = sphi 0, %s70
    %s85 = sphi 0, %s71
    %s89 = sphi 0, %s89
    %s91 = sphi 0, %s89
    %s92 = sphi 0, %s91
    %s106 = sphi 0, %s92
    %s110 = sphi 0, %s110
    %s112 = sphi 0, %s110
    %s113 = sphi 0, %s112
    %s127 = sphi 0, %s113
    %s131 = sphi 0, %s131
    %s133 = sphi 0, %s131
    %s134 = sphi 0, %s133
    %s148 = sphi 0, %s134
    %s152 = sphi 0, %s152
    %s154 = sphi 0, %s152
    %s155 = sphi 0, %s154
    %s169 = sphi 0, %s155
    %s175 = sphi 0, %s177
    %s178 = sphi 0, %s175
    %s179 = sphi 0, %s178
    %s195 = sphi 0, %s179
  $region4: #{bottleneck_forward.1} parent=0 // loop_header_branch
    %16 = sbr.rel (%p14) target = $region8
  $region5: #{bottleneck_forward.1} parent=0 // loop_body
    %s18 = ssub.s32 %s13, 1
    %s19 = ssub.s32 %s13, 2
    %s20 = sadd.s32 %s13, 1
    %s21 = ssub.s32 %s13, %s20
    %p22 = scmp.eq.s32.totalorder %s21, 0
    %s24 = sadd.s32 %s23, 1
    %s25 = scalar_select %p22, %s23, %s24
    %p28 = pneg %p22
    %p29 = scmp.eq.s32.totalorder %s13, 1
    %p30 = por %p28, %p29
    %p31 = scmp.ne.s32.totalorder %s23, %s26
    %p32 = scmp.eq.s32.totalorder %s13, 0
    %p33 = por %p31, %p32
    %p34 = scmp.ne.s32.totalorder %s23, %s26
    %p35 = scmp.eq.s32.totalorder %s18, 1
    %p36 = por %p34, %p35
    %p37 = scmp.ne.s32.totalorder %s26, %s27
    %p38 = scmp.eq.s32.totalorder %s18, 0
    %p39 = por %p37, %p38
    %p40 = scmp.ne.s32.totalorder %s26, %s27
    %p41 = scmp.eq.s32.totalorder %s19, 1
    %p42 = por %p40, %p41
    %p44 = scmp.ne.s32.totalorder %s27, %s43
    %p45 = scmp.eq.s32.totalorder %s19, 0
    %p46 = por %p44, %p45
    %s48 = sadd.s32 %s47, 1
    %p51 = scmp.eq.s32.totalorder %s13, 1
    %p52 = scmp.ne.s32.totalorder %s47, %s49
    %p53 = scmp.eq.s32.totalorder %s13, 0
    %p54 = por %p52, %p53
    %p55 = scmp.ne.s32.totalorder %s47, %s49
    %p56 = scmp.eq.s32.totalorder %s18, 1
    %p57 = por %p55, %p56
    %p58 = scmp.ne.s32.totalorder %s49, %s50
    %p59 = scmp.eq.s32.totalorder %s18, 0
    %p60 = por %p58, %p59
    %p61 = scmp.ne.s32.totalorder %s49, %s50
    %p62 = scmp.eq.s32.totalorder %s19, 1
    %p63 = por %p61, %p62
    %p65 = scmp.ne.s32.totalorder %s50, %s64
    %p66 = scmp.eq.s32.totalorder %s19, 0
    %p67 = por %p65, %p66
    %s69 = sadd.s32 %s68, 1
    %p72 = scmp.eq.s32.totalorder %s13, 1
    %p73 = scmp.ne.s32.totalorder %s68, %s70
    %p74 = scmp.eq.s32.totalorder %s13, 0
    %p75 = por %p73, %p74
    %p76 = scmp.ne.s32.totalorder %s68, %s70
    %p77 = scmp.eq.s32.totalorder %s18, 1
    %p78 = por %p76, %p77
    %p79 = scmp.ne.s32.totalorder %s70, %s71
    %p80 = scmp.eq.s32.totalorder %s18, 0
    %p81 = por %p79, %p80
    %p82 = scmp.ne.s32.totalorder %s70, %s71
    %p83 = scmp.eq.s32.totalorder %s19, 1
    %p84 = por %p82, %p83
    %p86 = scmp.ne.s32.totalorder %s71, %s85
    %p87 = scmp.eq.s32.totalorder %s19, 0
    %p88 = por %p86, %p87
    %s90 = sadd.s32 %s89, 1
    %p93 = scmp.eq.s32.totalorder %s13, 1
    %p94 = scmp.ne.s32.totalorder %s89, %s91
    %p95 = scmp.eq.s32.totalorder %s13, 0
    %p96 = por %p94, %p95
    %p97 = scmp.ne.s32.totalorder %s89, %s91
    %p98 = scmp.eq.s32.totalorder %s18, 1
    %p99 = por %p97, %p98
    %p100 = scmp.ne.s32.totalorder %s91, %s92
    %p101 = scmp.eq.s32.totalorder %s18, 0
    %p102 = por %p100, %p101
    %p103 = scmp.ne.s32.totalorder %s91, %s92
    %p104 = scmp.eq.s32.totalorder %s19, 1
    %p105 = por %p103, %p104
    %p107 = scmp.ne.s32.totalorder %s92, %s106
    %p108 = scmp.eq.s32.totalorder %s19, 0
    %p109 = por %p107, %p108
    %s111 = sadd.s32 %s110, 1
    %p114 = scmp.eq.s32.totalorder %s13, 1
    %p115 = scmp.ne.s32.totalorder %s110, %s112
    %p116 = scmp.eq.s32.totalorder %s13, 0
    %p117 = por %p115, %p116
    %p118 = scmp.ne.s32.totalorder %s110, %s112
    %p119 = scmp.eq.s32.totalorder %s18, 1
    %p120 = por %p118, %p119
    %p121 = scmp.ne.s32.totalorder %s112, %s113
    %p122 = scmp.eq.s32.totalorder %s18, 0
    %p123 = por %p121, %p122
    %p124 = scmp.ne.s32.totalorder %s112, %s113
    %p125 = scmp.eq.s32.totalorder %s19, 1
    %p126 = por %p124, %p125
    %p128 = scmp.ne.s32.totalorder %s113, %s127
    %p129 = scmp.eq.s32.totalorder %s19, 0
    %p130 = por %p128, %p129
    %s132 = sadd.s32 %s131, 1
    %p135 = scmp.eq.s32.totalorder %s13, 1
    %p136 = scmp.ne.s32.totalorder %s131, %s133
    %p137 = scmp.eq.s32.totalorder %s13, 0
    %p138 = por %p136, %p137
    %p139 = scmp.ne.s32.totalorder %s131, %s133
    %p140 = scmp.eq.s32.totalorder %s18, 1
    %p141 = por %p139, %p140
    %p142 = scmp.ne.s32.totalorder %s133, %s134
    %p143 = scmp.eq.s32.totalorder %s18, 0
    %p144 = por %p142, %p143
    %p145 = scmp.ne.s32.totalorder %s133, %s134
    %p146 = scmp.eq.s32.totalorder %s19, 1
    %p147 = por %p145, %p146
    %p149 = scmp.ne.s32.totalorder %s134, %s148
    %p150 = scmp.eq.s32.totalorder %s19, 0
    %p151 = por %p149, %p150
    %s153 = sadd.s32 %s152, 1
    %p156 = scmp.eq.s32.totalorder %s13, 1
    %p157 = scmp.ne.s32.totalorder %s152, %s154
    %p158 = scmp.eq.s32.totalorder %s13, 0
    %p159 = por %p157, %p158
    %p160 = scmp.ne.s32.totalorder %s152, %s154
    %p161 = scmp.eq.s32.totalorder %s18, 1
    %p162 = por %p160, %p161
    %p163 = scmp.ne.s32.totalorder %s154, %s155
    %p164 = scmp.eq.s32.totalorder %s18, 0
    %p165 = por %p163, %p164
    %p166 = scmp.ne.s32.totalorder %s154, %s155
    %p167 = scmp.eq.s32.totalorder %s19, 1
    %p168 = por %p166, %p167
    %p170 = scmp.ne.s32.totalorder %s155, %s169
    %p171 = scmp.eq.s32.totalorder %s19, 0
    %p172 = por %p170, %p171
    %s173 = ssub.s32 %s13, %s20
    %p174 = scmp.eq.s32.totalorder %s173, 0
    %s176 = sadd.s32 %s175, 1
    %s177 = scalar_select %p174, %s175, %s176
    %p180 = pneg %p174
    %p181 = scmp.eq.s32.totalorder %s13, 1
    %p182 = por %p180, %p181
    %p183 = scmp.ne.s32.totalorder %s175, %s178
    %p184 = scmp.eq.s32.totalorder %s13, 0
    %p185 = por %p183, %p184
    %p186 = scmp.ne.s32.totalorder %s175, %s178
    %p187 = scmp.eq.s32.totalorder %s18, 1
    %p188 = por %p186, %p187
    %p189 = scmp.ne.s32.totalorder %s178, %s179
    %p190 = scmp.eq.s32.totalorder %s18, 0
    %p191 = por %p189, %p190
    %p192 = scmp.ne.s32.totalorder %s178, %s179
    %p193 = scmp.eq.s32.totalorder %s19, 1
    %p194 = por %p192, %p193
    %p196 = scmp.ne.s32.totalorder %s179, %s195
    %p197 = scmp.eq.s32.totalorder %s19, 0
    %p198 = por %p196, %p197
    %p199 = scmp.le.s32.totalorder 1, %s13
    %p200 = scmp.lt.s32.totalorder %s13, 3
    %p201 = pnand %p199, %p200
    %p202 = pneg %p201
    // Predicated region
    $region9: #{bottleneck_forward.1} parent=5 // pred_check
      _
    $region10: #{bottleneck_forward.1} parent=5 // pred_check_branch
      %204 = sbr.rel (%p201) target = $region12
    $region11: #{bottleneck_forward.1} parent=5 // pred_region
      %s205 = ssub.s32 %s13, 1
      // Predicated region
      $region13: #{bottleneck_forward.1} parent=11 // pred_check
        %p206 = pneg %p60
      $region14: #{bottleneck_forward.1} parent=11 // pred_check_branch
        %208 = sbr.rel (%p206) target = $region16
      $region15: #{bottleneck_forward.1} parent=11 // pred_region
        _
      $region16: #{bottleneck_forward.1} parent=11 // pred_fallthru
        _
      // Predicated region
      $region17: #{bottleneck_forward.1} parent=11 // pred_check
        %p209 = pneg %p81
      $region18: #{bottleneck_forward.1} parent=11 // pred_check_branch
        %211 = sbr.rel (%p209) target = $region20
      $region19: #{bottleneck_forward.1} parent=11 // pred_region
        _
      $region20: #{bottleneck_forward.1} parent=11 // pred_fallthru
        _
      // Predicated region
      $region21: #{bottleneck_forward.1} parent=11 // pred_check
        %p212 = pneg %p102
      $region22: #{bottleneck_forward.1} parent=11 // pred_check_branch
        %214 = sbr.rel (%p212) target = $region24
      $region23: #{bottleneck_forward.1} parent=11 // pred_region
        _
      $region24: #{bottleneck_forward.1} parent=11 // pred_fallthru
        _
      // Predicated region
      $region25: #{bottleneck_forward.1} parent=11 // pred_check
        %p215 = pneg %p123
      $region26: #{bottleneck_forward.1} parent=11 // pred_check_branch
        %217 = sbr.rel (%p215) target = $region28
      $region27: #{bottleneck_forward.1} parent=11 // pred_region
        _
      $region28: #{bottleneck_forward.1} parent=11 // pred_fallthru
        _
      // Predicated region
      $region29: #{bottleneck_forward.1} parent=11 // pred_check
        %p218 = pneg %p144
      $region30: #{bottleneck_forward.1} parent=11 // pred_check_branch
        %220 = sbr.rel (%p218) target = $region32
      $region31: #{bottleneck_forward.1} parent=11 // pred_region
        _
      $region32: #{bottleneck_forward.1} parent=11 // pred_fallthru
        _
      // Predicated region
      $region33: #{bottleneck_forward.1} parent=11 // pred_check
        %p221 = pneg %p165
      $region34: #{bottleneck_forward.1} parent=11 // pred_check_branch
        %223 = sbr.rel (%p221) target = $region36
      $region35: #{bottleneck_forward.1} parent=11 // pred_region
        _
      $region36: #{bottleneck_forward.1} parent=11 // pred_fallthru
        _
    $region12: #{bottleneck_forward.1} parent=5 // pred_fallthru
      _
    %p224 = scmp.lt.s32.totalorder %s13, 2
    // Predicated region
    $region37: #{bottleneck_forward.1} parent=5 // pred_check
      %p225 = pneg %p224
    $region38: #{bottleneck_forward.1} parent=5 // pred_check_branch
      %227 = sbr.rel (%p225) target = $region40
    $region39: #{bottleneck_forward.1} parent=5 // pred_region
      // Predicated region
      $region41: #{bottleneck_forward.1} parent=39 // pred_check
        %p228 = pneg %p33
      $region42: #{bottleneck_forward.1} parent=39 // pred_check_branch
        %230 = sbr.rel (%p228) target = $region44
      $region43: #{bottleneck_forward.1} parent=39 // pred_region
        %p231 = scmp.lt.s32.totalorder %s13, 1
        %s232 = scalar_select %p231, %s13, 1
        %s233 = smul.addr %s232, 32
        %s234 = smul.addr %s233, 4
        %s235 = scalar_lea.vmem %s0, %s234
      $region44: #{bottleneck_forward.1} parent=39 // pred_fallthru
        _
    $region40: #{bottleneck_forward.1} parent=5 // pred_fallthru
      _
    %p236 = scmp.le.s32.totalorder 1, %s13
    %p237 = scmp.lt.s32.totalorder %s13, 3
    %p238 = pnand %p236, %p237
    %p239 = pneg %p238
    // Predicated region
    $region45: #{bottleneck_forward.1} parent=5 // pred_check
      _
    $region46: #{bottleneck_forward.1} parent=5 // pred_check_branch
      %241 = sbr.rel (%p238) target = $region48
    $region47: #{bottleneck_forward.1} parent=5 // pred_region
      %s242 = ssub.s32 %s13, 1
      %p243 = scmp.lt.s32.totalorder %s18, 1
      %s244 = scalar_select %p243, %s18, 1
      %s245 = smul.addr %s244, 32
      %s246 = smul.addr %s245, 4
      %s247 = scalar_lea.vmem %s0, %s246
      %p248 = pneg %p39
      %p249 = pneg %p36
      %p250 = pneg %p60
      %p251 = pneg %p57
      %p252 = pneg %p81
      %p253 = pneg %p78
      %p254 = pneg %p102
      %p255 = pneg %p99
      %p256 = pneg %p123
      %p257 = pneg %p120
      %p258 = pneg %p144
      %p259 = pneg %p141
      %p260 = pneg %p165
      %p261 = pneg %p162
      %p262 = pneg %p191
      %p263 = pneg %p188
      %p264 = scmp.lt.s32.totalorder %s18, 1
      %s265 = scalar_select %p264, %s18, 1
      %s266 = smul.addr %s265, 32
      %s267 = smul.addr %s266, 8
      %s268 = scalar_lea.vmem %s7, %s267
      %p269 = scmp.lt.s32.totalorder %s18, 1
      %s270 = scalar_select %p269, %s18, 1
      %s271 = smul.addr %s270, 32
      %s272 = smul.addr %s271, 4
      %s273 = scalar_lea.vmem %s0, %s272
      %p274 = scmp.lt.s32.totalorder %s18, 1
      %s275 = scalar_select %p274, %s18, 1
      %s276 = smul.addr %s275, 32
      %s277 = smul.addr %s276, 8
      %s278 = scalar_lea.vmem %s7, %s277
      %280 = vst [vmem:[#allocation2] sm:$0xf] 0
      %281 = vst [vmem:[#allocation2 + $0x4] sm:$0xf] 0
      %282 = vst [vmem:[#allocation2 + $0x8] sm:$0x3] 0
      %283 = vst [vmem:[#allocation2 + $0x10] sm:$0x4] 0
      %284 = vst [vmem:[#allocation2 + $0x18] sm:$0x8] 0
      %285 = vst [vmem:[#allocation2 + $0x24] sm:$0x1] 0
      %286 = vst [vmem:[#allocation2 + $0x2c] sm:$0x2] 0
      %287 = vst [vmem:[#allocation2 + $0x34] sm:$0x4] 0
      %288 = vst [vmem:[#allocation2 + $0x3c] sm:$0x8] 0
      %289 = vst [vmem:[#allocation2 + $0x48] sm:$0x1] 0
      %290 = vst [vmem:[#allocation2 + $0x50] sm:$0x2] 0
      %291 = vst [vmem:[#allocation2 + $0x58] sm:$0x4] 0
      %292 = vst [vmem:[#allocation2 + $0x60] sm:$0x8] 0
      %293 = vst [vmem:[#allocation2 + $0x6c] sm:$0x1] 0
      %294 = vst [vmem:[#allocation2 + $0x74] sm:$0x2] 0
      %295 = vst [vmem:[#allocation2 + $0x7c] sm:$0x4] 0
      %296 = vst [vmem:[#allocation2 + $0x84] sm:$0x8] 0
      %297 = vst [vmem:[#allocation2 + $0x90] sm:$0x1] 0
      %298 = vst [vmem:[#allocation2 + $0x98] sm:$0xe] 0
      %299 = vst [vmem:[#allocation2 + $0x9c] sm:$0xf] 0
      %300 = vst [vmem:[#allocation2 + $0xa0] sm:$0xf] 0
      %v301 = vld [vmem:[%s273] sm:$0xf]
      %v302 = vld [vmem:[%s273 + $0x4] sm:$0xf]
      %v303 = vld [vmem:[%s273 + $0x8] sm:$0xf]
      %v304 = vld [vmem:[%s273 + $0xc] sm:$0xf]
      %v305 = vld [vmem:[%s273 + $0x10] sm:$0xf]
      %v306 = vld [vmem:[%s273 + $0x14] sm:$0xf]
      %v307 = vld [vmem:[%s273 + $0x18] sm:$0xf]
      %v308 = vld [vmem:[%s273 + $0x1c] sm:$0xf]
      %v309 = vld [vmem:[%s273 + $0x20] sm:$0xf]
      %v310 = vld [vmem:[%s273 + $0x24] sm:$0xf]
      %v311 = vld [vmem:[%s273 + $0x28] sm:$0xf]
      %v312 = vld [vmem:[%s273 + $0x2c] sm:$0xf]
      %v313 = vld [vmem:[%s273 + $0x30] sm:$0xf]
      %v314 = vld [vmem:[%s273 + $0x34] sm:$0xf]
      %v315 = vld [vmem:[%s273 + $0x38] sm:$0xf]
      %v316 = vld [vmem:[%s273 + $0x3c] sm:$0xf]
      %v317 = vld [vmem:[%s273 + $0x40] sm:$0xf]
      %v318 = vld [vmem:[%s273 + $0x44] sm:$0xf]
      %v319 = vld [vmem:[%s273 + $0x48] sm:$0xf]
      %v320 = vld [vmem:[%s273 + $0x4c] sm:$0xf]
      %v321 = vld [vmem:[%s273 + $0x50] sm:$0xf]
      %v322 = vld [vmem:[%s273 + $0x54] sm:$0xf]
      %v323 = vld [vmem:[%s273 + $0x58] sm:$0xf]
      %v324 = vld [vmem:[%s273 + $0x5c] sm:$0xf]
      %v325 = vld [vmem:[%s273 + $0x60] sm:$0xf]
      %v326 = vld [vmem:[%s273 + $0x64] sm:$0xf]
      %v327 = vld [vmem:[%s273 + $0x68] sm:$0xf]
      %v328 = vld [vmem:[%s273 + $0x6c] sm:$0xf]
      %v329 = vld [vmem:[%s273 + $0x70] sm:$0xf]
      %v330 = vld [vmem:[%s273 + $0x74] sm:$0xf]
      %v331 = vld [vmem:[%s273 + $0x78] sm:$0xf]
      %v332 = vld [vmem:[%s273 + $0x7c] sm:$0xf]
      %v333 = vld [vmem:[%s1] sm:$0xf]
      %v334 = vld [vmem:[%s1 + $0x4] sm:$0xf]
      %v335 = vld [vmem:[%s1 + $0x8] sm:$0xf]
      %v336 = vld [vmem:[%s1 + $0xc] sm:$0xf]
      %v337 = vld [vmem:[%s1 + $0x10] sm:$0xf]
      %v338 = vld [vmem:[%s1 + $0x14] sm:$0xf]
      %v339 = vld [vmem:[%s1 + $0x18] sm:$0xf]
      %v340 = vld [vmem:[%s1 + $0x1c] sm:$0xf]
      %v341 = vld [vmem:[%s1 + $0x20] sm:$0xf]
      %v342 = vld [vmem:[%s1 + $0x24] sm:$0xf]
      %v343 = vld [vmem:[%s1 + $0x28] sm:$0xf]
      %v344 = vld [vmem:[%s1 + $0x2c] sm:$0xf]
      %v345 = vld [vmem:[%s1 + $0x30] sm:$0xf]
      %v346 = vld [vmem:[%s1 + $0x34] sm:$0xf]
      %v347 = vld [vmem:[%s1 + $0x38] sm:$0xf]
      %v348 = vld [vmem:[%s1 + $0x3c] sm:$0xf]
      %v349 = vld [vmem:[%s2] sm:$0x1]
      %v351 = vlaneseq
      %v352 = vshrl.u32 %v351, 7
      %v353 = vsub.s32 0, %v352
      %v354 = vrot.slane %v349, %v353
      %v388 = vunpack.c.l.b16 %v301
      %v389 = vunpack.c.l.b16 %v302
      %v390 = vunpack.c.l.b16 %v303
      %v391 = vunpack.c.l.b16 %v304
      %v392 = vunpack.c.l.b16 %v305
      %v393 = vunpack.c.l.b16 %v306
      %v394 = vunpack.c.l.b16 %v307
      %v395 = vunpack.c.l.b16 %v308
      %v396 = vunpack.c.l.b16 %v309
      %v397 = vunpack.c.l.b16 %v310
      %v398 = vunpack.c.l.b16 %v311
      %v399 = vunpack.c.l.b16 %v312
      %v400 = vunpack.c.l.b16 %v313
      %v401 = vunpack.c.l.b16 %v314
      %v402 = vunpack.c.l.b16 %v315
      %v403 = vunpack.c.l.b16 %v316
      %v404 = vunpack.c.l.b16 %v317
      %v405 = vunpack.c.l.b16 %v318
      %v406 = vunpack.c.l.b16 %v319
      %v407 = vunpack.c.l.b16 %v320
      %v408 = vunpack.c.l.b16 %v321
      %v409 = vunpack.c.l.b16 %v322
      %v410 = vunpack.c.l.b16 %v323
      %v411 = vunpack.c.l.b16 %v324
      %v412 = vunpack.c.l.b16 %v325
      %v413 = vunpack.c.l.b16 %v326
      %v414 = vunpack.c.l.b16 %v327
      %v415 = vunpack.c.l.b16 %v328
      %v416 = vunpack.c.l.b16 %v329
      %v417 = vunpack.c.l.b16 %v330
      %v418 = vunpack.c.l.b16 %v331
      %v419 = vunpack.c.l.b16 %v332
      %v420 = vpack.c.b16 %v389, %v388
      %v421 = vpack.c.b16 %v391, %v390
      %v422 = vpack.c.b16 %v393, %v392
      %v423 = vpack.c.b16 %v395, %v394
      %v424 = vpack.c.b16 %v397, %v396
      %v425 = vpack.c.b16 %v399, %v398
      %v426 = vpack.c.b16 %v401, %v400
      %v427 = vpack.c.b16 %v403, %v402
      %v428 = vpack.c.b16 %v405, %v404
      %v429 = vpack.c.b16 %v407, %v406
      %v430 = vpack.c.b16 %v409, %v408
      %v431 = vpack.c.b16 %v411, %v410
      %v432 = vpack.c.b16 %v413, %v412
      %v433 = vpack.c.b16 %v415, %v414
      %v434 = vpack.c.b16 %v417, %v416
      %v435 = vpack.c.b16 %v419, %v418
      %v468 = vunpack.c.l.b16 %v333
      %v469 = vunpack.c.l.b16 %v334
      %v470 = vunpack.c.l.b16 %v335
      %v471 = vunpack.c.l.b16 %v336
      %v472 = vunpack.c.l.b16 %v337
      %v473 = vunpack.c.l.b16 %v338
      %v474 = vunpack.c.l.b16 %v339
      %v475 = vunpack.c.l.b16 %v340
      %v476 = vunpack.c.l.b16 %v341
      %v477 = vunpack.c.l.b16 %v342
      %v478 = vunpack.c.l.b16 %v343
      %v479 = vunpack.c.l.b16 %v344
      %v480 = vunpack.c.l.b16 %v345
      %v481 = vunpack.c.l.b16 %v346
      %v482 = vunpack.c.l.b16 %v347
      %v483 = vunpack.c.l.b16 %v348
      %v484 = vpack.c.b16 %v469, %v468
      %v485 = vpack.c.b16 %v471, %v470
      %v486 = vpack.c.b16 %v473, %v472
      %v487 = vpack.c.b16 %v475, %v474
      %v488 = vpack.c.b16 %v477, %v476
      %v489 = vpack.c.b16 %v479, %v478
      %v490 = vpack.c.b16 %v481, %v480
      %v491 = vpack.c.b16 %v483, %v482
      %500 = vmatprep.subr.bf16.mxu0 0
      %501 = vmatpush1.bf16.msra.mxu0 %v484
      %502 = vmatprep.subr.bf16.mxu0 0
      %503 = vmatpush1.bf16.msra.mxu0 %v485
      %504 = vmatprep.subr.bf16.mxu0 0
      %505 = vmatpush1.bf16.msra.mxu0 %v486
      %506 = vmatprep.subr.bf16.mxu0 0
      %507 = vmatpush1.bf16.msra.mxu0 %v487
      %508 = vmatprep.subr.bf16.mxu0 0
      %509 = vmatpush1.bf16.msra.mxu0 %v488
      %510 = vmatprep.subr.bf16.mxu0 0
      %511 = vmatpush1.bf16.msra.mxu0 %v489
      %512 = vmatprep.subr.bf16.mxu0 0
      %513 = vmatpush1.bf16.msra.mxu0 %v490
      %514 = vmatprep.subr.bf16.mxu0 0
      %515 = vmatpush1.bf16.msra.mxu0 %v491
      %516 = vmatprep.subr.bf16.mxu0 0
      %517 = vmatpush1.bf16.msra.mxu0 0
      %518 = vmatprep.subr.bf16.mxu0 0
      %519 = vmatpush1.bf16.msra.mxu0 0
      %520 = vmatprep.subr.bf16.mxu0 0
      %521 = vmatpush1.bf16.msra.mxu0 0
      %522 = vmatprep.subr.bf16.mxu0 0
      %523 = vmatpush1.bf16.msra.mxu0 0
      %524 = vmatprep.subr.bf16.mxu0 0
      %525 = vmatpush1.bf16.msra.mxu0 0
      %526 = vmatprep.subr.bf16.mxu0 0
      %527 = vmatpush1.bf16.msra.mxu0 0
      %528 = vmatprep.subr.bf16.mxu0 0
      %529 = vmatpush1.bf16.msra.mxu0 0
      %530 = vmatprep.subr.bf16.mxu0 0
      %531 = vmatpush1.bf16.msra.mxu0 0
      %532 = vmatprep.mubr.bf16.mxu0 0
      %533 = vmatmul.mubr.bf16.gmra.mrb[0].mxu0 %v420
      %v534 = vpop.f32.mrb[0].mxu0
      %v535 = vadd.f32 %v354, %v534
      %v536 = vpop.f32.mrb[0].mxu0
      %v537 = vpop.f32.mrb[0].mxu0
      %v538 = vadd.f32 %v354, %v537
      %v539 = vpop.f32.mrb[0].mxu0
      %540 = vmatprep.mubr.bf16.mxu0 0
      %541 = vmatmul.mubr.bf16.gmra.mrb[0].mxu0 %v421
      %v542 = vpop.f32.mrb[0].mxu0
      %v543 = vadd.f32 %v354, %v542
      %v544 = vpop.f32.mrb[0].mxu0
      %v545 = vpop.f32.mrb[0].mxu0
      %v546 = vadd.f32 %v354, %v545
      %v547 = vpop.f32.mrb[0].mxu0
      %548 = vmatprep.mubr.bf16.mxu0 0
      %549 = vmatmul.mubr.bf16.gmra.mrb[0].mxu0 %v422
      %v550 = vpop.f32.mrb[0].mxu0
      %v551 = vadd.f32 %v354, %v550
      %v552 = vpop.f32.mrb[0].mxu0
      %v553 = vpop.f32.mrb[0].mxu0
      %v554 = vadd.f32 %v354, %v553
      %v555 = vpop.f32.mrb[0].mxu0
      %556 = vmatprep.mubr.bf16.mxu0 0
      %557 = vmatmul.mubr.bf16.gmra.mrb[0].mxu0 %v423
      %v558 = vpop.f32.mrb[0].mxu0
      %v559 = vadd.f32 %v354, %v558
      %v560 = vpop.f32.mrb[0].mxu0
      %v561 = vpop.f32.mrb[0].mxu0
      %v562 = vadd.f32 %v354, %v561
      %v563 = vpop.f32.mrb[0].mxu0
      %564 = vmatprep.mubr.bf16.mxu0 0
      %565 = vmatmul.mubr.bf16.gmra.mrb[0].mxu0 %v424
      %v566 = vpop.f32.mrb[0].mxu0
      %v567 = vadd.f32 %v354, %v566
      %v568 = vpop.f32.mrb[0].mxu0
      %v569 = vpop.f32.mrb[0].mxu0
      %v570 = vadd.f32 %v354, %v569
      %v571 = vpop.f32.mrb[0].mxu0
      %572 = vmatprep.mubr.bf16.mxu0 0
      %573 = vmatmul.mubr.bf16.gmra.mrb[0].mxu0 %v425
      %v574 = vpop.f32.mrb[0].mxu0
      %v575 = vadd.f32 %v354, %v574
      %v576 = vpop.f32.mrb[0].mxu0
      %v577 = vpop.f32.mrb[0].mxu0
      %v578 = vadd.f32 %v354, %v577
      %v579 = vpop.f32.mrb[0].mxu0
      %580 = vmatprep.mubr.bf16.mxu0 0
      %581 = vmatmul.mubr.bf16.gmra.mrb[0].mxu0 %v426
      %v582 = vpop.f32.mrb[0].mxu0
      %v583 = vadd.f32 %v354, %v582
      %v584 = vpop.f32.mrb[0].mxu0
      %v585 = vpop.f32.mrb[0].mxu0
      %v586 = vadd.f32 %v354, %v585
      %v587 = vpop.f32.mrb[0].mxu0
      %588 = vmatprep.mubr.bf16.mxu0 0
      %589 = vmatmul.mubr.bf16.gmra.mrb[0].mxu0 %v427
      %v590 = vpop.f32.mrb[0].mxu0
      %v591 = vadd.f32 %v354, %v590
      %v592 = vpop.f32.mrb[0].mxu0
      %v593 = vpop.f32.mrb[0].mxu0
      %v594 = vadd.f32 %v354, %v593
      %v595 = vpop.f32.mrb[0].mxu0
      %596 = vmatprep.mubr.bf16.mxu0 0
      %597 = vmatmul.mubr.bf16.gmra.mrb[0].mxu0 %v428
      %v598 = vpop.f32.mrb[0].mxu0
      %v599 = vadd.f32 %v354, %v598
      %v600 = vpop.f32.mrb[0].mxu0
      %v601 = vpop.f32.mrb[0].mxu0
      %v602 = vadd.f32 %v354, %v601
      %v603 = vpop.f32.mrb[0].mxu0
      %604 = vmatprep.mubr.bf16.mxu0 0
      %605 = vmatmul.mubr.bf16.gmra.mrb[0].mxu0 %v429
      %v606 = vpop.f32.mrb[0].mxu0
      %v607 = vadd.f32 %v354, %v606
      %v608 = vpop.f32.mrb[0].mxu0
      %v609 = vpop.f32.mrb[0].mxu0
      %v610 = vadd.f32 %v354, %v609
      %v611 = vpop.f32.mrb[0].mxu0
      %612 = vmatprep.mubr.bf16.mxu0 0
      %613 = vmatmul.mubr.bf16.gmra.mrb[0].mxu0 %v430
      %v614 = vpop.f32.mrb[0].mxu0
      %v615 = vadd.f32 %v354, %v614
      %v616 = vpop.f32.mrb[0].mxu0
      %v617 = vpop.f32.mrb[0].mxu0
      %v618 = vadd.f32 %v354, %v617
      %v619 = vpop.f32.mrb[0].mxu0
      %620 = vmatprep.mubr.bf16.mxu0 0
      %621 = vmatmul.mubr.bf16.gmra.mrb[0].mxu0 %v431
      %v622 = vpop.f32.mrb[0].mxu0
      %v623 = vadd.f32 %v354, %v622
      %v624 = vpop.f32.mrb[0].mxu0
      %v625 = vpop.f32.mrb[0].mxu0
      %v626 = vadd.f32 %v354, %v625
      %v627 = vpop.f32.mrb[0].mxu0
      %628 = vmatprep.mubr.bf16.mxu0 0
      %629 = vmatmul.mubr.bf16.gmra.mrb[0].mxu0 %v432
      %v630 = vpop.f32.mrb[0].mxu0
      %v631 = vadd.f32 %v354, %v630
      %v632 = vpop.f32.mrb[0].mxu0
      %v633 = vpop.f32.mrb[0].mxu0
      %v634 = vadd.f32 %v354, %v633
      %v635 = vpop.f32.mrb[0].mxu0
      %636 = vmatprep.mubr.bf16.mxu0 0
      %637 = vmatmul.mubr.bf16.gmra.mrb[0].mxu0 %v433
      %v638 = vpop.f32.mrb[0].mxu0
      %v639 = vadd.f32 %v354, %v638
      %v640 = vpop.f32.mrb[0].mxu0
      %v641 = vpop.f32.mrb[0].mxu0
      %v642 = vadd.f32 %v354, %v641
      %v643 = vpop.f32.mrb[0].mxu0
      %644 = vmatprep.mubr.bf16.mxu0 0
      %645 = vmatmul.mubr.bf16.gmra.mrb[0].mxu0 %v434
      %v646 = vpop.f32.mrb[0].mxu0
      %v647 = vadd.f32 %v354, %v646
      %v648 = vpop.f32.mrb[0].mxu0
      %v649 = vpop.f32.mrb[0].mxu0
      %v650 = vadd.f32 %v354, %v649
      %v651 = vpop.f32.mrb[0].mxu0
      %652 = vmatprep.mubr.bf16.mxu0 0
      %653 = vmatmul.mubr.bf16.gmra.mrb[0].mxu0 %v435
      %v654 = vpop.f32.mrb[0].mxu0
      %v655 = vadd.f32 %v354, %v654
      %v656 = vpop.f32.mrb[0].mxu0
      %v657 = vpop.f32.mrb[0].mxu0
      %v658 = vadd.f32 %v354, %v657
      %v659 = vpop.f32.mrb[0].mxu0
      %660 = vdwg.mxu0
      %v661 = vmax.f32 %v535, 0.0
      %v662 = vmax.f32 %v538, 0.0
      %v663 = vmax.f32 %v543, 0.0
      %v664 = vmax.f32 %v546, 0.0
      %v665 = vmax.f32 %v551, 0.0
      %v666 = vmax.f32 %v554, 0.0
      %v667 = vmax.f32 %v559, 0.0
      %v668 = vmax.f32 %v562, 0.0
      %v669 = vmax.f32 %v567, 0.0
      %v670 = vmax.f32 %v570, 0.0
      %v671 = vmax.f32 %v575, 0.0
      %v672 = vmax.f32 %v578, 0.0
      %v673 = vmax.f32 %v583, 0.0
      %v674 = vmax.f32 %v586, 0.0
      %v675 = vmax.f32 %v591, 0.0
      %v676 = vmax.f32 %v594, 0.0
      %v677 = vmax.f32 %v599, 0.0
      %v678 = vmax.f32 %v602, 0.0
      %v679 = vmax.f32 %v607, 0.0
      %v680 = vmax.f32 %v610, 0.0
      %v681 = vmax.f32 %v615, 0.0
      %v682 = vmax.f32 %v618, 0.0
      %v683 = vmax.f32 %v623, 0.0
      %v684 = vmax.f32 %v626, 0.0
      %v685 = vmax.f32 %v631, 0.0
      %v686 = vmax.f32 %v634, 0.0
      %v687 = vmax.f32 %v639, 0.0
      %v688 = vmax.f32 %v642, 0.0
      %v689 = vmax.f32 %v647, 0.0
      %v690 = vmax.f32 %v650, 0.0
      %v691 = vmax.f32 %v655, 0.0
      %v692 = vmax.f32 %v658, 0.0
      %v693 = vpack.c.bf16 %v662, %v661
      %v694 = vpack.c.bf16 %v664, %v663
      %v695 = vpack.c.bf16 %v666, %v665
      %v696 = vpack.c.bf16 %v668, %v667
      %v697 = vpack.c.bf16 %v670, %v669
      %v698 = vpack.c.bf16 %v672, %v671
      %v699 = vpack.c.bf16 %v674, %v673
      %v700 = vpack.c.bf16 %v676, %v675
      %v701 = vpack.c.bf16 %v678, %v677
      %v702 = vpack.c.bf16 %v680, %v679
      %v703 = vpack.c.bf16 %v682, %v681
      %v704 = vpack.c.bf16 %v684, %v683
      %v705 = vpack.c.bf16 %v686, %v685
      %v706 = vpack.c.bf16 %v688, %v687
      %v707 = vpack.c.bf16 %v690, %v689
      %v708 = vpack.c.bf16 %v692, %v691
      %v710 = vunpack.c.l.b16 %v693
      %v711 = vunpack.c.h.b16 %v693
      %v712 = vpack.c.b16 %v710, %v710
      %v713 = vpack.c.b16 %v711, %v711
      %vm714 = vcmask 1041408
      %vm715 = vcmask 1045508
      %vm716 = vmor %vm714, %vm715
      %v717 = vrot.slane %v712, 6
      %v718 = vrot.slane %v717, 4
      %v719 = vrot.slane %v713, 6
      %v720 = vsel %vm716, %v718, %v719
      %v721 = vrot.slane %v719, 4
      %725 = vst [vmem:[#allocation2 + $0x8] sm:$0xc] %v717
      %726 = vst [vmem:[#allocation2 + $0xc] sm:$0xf] %v720
      %727 = vst [vmem:[#allocation2 + $0x10] sm:$0x3] %v721
      %v729 = vunpack.c.l.b16 %v694
      %v730 = vunpack.c.h.b16 %v694
      %v731 = vpack.c.b16 %v729, %v729
      %v732 = vpack.c.b16 %v730, %v730
      %vm733 = vcmask 1042432
      %vm734 = vcmask 1046532
      %vm735 = vmor %vm733, %vm734
      %v736 = vrot.slane %v731, 5
      %v737 = vrot.slane %v736, 4
      %v738 = vrot.slane %v732, 5
      %v739 = vsel %vm735, %v737, %v738
      %v740 = vrot.slane %v738, 4
      %744 = vst [vmem:[#allocation2 + $0x10] sm:$0x8] %v736
      %745 = vst [vmem:[#allocation2 + $0x14] sm:$0xf] %v739
      %746 = vst [vmem:[#allocation2 + $0x18] sm:$0x7] %v740
      %v748 = vunpack.c.l.b16 %v695
      %v749 = vunpack.c.h.b16 %v695
      %v750 = vpack.c.b16 %v748, %v748
      %v751 = vpack.c.b16 %v749, %v749
      %754 = vst [vmem:[#allocation2 + $0x1c] sm:$0xf] %v750
      %755 = vst [vmem:[#allocation2 + $0x20] sm:$0xf] %v751
      %v757 = vunpack.c.l.b16 %v696
      %v758 = vunpack.c.h.b16 %v696
      %v759 = vpack.c.b16 %v757, %v757
      %v760 = vpack.c.b16 %v758, %v758
      %vm761 = vcmask 1040384
      %vm762 = vcmask 1044484
      %vm763 = vmor %vm761, %vm762
      %v764 = vrot.slane %v759, 7
      %v765 = vrot.slane %v764, 4
      %v766 = vrot.slane %v760, 7
      %v767 = vsel %vm763, %v765, %v766
      %v768 = vrot.slane %v766, 4
      %772 = vst [vmem:[#allocation2 + $0x24] sm:$0xe] %v764
      %773 = vst [vmem:[#allocation2 + $0x28] sm:$0xf] %v767
      %774 = vst [vmem:[#allocation2 + $0x2c] sm:$0x1] %v768
      %v776 = vunpack.c.l.b16 %v697
      %v777 = vunpack.c.h.b16 %v697
      %v778 = vpack.c.b16 %v776, %v776
      %v779 = vpack.c.b16 %v777, %v777
      %v780 = vrot.slane %v778, 6
      %v781 = vrot.slane %v780, 4
      %v782 = vrot.slane %v779, 6
      %v783 = vsel %vm716, %v781, %v782
      %v784 = vrot.slane %v782, 4
      %788 = vst [vmem:[#allocation2 + $0x2c] sm:$0xc] %v780
      %789 = vst [vmem:[#allocation2 + $0x30] sm:$0xf] %v783
      %790 = vst [vmem:[#allocation2 + $0x34] sm:$0x3] %v784
      %v792 = vunpack.c.l.b16 %v698
      %v793 = vunpack.c.h.b16 %v698
      %v794 = vpack.c.b16 %v792, %v792
      %v795 = vpack.c.b16 %v793, %v793
      %v796 = vrot.slane %v794, 5
      %v797 = vrot.slane %v796, 4
      %v798 = vrot.slane %v795, 5
      %v799 = vsel %vm735, %v797, %v798
      %v800 = vrot.slane %v798, 4
      %804 = vst [vmem:[#allocation2 + $0x34] sm:$0x8] %v796
      %805 = vst [vmem:[#allocation2 + $0x38] sm:$0xf] %v799
      %806 = vst [vmem:[#allocation2 + $0x3c] sm:$0x7] %v800
      %v808 = vunpack.c.l.b16 %v699
      %v809 = vunpack.c.h.b16 %v699
      %v810 = vpack.c.b16 %v808, %v808
      %v811 = vpack.c.b16 %v809, %v809
      %814 = vst [vmem:[#allocation2 + $0x40] sm:$0xf] %v810
      %815 = vst [vmem:[#allocation2 + $0x44] sm:$0xf] %v811
      %v817 = vunpack.c.l.b16 %v700
      %v818 = vunpack.c.h.b16 %v700
      %v819 = vpack.c.b16 %v817, %v817
      %v820 = vpack.c.b16 %v818, %v818
      %v821 = vrot.slane %v819, 7
      %v822 = vrot.slane %v821, 4
      %v823 = vrot.slane %v820, 7
      %v824 = vsel %vm763, %v822, %v823
      %v825 = vrot.slane %v823, 4
      %829 = vst [vmem:[#allocation2 + $0x48] sm:$0xe] %v821
      %830 = vst [vmem:[#allocation2 + $0x4c] sm:$0xf] %v824
      %831 = vst [vmem:[#allocation2 + $0x50] sm:$0x1] %v825
      %v833 = vunpack.c.l.b16 %v701
      %v834 = vunpack.c.h.b16 %v701
      %v835 = vpack.c.b16 %v833, %v833
      %v836 = vpack.c.b16 %v834, %v834
      %v837 = vrot.slane %v835, 6
      %v838 = vrot.slane %v837, 4
      %v839 = vrot.slane %v836, 6
      %v840 = vsel %vm716, %v838, %v839
      %v841 = vrot.slane %v839, 4
      %845 = vst [vmem:[#allocation2 + $0x50] sm:$0xc] %v837
      %846 = vst [vmem:[#allocation2 + $0x54] sm:$0xf] %v840
      %847 = vst [vmem:[#allocation2 + $0x58] sm:$0x3] %v841
      %v849 = vunpack.c.l.b16 %v702
      %v850 = vunpack.c.h.b16 %v702
      %v851 = vpack.c.b16 %v849, %v849
      %v852 = vpack.c.b16 %v850, %v850
      %v853 = vrot.slane %v851, 5
      %v854 = vrot.slane %v853, 4
      %v855 = vrot.slane %v852, 5
      %v856 = vsel %vm735, %v854, %v855
      %v857 = vrot.slane %v855, 4
      %861 = vst [vmem:[#allocation2 + $0x58] sm:$0x8] %v853
      %862 = vst [vmem:[#allocation2 + $0x5c] sm:$0xf] %v856
      %863 = vst [vmem:[#allocation2 + $0x60] sm:$0x7] %v857
      %v865 = vunpack.c.l.b16 %v703
      %v866 = vunpack.c.h.b16 %v703
      %v867 = vpack.c.b16 %v865, %v865
      %v868 = vpack.c.b16 %v866, %v866
      %871 = vst [vmem:[#allocation2 + $0x64] sm:$0xf] %v867
      %872 = vst [vmem:[#allocation2 + $0x68] sm:$0xf] %v868
      %v874 = vunpack.c.l.b16 %v704
      %v875 = vunpack.c.h.b16 %v704
      %v876 = vpack.c.b16 %v874, %v874
      %v877 = vpack.c.b16 %v875, %v875
      %v878 = vrot.slane %v876, 7
      %v879 = vrot.slane %v878, 4
      %v880 = vrot.slane %v877, 7
      %v881 = vsel %vm763, %v879, %v880
      %v882 = vrot.slane %v880, 4
      %886 = vst [vmem:[#allocation2 + $0x6c] sm:$0xe] %v878
      %887 = vst [vmem:[#allocation2 + $0x70] sm:$0xf] %v881
      %888 = vst [vmem:[#allocation2 + $0x74] sm:$0x1] %v882
      %v890 = vunpack.c.l.b16 %v705
      %v891 = vunpack.c.h.b16 %v705
      %v892 = vpack.c.b16 %v890, %v890
      %v893 = vpack.c.b16 %v891, %v891
      %v894 = vrot.slane %v892, 6
      %v895 = vrot.slane %v894, 4
      %v896 = vrot.slane %v893, 6
      %v897 = vsel %vm716, %v895, %v896
      %v898 = vrot.slane %v896, 4
      %902 = vst [vmem:[#allocation2 + $0x74] sm:$0xc] %v894
      %903 = vst [vmem:[#allocation2 + $0x78] sm:$0xf] %v897
      %904 = vst [vmem:[#allocation2 + $0x7c] sm:$0x3] %v898
      %v906 = vunpack.c.l.b16 %v706
      %v907 = vunpack.c.h.b16 %v706
      %v908 = vpack.c.b16 %v906, %v906
      %v909 = vpack.c.b16 %v907, %v907
      %v910 = vrot.slane %v908, 5
      %v911 = vrot.slane %v910, 4
      %v912 = vrot.slane %v909, 5
      %v913 = vsel %vm735, %v911, %v912
      %v914 = vrot.slane %v912, 4
      %918 = vst [vmem:[#allocation2 + $0x7c] sm:$0x8] %v910
      %919 = vst [vmem:[#allocation2 + $0x80] sm:$0xf] %v913
      %920 = vst [vmem:[#allocation2 + $0x84] sm:$0x7] %v914
      %v922 = vunpack.c.l.b16 %v707
      %v923 = vunpack.c.h.b16 %v707
      %v924 = vpack.c.b16 %v922, %v922
      %v925 = vpack.c.b16 %v923, %v923
      %928 = vst [vmem:[#allocation2 + $0x88] sm:$0xf] %v924
      %929 = vst [vmem:[#allocation2 + $0x8c] sm:$0xf] %v925
      %v931 = vunpack.c.l.b16 %v708
      %v932 = vunpack.c.h.b16 %v708
      %v933 = vpack.c.b16 %v931, %v931
      %v934 = vpack.c.b16 %v932, %v932
      %v935 = vrot.slane %v933, 7
      %v936 = vrot.slane %v935, 4
      %v937 = vrot.slane %v934, 7
      %v938 = vsel %vm763, %v936, %v937
      %v939 = vrot.slane %v937, 4
      %943 = vst [vmem:[#allocation2 + $0x90] sm:$0xe] %v935
      %944 = vst [vmem:[#allocation2 + $0x94] sm:$0xf] %v938
      %945 = vst [vmem:[#allocation2 + $0x98] sm:$0x1] %v939
      %v946 = vld [vmem:[#allocation2] sm:$0xf]
      %v947 = vld [vmem:[#allocation2 + $0x4] sm:$0xf]
      %v948 = vld [vmem:[#allocation2 + $0x8] sm:$0xf]
      %v949 = vld [vmem:[#allocation2 + $0xc] sm:$0xf]
      %v950 = vld [vmem:[#allocation2 + $0x10] sm:$0xf]
      %v951 = vld [vmem:[#allocation2 + $0x14] sm:$0xf]
      %v952 = vld [vmem:[#allocation2 + $0x18] sm:$0xf]
      %v953 = vld [vmem:[#allocation2 + $0x1c] sm:$0xf]
      %v954 = vld [vmem:[#allocation2 + $0x20] sm:$0xf]
      %v955 = vld [vmem:[#allocation2 + $0x24] sm:$0xf]
      %v956 = vld [vmem:[#allocation2 + $0x28] sm:$0xf]
      %v957 = vld [vmem:[#allocation2 + $0x2c] sm:$0xf]
      %v958 = vld [vmem:[#allocation2 + $0x30] sm:$0xf]
      %v959 = vld [vmem:[#allocation2 + $0x34] sm:$0xf]
      %v960 = vld [vmem:[#allocation2 + $0x38] sm:$0xf]
      %v961 = vld [vmem:[#allocation2 + $0x3c] sm:$0xf]
      %v962 = vld [vmem:[#allocation2 + $0x40] sm:$0xf]
      %v963 = vld [vmem:[#allocation2 + $0x44] sm:$0xf]
      %v964 = vld [vmem:[#allocation2 + $0x48] sm:$0xf]
      %v965 = vld [vmem:[#allocation2 + $0x4c] sm:$0xf]
      %v966 = vld [vmem:[#allocation2 + $0x50] sm:$0xf]
      %v967 = vld [vmem:[#allocation2 + $0x54] sm:$0xf]
      %v968 = vld [vmem:[#allocation2 + $0x58] sm:$0xf]
      %v969 = vld [vmem:[#allocation2 + $0x5c] sm:$0xf]
      %v970 = vld [vmem:[#allocation2 + $0x60] sm:$0xf]
      %v971 = vld [vmem:[#allocation2 + $0x64] sm:$0xf]
      %v972 = vld [vmem:[#allocation2 + $0x68] sm:$0xf]
      %v973 = vld [vmem:[#allocation2 + $0x6c] sm:$0xf]
      %v974 = vld [vmem:[#allocation2 + $0x70] sm:$0xf]
      %v975 = vld [vmem:[#allocation2 + $0x74] sm:$0xf]
      %v976 = vld [vmem:[#allocation2 + $0x78] sm:$0xf]
      %v977 = vld [vmem:[#allocation2 + $0x7c] sm:$0xf]
      %v978 = vld [vmem:[#allocation2 + $0x80] sm:$0xf]
      %v979 = vld [vmem:[#allocation2 + $0x84] sm:$0xf]
      %v980 = vld [vmem:[#allocation2 + $0x88] sm:$0xf]
      %v981 = vld [vmem:[#allocation2 + $0x8c] sm:$0xf]
      %v982 = vld [vmem:[#allocation2 + $0x90] sm:$0x1]
      %v983 = vld [vmem:[%s3] sm:$0xf]
      %v984 = vld [vmem:[%s3 + $0x4] sm:$0xf]
      %v985 = vld [vmem:[%s3 + $0x8] sm:$0xf]
      %v986 = vld [vmem:[%s3 + $0xc] sm:$0xf]
      %v987 = vld [vmem:[%s3 + $0x10] sm:$0xf]
      %v988 = vld [vmem:[%s3 + $0x14] sm:$0xf]
      %v989 = vld [vmem:[%s3 + $0x18] sm:$0xf]
      %v990 = vld [vmem:[%s3 + $0x1c] sm:$0xf]
      %v991 = vld [vmem:[%s3 + $0x20] sm:$0xf]
      %v992 = vld [vmem:[%s3 + $0x24] sm:$0xf]
      %v993 = vld [vmem:[%s3 + $0x28] sm:$0xf]
      %v994 = vld [vmem:[%s3 + $0x2c] sm:$0xf]
      %v995 = vld [vmem:[%s3 + $0x30] sm:$0xf]
      %v996 = vld [vmem:[%s3 + $0x34] sm:$0xf]
      %v997 = vld [vmem:[%s3 + $0x38] sm:$0xf]
      %v998 = vld [vmem:[%s3 + $0x3c] sm:$0xf]
      %v1036 = vunpack.c.l.b16 %v946
      %v1037 = vunpack.c.l.b16 %v947
      %v1038 = vunpack.c.l.b16 %v948
      %v1039 = vunpack.c.l.b16 %v949
      %v1040 = vunpack.c.l.b16 %v950
      %v1041 = vunpack.c.l.b16 %v951
      %v1042 = vunpack.c.l.b16 %v952
      %v1043 = vunpack.c.l.b16 %v953
      %v1044 = vunpack.c.l.b16 %v954
      %v1045 = vunpack.c.l.b16 %v955
      %v1046 = vunpack.c.l.b16 %v956
      %v1047 = vunpack.c.l.b16 %v957
      %v1048 = vunpack.c.l.b16 %v958
      %v1049 = vunpack.c.l.b16 %v959
      %v1050 = vunpack.c.l.b16 %v960
      %v1051 = vunpack.c.l.b16 %v961
      %v1052 = vunpack.c.l.b16 %v962
      %v1053 = vunpack.c.l.b16 %v963
      %v1054 = vunpack.c.l.b16 %v964
      %v1055 = vunpack.c.l.b16 %v965
      %v1056 = vunpack.c.l.b16 %v966
      %v1057 = vunpack.c.l.b16 %v967
      %v1058 = vunpack.c.l.b16 %v968
      %v1059 = vunpack.c.l.b16 %v969
      %v1060 = vunpack.c.l.b16 %v970
      %v1061 = vunpack.c.l.b16 %v971
      %v1062 = vunpack.c.l.b16 %v972
      %v1063 = vunpack.c.l.b16 %v973
      %v1064 = vunpack.c.l.b16 %v974
      %v1065 = vunpack.c.l.b16 %v975
      %v1066 = vunpack.c.l.b16 %v976
      %v1067 = vunpack.c.l.b16 %v977
      %v1068 = vunpack.c.l.b16 %v978
      %v1069 = vunpack.c.l.b16 %v979
      %v1070 = vunpack.c.l.b16 %v980
      %v1071 = vunpack.c.l.b16 %v981
      %v1072 = vunpack.c.l.b16 %v982
      %v1073 = vpack.c.b16 %v1037, %v1036
      %v1074 = vpack.c.b16 %v1039, %v1038
      %v1075 = vpack.c.b16 %v1041, %v1040
      %v1076 = vpack.c.b16 %v1043, %v1042
      %v1077 = vpack.c.b16 %v1045, %v1044
      %v1078 = vpack.c.b16 %v1047, %v1046
      %v1079 = vpack.c.b16 %v1049, %v1048
      %v1080 = vpack.c.b16 %v1051, %v1050
      %v1081 = vpack.c.b16 %v1053, %v1052
      %v1082 = vpack.c.b16 %v1055, %v1054
      %v1083 = vpack.c.b16 %v1057, %v1056
      %v1084 = vpack.c.b16 %v1059, %v1058
      %v1085 = vpack.c.b16 %v1061, %v1060
      %v1086 = vpack.c.b16 %v1063, %v1062
      %v1087 = vpack.c.b16 %v1065, %v1064
      %v1088 = vpack.c.b16 %v1067, %v1066
      %v1089 = vpack.c.b16 %v1069, %v1068
      %v1090 = vpack.c.b16 %v1071, %v1070
      %v1091 = vpack.c.b16 %v1072, %v1072
      %vm1092 = vsmask.f32 7424
      %v1094 = vshrl.u32 %v1073, 16
      %v1096 = vshll.u32 %v1073, 16
      %v1098 = vrot.slane %v1096, 1
      %v1099 = vor.u32 %v1094, %v1098
      %v1101 = vshll.u32 %v1074, 16
      %v1103 = vrot.slane %v1101, 1
      %v1104 = vsel %vm1092, %v1099, %v1103
      %v1105 = vshrl.u32 %v1074, 16
      %v1107 = vor.u32 %v1105, %v1103
      %v1109 = vshll.u32 %v1075, 16
      %v1111 = vrot.slane %v1109, 1
      %v1112 = vsel %vm1092, %v1107, %v1111
      %v1113 = vshrl.u32 %v1075, 16
      %v1115 = vor.u32 %v1113, %v1111
      %v1117 = vshll.u32 %v1076, 16
      %v1119 = vrot.slane %v1117, 1
      %v1120 = vsel %vm1092, %v1115, %v1119
      %v1121 = vshrl.u32 %v1076, 16
      %v1123 = vor.u32 %v1121, %v1119
      %v1125 = vshll.u32 %v1077, 16
      %v1127 = vrot.slane %v1125, 1
      %v1128 = vsel %vm1092, %v1123, %v1127
      %v1129 = vshrl.u32 %v1077, 16
      %v1131 = vor.u32 %v1129, %v1127
      %v1133 = vshll.u32 %v1078, 16
      %v1135 = vrot.slane %v1133, 1
      %v1136 = vsel %vm1092, %v1131, %v1135
      %v1137 = vshrl.u32 %v1078, 16
      %v1139 = vor.u32 %v1137, %v1135
      %v1141 = vshll.u32 %v1079, 16
      %v1143 = vrot.slane %v1141, 1
      %v1144 = vsel %vm1092, %v1139, %v1143
      %v1145 = vshrl.u32 %v1079, 16
      %v1147 = vor.u32 %v1145, %v1143
      %v1149 = vshll.u32 %v1080, 16
      %v1151 = vrot.slane %v1149, 1
      %v1152 = vsel %vm1092, %v1147, %v1151
      %v1153 = vshrl.u32 %v1080, 16
      %v1155 = vor.u32 %v1153, %v1151
      %v1157 = vshll.u32 %v1081, 16
      %v1159 = vrot.slane %v1157, 1
      %v1160 = vsel %vm1092, %v1155, %v1159
      %v1161 = vshrl.u32 %v1081, 16
      %v1163 = vor.u32 %v1161, %v1159
      %v1165 = vshll.u32 %v1082, 16
      %v1167 = vrot.slane %v1165, 1
      %v1168 = vsel %vm1092, %v1163, %v1167
      %v1169 = vshrl.u32 %v1082, 16
      %v1171 = vor.u32 %v1169, %v1167
      %v1173 = vshll.u32 %v1083, 16
      %v1175 = vrot.slane %v1173, 1
      %v1176 = vsel %vm1092, %v1171, %v1175
      %v1177 = vshrl.u32 %v1083, 16
      %v1179 = vor.u32 %v1177, %v1175
      %v1181 = vshll.u32 %v1084, 16
      %v1183 = vrot.slane %v1181, 1
      %v1184 = vsel %vm1092, %v1179, %v1183
      %v1185 = vshrl.u32 %v1084, 16
      %v1187 = vor.u32 %v1185, %v1183
      %v1189 = vshll.u32 %v1085, 16
      %v1191 = vrot.slane %v1189, 1
      %v1192 = vsel %vm1092, %v1187, %v1191
      %v1193 = vshrl.u32 %v1085, 16
      %v1195 = vor.u32 %v1193, %v1191
      %v1197 = vshll.u32 %v1086, 16
      %v1199 = vrot.slane %v1197, 1
      %v1200 = vsel %vm1092, %v1195, %v1199
      %v1201 = vshrl.u32 %v1086, 16
      %v1203 = vor.u32 %v1201, %v1199
      %v1205 = vshll.u32 %v1087, 16
      %v1207 = vrot.slane %v1205, 1
      %v1208 = vsel %vm1092, %v1203, %v1207
      %v1209 = vshrl.u32 %v1087, 16
      %v1211 = vor.u32 %v1209, %v1207
      %v1213 = vshll.u32 %v1088, 16
      %v1215 = vrot.slane %v1213, 1
      %v1216 = vsel %vm1092, %v1211, %v1215
      %v1217 = vshrl.u32 %v1088, 16
      %v1219 = vor.u32 %v1217, %v1215
      %v1221 = vshll.u32 %v1089, 16
      %v1223 = vrot.slane %v1221, 1
      %v1224 = vsel %vm1092, %v1219, %v1223
      %v1225 = vshrl.u32 %v1089, 16
      %v1227 = vor.u32 %v1225, %v1223
      %v1229 = vshll.u32 %v1090, 16
      %v1231 = vrot.slane %v1229, 1
      %v1232 = vsel %vm1092, %v1227, %v1231
      %v1233 = vshrl.u32 %v1090, 16
      %v1235 = vor.u32 %v1233, %v1231
      %v1237 = vshll.u32 %v1091, 16
      %v1239 = vrot.slane %v1237, 1
      %v1240 = vsel %vm1092, %v1235, %v1239
      %v1275 = vunpack.c.l.b16 %v983
      %v1276 = vunpack.c.l.b16 %v984
      %v1277 = vunpack.c.l.b16 %v985
      %v1278 = vunpack.c.l.b16 %v986
      %v1279 = vunpack.c.l.b16 %v987
      %v1280 = vunpack.c.l.b16 %v988
      %v1281 = vunpack.c.l.b16 %v989
      %v1282 = vunpack.c.l.b16 %v990
      %v1283 = vunpack.c.l.b16 %v991
      %v1284 = vunpack.c.l.b16 %v992
      %v1285 = vunpack.c.l.b16 %v993
      %v1286 = vunpack.c.l.b16 %v994
      %v1287 = vunpack.c.l.b16 %v995
      %v1288 = vunpack.c.l.b16 %v996
      %v1289 = vunpack.c.l.b16 %v997
      %v1290 = vunpack.c.l.b16 %v998
      %v1291 = vpack.c.b16 %v1276, %v1275
      %v1292 = vpack.c.b16 %v1278, %v1277
      %v1293 = vpack.c.b16 %v1280, %v1279
      %v1294 = vpack.c.b16 %v1282, %v1281
      %v1295 = vpack.c.b16 %v1284, %v1283
      %v1296 = vpack.c.b16 %v1286, %v1285
      %v1297 = vpack.c.b16 %v1288, %v1287
      %v1298 = vpack.c.b16 %v1290, %v1289
      %1307 = vmatprep.subr.bf16.mxu0 0
      %1308 = vmatpush1.bf16.msra.mxu0 %v1291
      %1309 = vmatprep.subr.bf16.mxu0 0
      %1310 = vmatpush1.bf16.msra.mxu0 %v1292
      %1311 = vmatprep.subr.bf16.mxu0 0
      %1312 = vmatpush1.bf16.msra.mxu0 %v1293
      %1313 = vmatprep.subr.bf16.mxu0 0
      %1314 = vmatpush1.bf16.msra.mxu0 %v1294
      %1315 = vmatprep.subr.bf16.mxu0 0
      %1316 = vmatpush1.bf16.msra.mxu0 %v1295
      %1317 = vmatprep.subr.bf16.mxu0 0
      %1318 = vmatpush1.bf16.msra.mxu0 %v1296
      %1319 = vmatprep.subr.bf16.mxu0 0
      %1320 = vmatpush1.bf16.msra.mxu0 %v1297
      %1321 = vmatprep.subr.bf16.mxu0 0
      %1322 = vmatpush1.bf16.msra.mxu0 %v1298
      %1323 = vmatprep.subr.bf16.mxu0 0
      %1324 = vmatpush1.bf16.msra.mxu0 0
      %1325 = vmatprep.subr.bf16.mxu0 0
      %1326 = vmatpush1.bf16.msra.mxu0 0
      %1327 = vmatprep.subr.bf16.mxu0 0
      %1328 = vmatpush1.bf16.msra.mxu0 0
      %1329 = vmatprep.subr.bf16.mxu0 0
      %1330 = vmatpush1.bf16.msra.mxu0 0
      %1331 = vmatprep.subr.bf16.mxu0 0
      %1332 = vmatpush1.bf16.msra.mxu0 0
      %1333 = vmatprep.subr.bf16.mxu0 0
      %1334 = vmatpush1.bf16.msra.mxu0 0
      %1335 = vmatprep.subr.bf16.mxu0 0
      %1336 = vmatpush1.bf16.msra.mxu0 0
      %1337 = vmatprep.subr.bf16.mxu0 0
      %1338 = vmatpush1.bf16.msra.mxu0 0
      %1339 = vmatprep.mubr.bf16.mxu0 0
      %1340 = vmatmul.mubr.bf16.gmra.mrb[0].mxu0 %v1104
      %v1341 = vpop.f32.mrb[0].mxu0
      %v1342 = vadd.f32 0.0, %v1341
      %v1343 = vpop.f32.mrb[0].mxu0
      %v1344 = vpop.f32.mrb[0].mxu0
      %v1345 = vadd.f32 0.0, %v1344
      %v1346 = vpop.f32.mrb[0].mxu0
      %1347 = vmatprep.mubr.bf16.mxu0 0
      %1348 = vmatmul.mubr.bf16.gmra.mrb[0].mxu0 %v1112
      %v1349 = vpop.f32.mrb[0].mxu0
      %v1350 = vadd.f32 0.0, %v1349
      %v1351 = vpop.f32.mrb[0].mxu0
      %v1352 = vpop.f32.mrb[0].mxu0
      %v1353 = vadd.f32 0.0, %v1352
      %v1354 = vpop.f32.mrb[0].mxu0
      %1355 = vmatprep.mubr.bf16.mxu0 0
      %1356 = vmatmul.mubr.bf16.gmra.mrb[0].mxu0 %v1120
      %v1357 = vpop.f32.mrb[0].mxu0
      %v1358 = vadd.f32 0.0, %v1357
      %v1359 = vpop.f32.mrb[0].mxu0
      %v1360 = vpop.f32.mrb[0].mxu0
      %v1361 = vadd.f32 0.0, %v1360
      %v1362 = vpop.f32.mrb[0].mxu0
      %1363 = vmatprep.mubr.bf16.mxu0 0
      %1364 = vmatmul.mubr.bf16.gmra.mrb[0].mxu0 %v1128
      %v1365 = vpop.f32.mrb[0].mxu0
      %v1366 = vadd.f32 0.0, %v1365
      %v1367 = vpop.f32.mrb[0].mxu0
      %v1368 = vpop.f32.mrb[0].mxu0
      %v1369 = vadd.f32 0.0, %v1368
      %v1370 = vpop.f32.mrb[0].mxu0
      %1371 = vmatprep.mubr.bf16.mxu0 0
      %1372 = vmatmul.mubr.bf16.gmra.mrb[0].mxu0 %v1136
      %v1373 = vpop.f32.mrb[0].mxu0
      %v1374 = vadd.f32 0.0, %v1373
      %v1375 = vpop.f32.mrb[0].mxu0
      %v1376 = vpop.f32.mrb[0].mxu0
      %v1377 = vadd.f32 0.0, %v1376
      %v1378 = vpop.f32.mrb[0].mxu0
      %1379 = vmatprep.mubr.bf16.mxu0 0
      %1380 = vmatmul.mubr.bf16.gmra.mrb[0].mxu0 %v1144
      %v1381 = vpop.f32.mrb[0].mxu0
      %v1382 = vadd.f32 0.0, %v1381
      %v1383 = vpop.f32.mrb[0].mxu0
      %v1384 = vpop.f32.mrb[0].mxu0
      %v1385 = vadd.f32 0.0, %v1384
      %v1386 = vpop.f32.mrb[0].mxu0
      %1387 = vmatprep.mubr.bf16.mxu0 0
      %1388 = vmatmul.mubr.bf16.gmra.mrb[0].mxu0 %v1152
      %v1389 = vpop.f32.mrb[0].mxu0
      %v1390 = vadd.f32 0.0, %v1389
      %v1391 = vpop.f32.mrb[0].mxu0
      %v1392 = vpop.f32.mrb[0].mxu0
      %v1393 = vadd.f32 0.0, %v1392
      %v1394 = vpop.f32.mrb[0].mxu0
      %1395 = vmatprep.mubr.bf16.mxu0 0
      %1396 = vmatmul.mubr.bf16.gmra.mrb[0].mxu0 %v1160
      %v1397 = vpop.f32.mrb[0].mxu0
      %v1398 = vadd.f32 0.0, %v1397
      %v1399 = vpop.f32.mrb[0].mxu0
      %v1400 = vpop.f32.mrb[0].mxu0
      %v1401 = vadd.f32 0.0, %v1400
      %v1402 = vpop.f32.mrb[0].mxu0
      %1403 = vmatprep.mubr.bf16.mxu0 0
      %1404 = vmatmul.mubr.bf16.gmra.mrb[0].mxu0 %v1168
      %v1405 = vpop.f32.mrb[0].mxu0
      %v1406 = vadd.f32 0.0, %v1405
      %v1407 = vpop.f32.mrb[0].mxu0
      %v1408 = vpop.f32.mrb[0].mxu0
      %v1409 = vadd.f32 0.0, %v1408
      %v1410 = vpop.f32.mrb[0].mxu0
      %1411 = vmatprep.mubr.bf16.mxu0 0
      %1412 = vmatmul.mubr.bf16.gmra.mrb[0].mxu0 %v1176
      %v1413 = vpop.f32.mrb[0].mxu0
      %v1414 = vadd.f32 0.0, %v1413
      %v1415 = vpop.f32.mrb[0].mxu0
      %v1416 = vpop.f32.mrb[0].mxu0
      %v1417 = vadd.f32 0.0, %v1416
      %v1418 = vpop.f32.mrb[0].mxu0
      %1419 = vmatprep.mubr.bf16.mxu0 0
      %1420 = vmatmul.mubr.bf16.gmra.mrb[0].mxu0 %v1184
      %v1421 = vpop.f32.mrb[0].mxu0
      %v1422 = vadd.f32 0.0, %v1421
      %v1423 = vpop.f32.mrb[0].mxu0
      %v1424 = vpop.f32.mrb[0].mxu0
      %v1425 = vadd.f32 0.0, %v1424
      %v1426 = vpop.f32.mrb[0].mxu0
      %1427 = vmatprep.mubr.bf16.mxu0 0
      %1428 = vmatmul.mubr.bf16.gmra.mrb[0].mxu0 %v1192
      %v1429 = vpop.f32.mrb[0].mxu0
      %v1430 = vadd.f32 0.0, %v1429
      %v1431 = vpop.f32.mrb[0].mxu0
      %v1432 = vpop.f32.mrb[0].mxu0
      %v1433 = vadd.f32 0.0, %v1432
      %v1434 = vpop.f32.mrb[0].mxu0
      %1435 = vmatprep.mubr.bf16.mxu0 0
      %1436 = vmatmul.mubr.bf16.gmra.mrb[0].mxu0 %v1200
      %v1437 = vpop.f32.mrb[0].mxu0
      %v1438 = vadd.f32 0.0, %v1437
      %v1439 = vpop.f32.mrb[0].mxu0
      %v1440 = vpop.f32.mrb[0].mxu0
      %v1441 = vadd.f32 0.0, %v1440
      %v1442 = vpop.f32.mrb[0].mxu0
      %1443 = vmatprep.mubr.bf16.mxu0 0
      %1444 = vmatmul.mubr.bf16.gmra.mrb[0].mxu0 %v1208
      %v1445 = vpop.f32.mrb[0].mxu0
      %v1446 = vadd.f32 0.0, %v1445
      %v1447 = vpop.f32.mrb[0].mxu0
      %v1448 = vpop.f32.mrb[0].mxu0
      %v1449 = vadd.f32 0.0, %v1448
      %v1450 = vpop.f32.mrb[0].mxu0
      %1451 = vmatprep.mubr.bf16.mxu0 0
      %1452 = vmatmul.mubr.bf16.gmra.mrb[0].mxu0 %v1216
      %v1453 = vpop.f32.mrb[0].mxu0
      %v1454 = vadd.f32 0.0, %v1453
      %v1455 = vpop.f32.mrb[0].mxu0
      %v1456 = vpop.f32.mrb[0].mxu0
      %v1457 = vadd.f32 0.0, %v1456
      %v1458 = vpop.f32.mrb[0].mxu0
      %1459 = vmatprep.mubr.bf16.mxu0 0
      %1460 = vmatmul.mubr.bf16.gmra.mrb[0].mxu0 %v1224
      %v1461 = vpop.f32.mrb[0].mxu0
      %v1462 = vadd.f32 0.0, %v1461
      %v1463 = vpop.f32.mrb[0].mxu0
      %v1464 = vpop.f32.mrb[0].mxu0
      %v1465 = vadd.f32 0.0, %v1464
      %v1466 = vpop.f32.mrb[0].mxu0
      %1467 = vmatprep.mubr.bf16.mxu0 0
      %1468 = vmatmul.mubr.bf16.gmra.mrb[0].mxu0 %v1232
      %v1469 = vpop.f32.mrb[0].mxu0
      %v1470 = vadd.f32 0.0, %v1469
      %v1471 = vpop.f32.mrb[0].mxu0
      %v1472 = vpop.f32.mrb[0].mxu0
      %v1473 = vadd.f32 0.0, %v1472
      %v1474 = vpop.f32.mrb[0].mxu0
      %1475 = vmatprep.mubr.bf16.mxu0 0
      %1476 = vmatmul.mubr.bf16.gmra.mrb[0].mxu0 %v1240
      %v1477 = vpop.f32.mrb[0].mxu0
      %v1478 = vadd.f32 0.0, %v1477
      %v1479 = vpop.f32.mrb[0].mxu0
      %v1480 = vpop.f32.mrb[0].mxu0
      %v1481 = vadd.f32 0.0, %v1480
      %v1482 = vpop.f32.mrb[0].mxu0
      %1483 = vdwg.mxu0
      %1484 = vst [vmem:[#allocation3] sm:$0xff] %v1342
      %1485 = vst [vmem:[#allocation3 + $0x8] sm:$0xff] %v1345
      %1486 = vst [vmem:[#allocation3 + $0x10] sm:$0xff] %v1350
      %1487 = vst [vmem:[#allocation3 + $0x18] sm:$0xff] %v1353
      %1488 = vst [vmem:[#allocation3 + $0x20] sm:$0xff] %v1358
      %1489 = vst [vmem:[#allocation3 + $0x28] sm:$0xff] %v1361
      %1490 = vst [vmem:[#allocation3 + $0x30] sm:$0xff] %v1366
      %1491 = vst [vmem:[#allocation3 + $0x38] sm:$0xff] %v1369
      %1492 = vst [vmem:[#allocation3 + $0x40] sm:$0xff] %v1374
      %1493 = vst [vmem:[#allocation3 + $0x48] sm:$0xff] %v1377
      %1494 = vst [vmem:[#allocation3 + $0x50] sm:$0xff] %v1382
      %1495 = vst [vmem:[#allocation3 + $0x58] sm:$0xff] %v1385
      %1496 = vst [vmem:[#allocation3 + $0x60] sm:$0xff] %v1390
      %1497 = vst [vmem:[#allocation3 + $0x68] sm:$0xff] %v1393
      %1498 = vst [vmem:[#allocation3 + $0x70] sm:$0xff] %v1398
      %1499 = vst [vmem:[#allocation3 + $0x78] sm:$0xff] %v1401
      %1500 = vst [vmem:[#allocation3 + $0x80] sm:$0xff] %v1406
      %1501 = vst [vmem:[#allocation3 + $0x88] sm:$0xff] %v1409
      %1502 = vst [vmem:[#allocation3 + $0x90] sm:$0xff] %v1414
      %1503 = vst [vmem:[#allocation3 + $0x98] sm:$0xff] %v1417
      %1504 = vst [vmem:[#allocation3 + $0xa0] sm:$0xff] %v1422
      %1505 = vst [vmem:[#allocation3 + $0xa8] sm:$0xff] %v1425
      %1506 = vst [vmem:[#allocation3 + $0xb0] sm:$0xff] %v1430
      %1507 = vst [vmem:[#allocation3 + $0xb8] sm:$0xff] %v1433
      %1508 = vst [vmem:[#allocation3 + $0xc0] sm:$0xff] %v1438
      %1509 = vst [vmem:[#allocation3 + $0xc8] sm:$0xff] %v1441
      %1510 = vst [vmem:[#allocation3 + $0xd0] sm:$0xff] %v1446
      %1511 = vst [vmem:[#allocation3 + $0xd8] sm:$0xff] %v1449
      %1512 = vst [vmem:[#allocation3 + $0xe0] sm:$0xff] %v1454
      %1513 = vst [vmem:[#allocation3 + $0xe8] sm:$0xff] %v1457
      %1514 = vst [vmem:[#allocation3 + $0xf0] sm:$0xff] %v1462
      %1515 = vst [vmem:[#allocation3 + $0xf8] sm:$0xff] %v1465
      %1516 = vst [vmem:[#allocation3 + $0x100] sm:$0xff] %v1470
      %1517 = vst [vmem:[#allocation3 + $0x108] sm:$0xff] %v1473
      %1518 = vst [vmem:[#allocation3 + $0x110] sm:$0xff] %v1478
      %1519 = vst [vmem:[#allocation3 + $0x118] sm:$0xff] %v1481
      %v1520 = vld [vmem:[#allocation2] sm:$0xe]
      %v1521 = vld [vmem:[#allocation2 + $0x4] sm:$0xf]
      %v1522 = vld [vmem:[#allocation2 + $0x8] sm:$0xf]
      %v1523 = vld [vmem:[#allocation2 + $0xc] sm:$0xf]
      %v1524 = vld [vmem:[#allocation2 + $0x10] sm:$0xf]
      %v1525 = vld [vmem:[#allocation2 + $0x14] sm:$0xf]
      %v1526 = vld [vmem:[#allocation2 + $0x18] sm:$0xf]
      %v1527 = vld [vmem:[#allocation2 + $0x1c] sm:$0xf]
      %v1528 = vld [vmem:[#allocation2 + $0x20] sm:$0xf]
      %v1529 = vld [vmem:[#allocation2 + $0x24] sm:$0xf]
      %v1530 = vld [vmem:[#allocation2 + $0x28] sm:$0xf]
      %v1531 = vld [vmem:[#allocation2 + $0x2c] sm:$0xf]
      %v1532 = vld [vmem:[#allocation2 + $0x30] sm:$0xf]
      %v1533 = vld [vmem:[#allocation2 + $0x34] sm:$0xf]
      %v1534 = vld [vmem:[#allocation2 + $0x38] sm:$0xf]
      %v1535 = vld [vmem:[#allocation2 + $0x3c] sm:$0xf]
      %v1536 = vld [vmem:[#allocation2 + $0x40] sm:$0xf]
      %v1537 = vld [vmem:[#allocation2 + $0x44] sm:$0xf]
      %v1538 = vld [vmem:[#allocation2 + $0x48] sm:$0xf]
      %v1539 = vld [vmem:[#allocation2 + $0x4c] sm:$0xf]
      %v1540 = vld [vmem:[#allocation2 + $0x50] sm:$0xf]
      %v1541 = vld [vmem:[#allocation2 + $0x54] sm:$0xf]
      %v1542 = vld [vmem:[#allocation2 + $0x58] sm:$0xf]
      %v1543 = vld [vmem:[#allocation2 + $0x5c] sm:$0xf]
      %v1544 = vld [vmem:[#allocation2 + $0x60] sm:$0xf]
      %v1545 = vld [vmem:[#allocation2 + $0x64] sm:$0xf]
      %v1546 = vld [vmem:[#allocation2 + $0x68] sm:$0xf]
      %v1547 = vld [vmem:[#allocation2 + $0x6c] sm:$0xf]
      %v1548 = vld [vmem:[#allocation2 + $0x70] sm:$0xf]
      %v1549 = vld [vmem:[#allocation2 + $0x74] sm:$0xf]
      %v1550 = vld [vmem:[#allocation2 + $0x78] sm:$0xf]
      %v1551 = vld [vmem:[#allocation2 + $0x7c] sm:$0xf]
      %v1552 = vld [vmem:[#allocation2 + $0x80] sm:$0xf]
      %v1553 = vld [vmem:[#allocation2 + $0x84] sm:$0xf]
      %v1554 = vld [vmem:[#allocation2 + $0x88] sm:$0xf]
      %v1555 = vld [vmem:[#allocation2 + $0x8c] sm:$0xf]
      %v1556 = vld [vmem:[#allocation2 + $0x90] sm:$0x1]
      %s1557 = scalar_lea.vmem %s3, 64
      %v1558 = vld [vmem:[%s1557] sm:$0xf]
      %v1559 = vld [vmem:[%s1557 + $0x4] sm:$0xf]
      %v1560 = vld [vmem:[%s1557 + $0x8] sm:$0xf]
      %v1561 = vld [vmem:[%s1557 + $0xc] sm:$0xf]
      %v1562 = vld [vmem:[%s1557 + $0x10] sm:$0xf]
      %v1563 = vld [vmem:[%s1557 + $0x14] sm:$0xf]
      %v1564 = vld [vmem:[%s1557 + $0x18] sm:$0xf]
      %v1565 = vld [vmem:[%s1557 + $0x1c] sm:$0xf]
      %v1566 = vld [vmem:[%s1557 + $0x20] sm:$0xf]
      %v1567 = vld [vmem:[%s1557 + $0x24] sm:$0xf]
      %v1568 = vld [vmem:[%s1557 + $0x28] sm:$0xf]
      %v1569 = vld [vmem:[%s1557 + $0x2c] sm:$0xf]
      %v1570 = vld [vmem:[%s1557 + $0x30] sm:$0xf]
      %v1571 = vld [vmem:[%s1557 + $0x34] sm:$0xf]
      %v1572 = vld [vmem:[%s1557 + $0x38] sm:$0xf]
      %v1573 = vld [vmem:[%s1557 + $0x3c] sm:$0xf]
      %v1611 = vunpack.c.l.b16 %v1520
      %v1612 = vunpack.c.l.b16 %v1521
      %v1613 = vunpack.c.l.b16 %v1522
      %v1614 = vunpack.c.l.b16 %v1523
      %v1615 = vunpack.c.l.b16 %v1524
      %v1616 = vunpack.c.l.b16 %v1525
      %v1617 = vunpack.c.l.b16 %v1526
      %v1618 = vunpack.c.l.b16 %v1527
      %v1619 = vunpack.c.l.b16 %v1528
      %v1620 = vunpack.c.l.b16 %v1529
      %v1621 = vunpack.c.l.b16 %v1530
      %v1622 = vunpack.c.l.b16 %v1531
      %v1623 = vunpack.c.l.b16 %v1532
      %v1624 = vunpack.c.l.b16 %v1533
      %v1625 = vunpack.c.l.b16 %v1534
      %v1626 = vunpack.c.l.b16 %v1535
      %v1627 = vunpack.c.l.b16 %v1536
      %v1628 = vunpack.c.l.b16 %v1537
      %v1629 = vunpack.c.l.b16 %v1538
      %v1630 = vunpack.c.l.b16 %v1539
      %v1631 = vunpack.c.l.b16 %v1540
      %v1632 = vunpack.c.l.b16 %v1541
      %v1633 = vunpack.c.l.b16 %v1542
      %v1634 = vunpack.c.l.b16 %v1543
      %v1635 = vunpack.c.l.b16 %v1544
      %v1636 = vunpack.c.l.b16 %v1545
      %v1637 = vunpack.c.l.b16 %v1546
      %v1638 = vunpack.c.l.b16 %v1547
      %v1639 = vunpack.c.l.b16 %v1548
      %v1640 = vunpack.c.l.b16 %v1549
      %v1641 = vunpack.c.l.b16 %v1550
      %v1642 = vunpack.c.l.b16 %v1551
      %v1643 = vunpack.c.l.b16 %v1552
      %v1644 = vunpack.c.l.b16 %v1553
      %v1645 = vunpack.c.l.b16 %v1554
      %v1646 = vunpack.c.l.b16 %v1555
      %v1647 = vunpack.c.l.b16 %v1556
      %v1648 = vpack.c.b16 %v1612, %v1611
      %v1649 = vpack.c.b16 %v1614, %v1613
      %v1650 = vpack.c.b16 %v1616, %v1615
      %v1651 = vpack.c.b16 %v1618, %v1617
      %v1652 = vpack.c.b16 %v1620, %v1619
      %v1653 = vpack.c.b16 %v1622, %v1621
      %v1654 = vpack.c.b16 %v1624, %v1623
      %v1655 = vpack.c.b16 %v1626, %v1625
      %v1656 = vpack.c.b16 %v1628, %v1627
      %v1657 = vpack.c.b16 %v1630, %v1629
      %v1658 = vpack.c.b16 %v1632, %v1631
      %v1659 = vpack.c.b16 %v1634, %v1633
      %v1660 = vpack.c.b16 %v1636, %v1635
      %v1661 = vpack.c.b16 %v1638, %v1637
      %v1662 = vpack.c.b16 %v1640, %v1639
      %v1663 = vpack.c.b16 %v1642, %v1641
      %v1664 = vpack.c.b16 %v1644, %v1643
      %v1665 = vpack.c.b16 %v1646, %v1645
      %v1666 = vpack.c.b16 %v1647, %v1647
      %vm1667 = vcmask 1046528
      %v1668 = vrot.slane %v1648, 1
      %v1669 = vrot.slane %v1649, 1
      %v1670 = vsel %vm1667, %v1668, %v1669
      %v1671 = vrot.slane %v1650, 1
      %v1672 = vsel %vm1667, %v1669, %v1671
      %v1673 = vrot.slane %v1651, 1
      %v1674 = vsel %vm1667, %v1671, %v1673
      %v1675 = vrot.slane %v1652, 1
      %v1676 = vsel %vm1667, %v1673, %v1675
      %v1677 = vrot.slane %v1653, 1
      %v1678 = vsel %vm1667, %v1675, %v1677
      %v1679 = vrot.slane %v1654, 1
      %v1680 = vsel %vm1667, %v1677, %v1679
      %v1681 = vrot.slane %v1655, 1
      %v1682 = vsel %vm1667, %v1679, %v1681
      %v1683 = vrot.slane %v1656, 1
      %v1684 = vsel %vm1667, %v1681, %v1683
      %v1685 = vrot.slane %v1657, 1
      %v1686 = vsel %vm1667, %v1683, %v1685
      %v1687 = vrot.slane %v1658, 1
      %v1688 = vsel %vm1667, %v1685, %v1687
      %v1689 = vrot.slane %v1659, 1
      %v1690 = vsel %vm1667, %v1687, %v1689
      %v1691 = vrot.slane %v1660, 1
      %v1692 = vsel %vm1667, %v1689, %v1691
      %v1693 = vrot.slane %v1661, 1
      %v1694 = vsel %vm1667, %v1691, %v1693
      %v1695 = vrot.slane %v1662, 1
      %v1696 = vsel %vm1667, %v1693, %v1695
      %v1697 = vrot.slane %v1663, 1
      %v1698 = vsel %vm1667, %v1695, %v1697
      %v1699 = vrot.slane %v1664, 1
      %v1700 = vsel %vm1667, %v1697, %v1699
      %v1701 = vrot.slane %v1665, 1
      %v1702 = vsel %vm1667, %v1699, %v1701
      %v1703 = vrot.slane %v1666, 1
      %v1704 = vsel %vm1667, %v1701, %v1703
      %v1739 = vunpack.c.l.b16 %v1558
      %v1740 = vunpack.c.l.b16 %v1559
      %v1741 = vunpack.c.l.b16 %v1560
      %v1742 = vunpack.c.l.b16 %v1561
      %v1743 = vunpack.c.l.b16 %v1562
      %v1744 = vunpack.c.l.b16 %v1563
      %v1745 = vunpack.c.l.b16 %v1564
      %v1746 = vunpack.c.l.b16 %v1565
      %v1747 = vunpack.c.l.b16 %v1566
      %v1748 = vunpack.c.l.b16 %v1567
      %v1749 = vunpack.c.l.b16 %v1568
      %v1750 = vunpack.c.l.b16 %v1569
      %v1751 = vunpack.c.l.b16 %v1570
      %v1752 = vunpack.c.l.b16 %v1571
      %v1753 = vunpack.c.l.b16 %v1572
      %v1754 = vunpack.c.l.b16 %v1573
      %v1755 = vpack.c.b16 %v1740, %v1739
      %v1756 = vpack.c.b16 %v1742, %v1741
      %v1757 = vpack.c.b16 %v1744, %v1743
      %v1758 = vpack.c.b16 %v1746, %v1745
      %v1759 = vpack.c.b16 %v1748, %v1747
      %v1760 = vpack.c.b16 %v1750, %v1749
      %v1761 = vpack.c.b16 %v1752, %v1751
      %v1762 = vpack.c.b16 %v1754, %v1753
      %1771 = vmatprep.subr.bf16.mxu0 0
      %1772 = vmatpush1.bf16.msra.mxu0 %v1755
      %1773 = vmatprep.subr.bf16.mxu0 0
      %1774 = vmatpush1.bf16.msra.mxu0 %v1756
      %1775 = vmatprep.subr.bf16.mxu0 0
      %1776 = vmatpush1.bf16.msra.mxu0 %v1757
      %1777 = vmatprep.subr.bf16.mxu0 0
      %1778 = vmatpush1.bf16.msra.mxu0 %v1758
      %1779 = vmatprep.subr.bf16.mxu0 0
      %1780 = vmatpush1.bf16.msra.mxu0 %v1759
      %1781 = vmatprep.subr.bf16.mxu0 0
      %1782 = vmatpush1.bf16.msra.mxu0 %v1760
      %1783 = vmatprep.subr.bf16.mxu0 0
      %1784 = vmatpush1.bf16.msra.mxu0 %v1761
      %1785 = vmatprep.subr.bf16.mxu0 0
      %1786 = vmatpush1.bf16.msra.mxu0 %v1762
      %1787 = vmatprep.subr.bf16.mxu0 0
      %1788 = vmatpush1.bf16.msra.mxu0 0
      %1789 = vmatprep.subr.bf16.mxu0 0
      %1790 = vmatpush1.bf16.msra.mxu0 0
      %1791 = vmatprep.subr.bf16.mxu0 0
      %1792 = vmatpush1.bf16.msra.mxu0 0
      %1793 = vmatprep.subr.bf16.mxu0 0
      %1794 = vmatpush1.bf16.msra.mxu0 0
      %1795 = vmatprep.subr.bf16.mxu0 0
      %1796 = vmatpush1.bf16.msra.mxu0 0
      %1797 = vmatprep.subr.bf16.mxu0 0
      %1798 = vmatpush1.bf16.msra.mxu0 0
      %1799 = vmatprep.subr.bf16.mxu0 0
      %1800 = vmatpush1.bf16.msra.mxu0 0
      %1801 = vmatprep.subr.bf16.mxu0 0
      %1802 = vmatpush1.bf16.msra.mxu0 0
      %1803 = vmatprep.mubr.bf16.mxu0 0
      %1804 = vmatmul.mubr.bf16.gmra.mrb[0].mxu0 %v1670
      %v1805 = vpop.f32.mrb[0].mxu0
      %v1806 = vadd.f32 0.0, %v1805
      %v1807 = vpop.f32.mrb[0].mxu0
      %v1808 = vpop.f32.mrb[0].mxu0
      %v1809 = vadd.f32 0.0, %v1808
      %v1810 = vpop.f32.mrb[0].mxu0
      %1811 = vmatprep.mubr.bf16.mxu0 0
      %1812 = vmatmul.mubr.bf16.gmra.mrb[0].mxu0 %v1672
      %v1813 = vpop.f32.mrb[0].mxu0
      %v1814 = vadd.f32 0.0, %v1813
      %v1815 = vpop.f32.mrb[0].mxu0
      %v1816 = vpop.f32.mrb[0].mxu0
      %v1817 = vadd.f32 0.0, %v1816
      %v1818 = vpop.f32.mrb[0].mxu0
      %1819 = vmatprep.mubr.bf16.mxu0 0
      %1820 = vmatmul.mubr.bf16.gmra.mrb[0].mxu0 %v1674
      %v1821 = vpop.f32.mrb[0].mxu0
      %v1822 = vadd.f32 0.0, %v1821
      %v1823 = vpop.f32.mrb[0].mxu0
      %v1824 = vpop.f32.mrb[0].mxu0
      %v1825 = vadd.f32 0.0, %v1824
      %v1826 = vpop.f32.mrb[0].mxu0
      %1827 = vmatprep.mubr.bf16.mxu0 0
      %1828 = vmatmul.mubr.bf16.gmra.mrb[0].mxu0 %v1676
      %v1829 = vpop.f32.mrb[0].mxu0
      %v1830 = vadd.f32 0.0, %v1829
      %v1831 = vpop.f32.mrb[0].mxu0
      %v1832 = vpop.f32.mrb[0].mxu0
      %v1833 = vadd.f32 0.0, %v1832
      %v1834 = vpop.f32.mrb[0].mxu0
      %1835 = vmatprep.mubr.bf16.mxu0 0
      %1836 = vmatmul.mubr.bf16.gmra.mrb[0].mxu0 %v1678
      %v1837 = vpop.f32.mrb[0].mxu0
      %v1838 = vadd.f32 0.0, %v1837
      %v1839 = vpop.f32.mrb[0].mxu0
      %v1840 = vpop.f32.mrb[0].mxu0
      %v1841 = vadd.f32 0.0, %v1840
      %v1842 = vpop.f32.mrb[0].mxu0
      %1843 = vmatprep.mubr.bf16.mxu0 0
      %1844 = vmatmul.mubr.bf16.gmra.mrb[0].mxu0 %v1680
      %v1845 = vpop.f32.mrb[0].mxu0
      %v1846 = vadd.f32 0.0, %v1845
      %v1847 = vpop.f32.mrb[0].mxu0
      %v1848 = vpop.f32.mrb[0].mxu0
      %v1849 = vadd.f32 0.0, %v1848
      %v1850 = vpop.f32.mrb[0].mxu0
      %1851 = vmatprep.mubr.bf16.mxu0 0
      %1852 = vmatmul.mubr.bf16.gmra.mrb[0].mxu0 %v1682
      %v1853 = vpop.f32.mrb[0].mxu0
      %v1854 = vadd.f32 0.0, %v1853
      %v1855 = vpop.f32.mrb[0].mxu0
      %v1856 = vpop.f32.mrb[0].mxu0
      %v1857 = vadd.f32 0.0, %v1856
      %v1858 = vpop.f32.mrb[0].mxu0
      %1859 = vmatprep.mubr.bf16.mxu0 0
      %1860 = vmatmul.mubr.bf16.gmra.mrb[0].mxu0 %v1684
      %v1861 = vpop.f32.mrb[0].mxu0
      %v1862 = vadd.f32 0.0, %v1861
      %v1863 = vpop.f32.mrb[0].mxu0
      %v1864 = vpop.f32.mrb[0].mxu0
      %v1865 = vadd.f32 0.0, %v1864
      %v1866 = vpop.f32.mrb[0].mxu0
      %1867 = vmatprep.mubr.bf16.mxu0 0
      %1868 = vmatmul.mubr.bf16.gmra.mrb[0].mxu0 %v1686
      %v1869 = vpop.f32.mrb[0].mxu0
      %v1870 = vadd.f32 0.0, %v1869
      %v1871 = vpop.f32.mrb[0].mxu0
      %v1872 = vpop.f32.mrb[0].mxu0
      %v1873 = vadd.f32 0.0, %v1872
      %v1874 = vpop.f32.mrb[0].mxu0
      %1875 = vmatprep.mubr.bf16.mxu0 0
      %1876 = vmatmul.mubr.bf16.gmra.mrb[0].mxu0 %v1688
      %v1877 = vpop.f32.mrb[0].mxu0
      %v1878 = vadd.f32 0.0, %v1877
      %v1879 = vpop.f32.mrb[0].mxu0
      %v1880 = vpop.f32.mrb[0].mxu0
      %v1881 = vadd.f32 0.0, %v1880
      %v1882 = vpop.f32.mrb[0].mxu0
      %1883 = vmatprep.mubr.bf16.mxu0 0
      %1884 = vmatmul.mubr.bf16.gmra.mrb[0].mxu0 %v1690
      %v1885 = vpop.f32.mrb[0].mxu0
      %v1886 = vadd.f32 0.0, %v1885
      %v1887 = vpop.f32.mrb[0].mxu0
      %v1888 = vpop.f32.mrb[0].mxu0
      %v1889 = vadd.f32 0.0, %v1888
      %v1890 = vpop.f32.mrb[0].mxu0
      %1891 = vmatprep.mubr.bf16.mxu0 0
      %1892 = vmatmul.mubr.bf16.gmra.mrb[0].mxu0 %v1692
      %v1893 = vpop.f32.mrb[0].mxu0
      %v1894 = vadd.f32 0.0, %v1893
      %v1895 = vpop.f32.mrb[0].mxu0
      %v1896 = vpop.f32.mrb[0].mxu0
      %v1897 = vadd.f32 0.0, %v1896
      %v1898 = vpop.f32.mrb[0].mxu0
      %1899 = vmatprep.mubr.bf16.mxu0 0
      %1900 = vmatmul.mubr.bf16.gmra.mrb[0].mxu0 %v1694
      %v1901 = vpop.f32.mrb[0].mxu0
      %v1902 = vadd.f32 0.0, %v1901
      %v1903 = vpop.f32.mrb[0].mxu0
      %v1904 = vpop.f32.mrb[0].mxu0
      %v1905 = vadd.f32 0.0, %v1904
      %v1906 = vpop.f32.mrb[0].mxu0
      %1907 = vmatprep.mubr.bf16.mxu0 0
      %1908 = vmatmul.mubr.bf16.gmra.mrb[0].mxu0 %v1696
      %v1909 = vpop.f32.mrb[0].mxu0
      %v1910 = vadd.f32 0.0, %v1909
      %v1911 = vpop.f32.mrb[0].mxu0
      %v1912 = vpop.f32.mrb[0].mxu0
      %v1913 = vadd.f32 0.0, %v1912
      %v1914 = vpop.f32.mrb[0].mxu0
      %1915 = vmatprep.mubr.bf16.mxu0 0
      %1916 = vmatmul.mubr.bf16.gmra.mrb[0].mxu0 %v1698
      %v1917 = vpop.f32.mrb[0].mxu0
      %v1918 = vadd.f32 0.0, %v1917
      %v1919 = vpop.f32.mrb[0].mxu0
      %v1920 = vpop.f32.mrb[0].mxu0
      %v1921 = vadd.f32 0.0, %v1920
      %v1922 = vpop.f32.mrb[0].mxu0
      %1923 = vmatprep.mubr.bf16.mxu0 0
      %1924 = vmatmul.mubr.bf16.gmra.mrb[0].mxu0 %v1700
      %v1925 = vpop.f32.mrb[0].mxu0
      %v1926 = vadd.f32 0.0, %v1925
      %v1927 = vpop.f32.mrb[0].mxu0
      %v1928 = vpop.f32.mrb[0].mxu0
      %v1929 = vadd.f32 0.0, %v1928
      %v1930 = vpop.f32.mrb[0].mxu0
      %1931 = vmatprep.mubr.bf16.mxu0 0
      %1932 = vmatmul.mubr.bf16.gmra.mrb[0].mxu0 %v1702
      %v1933 = vpop.f32.mrb[0].mxu0
      %v1934 = vadd.f32 0.0, %v1933
      %v1935 = vpop.f32.mrb[0].mxu0
      %v1936 = vpop.f32.mrb[0].mxu0
      %v1937 = vadd.f32 0.0, %v1936
      %v1938 = vpop.f32.mrb[0].mxu0
      %1939 = vmatprep.mubr.bf16.mxu0 0
      %1940 = vmatmul.mubr.bf16.gmra.mrb[0].mxu0 %v1704
      %v1941 = vpop.f32.mrb[0].mxu0
      %v1942 = vadd.f32 0.0, %v1941
      %v1943 = vpop.f32.mrb[0].mxu0
      %v1944 = vpop.f32.mrb[0].mxu0
      %v1945 = vadd.f32 0.0, %v1944
      %v1946 = vpop.f32.mrb[0].mxu0
      %1947 = vdwg.mxu0
      %v1948 = vld [vmem:[#allocation3] sm:$0xff]
      %v1949 = vld [vmem:[#allocation3 + $0x8] sm:$0xff]
      %v1950 = vld [vmem:[#allocation3 + $0x10] sm:$0xff]
      %v1951 = vld [vmem:[#allocation3 + $0x18] sm:$0xff]
      %v1952 = vld [vmem:[#allocation3 + $0x20] sm:$0xff]
      %v1953 = vld [vmem:[#allocation3 + $0x28] sm:$0xff]
      %v1954 = vld [vmem:[#allocation3 + $0x30] sm:$0xff]
      %v1955 = vld [vmem:[#allocation3 + $0x38] sm:$0xff]
      %v1956 = vld [vmem:[#allocation3 + $0x40] sm:$0xff]
      %v1957 = vld [vmem:[#allocation3 + $0x48] sm:$0xff]
      %v1958 = vld [vmem:[#allocation3 + $0x50] sm:$0xff]
      %v1959 = vld [vmem:[#allocation3 + $0x58] sm:$0xff]
      %v1960 = vld [vmem:[#allocation3 + $0x60] sm:$0xff]
      %v1961 = vld [vmem:[#allocation3 + $0x68] sm:$0xff]
      %v1962 = vld [vmem:[#allocation3 + $0x70] sm:$0xff]
      %v1963 = vld [vmem:[#allocation3 + $0x78] sm:$0xff]
      %v1964 = vld [vmem:[#allocation3 + $0x80] sm:$0xff]
      %v1965 = vld [vmem:[#allocation3 + $0x88] sm:$0xff]
      %v1966 = vld [vmem:[#allocation3 + $0x90] sm:$0xff]
      %v1967 = vld [vmem:[#allocation3 + $0x98] sm:$0xff]
      %v1968 = vld [vmem:[#allocation3 + $0xa0] sm:$0xff]
      %v1969 = vld [vmem:[#allocation3 + $0xa8] sm:$0xff]
      %v1970 = vld [vmem:[#allocation3 + $0xb0] sm:$0xff]
      %v1971 = vld [vmem:[#allocation3 + $0xb8] sm:$0xff]
      %v1972 = vld [vmem:[#allocation3 + $0xc0] sm:$0xff]
      %v1973 = vld [vmem:[#allocation3 + $0xc8] sm:$0xff]
      %v1974 = vld [vmem:[#allocation3 + $0xd0] sm:$0xff]
      %v1975 = vld [vmem:[#allocation3 + $0xd8] sm:$0xff]
      %v1976 = vld [vmem:[#allocation3 + $0xe0] sm:$0xff]
      %v1977 = vld [vmem:[#allocation3 + $0xe8] sm:$0xff]
      %v1978 = vld [vmem:[#allocation3 + $0xf0] sm:$0xff]
      %v1979 = vld [vmem:[#allocation3 + $0xf8] sm:$0xff]
      %v1980 = vld [vmem:[#allocation3 + $0x100] sm:$0xff]
      %v1981 = vld [vmem:[#allocation3 + $0x108] sm:$0xff]
      %v1982 = vld [vmem:[#allocation3 + $0x110] sm:$0xff]
      %v1983 = vld [vmem:[#allocation3 + $0x118] sm:$0xff]
      %v1984 = vadd.f32 %v1948, %v1806
      %v1985 = vadd.f32 %v1949, %v1809
      %v1986 = vadd.f32 %v1950, %v1814
      %v1987 = vadd.f32 %v1951, %v1817
      %v1988 = vadd.f32 %v1952, %v1822
      %v1989 = vadd.f32 %v1953, %v1825
      %v1990 = vadd.f32 %v1954, %v1830
      %v1991 = vadd.f32 %v1955, %v1833
      %v1992 = vadd.f32 %v1956, %v1838
      %v1993 = vadd.f32 %v1957, %v1841
      %v1994 = vadd.f32 %v1958, %v1846
      %v1995 = vadd.f32 %v1959, %v1849
      %v1996 = vadd.f32 %v1960, %v1854
      %v1997 = vadd.f32 %v1961, %v1857
      %v1998 = vadd.f32 %v1962, %v1862
      %v1999 = vadd.f32 %v1963, %v1865
      %v2000 = vadd.f32 %v1964, %v1870
      %v2001 = vadd.f32 %v1965, %v1873
      %v2002 = vadd.f32 %v1966, %v1878
      %v2003 = vadd.f32 %v1967, %v1881
      %v2004 = vadd.f32 %v1968, %v1886
      %v2005 = vadd.f32 %v1969, %v1889
      %v2006 = vadd.f32 %v1970, %v1894
      %v2007 = vadd.f32 %v1971, %v1897
      %v2008 = vadd.f32 %v1972, %v1902
      %v2009 = vadd.f32 %v1973, %v1905
      %v2010 = vadd.f32 %v1974, %v1910
      %v2011 = vadd.f32 %v1975, %v1913
      %v2012 = vadd.f32 %v1976, %v1918
      %v2013 = vadd.f32 %v1977, %v1921
      %v2014 = vadd.f32 %v1978, %v1926
      %v2015 = vadd.f32 %v1979, %v1929
      %v2016 = vadd.f32 %v1980, %v1934
      %v2017 = vadd.f32 %v1981, %v1937
      %v2018 = vadd.f32 %v1982, %v1942
      %v2019 = vadd.f32 %v1983, %v1945
      %2020 = vst [vmem:[#allocation3] sm:$0xff] %v1984
      %2021 = vst [vmem:[#allocation3 + $0x8] sm:$0xff] %v1985
      %2022 = vst [vmem:[#allocation3 + $0x10] sm:$0xff] %v1986
      %2023 = vst [vmem:[#allocation3 + $0x18] sm:$0xff] %v1987
      %2024 = vst [vmem:[#allocation3 + $0x20] sm:$0xff] %v1988
      %2025 = vst [vmem:[#allocation3 + $0x28] sm:$0xff] %v1989
      %2026 = vst [vmem:[#allocation3 + $0x30] sm:$0xff] %v1990
      %2027 = vst [vmem:[#allocation3 + $0x38] sm:$0xff] %v1991
      %2028 = vst [vmem:[#allocation3 + $0x40] sm:$0xff] %v1992
      %2029 = vst [vmem:[#allocation3 + $0x48] sm:$0xff] %v1993
      %2030 = vst [vmem:[#allocation3 + $0x50] sm:$0xff] %v1994
      %2031 = vst [vmem:[#allocation3 + $0x58] sm:$0xff] %v1995
      %2032 = vst [vmem:[#allocation3 + $0x60] sm:$0xff] %v1996
      %2033 = vst [vmem:[#allocation3 + $0x68] sm:$0xff] %v1997
      %2034 = vst [vmem:[#allocation3 + $0x70] sm:$0xff] %v1998
      %2035 = vst [vmem:[#allocation3 + $0x78] sm:$0xff] %v1999
      %2036 = vst [vmem:[#allocation3 + $0x80] sm:$0xff] %v2000
      %2037 = vst [vmem:[#allocation3 + $0x88] sm:$0xff] %v2001
      %2038 = vst [vmem:[#allocation3 + $0x90] sm:$0xff] %v2002
      %2039 = vst [vmem:[#allocation3 + $0x98] sm:$0xff] %v2003
      %2040 = vst [vmem:[#allocation3 + $0xa0] sm:$0xff] %v2004
      %2041 = vst [vmem:[#allocation3 + $0xa8] sm:$0xff] %v2005
      %2042 = vst [vmem:[#allocation3 + $0xb0] sm:$0xff] %v2006
      %2043 = vst [vmem:[#allocation3 + $0xb8] sm:$0xff] %v2007
      %2044 = vst [vmem:[#allocation3 + $0xc0] sm:$0xff] %v2008
      %2045 = vst [vmem:[#allocation3 + $0xc8] sm:$0xff] %v2009
      %2046 = vst [vmem:[#allocation3 + $0xd0] sm:$0xff] %v2010
      %2047 = vst [vmem:[#allocation3 + $0xd8] sm:$0xff] %v2011
      %2048 = vst [vmem:[#allocation3 + $0xe0] sm:$0xff] %v2012
      %2049 = vst [vmem:[#allocation3 + $0xe8] sm:$0xff] %v2013
      %2050 = vst [vmem:[#allocation3 + $0xf0] sm:$0xff] %v2014
      %2051 = vst [vmem:[#allocation3 + $0xf8] sm:$0xff] %v2015
      %2052 = vst [vmem:[#allocation3 + $0x100] sm:$0xff] %v2016
      %2053 = vst [vmem:[#allocation3 + $0x108] sm:$0xff] %v2017
      %2054 = vst [vmem:[#allocation3 + $0x110] sm:$0xff] %v2018
      %2055 = vst [vmem:[#allocation3 + $0x118] sm:$0xff] %v2019
      %v2056 = vld [vmem:[#allocation2] sm:$0xe]
      %v2057 = vld [vmem:[#allocation2 + $0x4] sm:$0xf]
      %v2058 = vld [vmem:[#allocation2 + $0x8] sm:$0xf]
      %v2059 = vld [vmem:[#allocation2 + $0xc] sm:$0xf]
      %v2060 = vld [vmem:[#allocation2 + $0x10] sm:$0xf]
      %v2061 = vld [vmem:[#allocation2 + $0x14] sm:$0xf]
      %v2062 = vld [vmem:[#allocation2 + $0x18] sm:$0xf]
      %v2063 = vld [vmem:[#allocation2 + $0x1c] sm:$0xf]
      %v2064 = vld [vmem:[#allocation2 + $0x20] sm:$0xf]
      %v2065 = vld [vmem:[#allocation2 + $0x24] sm:$0xf]
      %v2066 = vld [vmem:[#allocation2 + $0x28] sm:$0xf]
      %v2067 = vld [vmem:[#allocation2 + $0x2c] sm:$0xf]
      %v2068 = vld [vmem:[#allocation2 + $0x30] sm:$0xf]
      %v2069 = vld [vmem:[#allocation2 + $0x34] sm:$0xf]
      %v2070 = vld [vmem:[#allocation2 + $0x38] sm:$0xf]
      %v2071 = vld [vmem:[#allocation2 + $0x3c] sm:$0xf]
      %v2072 = vld [vmem:[#allocation2 + $0x40] sm:$0xf]
      %v2073 = vld [vmem:[#allocation2 + $0x44] sm:$0xf]
      %v2074 = vld [vmem:[#allocation2 + $0x48] sm:$0xf]
      %v2075 = vld [vmem:[#allocation2 + $0x4c] sm:$0xf]
      %v2076 = vld [vmem:[#allocation2 + $0x50] sm:$0xf]
      %v2077 = vld [vmem:[#allocation2 + $0x54] sm:$0xf]
      %v2078 = vld [vmem:[#allocation2 + $0x58] sm:$0xf]
      %v2079 = vld [vmem:[#allocation2 + $0x5c] sm:$0xf]
      %v2080 = vld [vmem:[#allocation2 + $0x60] sm:$0xf]
      %v2081 = vld [vmem:[#allocation2 + $0x64] sm:$0xf]
      %v2082 = vld [vmem:[#allocation2 + $0x68] sm:$0xf]
      %v2083 = vld [vmem:[#allocation2 + $0x6c] sm:$0xf]
      %v2084 = vld [vmem:[#allocation2 + $0x70] sm:$0xf]
      %v2085 = vld [vmem:[#allocation2 + $0x74] sm:$0xf]
      %v2086 = vld [vmem:[#allocation2 + $0x78] sm:$0xf]
      %v2087 = vld [vmem:[#allocation2 + $0x7c] sm:$0xf]
      %v2088 = vld [vmem:[#allocation2 + $0x80] sm:$0xf]
      %v2089 = vld [vmem:[#allocation2 + $0x84] sm:$0xf]
      %v2090 = vld [vmem:[#allocation2 + $0x88] sm:$0xf]
      %v2091 = vld [vmem:[#allocation2 + $0x8c] sm:$0xf]
      %v2092 = vld [vmem:[#allocation2 + $0x90] sm:$0x3]
      %s2093 = scalar_lea.vmem %s3, 128
      %v2094 = vld [vmem:[%s2093] sm:$0xf]
      %v2095 = vld [vmem:[%s2093 + $0x4] sm:$0xf]
      %v2096 = vld [vmem:[%s2093 + $0x8] sm:$0xf]
      %v2097 = vld [vmem:[%s2093 + $0xc] sm:$0xf]
      %v2098 = vld [vmem:[%s2093 + $0x10] sm:$0xf]
      %v2099 = vld [vmem:[%s2093 + $0x14] sm:$0xf]
      %v2100 = vld [vmem:[%s2093 + $0x18] sm:$0xf]
      %v2101 = vld [vmem:[%s2093 + $0x1c] sm:$0xf]
      %v2102 = vld [vmem:[%s2093 + $0x20] sm:$0xf]
      %v2103 = vld [vmem:[%s2093 + $0x24] sm:$0xf]
      %v2104 = vld [vmem:[%s2093 + $0x28] sm:$0xf]
      %v2105 = vld [vmem:[%s2093 + $0x2c] sm:$0xf]
      %v2106 = vld [vmem:[%s2093 + $0x30] sm:$0xf]
      %v2107 = vld [vmem:[%s2093 + $0x34] sm:$0xf]
      %v2108 = vld [vmem:[%s2093 + $0x38] sm:$0xf]
      %v2109 = vld [vmem:[%s2093 + $0x3c] sm:$0xf]
      %v2147 = vunpack.c.l.b16 %v2056
      %v2148 = vunpack.c.l.b16 %v2057
      %v2149 = vunpack.c.l.b16 %v2058
      %v2150 = vunpack.c.l.b16 %v2059
      %v2151 = vunpack.c.l.b16 %v2060
      %v2152 = vunpack.c.l.b16 %v2061
      %v2153 = vunpack.c.l.b16 %v2062
      %v2154 = vunpack.c.l.b16 %v2063
      %v2155 = vunpack.c.l.b16 %v2064
      %v2156 = vunpack.c.l.b16 %v2065
      %v2157 = vunpack.c.l.b16 %v2066
      %v2158 = vunpack.c.l.b16 %v2067
      %v2159 = vunpack.c.l.b16 %v2068
      %v2160 = vunpack.c.l.b16 %v2069
      %v2161 = vunpack.c.l.b16 %v2070
      %v2162 = vunpack.c.l.b16 %v2071
      %v2163 = vunpack.c.l.b16 %v2072
      %v2164 = vunpack.c.l.b16 %v2073
      %v2165 = vunpack.c.l.b16 %v2074
      %v2166 = vunpack.c.l.b16 %v2075
      %v2167 = vunpack.c.l.b16 %v2076
      %v2168 = vunpack.c.l.b16 %v2077
      %v2169 = vunpack.c.l.b16 %v2078
      %v2170 = vunpack.c.l.b16 %v2079
      %v2171 = vunpack.c.l.b16 %v2080
      %v2172 = vunpack.c.l.b16 %v2081
      %v2173 = vunpack.c.l.b16 %v2082
      %v2174 = vunpack.c.l.b16 %v2083
      %v2175 = vunpack.c.l.b16 %v2084
      %v2176 = vunpack.c.l.b16 %v2085
      %v2177 = vunpack.c.l.b16 %v2086
      %v2178 = vunpack.c.l.b16 %v2087
      %v2179 = vunpack.c.l.b16 %v2088
      %v2180 = vunpack.c.l.b16 %v2089
      %v2181 = vunpack.c.l.b16 %v2090
      %v2182 = vunpack.c.l.b16 %v2091
      %v2183 = vunpack.c.l.b16 %v2092
      %v2184 = vpack.c.b16 %v2148, %v2147
      %v2185 = vpack.c.b16 %v2150, %v2149
      %v2186 = vpack.c.b16 %v2152, %v2151
      %v2187 = vpack.c.b16 %v2154, %v2153
      %v2188 = vpack.c.b16 %v2156, %v2155
      %v2189 = vpack.c.b16 %v2158, %v2157
      %v2190 = vpack.c.b16 %v2160, %v2159
      %v2191 = vpack.c.b16 %v2162, %v2161
      %v2192 = vpack.c.b16 %v2164, %v2163
      %v2193 = vpack.c.b16 %v2166, %v2165
      %v2194 = vpack.c.b16 %v2168, %v2167
      %v2195 = vpack.c.b16 %v2170, %v2169
      %v2196 = vpack.c.b16 %v2172, %v2171
      %v2197 = vpack.c.b16 %v2174, %v2173
      %v2198 = vpack.c.b16 %v2176, %v2175
      %v2199 = vpack.c.b16 %v2178, %v2177
      %v2200 = vpack.c.b16 %v2180, %v2179
      %v2201 = vpack.c.b16 %v2182, %v2181
      %v2202 = vpack.c.b16 %v2183, %v2183
      %vm2203 = vsmask.f32 6400
      %v2205 = vshrl.u32 %v2184, 16
      %v2207 = vrot.slane %v2205, 1
      %v2208 = vshll.u32 %v2184, 16
      %v2210 = vrot.slane %v2208, 2
      %v2211 = vor.u32 %v2207, %v2210
      %v2213 = vshrl.u32 %v2185, 16
      %v2215 = vrot.slane %v2213, 1
      %v2216 = vshll.u32 %v2185, 16
      %v2218 = vrot.slane %v2216, 2
      %v2219 = vor.u32 %v2215, %v2218
      %v2220 = vsel %vm2203, %v2211, %v2219
      %v2222 = vshrl.u32 %v2186, 16
      %v2224 = vrot.slane %v2222, 1
      %v2225 = vshll.u32 %v2186, 16
      %v2227 = vrot.slane %v2225, 2
      %v2228 = vor.u32 %v2224, %v2227
      %v2229 = vsel %vm2203, %v2219, %v2228
      %v2231 = vshrl.u32 %v2187, 16
      %v2233 = vrot.slane %v2231, 1
      %v2234 = vshll.u32 %v2187, 16
      %v2236 = vrot.slane %v2234, 2
      %v2237 = vor.u32 %v2233, %v2236
      %v2238 = vsel %vm2203, %v2228, %v2237
      %v2240 = vshrl.u32 %v2188, 16
      %v2242 = vrot.slane %v2240, 1
      %v2243 = vshll.u32 %v2188, 16
      %v2245 = vrot.slane %v2243, 2
      %v2246 = vor.u32 %v2242, %v2245
      %v2247 = vsel %vm2203, %v2237, %v2246
      %v2249 = vshrl.u32 %v2189, 16
      %v2251 = vrot.slane %v2249, 1
      %v2252 = vshll.u32 %v2189, 16
      %v2254 = vrot.slane %v2252, 2
      %v2255 = vor.u32 %v2251, %v2254
      %v2256 = vsel %vm2203, %v2246, %v2255
      %v2258 = vshrl.u32 %v2190, 16
      %v2260 = vrot.slane %v2258, 1
      %v2261 = vshll.u32 %v2190, 16
      %v2263 = vrot.slane %v2261, 2
      %v2264 = vor.u32 %v2260, %v2263
      %v2265 = vsel %vm2203, %v2255, %v2264
      %v2267 = vshrl.u32 %v2191, 16
      %v2269 = vrot.slane %v2267, 1
      %v2270 = vshll.u32 %v2191, 16
      %v2272 = vrot.slane %v2270, 2
      %v2273 = vor.u32 %v2269, %v2272
      %v2274 = vsel %vm2203, %v2264, %v2273
      %v2276 = vshrl.u32 %v2192, 16
      %v2278 = vrot.slane %v2276, 1
      %v2279 = vshll.u32 %v2192, 16
      %v2281 = vrot.slane %v2279, 2
      %v2282 = vor.u32 %v2278, %v2281
      %v2283 = vsel %vm2203, %v2273, %v2282
      %v2285 = vshrl.u32 %v2193, 16
      %v2287 = vrot.slane %v2285, 1
      %v2288 = vshll.u32 %v2193, 16
      %v2290 = vrot.slane %v2288, 2
      %v2291 = vor.u32 %v2287, %v2290
      %v2292 = vsel %vm2203, %v2282, %v2291
      %v2294 = vshrl.u32 %v2194, 16
      %v2296 = vrot.slane %v2294, 1
      %v2297 = vshll.u32 %v2194, 16
      %v2299 = vrot.slane %v2297, 2
      %v2300 = vor.u32 %v2296, %v2299
      %v2301 = vsel %vm2203, %v2291, %v2300
      %v2303 = vshrl.u32 %v2195, 16
      %v2305 = vrot.slane %v2303, 1
      %v2306 = vshll.u32 %v2195, 16
      %v2308 = vrot.slane %v2306, 2
      %v2309 = vor.u32 %v2305, %v2308
      %v2310 = vsel %vm2203, %v2300, %v2309
      %v2312 = vshrl.u32 %v2196, 16
      %v2314 = vrot.slane %v2312, 1
      %v2315 = vshll.u32 %v2196, 16
      %v2317 = vrot.slane %v2315, 2
      %v2318 = vor.u32 %v2314, %v2317
      %v2319 = vsel %vm2203, %v2309, %v2318
      %v2321 = vshrl.u32 %v2197, 16
      %v2323 = vrot.slane %v2321, 1
      %v2324 = vshll.u32 %v2197, 16
      %v2326 = vrot.slane %v2324, 2
      %v2327 = vor.u32 %v2323, %v2326
      %v2328 = vsel %vm2203, %v2318, %v2327
      %v2330 = vshrl.u32 %v2198, 16
      %v2332 = vrot.slane %v2330, 1
      %v2333 = vshll.u32 %v2198, 16
      %v2335 = vrot.slane %v2333, 2
      %v2336 = vor.u32 %v2332, %v2335
      %v2337 = vsel %vm2203, %v2327, %v2336
      %v2339 = vshrl.u32 %v2199, 16
      %v2341 = vrot.slane %v2339, 1
      %v2342 = vshll.u32 %v2199, 16
      %v2344 = vrot.slane %v2342, 2
      %v2345 = vor.u32 %v2341, %v2344
      %v2346 = vsel %vm2203, %v2336, %v2345
      %v2348 = vshrl.u32 %v2200, 16
      %v2350 = vrot.slane %v2348, 1
      %v2351 = vshll.u32 %v2200, 16
      %v2353 = vrot.slane %v2351, 2
      %v2354 = vor.u32 %v2350, %v2353
      %v2355 = vsel %vm2203, %v2345, %v2354
      %v2357 = vshrl.u32 %v2201, 16
      %v2359 = vrot.slane %v2357, 1
      %v2360 = vshll.u32 %v2201, 16
      %v2362 = vrot.slane %v2360, 2
      %v2363 = vor.u32 %v2359, %v2362
      %v2364 = vsel %vm2203, %v2354, %v2363
      %v2366 = vshrl.u32 %v2202, 16
      %v2368 = vrot.slane %v2366, 1
      %v2369 = vshll.u32 %v2202, 16
      %v2371 = vrot.slane %v2369, 2
      %v2372 = vor.u32 %v2368, %v2371
      %v2373 = vsel %vm2203, %v2363, %v2372
      %v2408 = vunpack.c.l.b16 %v2094
      %v2409 = vunpack.c.l.b16 %v2095
      %v2410 = vunpack.c.l.b16 %v2096
      %v2411 = vunpack.c.l.b16 %v2097
      %v2412 = vunpack.c.l.b16 %v2098
      %v2413 = vunpack.c.l.b16 %v2099
      %v2414 = vunpack.c.l.b16 %v2100
      %v2415 = vunpack.c.l.b16 %v2101
      %v2416 = vunpack.c.l.b16 %v2102
      %v2417 = vunpack.c.l.b16 %v2103
      %v2418 = vunpack.c.l.b16 %v2104
      %v2419 = vunpack.c.l.b16 %v2105
      %v2420 = vunpack.c.l.b16 %v2106
      %v2421 = vunpack.c.l.b16 %v2107
      %v2422 = vunpack.c.l.b16 %v2108
      %v2423 = vunpack.c.l.b16 %v2109
      %v2424 = vpack.c.b16 %v2409, %v2408
      %v2425 = vpack.c.b16 %v2411, %v2410
      %v2426 = vpack.c.b16 %v2413, %v2412
      %v2427 = vpack.c.b16 %v2415, %v2414
      %v2428 = vpack.c.b16 %v2417, %v2416
      %v2429 = vpack.c.b16 %v2419, %v2418
      %v2430 = vpack.c.b16 %v2421, %v2420
      %v2431 = vpack.c.b16 %v2423, %v2422
      %2440 = vmatprep.subr.bf16.mxu0 0
      %2441 = vmatpush1.bf16.msra.mxu0 %v2424
      %2442 = vmatprep.subr.bf16.mxu0 0
      %2443 = vmatpush1.bf16.msra.mxu0 %v2425
      %2444 = vmatprep.subr.bf16.mxu0 0
      %2445 = vmatpush1.bf16.msra.mxu0 %v2426
      %2446 = vmatprep.subr.bf16.mxu0 0
      %2447 = vmatpush1.bf16.msra.mxu0 %v2427
      %2448 = vmatprep.subr.bf16.mxu0 0
      %2449 = vmatpush1.bf16.msra.mxu0 %v2428
      %2450 = vmatprep.subr.bf16.mxu0 0
      %2451 = vmatpush1.bf16.msra.mxu0 %v2429
      %2452 = vmatprep.subr.bf16.mxu0 0
      %2453 = vmatpush1.bf16.msra.mxu0 %v2430
      %2454 = vmatprep.subr.bf16.mxu0 0
      %2455 = vmatpush1.bf16.msra.mxu0 %v2431
      %2456 = vmatprep.subr.bf16.mxu0 0
      %2457 = vmatpush1.bf16.msra.mxu0 0
      %2458 = vmatprep.subr.bf16.mxu0 0
      %2459 = vmatpush1.bf16.msra.mxu0 0
      %2460 = vmatprep.subr.bf16.mxu0 0
      %2461 = vmatpush1.bf16.msra.mxu0 0
      %2462 = vmatprep.subr.bf16.mxu0 0
      %2463 = vmatpush1.bf16.msra.mxu0 0
      %2464 = vmatprep.subr.bf16.mxu0 0
      %2465 = vmatpush1.bf16.msra.mxu0 0
      %2466 = vmatprep.subr.bf16.mxu0 0
      %2467 = vmatpush1.bf16.msra.mxu0 0
      %2468 = vmatprep.subr.bf16.mxu0 0
      %2469 = vmatpush1.bf16.msra.mxu0 0
      %2470 = vmatprep.subr.bf16.mxu0 0
      %2471 = vmatpush1.bf16.msra.mxu0 0
      %2472 = vmatprep.mubr.bf16.mxu0 0
      %2473 = vmatmul.mubr.bf16.gmra.mrb[0].mxu0 %v2220
      %v2474 = vpop.f32.mrb[0].mxu0
      %v2475 = vadd.f32 0.0, %v2474
      %v2476 = vpop.f32.mrb[0].mxu0
      %v2477 = vpop.f32.mrb[0].mxu0
      %v2478 = vadd.f32 0.0, %v2477
      %v2479 = vpop.f32.mrb[0].mxu0
      %2480 = vmatprep.mubr.bf16.mxu0 0
      %2481 = vmatmul.mubr.bf16.gmra.mrb[0].mxu0 %v2229
      %v2482 = vpop.f32.mrb[0].mxu0
      %v2483 = vadd.f32 0.0, %v2482
      %v2484 = vpop.f32.mrb[0].mxu0
      %v2485 = vpop.f32.mrb[0].mxu0
      %v2486 = vadd.f32 0.0, %v2485
      %v2487 = vpop.f32.mrb[0].mxu0
      %2488 = vmatprep.mubr.bf16.mxu0 0
      %2489 = vmatmul.mubr.bf16.gmra.mrb[0].mxu0 %v2238
      %v2490 = vpop.f32.mrb[0].mxu0
      %v2491 = vadd.f32 0.0, %v2490
      %v2492 = vpop.f32.mrb[0].mxu0
      %v2493 = vpop.f32.mrb[0].mxu0
      %v2494 = vadd.f32 0.0, %v2493
      %v2495 = vpop.f32.mrb[0].mxu0
      %2496 = vmatprep.mubr.bf16.mxu0 0
      %2497 = vmatmul.mubr.bf16.gmra.mrb[0].mxu0 %v2247
      %v2498 = vpop.f32.mrb[0].mxu0
      %v2499 = vadd.f32 0.0, %v2498
      %v2500 = vpop.f32.mrb[0].mxu0
      %v2501 = vpop.f32.mrb[0].mxu0
      %v2502 = vadd.f32 0.0, %v2501
      %v2503 = vpop.f32.mrb[0].mxu0
      %2504 = vmatprep.mubr.bf16.mxu0 0
      %2505 = vmatmul.mubr.bf16.gmra.mrb[0].mxu0 %v2256
      %v2506 = vpop.f32.mrb[0].mxu0
      %v2507 = vadd.f32 0.0, %v2506
      %v2508 = vpop.f32.mrb[0].mxu0
      %v2509 = vpop.f32.mrb[0].mxu0
      %v2510 = vadd.f32 0.0, %v2509
      %v2511 = vpop.f32.mrb[0].mxu0
      %2512 = vmatprep.mubr.bf16.mxu0 0
      %2513 = vmatmul.mubr.bf16.gmra.mrb[0].mxu0 %v2265
      %v2514 = vpop.f32.mrb[0].mxu0
      %v2515 = vadd.f32 0.0, %v2514
      %v2516 = vpop.f32.mrb[0].mxu0
      %v2517 = vpop.f32.mrb[0].mxu0
      %v2518 = vadd.f32 0.0, %v2517
      %v2519 = vpop.f32.mrb[0].mxu0
      %2520 = vmatprep.mubr.bf16.mxu0 0
      %2521 = vmatmul.mubr.bf16.gmra.mrb[0].mxu0 %v2274
      %v2522 = vpop.f32.mrb[0].mxu0
      %v2523 = vadd.f32 0.0, %v2522
      %v2524 = vpop.f32.mrb[0].mxu0
      %v2525 = vpop.f32.mrb[0].mxu0
      %v2526 = vadd.f32 0.0, %v2525
      %v2527 = vpop.f32.mrb[0].mxu0
      %2528 = vmatprep.mubr.bf16.mxu0 0
      %2529 = vmatmul.mubr.bf16.gmra.mrb[0].mxu0 %v2283
      %v2530 = vpop.f32.mrb[0].mxu0
      %v2531 = vadd.f32 0.0, %v2530
      %v2532 = vpop.f32.mrb[0].mxu0
      %v2533 = vpop.f32.mrb[0].mxu0
      %v2534 = vadd.f32 0.0, %v2533
      %v2535 = vpop.f32.mrb[0].mxu0
      %2536 = vmatprep.mubr.bf16.mxu0 0
      %2537 = vmatmul.mubr.bf16.gmra.mrb[0].mxu0 %v2292
      %v2538 = vpop.f32.mrb[0].mxu0
      %v2539 = vadd.f32 0.0, %v2538
      %v2540 = vpop.f32.mrb[0].mxu0
      %v2541 = vpop.f32.mrb[0].mxu0
      %v2542 = vadd.f32 0.0, %v2541
      %v2543 = vpop.f32.mrb[0].mxu0
      %2544 = vmatprep.mubr.bf16.mxu0 0
      %2545 = vmatmul.mubr.bf16.gmra.mrb[0].mxu0 %v2301
      %v2546 = vpop.f32.mrb[0].mxu0
      %v2547 = vadd.f32 0.0, %v2546
      %v2548 = vpop.f32.mrb[0].mxu0
      %v2549 = vpop.f32.mrb[0].mxu0
      %v2550 = vadd.f32 0.0, %v2549
      %v2551 = vpop.f32.mrb[0].mxu0
      %2552 = vmatprep.mubr.bf16.mxu0 0
      %2553 = vmatmul.mubr.bf16.gmra.mrb[0].mxu0 %v2310
      %v2554 = vpop.f32.mrb[0].mxu0
      %v2555 = vadd.f32 0.0, %v2554
      %v2556 = vpop.f32.mrb[0].mxu0
      %v2557 = vpop.f32.mrb[0].mxu0
      %v2558 = vadd.f32 0.0, %v2557
      %v2559 = vpop.f32.mrb[0].mxu0
      %2560 = vmatprep.mubr.bf16.mxu0 0
      %2561 = vmatmul.mubr.bf16.gmra.mrb[0].mxu0 %v2319
      %v2562 = vpop.f32.mrb[0].mxu0
      %v2563 = vadd.f32 0.0, %v2562
      %v2564 = vpop.f32.mrb[0].mxu0
      %v2565 = vpop.f32.mrb[0].mxu0
      %v2566 = vadd.f32 0.0, %v2565
      %v2567 = vpop.f32.mrb[0].mxu0
      %2568 = vmatprep.mubr.bf16.mxu0 0
      %2569 = vmatmul.mubr.bf16.gmra.mrb[0].mxu0 %v2328
      %v2570 = vpop.f32.mrb[0].mxu0
      %v2571 = vadd.f32 0.0, %v2570
      %v2572 = vpop.f32.mrb[0].mxu0
      %v2573 = vpop.f32.mrb[0].mxu0
      %v2574 = vadd.f32 0.0, %v2573
      %v2575 = vpop.f32.mrb[0].mxu0
      %2576 = vmatprep.mubr.bf16.mxu0 0
      %2577 = vmatmul.mubr.bf16.gmra.mrb[0].mxu0 %v2337
      %v2578 = vpop.f32.mrb[0].mxu0
      %v2579 = vadd.f32 0.0, %v2578
      %v2580 = vpop.f32.mrb[0].mxu0
      %v2581 = vpop.f32.mrb[0].mxu0
      %v2582 = vadd.f32 0.0, %v2581
      %v2583 = vpop.f32.mrb[0].mxu0
      %2584 = vmatprep.mubr.bf16.mxu0 0
      %2585 = vmatmul.mubr.bf16.gmra.mrb[0].mxu0 %v2346
      %v2586 = vpop.f32.mrb[0].mxu0
      %v2587 = vadd.f32 0.0, %v2586
      %v2588 = vpop.f32.mrb[0].mxu0
      %v2589 = vpop.f32.mrb[0].mxu0
      %v2590 = vadd.f32 0.0, %v2589
      %v2591 = vpop.f32.mrb[0].mxu0
      %2592 = vmatprep.mubr.bf16.mxu0 0
      %2593 = vmatmul.mubr.bf16.gmra.mrb[0].mxu0 %v2355
      %v2594 = vpop.f32.mrb[0].mxu0
      %v2595 = vadd.f32 0.0, %v2594
      %v2596 = vpop.f32.mrb[0].mxu0
      %v2597 = vpop.f32.mrb[0].mxu0
      %v2598 = vadd.f32 0.0, %v2597
      %v2599 = vpop.f32.mrb[0].mxu0
      %2600 = vmatprep.mubr.bf16.mxu0 0
      %2601 = vmatmul.mubr.bf16.gmra.mrb[0].mxu0 %v2364
      %v2602 = vpop.f32.mrb[0].mxu0
      %v2603 = vadd.f32 0.0, %v2602
      %v2604 = vpop.f32.mrb[0].mxu0
      %v2605 = vpop.f32.mrb[0].mxu0
      %v2606 = vadd.f32 0.0, %v2605
      %v2607 = vpop.f32.mrb[0].mxu0
      %2608 = vmatprep.mubr.bf16.mxu0 0
      %2609 = vmatmul.mubr.bf16.gmra.mrb[0].mxu0 %v2373
      %v2610 = vpop.f32.mrb[0].mxu0
      %v2611 = vadd.f32 0.0, %v2610
      %v2612 = vpop.f32.mrb[0].mxu0
      %v2613 = vpop.f32.mrb[0].mxu0
      %v2614 = vadd.f32 0.0, %v2613
      %v2615 = vpop.f32.mrb[0].mxu0
      %2616 = vdwg.mxu0
      %v2617 = vld [vmem:[#allocation3] sm:$0xff]
      %v2618 = vld [vmem:[#allocation3 + $0x8] sm:$0xff]
      %v2619 = vld [vmem:[#allocation3 + $0x10] sm:$0xff]
      %v2620 = vld [vmem:[#allocation3 + $0x18] sm:$0xff]
      %v2621 = vld [vmem:[#allocation3 + $0x20] sm:$0xff]
      %v2622 = vld [vmem:[#allocation3 + $0x28] sm:$0xff]
      %v2623 = vld [vmem:[#allocation3 + $0x30] sm:$0xff]
      %v2624 = vld [vmem:[#allocation3 + $0x38] sm:$0xff]
      %v2625 = vld [vmem:[#allocation3 + $0x40] sm:$0xff]
      %v2626 = vld [vmem:[#allocation3 + $0x48] sm:$0xff]
      %v2627 = vld [vmem:[#allocation3 + $0x50] sm:$0xff]
      %v2628 = vld [vmem:[#allocation3 + $0x58] sm:$0xff]
      %v2629 = vld [vmem:[#allocation3 + $0x60] sm:$0xff]
      %v2630 = vld [vmem:[#allocation3 + $0x68] sm:$0xff]
      %v2631 = vld [vmem:[#allocation3 + $0x70] sm:$0xff]
      %v2632 = vld [vmem:[#allocation3 + $0x78] sm:$0xff]
      %v2633 = vld [vmem:[#allocation3 + $0x80] sm:$0xff]
      %v2634 = vld [vmem:[#allocation3 + $0x88] sm:$0xff]
      %v2635 = vld [vmem:[#allocation3 + $0x90] sm:$0xff]
      %v2636 = vld [vmem:[#allocation3 + $0x98] sm:$0xff]
      %v2637 = vld [vmem:[#allocation3 + $0xa0] sm:$0xff]
      %v2638 = vld [vmem:[#allocation3 + $0xa8] sm:$0xff]
      %v2639 = vld [vmem:[#allocation3 + $0xb0] sm:$0xff]
      %v2640 = vld [vmem:[#allocation3 + $0xb8] sm:$0xff]
      %v2641 = vld [vmem:[#allocation3 + $0xc0] sm:$0xff]
      %v2642 = vld [vmem:[#allocation3 + $0xc8] sm:$0xff]
      %v2643 = vld [vmem:[#allocation3 + $0xd0] sm:$0xff]
      %v2644 = vld [vmem:[#allocation3 + $0xd8] sm:$0xff]
      %v2645 = vld [vmem:[#allocation3 + $0xe0] sm:$0xff]
      %v2646 = vld [vmem:[#allocation3 + $0xe8] sm:$0xff]
      %v2647 = vld [vmem:[#allocation3 + $0xf0] sm:$0xff]
      %v2648 = vld [vmem:[#allocation3 + $0xf8] sm:$0xff]
      %v2649 = vld [vmem:[#allocation3 + $0x100] sm:$0xff]
      %v2650 = vld [vmem:[#allocation3 + $0x108] sm:$0xff]
      %v2651 = vld [vmem:[#allocation3 + $0x110] sm:$0xff]
      %v2652 = vld [vmem:[#allocation3 + $0x118] sm:$0xff]
      %v2653 = vadd.f32 %v2617, %v2475
      %v2654 = vadd.f32 %v2618, %v2478
      %v2655 = vadd.f32 %v2619, %v2483
      %v2656 = vadd.f32 %v2620, %v2486
      %v2657 = vadd.f32 %v2621, %v2491
      %v2658 = vadd.f32 %v2622, %v2494
      %v2659 = vadd.f32 %v2623, %v2499
      %v2660 = vadd.f32 %v2624, %v2502
      %v2661 = vadd.f32 %v2625, %v2507
      %v2662 = vadd.f32 %v2626, %v2510
      %v2663 = vadd.f32 %v2627, %v2515
      %v2664 = vadd.f32 %v2628, %v2518
      %v2665 = vadd.f32 %v2629, %v2523
      %v2666 = vadd.f32 %v2630, %v2526
      %v2667 = vadd.f32 %v2631, %v2531
      %v2668 = vadd.f32 %v2632, %v2534
      %v2669 = vadd.f32 %v2633, %v2539
      %v2670 = vadd.f32 %v2634, %v2542
      %v2671 = vadd.f32 %v2635, %v2547
      %v2672 = vadd.f32 %v2636, %v2550
      %v2673 = vadd.f32 %v2637, %v2555
      %v2674 = vadd.f32 %v2638, %v2558
      %v2675 = vadd.f32 %v2639, %v2563
      %v2676 = vadd.f32 %v2640, %v2566
      %v2677 = vadd.f32 %v2641, %v2571
      %v2678 = vadd.f32 %v2642, %v2574
      %v2679 = vadd.f32 %v2643, %v2579
      %v2680 = vadd.f32 %v2644, %v2582
      %v2681 = vadd.f32 %v2645, %v2587
      %v2682 = vadd.f32 %v2646, %v2590
      %v2683 = vadd.f32 %v2647, %v2595
      %v2684 = vadd.f32 %v2648, %v2598
      %v2685 = vadd.f32 %v2649, %v2603
      %v2686 = vadd.f32 %v2650, %v2606
      %v2687 = vadd.f32 %v2651, %v2611
      %v2688 = vadd.f32 %v2652, %v2614
      %2689 = vst [vmem:[#allocation3] sm:$0xff] %v2653
      %2690 = vst [vmem:[#allocation3 + $0x8] sm:$0xff] %v2654
      %2691 = vst [vmem:[#allocation3 + $0x10] sm:$0xff] %v2655
      %2692 = vst [vmem:[#allocation3 + $0x18] sm:$0xff] %v2656
      %2693 = vst [vmem:[#allocation3 + $0x20] sm:$0xff] %v2657
      %2694 = vst [vmem:[#allocation3 + $0x28] sm:$0xff] %v2658
      %2695 = vst [vmem:[#allocation3 + $0x30] sm:$0xff] %v2659
      %2696 = vst [vmem:[#allocation3 + $0x38] sm:$0xff] %v2660
      %2697 = vst [vmem:[#allocation3 + $0x40] sm:$0xff] %v2661
      %2698 = vst [vmem:[#allocation3 + $0x48] sm:$0xff] %v2662
      %2699 = vst [vmem:[#allocation3 + $0x50] sm:$0xff] %v2663
      %2700 = vst [vmem:[#allocation3 + $0x58] sm:$0xff] %v2664
      %2701 = vst [vmem:[#allocation3 + $0x60] sm:$0xff] %v2665
      %2702 = vst [vmem:[#allocation3 + $0x68] sm:$0xff] %v2666
      %2703 = vst [vmem:[#allocation3 + $0x70] sm:$0xff] %v2667
      %2704 = vst [vmem:[#allocation3 + $0x78] sm:$0xff] %v2668
      %2705 = vst [vmem:[#allocation3 + $0x80] sm:$0xff] %v2669
      %2706 = vst [vmem:[#allocation3 + $0x88] sm:$0xff] %v2670
      %2707 = vst [vmem:[#allocation3 + $0x90] sm:$0xff] %v2671
      %2708 = vst [vmem:[#allocation3 + $0x98] sm:$0xff] %v2672
      %2709 = vst [vmem:[#allocation3 + $0xa0] sm:$0xff] %v2673
      %2710 = vst [vmem:[#allocation3 + $0xa8] sm:$0xff] %v2674
      %2711 = vst [vmem:[#allocation3 + $0xb0] sm:$0xff] %v2675
      %2712 = vst [vmem:[#allocation3 + $0xb8] sm:$0xff] %v2676
      %2713 = vst [vmem:[#allocation3 + $0xc0] sm:$0xff] %v2677
      %2714 = vst [vmem:[#allocation3 + $0xc8] sm:$0xff] %v2678
      %2715 = vst [vmem:[#allocation3 + $0xd0] sm:$0xff] %v2679
      %2716 = vst [vmem:[#allocation3 + $0xd8] sm:$0xff] %v2680
      %2717 = vst [vmem:[#allocation3 + $0xe0] sm:$0xff] %v2681
      %2718 = vst [vmem:[#allocation3 + $0xe8] sm:$0xff] %v2682
      %2719 = vst [vmem:[#allocation3 + $0xf0] sm:$0xff] %v2683
      %2720 = vst [vmem:[#allocation3 + $0xf8] sm:$0xff] %v2684
      %2721 = vst [vmem:[#allocation3 + $0x100] sm:$0xff] %v2685
      %2722 = vst [vmem:[#allocation3 + $0x108] sm:$0xff] %v2686
      %2723 = vst [vmem:[#allocation3 + $0x110] sm:$0xff] %v2687
      %2724 = vst [vmem:[#allocation3 + $0x118] sm:$0xff] %v2688
      %v2725 = vld [vmem:[#allocation2 + $0x8] sm:$0xe]
      %v2726 = vld [vmem:[#allocation2 + $0xc] sm:$0xf]
      %v2727 = vld [vmem:[#allocation2 + $0x10] sm:$0xf]
      %v2728 = vld [vmem:[#allocation2 + $0x14] sm:$0xf]
      %v2729 = vld [vmem:[#allocation2 + $0x18] sm:$0xf]
      %v2730 = vld [vmem:[#allocation2 + $0x1c] sm:$0xf]
      %v2731 = vld [vmem:[#allocation2 + $0x20] sm:$0xf]
      %v2732 = vld [vmem:[#allocation2 + $0x24] sm:$0xf]
      %v2733 = vld [vmem:[#allocation2 + $0x28] sm:$0xf]
      %v2734 = vld [vmem:[#allocation2 + $0x2c] sm:$0xf]
      %v2735 = vld [vmem:[#allocation2 + $0x30] sm:$0xf]
      %v2736 = vld [vmem:[#allocation2 + $0x34] sm:$0xf]
      %v2737 = vld [vmem:[#allocation2 + $0x38] sm:$0xf]
      %v2738 = vld [vmem:[#allocation2 + $0x3c] sm:$0xf]
      %v2739 = vld [vmem:[#allocation2 + $0x40] sm:$0xf]
      %v2740 = vld [vmem:[#allocation2 + $0x44] sm:$0xf]
      %v2741 = vld [vmem:[#allocation2 + $0x48] sm:$0xf]
      %v2742 = vld [vmem:[#allocation2 + $0x4c] sm:$0xf]
      %v2743 = vld [vmem:[#allocation2 + $0x50] sm:$0xf]
      %v2744 = vld [vmem:[#allocation2 + $0x54] sm:$0xf]
      %v2745 = vld [vmem:[#allocation2 + $0x58] sm:$0xf]
      %v2746 = vld [vmem:[#allocation2 + $0x5c] sm:$0xf]
      %v2747 = vld [vmem:[#allocation2 + $0x60] sm:$0xf]
      %v2748 = vld [vmem:[#allocation2 + $0x64] sm:$0xf]
      %v2749 = vld [vmem:[#allocation2 + $0x68] sm:$0xf]
      %v2750 = vld [vmem:[#allocation2 + $0x6c] sm:$0xf]
      %v2751 = vld [vmem:[#allocation2 + $0x70] sm:$0xf]
      %v2752 = vld [vmem:[#allocation2 + $0x74] sm:$0xf]
      %v2753 = vld [vmem:[#allocation2 + $0x78] sm:$0xf]
      %v2754 = vld [vmem:[#allocation2 + $0x7c] sm:$0xf]
      %v2755 = vld [vmem:[#allocation2 + $0x80] sm:$0xf]
      %v2756 = vld [vmem:[#allocation2 + $0x84] sm:$0xf]
      %v2757 = vld [vmem:[#allocation2 + $0x88] sm:$0xf]
      %v2758 = vld [vmem:[#allocation2 + $0x8c] sm:$0xf]
      %v2759 = vld [vmem:[#allocation2 + $0x90] sm:$0xf]
      %v2760 = vld [vmem:[#allocation2 + $0x94] sm:$0xf]
      %v2761 = vld [vmem:[#allocation2 + $0x98] sm:$0x3]
      %s2762 = scalar_lea.vmem %s3, 192
      %v2763 = vld [vmem:[%s2762] sm:$0xf]
      %v2764 = vld [vmem:[%s2762 + $0x4] sm:$0xf]
      %v2765 = vld [vmem:[%s2762 + $0x8] sm:$0xf]
      %v2766 = vld [vmem:[%s2762 + $0xc] sm:$0xf]
      %v2767 = vld [vmem:[%s2762 + $0x10] sm:$0xf]
      %v2768 = vld [vmem:[%s2762 + $0x14] sm:$0xf]
      %v2769 = vld [vmem:[%s2762 + $0x18] sm:$0xf]
      %v2770 = vld [vmem:[%s2762 + $0x1c] sm:$0xf]
      %v2771 = vld [vmem:[%s2762 + $0x20] sm:$0xf]
      %v2772 = vld [vmem:[%s2762 + $0x24] sm:$0xf]
      %v2773 = vld [vmem:[%s2762 + $0x28] sm:$0xf]
      %v2774 = vld [vmem:[%s2762 + $0x2c] sm:$0xf]
      %v2775 = vld [vmem:[%s2762 + $0x30] sm:$0xf]
      %v2776 = vld [vmem:[%s2762 + $0x34] sm:$0xf]
      %v2777 = vld [vmem:[%s2762 + $0x38] sm:$0xf]
      %v2778 = vld [vmem:[%s2762 + $0x3c] sm:$0xf]
      %v2816 = vunpack.c.l.b16 %v2725
      %v2817 = vunpack.c.l.b16 %v2726
      %v2818 = vunpack.c.l.b16 %v2727
      %v2819 = vunpack.c.l.b16 %v2728
      %v2820 = vunpack.c.l.b16 %v2729
      %v2821 = vunpack.c.l.b16 %v2730
      %v2822 = vunpack.c.l.b16 %v2731
      %v2823 = vunpack.c.l.b16 %v2732
      %v2824 = vunpack.c.l.b16 %v2733
      %v2825 = vunpack.c.l.b16 %v2734
      %v2826 = vunpack.c.l.b16 %v2735
      %v2827 = vunpack.c.l.b16 %v2736
      %v2828 = vunpack.c.l.b16 %v2737
      %v2829 = vunpack.c.l.b16 %v2738
      %v2830 = vunpack.c.l.b16 %v2739
      %v2831 = vunpack.c.l.b16 %v2740
      %v2832 = vunpack.c.l.b16 %v2741
      %v2833 = vunpack.c.l.b16 %v2742
      %v2834 = vunpack.c.l.b16 %v2743
      %v2835 = vunpack.c.l.b16 %v2744
      %v2836 = vunpack.c.l.b16 %v2745
      %v2837 = vunpack.c.l.b16 %v2746
      %v2838 = vunpack.c.l.b16 %v2747
      %v2839 = vunpack.c.l.b16 %v2748
      %v2840 = vunpack.c.l.b16 %v2749
      %v2841 = vunpack.c.l.b16 %v2750
      %v2842 = vunpack.c.l.b16 %v2751
      %v2843 = vunpack.c.l.b16 %v2752
      %v2844 = vunpack.c.l.b16 %v2753
      %v2845 = vunpack.c.l.b16 %v2754
      %v2846 = vunpack.c.l.b16 %v2755
      %v2847 = vunpack.c.l.b16 %v2756
      %v2848 = vunpack.c.l.b16 %v2757
      %v2849 = vunpack.c.l.b16 %v2758
      %v2850 = vunpack.c.l.b16 %v2759
      %v2851 = vunpack.c.l.b16 %v2760
      %v2852 = vunpack.c.l.b16 %v2761
      %v2853 = vpack.c.b16 %v2817, %v2816
      %v2854 = vpack.c.b16 %v2819, %v2818
      %v2855 = vpack.c.b16 %v2821, %v2820
      %v2856 = vpack.c.b16 %v2823, %v2822
      %v2857 = vpack.c.b16 %v2825, %v2824
      %v2858 = vpack.c.b16 %v2827, %v2826
      %v2859 = vpack.c.b16 %v2829, %v2828
      %v2860 = vpack.c.b16 %v2831, %v2830
      %v2861 = vpack.c.b16 %v2833, %v2832
      %v2862 = vpack.c.b16 %v2835, %v2834
      %v2863 = vpack.c.b16 %v2837, %v2836
      %v2864 = vpack.c.b16 %v2839, %v2838
      %v2865 = vpack.c.b16 %v2841, %v2840
      %v2866 = vpack.c.b16 %v2843, %v2842
      %v2867 = vpack.c.b16 %v2845, %v2844
      %v2868 = vpack.c.b16 %v2847, %v2846
      %v2869 = vpack.c.b16 %v2849, %v2848
      %v2870 = vpack.c.b16 %v2851, %v2850
      %v2871 = vpack.c.b16 %v2852, %v2852
      %v2873 = vshrl.u32 %v2853, 16
      %v2875 = vrot.slane %v2873, 1
      %v2876 = vshll.u32 %v2853, 16
      %v2878 = vrot.slane %v2876, 2
      %v2879 = vor.u32 %v2875, %v2878
      %v2881 = vshrl.u32 %v2854, 16
      %v2883 = vrot.slane %v2881, 1
      %v2884 = vshll.u32 %v2854, 16
      %v2886 = vrot.slane %v2884, 2
      %v2887 = vor.u32 %v2883, %v2886
      %v2888 = vsel %vm2203, %v2879, %v2887
      %v2890 = vshrl.u32 %v2855, 16
      %v2892 = vrot.slane %v2890, 1
      %v2893 = vshll.u32 %v2855, 16
      %v2895 = vrot.slane %v2893, 2
      %v2896 = vor.u32 %v2892, %v2895
      %v2897 = vsel %vm2203, %v2887, %v2896
      %v2899 = vshrl.u32 %v2856, 16
      %v2901 = vrot.slane %v2899, 1
      %v2902 = vshll.u32 %v2856, 16
      %v2904 = vrot.slane %v2902, 2
      %v2905 = vor.u32 %v2901, %v2904
      %v2906 = vsel %vm2203, %v2896, %v2905
      %v2908 = vshrl.u32 %v2857, 16
      %v2910 = vrot.slane %v2908, 1
      %v2911 = vshll.u32 %v2857, 16
      %v2913 = vrot.slane %v2911, 2
      %v2914 = vor.u32 %v2910, %v2913
      %v2915 = vsel %vm2203, %v2905, %v2914
      %v2917 = vshrl.u32 %v2858, 16
      %v2919 = vrot.slane %v2917, 1
      %v2920 = vshll.u32 %v2858, 16
      %v2922 = vrot.slane %v2920, 2
      %v2923 = vor.u32 %v2919, %v2922
      %v2924 = vsel %vm2203, %v2914, %v2923
      %v2926 = vshrl.u32 %v2859, 16
      %v2928 = vrot.slane %v2926, 1
      %v2929 = vshll.u32 %v2859, 16
      %v2931 = vrot.slane %v2929, 2
      %v2932 = vor.u32 %v2928, %v2931
      %v2933 = vsel %vm2203, %v2923, %v2932
      %v2935 = vshrl.u32 %v2860, 16
      %v2937 = vrot.slane %v2935, 1
      %v2938 = vshll.u32 %v2860, 16
      %v2940 = vrot.slane %v2938, 2
      %v2941 = vor.u32 %v2937, %v2940
      %v2942 = vsel %vm2203, %v2932, %v2941
      %v2944 = vshrl.u32 %v2861, 16
      %v2946 = vrot.slane %v2944, 1
      %v2947 = vshll.u32 %v2861, 16
      %v2949 = vrot.slane %v2947, 2
      %v2950 = vor.u32 %v2946, %v2949
      %v2951 = vsel %vm2203, %v2941, %v2950
      %v2953 = vshrl.u32 %v2862, 16
      %v2955 = vrot.slane %v2953, 1
      %v2956 = vshll.u32 %v2862, 16
      %v2958 = vrot.slane %v2956, 2
      %v2959 = vor.u32 %v2955, %v2958
      %v2960 = vsel %vm2203, %v2950, %v2959
      %v2962 = vshrl.u32 %v2863, 16
      %v2964 = vrot.slane %v2962, 1
      %v2965 = vshll.u32 %v2863, 16
      %v2967 = vrot.slane %v2965, 2
      %v2968 = vor.u32 %v2964, %v2967
      %v2969 = vsel %vm2203, %v2959, %v2968
      %v2971 = vshrl.u32 %v2864, 16
      %v2973 = vrot.slane %v2971, 1
      %v2974 = vshll.u32 %v2864, 16
      %v2976 = vrot.slane %v2974, 2
      %v2977 = vor.u32 %v2973, %v2976
      %v2978 = vsel %vm2203, %v2968, %v2977
      %v2980 = vshrl.u32 %v2865, 16
      %v2982 = vrot.slane %v2980, 1
      %v2983 = vshll.u32 %v2865, 16
      %v2985 = vrot.slane %v2983, 2
      %v2986 = vor.u32 %v2982, %v2985
      %v2987 = vsel %vm2203, %v2977, %v2986
      %v2989 = vshrl.u32 %v2866, 16
      %v2991 = vrot.slane %v2989, 1
      %v2992 = vshll.u32 %v2866, 16
      %v2994 = vrot.slane %v2992, 2
      %v2995 = vor.u32 %v2991, %v2994
      %v2996 = vsel %vm2203, %v2986, %v2995
      %v2998 = vshrl.u32 %v2867, 16
      %v3000 = vrot.slane %v2998, 1
      %v3001 = vshll.u32 %v2867, 16
      %v3003 = vrot.slane %v3001, 2
      %v3004 = vor.u32 %v3000, %v3003
      %v3005 = vsel %vm2203, %v2995, %v3004
      %v3007 = vshrl.u32 %v2868, 16
      %v3009 = vrot.slane %v3007, 1
      %v3010 = vshll.u32 %v2868, 16
      %v3012 = vrot.slane %v3010, 2
      %v3013 = vor.u32 %v3009, %v3012
      %v3014 = vsel %vm2203, %v3004, %v3013
      %v3016 = vshrl.u32 %v2869, 16
      %v3018 = vrot.slane %v3016, 1
      %v3019 = vshll.u32 %v2869, 16
      %v3021 = vrot.slane %v3019, 2
      %v3022 = vor.u32 %v3018, %v3021
      %v3023 = vsel %vm2203, %v3013, %v3022
      %v3025 = vshrl.u32 %v2870, 16
      %v3027 = vrot.slane %v3025, 1
      %v3028 = vshll.u32 %v2870, 16
      %v3030 = vrot.slane %v3028, 2
      %v3031 = vor.u32 %v3027, %v3030
      %v3032 = vsel %vm2203, %v3022, %v3031
      %v3034 = vshrl.u32 %v2871, 16
      %v3036 = vrot.slane %v3034, 1
      %v3037 = vshll.u32 %v2871, 16
      %v3039 = vrot.slane %v3037, 2
      %v3040 = vor.u32 %v3036, %v3039
      %v3041 = vsel %vm2203, %v3031, %v3040
      %v3076 = vunpack.c.l.b16 %v2763
      %v3077 = vunpack.c.l.b16 %v2764
      %v3078 = vunpack.c.l.b16 %v2765
      %v3079 = vunpack.c.l.b16 %v2766
      %v3080 = vunpack.c.l.b16 %v2767
      %v3081 = vunpack.c.l.b16 %v2768
      %v3082 = vunpack.c.l.b16 %v2769
      %v3083 = vunpack.c.l.b16 %v2770
      %v3084 = vunpack.c.l.b16 %v2771
      %v3085 = vunpack.c.l.b16 %v2772
      %v3086 = vunpack.c.l.b16 %v2773
      %v3087 = vunpack.c.l.b16 %v2774
      %v3088 = vunpack.c.l.b16 %v2775
      %v3089 = vunpack.c.l.b16 %v2776
      %v3090 = vunpack.c.l.b16 %v2777
      %v3091 = vunpack.c.l.b16 %v2778
      %v3092 = vpack.c.b16 %v3077, %v3076
      %v3093 = vpack.c.b16 %v3079, %v3078
      %v3094 = vpack.c.b16 %v3081, %v3080
      %v3095 = vpack.c.b16 %v3083, %v3082
      %v3096 = vpack.c.b16 %v3085, %v3084
      %v3097 = vpack.c.b16 %v3087, %v3086
      %v3098 = vpack.c.b16 %v3089, %v3088
      %v3099 = vpack.c.b16 %v3091, %v3090
      %3108 = vmatprep.subr.bf16.mxu0 0
      %3109 = vmatpush1.bf16.msra.mxu0 %v3092
      %3110 = vmatprep.subr.bf16.mxu0 0
      %3111 = vmatpush1.bf16.msra.mxu0 %v3093
      %3112 = vmatprep.subr.bf16.mxu0 0
      %3113 = vmatpush1.bf16.msra.mxu0 %v3094
      %3114 = vmatprep.subr.bf16.mxu0 0
      %3115 = vmatpush1.bf16.msra.mxu0 %v3095
      %3116 = vmatprep.subr.bf16.mxu0 0
      %3117 = vmatpush1.bf16.msra.mxu0 %v3096
      %3118 = vmatprep.subr.bf16.mxu0 0
      %3119 = vmatpush1.bf16.msra.mxu0 %v3097
      %3120 = vmatprep.subr.bf16.mxu0 0
      %3121 = vmatpush1.bf16.msra.mxu0 %v3098
      %3122 = vmatprep.subr.bf16.mxu0 0
      %3123 = vmatpush1.bf16.msra.mxu0 %v3099
      %3124 = vmatprep.subr.bf16.mxu0 0
      %3125 = vmatpush1.bf16.msra.mxu0 0
      %3126 = vmatprep.subr.bf16.mxu0 0
      %3127 = vmatpush1.bf16.msra.mxu0 0
      %3128 = vmatprep.subr.bf16.mxu0 0
      %3129 = vmatpush1.bf16.msra.mxu0 0
      %3130 = vmatprep.subr.bf16.mxu0 0
      %3131 = vmatpush1.bf16.msra.mxu0 0
      %3132 = vmatprep.subr.bf16.mxu0 0
      %3133 = vmatpush1.bf16.msra.mxu0 0
      %3134 = vmatprep.subr.bf16.mxu0 0
      %3135 = vmatpush1.bf16.msra.mxu0 0
      %3136 = vmatprep.subr.bf16.mxu0 0
      %3137 = vmatpush1.bf16.msra.mxu0 0
      %3138 = vmatprep.subr.bf16.mxu0 0
      %3139 = vmatpush1.bf16.msra.mxu0 0
      %3140 = vmatprep.mubr.bf16.mxu0 0
      %3141 = vmatmul.mubr.bf16.gmra.mrb[0].mxu0 %v2888
      %v3142 = vpop.f32.mrb[0].mxu0
      %v3143 = vadd.f32 0.0, %v3142
      %v3144 = vpop.f32.mrb[0].mxu0
      %v3145 = vpop.f32.mrb[0].mxu0
      %v3146 = vadd.f32 0.0, %v3145
      %v3147 = vpop.f32.mrb[0].mxu0
      %3148 = vmatprep.mubr.bf16.mxu0 0
      %3149 = vmatmul.mubr.bf16.gmra.mrb[0].mxu0 %v2897
      %v3150 = vpop.f32.mrb[0].mxu0
      %v3151 = vadd.f32 0.0, %v3150
      %v3152 = vpop.f32.mrb[0].mxu0
      %v3153 = vpop.f32.mrb[0].mxu0
      %v3154 = vadd.f32 0.0, %v3153
      %v3155 = vpop.f32.mrb[0].mxu0
      %3156 = vmatprep.mubr.bf16.mxu0 0
      %3157 = vmatmul.mubr.bf16.gmra.mrb[0].mxu0 %v2906
      %v3158 = vpop.f32.mrb[0].mxu0
      %v3159 = vadd.f32 0.0, %v3158
      %v3160 = vpop.f32.mrb[0].mxu0
      %v3161 = vpop.f32.mrb[0].mxu0
      %v3162 = vadd.f32 0.0, %v3161
      %v3163 = vpop.f32.mrb[0].mxu0
      %3164 = vmatprep.mubr.bf16.mxu0 0
      %3165 = vmatmul.mubr.bf16.gmra.mrb[0].mxu0 %v2915
      %v3166 = vpop.f32.mrb[0].mxu0
      %v3167 = vadd.f32 0.0, %v3166
      %v3168 = vpop.f32.mrb[0].mxu0
      %v3169 = vpop.f32.mrb[0].mxu0
      %v3170 = vadd.f32 0.0, %v3169
      %v3171 = vpop.f32.mrb[0].mxu0
      %3172 = vmatprep.mubr.bf16.mxu0 0
      %3173 = vmatmul.mubr.bf16.gmra.mrb[0].mxu0 %v2924
      %v3174 = vpop.f32.mrb[0].mxu0
      %v3175 = vadd.f32 0.0, %v3174
      %v3176 = vpop.f32.mrb[0].mxu0
      %v3177 = vpop.f32.mrb[0].mxu0
      %v3178 = vadd.f32 0.0, %v3177
      %v3179 = vpop.f32.mrb[0].mxu0
      %3180 = vmatprep.mubr.bf16.mxu0 0
      %3181 = vmatmul.mubr.bf16.gmra.mrb[0].mxu0 %v2933
      %v3182 = vpop.f32.mrb[0].mxu0
      %v3183 = vadd.f32 0.0, %v3182
      %v3184 = vpop.f32.mrb[0].mxu0
      %v3185 = vpop.f32.mrb[0].mxu0
      %v3186 = vadd.f32 0.0, %v3185
      %v3187 = vpop.f32.mrb[0].mxu0
      %3188 = vmatprep.mubr.bf16.mxu0 0
      %3189 = vmatmul.mubr.bf16.gmra.mrb[0].mxu0 %v2942
      %v3190 = vpop.f32.mrb[0].mxu0
      %v3191 = vadd.f32 0.0, %v3190
      %v3192 = vpop.f32.mrb[0].mxu0
      %v3193 = vpop.f32.mrb[0].mxu0
      %v3194 = vadd.f32 0.0, %v3193
      %v3195 = vpop.f32.mrb[0].mxu0
      %3196 = vmatprep.mubr.bf16.mxu0 0
      %3197 = vmatmul.mubr.bf16.gmra.mrb[0].mxu0 %v2951
      %v3198 = vpop.f32.mrb[0].mxu0
      %v3199 = vadd.f32 0.0, %v3198
      %v3200 = vpop.f32.mrb[0].mxu0
      %v3201 = vpop.f32.mrb[0].mxu0
      %v3202 = vadd.f32 0.0, %v3201
      %v3203 = vpop.f32.mrb[0].mxu0
      %3204 = vmatprep.mubr.bf16.mxu0 0
      %3205 = vmatmul.mubr.bf16.gmra.mrb[0].mxu0 %v2960
      %v3206 = vpop.f32.mrb[0].mxu0
      %v3207 = vadd.f32 0.0, %v3206
      %v3208 = vpop.f32.mrb[0].mxu0
      %v3209 = vpop.f32.mrb[0].mxu0
      %v3210 = vadd.f32 0.0, %v3209
      %v3211 = vpop.f32.mrb[0].mxu0
      %3212 = vmatprep.mubr.bf16.mxu0 0
      %3213 = vmatmul.mubr.bf16.gmra.mrb[0].mxu0 %v2969
      %v3214 = vpop.f32.mrb[0].mxu0
      %v3215 = vadd.f32 0.0, %v3214
      %v3216 = vpop.f32.mrb[0].mxu0
      %v3217 = vpop.f32.mrb[0].mxu0
      %v3218 = vadd.f32 0.0, %v3217
      %v3219 = vpop.f32.mrb[0].mxu0
      %3220 = vmatprep.mubr.bf16.mxu0 0
      %3221 = vmatmul.mubr.bf16.gmra.mrb[0].mxu0 %v2978
      %v3222 = vpop.f32.mrb[0].mxu0
      %v3223 = vadd.f32 0.0, %v3222
      %v3224 = vpop.f32.mrb[0].mxu0
      %v3225 = vpop.f32.mrb[0].mxu0
      %v3226 = vadd.f32 0.0, %v3225
      %v3227 = vpop.f32.mrb[0].mxu0
      %3228 = vmatprep.mubr.bf16.mxu0 0
      %3229 = vmatmul.mubr.bf16.gmra.mrb[0].mxu0 %v2987
      %v3230 = vpop.f32.mrb[0].mxu0
      %v3231 = vadd.f32 0.0, %v3230
      %v3232 = vpop.f32.mrb[0].mxu0
      %v3233 = vpop.f32.mrb[0].mxu0
      %v3234 = vadd.f32 0.0, %v3233
      %v3235 = vpop.f32.mrb[0].mxu0
      %3236 = vmatprep.mubr.bf16.mxu0 0
      %3237 = vmatmul.mubr.bf16.gmra.mrb[0].mxu0 %v2996
      %v3238 = vpop.f32.mrb[0].mxu0
      %v3239 = vadd.f32 0.0, %v3238
      %v3240 = vpop.f32.mrb[0].mxu0
      %v3241 = vpop.f32.mrb[0].mxu0
      %v3242 = vadd.f32 0.0, %v3241
      %v3243 = vpop.f32.mrb[0].mxu0
      %3244 = vmatprep.mubr.bf16.mxu0 0
      %3245 = vmatmul.mubr.bf16.gmra.mrb[0].mxu0 %v3005
      %v3246 = vpop.f32.mrb[0].mxu0
      %v3247 = vadd.f32 0.0, %v3246
      %v3248 = vpop.f32.mrb[0].mxu0
      %v3249 = vpop.f32.mrb[0].mxu0
      %v3250 = vadd.f32 0.0, %v3249
      %v3251 = vpop.f32.mrb[0].mxu0
      %3252 = vmatprep.mubr.bf16.mxu0 0
      %3253 = vmatmul.mubr.bf16.gmra.mrb[0].mxu0 %v3014
      %v3254 = vpop.f32.mrb[0].mxu0
      %v3255 = vadd.f32 0.0, %v3254
      %v3256 = vpop.f32.mrb[0].mxu0
      %v3257 = vpop.f32.mrb[0].mxu0
      %v3258 = vadd.f32 0.0, %v3257
      %v3259 = vpop.f32.mrb[0].mxu0
      %3260 = vmatprep.mubr.bf16.mxu0 0
      %3261 = vmatmul.mubr.bf16.gmra.mrb[0].mxu0 %v3023
      %v3262 = vpop.f32.mrb[0].mxu0
      %v3263 = vadd.f32 0.0, %v3262
      %v3264 = vpop.f32.mrb[0].mxu0
      %v3265 = vpop.f32.mrb[0].mxu0
      %v3266 = vadd.f32 0.0, %v3265
      %v3267 = vpop.f32.mrb[0].mxu0
      %3268 = vmatprep.mubr.bf16.mxu0 0
      %3269 = vmatmul.mubr.bf16.gmra.mrb[0].mxu0 %v3032
      %v3270 = vpop.f32.mrb[0].mxu0
      %v3271 = vadd.f32 0.0, %v3270
      %v3272 = vpop.f32.mrb[0].mxu0
      %v3273 = vpop.f32.mrb[0].mxu0
      %v3274 = vadd.f32 0.0, %v3273
      %v3275 = vpop.f32.mrb[0].mxu0
      %3276 = vmatprep.mubr.bf16.mxu0 0
      %3277 = vmatmul.mubr.bf16.gmra.mrb[0].mxu0 %v3041
      %v3278 = vpop.f32.mrb[0].mxu0
      %v3279 = vadd.f32 0.0, %v3278
      %v3280 = vpop.f32.mrb[0].mxu0
      %v3281 = vpop.f32.mrb[0].mxu0
      %v3282 = vadd.f32 0.0, %v3281
      %v3283 = vpop.f32.mrb[0].mxu0
      %3284 = vdwg.mxu0
      %v3285 = vld [vmem:[#allocation3] sm:$0xff]
      %v3286 = vld [vmem:[#allocation3 + $0x8] sm:$0xff]
      %v3287 = vld [vmem:[#allocation3 + $0x10] sm:$0xff]
      %v3288 = vld [vmem:[#allocation3 + $0x18] sm:$0xff]
      %v3289 = vld [vmem:[#allocation3 + $0x20] sm:$0xff]
      %v3290 = vld [vmem:[#allocation3 + $0x28] sm:$0xff]
      %v3291 = vld [vmem:[#allocation3 + $0x30] sm:$0xff]
      %v3292 = vld [vmem:[#allocation3 + $0x38] sm:$0xff]
      %v3293 = vld [vmem:[#allocation3 + $0x40] sm:$0xff]
      %v3294 = vld [vmem:[#allocation3 + $0x48] sm:$0xff]
      %v3295 = vld [vmem:[#allocation3 + $0x50] sm:$0xff]
      %v3296 = vld [vmem:[#allocation3 + $0x58] sm:$0xff]
      %v3297 = vld [vmem:[#allocation3 + $0x60] sm:$0xff]
      %v3298 = vld [vmem:[#allocation3 + $0x68] sm:$0xff]
      %v3299 = vld [vmem:[#allocation3 + $0x70] sm:$0xff]
      %v3300 = vld [vmem:[#allocation3 + $0x78] sm:$0xff]
      %v3301 = vld [vmem:[#allocation3 + $0x80] sm:$0xff]
      %v3302 = vld [vmem:[#allocation3 + $0x88] sm:$0xff]
      %v3303 = vld [vmem:[#allocation3 + $0x90] sm:$0xff]
      %v3304 = vld [vmem:[#allocation3 + $0x98] sm:$0xff]
      %v3305 = vld [vmem:[#allocation3 + $0xa0] sm:$0xff]
      %v3306 = vld [vmem:[#allocation3 + $0xa8] sm:$0xff]
      %v3307 = vld [vmem:[#allocation3 + $0xb0] sm:$0xff]
      %v3308 = vld [vmem:[#allocation3 + $0xb8] sm:$0xff]
      %v3309 = vld [vmem:[#allocation3 + $0xc0] sm:$0xff]
      %v3310 = vld [vmem:[#allocation3 + $0xc8] sm:$0xff]
      %v3311 = vld [vmem:[#allocation3 + $0xd0] sm:$0xff]
      %v3312 = vld [vmem:[#allocation3 + $0xd8] sm:$0xff]
      %v3313 = vld [vmem:[#allocation3 + $0xe0] sm:$0xff]
      %v3314 = vld [vmem:[#allocation3 + $0xe8] sm:$0xff]
      %v3315 = vld [vmem:[#allocation3 + $0xf0] sm:$0xff]
      %v3316 = vld [vmem:[#allocation3 + $0xf8] sm:$0xff]
      %v3317 = vld [vmem:[#allocation3 + $0x100] sm:$0xff]
      %v3318 = vld [vmem:[#allocation3 + $0x108] sm:$0xff]
      %v3319 = vld [vmem:[#allocation3 + $0x110] sm:$0xff]
      %v3320 = vld [vmem:[#allocation3 + $0x118] sm:$0xff]
      %v3321 = vadd.f32 %v3285, %v3143
      %v3322 = vadd.f32 %v3286, %v3146
      %v3323 = vadd.f32 %v3287, %v3151
      %v3324 = vadd.f32 %v3288, %v3154
      %v3325 = vadd.f32 %v3289, %v3159
      %v3326 = vadd.f32 %v3290, %v3162
      %v3327 = vadd.f32 %v3291, %v3167
      %v3328 = vadd.f32 %v3292, %v3170
      %v3329 = vadd.f32 %v3293, %v3175
      %v3330 = vadd.f32 %v3294, %v3178
      %v3331 = vadd.f32 %v3295, %v3183
      %v3332 = vadd.f32 %v3296, %v3186
      %v3333 = vadd.f32 %v3297, %v3191
      %v3334 = vadd.f32 %v3298, %v3194
      %v3335 = vadd.f32 %v3299, %v3199
      %v3336 = vadd.f32 %v3300, %v3202
      %v3337 = vadd.f32 %v3301, %v3207
      %v3338 = vadd.f32 %v3302, %v3210
      %v3339 = vadd.f32 %v3303, %v3215
      %v3340 = vadd.f32 %v3304, %v3218
      %v3341 = vadd.f32 %v3305, %v3223
      %v3342 = vadd.f32 %v3306, %v3226
      %v3343 = vadd.f32 %v3307, %v3231
      %v3344 = vadd.f32 %v3308, %v3234
      %v3345 = vadd.f32 %v3309, %v3239
      %v3346 = vadd.f32 %v3310, %v3242
      %v3347 = vadd.f32 %v3311, %v3247
      %v3348 = vadd.f32 %v3312, %v3250
      %v3349 = vadd.f32 %v3313, %v3255
      %v3350 = vadd.f32 %v3314, %v3258
      %v3351 = vadd.f32 %v3315, %v3263
      %v3352 = vadd.f32 %v3316, %v3266
      %v3353 = vadd.f32 %v3317, %v3271
      %v3354 = vadd.f32 %v3318, %v3274
      %v3355 = vadd.f32 %v3319, %v3279
      %v3356 = vadd.f32 %v3320, %v3282
      %3357 = vst [vmem:[#allocation3] sm:$0xff] %v3321
      %3358 = vst [vmem:[#allocation3 + $0x8] sm:$0xff] %v3322
      %3359 = vst [vmem:[#allocation3 + $0x10] sm:$0xff] %v3323
      %3360 = vst [vmem:[#allocation3 + $0x18] sm:$0xff] %v3324
      %3361 = vst [vmem:[#allocation3 + $0x20] sm:$0xff] %v3325
      %3362 = vst [vmem:[#allocation3 + $0x28] sm:$0xff] %v3326
      %3363 = vst [vmem:[#allocation3 + $0x30] sm:$0xff] %v3327
      %3364 = vst [vmem:[#allocation3 + $0x38] sm:$0xff] %v3328
      %3365 = vst [vmem:[#allocation3 + $0x40] sm:$0xff] %v3329
      %3366 = vst [vmem:[#allocation3 + $0x48] sm:$0xff] %v3330
      %3367 = vst [vmem:[#allocation3 + $0x50] sm:$0xff] %v3331
      %3368 = vst [vmem:[#allocation3 + $0x58] sm:$0xff] %v3332
      %3369 = vst [vmem:[#allocation3 + $0x60] sm:$0xff] %v3333
      %3370 = vst [vmem:[#allocation3 + $0x68] sm:$0xff] %v3334
      %3371 = vst [vmem:[#allocation3 + $0x70] sm:$0xff] %v3335
      %3372 = vst [vmem:[#allocation3 + $0x78] sm:$0xff] %v3336
      %3373 = vst [vmem:[#allocation3 + $0x80] sm:$0xff] %v3337
      %3374 = vst [vmem:[#allocation3 + $0x88] sm:$0xff] %v3338
      %3375 = vst [vmem:[#allocation3 + $0x90] sm:$0xff] %v3339
      %3376 = vst [vmem:[#allocation3 + $0x98] sm:$0xff] %v3340
      %3377 = vst [vmem:[#allocation3 + $0xa0] sm:$0xff] %v3341
      %3378 = vst [vmem:[#allocation3 + $0xa8] sm:$0xff] %v3342
      %3379 = vst [vmem:[#allocation3 + $0xb0] sm:$0xff] %v3343
      %3380 = vst [vmem:[#allocation3 + $0xb8] sm:$0xff] %v3344
      %3381 = vst [vmem:[#allocation3 + $0xc0] sm:$0xff] %v3345
      %3382 = vst [vmem:[#allocation3 + $0xc8] sm:$0xff] %v3346
      %3383 = vst [vmem:[#allocation3 + $0xd0] sm:$0xff] %v3347
      %3384 = vst [vmem:[#allocation3 + $0xd8] sm:$0xff] %v3348
      %3385 = vst [vmem:[#allocation3 + $0xe0] sm:$0xff] %v3349
      %3386 = vst [vmem:[#allocation3 + $0xe8] sm:$0xff] %v3350
      %3387 = vst [vmem:[#allocation3 + $0xf0] sm:$0xff] %v3351
      %3388 = vst [vmem:[#allocation3 + $0xf8] sm:$0xff] %v3352
      %3389 = vst [vmem:[#allocation3 + $0x100] sm:$0xff] %v3353
      %3390 = vst [vmem:[#allocation3 + $0x108] sm:$0xff] %v3354
      %3391 = vst [vmem:[#allocation3 + $0x110] sm:$0xff] %v3355
      %3392 = vst [vmem:[#allocation3 + $0x118] sm:$0xff] %v3356
      %v3393 = vld [vmem:[#allocation2 + $0x8] sm:$0xc]
      %v3394 = vld [vmem:[#allocation2 + $0xc] sm:$0xf]
      %v3395 = vld [vmem:[#allocation2 + $0x10] sm:$0xf]
      %v3396 = vld [vmem:[#allocation2 + $0x14] sm:$0xf]
      %v3397 = vld [vmem:[#allocation2 + $0x18] sm:$0xf]
      %v3398 = vld [vmem:[#allocation2 + $0x1c] sm:$0xf]
      %v3399 = vld [vmem:[#allocation2 + $0x20] sm:$0xf]
      %v3400 = vld [vmem:[#allocation2 + $0x24] sm:$0xf]
      %v3401 = vld [vmem:[#allocation2 + $0x28] sm:$0xf]
      %v3402 = vld [vmem:[#allocation2 + $0x2c] sm:$0xf]
      %v3403 = vld [vmem:[#allocation2 + $0x30] sm:$0xf]
      %v3404 = vld [vmem:[#allocation2 + $0x34] sm:$0xf]
      %v3405 = vld [vmem:[#allocation2 + $0x38] sm:$0xf]
      %v3406 = vld [vmem:[#allocation2 + $0x3c] sm:$0xf]
      %v3407 = vld [vmem:[#allocation2 + $0x40] sm:$0xf]
      %v3408 = vld [vmem:[#allocation2 + $0x44] sm:$0xf]
      %v3409 = vld [vmem:[#allocation2 + $0x48] sm:$0xf]
      %v3410 = vld [vmem:[#allocation2 + $0x4c] sm:$0xf]
      %v3411 = vld [vmem:[#allocation2 + $0x50] sm:$0xf]
      %v3412 = vld [vmem:[#allocation2 + $0x54] sm:$0xf]
      %v3413 = vld [vmem:[#allocation2 + $0x58] sm:$0xf]
      %v3414 = vld [vmem:[#allocation2 + $0x5c] sm:$0xf]
      %v3415 = vld [vmem:[#allocation2 + $0x60] sm:$0xf]
      %v3416 = vld [vmem:[#allocation2 + $0x64] sm:$0xf]
      %v3417 = vld [vmem:[#allocation2 + $0x68] sm:$0xf]
      %v3418 = vld [vmem:[#allocation2 + $0x6c] sm:$0xf]
      %v3419 = vld [vmem:[#allocation2 + $0x70] sm:$0xf]
      %v3420 = vld [vmem:[#allocation2 + $0x74] sm:$0xf]
      %v3421 = vld [vmem:[#allocation2 + $0x78] sm:$0xf]
      %v3422 = vld [vmem:[#allocation2 + $0x7c] sm:$0xf]
      %v3423 = vld [vmem:[#allocation2 + $0x80] sm:$0xf]
      %v3424 = vld [vmem:[#allocation2 + $0x84] sm:$0xf]
      %v3425 = vld [vmem:[#allocation2 + $0x88] sm:$0xf]
      %v3426 = vld [vmem:[#allocation2 + $0x8c] sm:$0xf]
      %v3427 = vld [vmem:[#allocation2 + $0x90] sm:$0xf]
      %v3428 = vld [vmem:[#allocation2 + $0x94] sm:$0xf]
      %v3429 = vld [vmem:[#allocation2 + $0x98] sm:$0x3]
      %s3430 = scalar_lea.vmem %s3, 256
      %v3431 = vld [vmem:[%s3430] sm:$0xf]
      %v3432 = vld [vmem:[%s3430 + $0x4] sm:$0xf]
      %v3433 = vld [vmem:[%s3430 + $0x8] sm:$0xf]
      %v3434 = vld [vmem:[%s3430 + $0xc] sm:$0xf]
      %v3435 = vld [vmem:[%s3430 + $0x10] sm:$0xf]
      %v3436 = vld [vmem:[%s3430 + $0x14] sm:$0xf]
      %v3437 = vld [vmem:[%s3430 + $0x18] sm:$0xf]
      %v3438 = vld [vmem:[%s3430 + $0x1c] sm:$0xf]
      %v3439 = vld [vmem:[%s3430 + $0x20] sm:$0xf]
      %v3440 = vld [vmem:[%s3430 + $0x24] sm:$0xf]
      %v3441 = vld [vmem:[%s3430 + $0x28] sm:$0xf]
      %v3442 = vld [vmem:[%s3430 + $0x2c] sm:$0xf]
      %v3443 = vld [vmem:[%s3430 + $0x30] sm:$0xf]
      %v3444 = vld [vmem:[%s3430 + $0x34] sm:$0xf]
      %v3445 = vld [vmem:[%s3430 + $0x38] sm:$0xf]
      %v3446 = vld [vmem:[%s3430 + $0x3c] sm:$0xf]
      %v3484 = vunpack.c.l.b16 %v3393
      %v3485 = vunpack.c.l.b16 %v3394
      %v3486 = vunpack.c.l.b16 %v3395
      %v3487 = vunpack.c.l.b16 %v3396
      %v3488 = vunpack.c.l.b16 %v3397
      %v3489 = vunpack.c.l.b16 %v3398
      %v3490 = vunpack.c.l.b16 %v3399
      %v3491 = vunpack.c.l.b16 %v3400
      %v3492 = vunpack.c.l.b16 %v3401
      %v3493 = vunpack.c.l.b16 %v3402
      %v3494 = vunpack.c.l.b16 %v3403
      %v3495 = vunpack.c.l.b16 %v3404
      %v3496 = vunpack.c.l.b16 %v3405
      %v3497 = vunpack.c.l.b16 %v3406
      %v3498 = vunpack.c.l.b16 %v3407
      %v3499 = vunpack.c.l.b16 %v3408
      %v3500 = vunpack.c.l.b16 %v3409
      %v3501 = vunpack.c.l.b16 %v3410
      %v3502 = vunpack.c.l.b16 %v3411
      %v3503 = vunpack.c.l.b16 %v3412
      %v3504 = vunpack.c.l.b16 %v3413
      %v3505 = vunpack.c.l.b16 %v3414
      %v3506 = vunpack.c.l.b16 %v3415
      %v3507 = vunpack.c.l.b16 %v3416
      %v3508 = vunpack.c.l.b16 %v3417
      %v3509 = vunpack.c.l.b16 %v3418
      %v3510 = vunpack.c.l.b16 %v3419
      %v3511 = vunpack.c.l.b16 %v3420
      %v3512 = vunpack.c.l.b16 %v3421
      %v3513 = vunpack.c.l.b16 %v3422
      %v3514 = vunpack.c.l.b16 %v3423
      %v3515 = vunpack.c.l.b16 %v3424
      %v3516 = vunpack.c.l.b16 %v3425
      %v3517 = vunpack.c.l.b16 %v3426
      %v3518 = vunpack.c.l.b16 %v3427
      %v3519 = vunpack.c.l.b16 %v3428
      %v3520 = vunpack.c.l.b16 %v3429
      %v3521 = vpack.c.b16 %v3485, %v3484
      %v3522 = vpack.c.b16 %v3487, %v3486
      %v3523 = vpack.c.b16 %v3489, %v3488
      %v3524 = vpack.c.b16 %v3491, %v3490
      %v3525 = vpack.c.b16 %v3493, %v3492
      %v3526 = vpack.c.b16 %v3495, %v3494
      %v3527 = vpack.c.b16 %v3497, %v3496
      %v3528 = vpack.c.b16 %v3499, %v3498
      %v3529 = vpack.c.b16 %v3501, %v3500
      %v3530 = vpack.c.b16 %v3503, %v3502
      %v3531 = vpack.c.b16 %v3505, %v3504
      %v3532 = vpack.c.b16 %v3507, %v3506
      %v3533 = vpack.c.b16 %v3509, %v3508
      %v3534 = vpack.c.b16 %v3511, %v3510
      %v3535 = vpack.c.b16 %v3513, %v3512
      %v3536 = vpack.c.b16 %v3515, %v3514
      %v3537 = vpack.c.b16 %v3517, %v3516
      %v3538 = vpack.c.b16 %v3519, %v3518
      %v3539 = vpack.c.b16 %v3520, %v3520
      %vm3540 = vcmask 1045504
      %v3541 = vrot.slane %v3521, 2
      %v3542 = vrot.slane %v3522, 2
      %v3543 = vsel %vm3540, %v3541, %v3542
      %v3544 = vrot.slane %v3523, 2
      %v3545 = vsel %vm3540, %v3542, %v3544
      %v3546 = vrot.slane %v3524, 2
      %v3547 = vsel %vm3540, %v3544, %v3546
      %v3548 = vrot.slane %v3525, 2
      %v3549 = vsel %vm3540, %v3546, %v3548
      %v3550 = vrot.slane %v3526, 2
      %v3551 = vsel %vm3540, %v3548, %v3550
      %v3552 = vrot.slane %v3527, 2
      %v3553 = vsel %vm3540, %v3550, %v3552
      %v3554 = vrot.slane %v3528, 2
      %v3555 = vsel %vm3540, %v3552, %v3554
      %v3556 = vrot.slane %v3529, 2
      %v3557 = vsel %vm3540, %v3554, %v3556
      %v3558 = vrot.slane %v3530, 2
      %v3559 = vsel %vm3540, %v3556, %v3558
      %v3560 = vrot.slane %v3531, 2
      %v3561 = vsel %vm3540, %v3558, %v3560
      %v3562 = vrot.slane %v3532, 2
      %v3563 = vsel %vm3540, %v3560, %v3562
      %v3564 = vrot.slane %v3533, 2
      %v3565 = vsel %vm3540, %v3562, %v3564
      %v3566 = vrot.slane %v3534, 2
      %v3567 = vsel %vm3540, %v3564, %v3566
      %v3568 = vrot.slane %v3535, 2
      %v3569 = vsel %vm3540, %v3566, %v3568
      %v3570 = vrot.slane %v3536, 2
      %v3571 = vsel %vm3540, %v3568, %v3570
      %v3572 = vrot.slane %v3537, 2
      %v3573 = vsel %vm3540, %v3570, %v3572
      %v3574 = vrot.slane %v3538, 2
      %v3575 = vsel %vm3540, %v3572, %v3574
      %v3576 = vrot.slane %v3539, 2
      %v3577 = vsel %vm3540, %v3574, %v3576
      %v3612 = vunpack.c.l.b16 %v3431
      %v3613 = vunpack.c.l.b16 %v3432
      %v3614 = vunpack.c.l.b16 %v3433
      %v3615 = vunpack.c.l.b16 %v3434
      %v3616 = vunpack.c.l.b16 %v3435
      %v3617 = vunpack.c.l.b16 %v3436
      %v3618 = vunpack.c.l.b16 %v3437
      %v3619 = vunpack.c.l.b16 %v3438
      %v3620 = vunpack.c.l.b16 %v3439
      %v3621 = vunpack.c.l.b16 %v3440
      %v3622 = vunpack.c.l.b16 %v3441
      %v3623 = vunpack.c.l.b16 %v3442
      %v3624 = vunpack.c.l.b16 %v3443
      %v3625 = vunpack.c.l.b16 %v3444
      %v3626 = vunpack.c.l.b16 %v3445
      %v3627 = vunpack.c.l.b16 %v3446
      %v3628 = vpack.c.b16 %v3613, %v3612
      %v3629 = vpack.c.b16 %v3615, %v3614
      %v3630 = vpack.c.b16 %v3617, %v3616
      %v3631 = vpack.c.b16 %v3619, %v3618
      %v3632 = vpack.c.b16 %v3621, %v3620
      %v3633 = vpack.c.b16 %v3623, %v3622
      %v3634 = vpack.c.b16 %v3625, %v3624
      %v3635 = vpack.c.b16 %v3627, %v3626
      %3644 = vmatprep.subr.bf16.mxu0 0
      %3645 = vmatpush1.bf16.msra.mxu0 %v3628
      %3646 = vmatprep.subr.bf16.mxu0 0
      %3647 = vmatpush1.bf16.msra.mxu0 %v3629
      %3648 = vmatprep.subr.bf16.mxu0 0
      %3649 = vmatpush1.bf16.msra.mxu0 %v3630
      %3650 = vmatprep.subr.bf16.mxu0 0
      %3651 = vmatpush1.bf16.msra.mxu0 %v3631
      %3652 = vmatprep.subr.bf16.mxu0 0
      %3653 = vmatpush1.bf16.msra.mxu0 %v3632
      %3654 = vmatprep.subr.bf16.mxu0 0
      %3655 = vmatpush1.bf16.msra.mxu0 %v3633
      %3656 = vmatprep.subr.bf16.mxu0 0
      %3657 = vmatpush1.bf16.msra.mxu0 %v3634
      %3658 = vmatprep.subr.bf16.mxu0 0
      %3659 = vmatpush1.bf16.msra.mxu0 %v3635
      %3660 = vmatprep.subr.bf16.mxu0 0
      %3661 = vmatpush1.bf16.msra.mxu0 0
      %3662 = vmatprep.subr.bf16.mxu0 0
      %3663 = vmatpush1.bf16.msra.mxu0 0
      %3664 = vmatprep.subr.bf16.mxu0 0
      %3665 = vmatpush1.bf16.msra.mxu0 0
      %3666 = vmatprep.subr.bf16.mxu0 0
      %3667 = vmatpush1.bf16.msra.mxu0 0
      %3668 = vmatprep.subr.bf16.mxu0 0
      %3669 = vmatpush1.bf16.msra.mxu0 0
      %3670 = vmatprep.subr.bf16.mxu0 0
      %3671 = vmatpush1.bf16.msra.mxu0 0
      %3672 = vmatprep.subr.bf16.mxu0 0
      %3673 = vmatpush1.bf16.msra.mxu0 0
      %3674 = vmatprep.subr.bf16.mxu0 0
      %3675 = vmatpush1.bf16.msra.mxu0 0
      %3676 = vmatprep.mubr.bf16.mxu0 0
      %3677 = vmatmul.mubr.bf16.gmra.mrb[0].mxu0 %v3543
      %v3678 = vpop.f32.mrb[0].mxu0
      %v3679 = vadd.f32 0.0, %v3678
      %v3680 = vpop.f32.mrb[0].mxu0
      %v3681 = vpop.f32.mrb[0].mxu0
      %v3682 = vadd.f32 0.0, %v3681
      %v3683 = vpop.f32.mrb[0].mxu0
      %3684 = vmatprep.mubr.bf16.mxu0 0
      %3685 = vmatmul.mubr.bf16.gmra.mrb[0].mxu0 %v3545
      %v3686 = vpop.f32.mrb[0].mxu0
      %v3687 = vadd.f32 0.0, %v3686
      %v3688 = vpop.f32.mrb[0].mxu0
      %v3689 = vpop.f32.mrb[0].mxu0
      %v3690 = vadd.f32 0.0, %v3689
      %v3691 = vpop.f32.mrb[0].mxu0
      %3692 = vmatprep.mubr.bf16.mxu0 0
      %3693 = vmatmul.mubr.bf16.gmra.mrb[0].mxu0 %v3547
      %v3694 = vpop.f32.mrb[0].mxu0
      %v3695 = vadd.f32 0.0, %v3694
      %v3696 = vpop.f32.mrb[0].mxu0
      %v3697 = vpop.f32.mrb[0].mxu0
      %v3698 = vadd.f32 0.0, %v3697
      %v3699 = vpop.f32.mrb[0].mxu0
      %3700 = vmatprep.mubr.bf16.mxu0 0
      %3701 = vmatmul.mubr.bf16.gmra.mrb[0].mxu0 %v3549
      %v3702 = vpop.f32.mrb[0].mxu0
      %v3703 = vadd.f32 0.0, %v3702
      %v3704 = vpop.f32.mrb[0].mxu0
      %v3705 = vpop.f32.mrb[0].mxu0
      %v3706 = vadd.f32 0.0, %v3705
      %v3707 = vpop.f32.mrb[0].mxu0
      %3708 = vmatprep.mubr.bf16.mxu0 0
      %3709 = vmatmul.mubr.bf16.gmra.mrb[0].mxu0 %v3551
      %v3710 = vpop.f32.mrb[0].mxu0
      %v3711 = vadd.f32 0.0, %v3710
      %v3712 = vpop.f32.mrb[0].mxu0
      %v3713 = vpop.f32.mrb[0].mxu0
      %v3714 = vadd.f32 0.0, %v3713
      %v3715 = vpop.f32.mrb[0].mxu0
      %3716 = vmatprep.mubr.bf16.mxu0 0
      %3717 = vmatmul.mubr.bf16.gmra.mrb[0].mxu0 %v3553
      %v3718 = vpop.f32.mrb[0].mxu0
      %v3719 = vadd.f32 0.0, %v3718
      %v3720 = vpop.f32.mrb[0].mxu0
      %v3721 = vpop.f32.mrb[0].mxu0
      %v3722 = vadd.f32 0.0, %v3721
      %v3723 = vpop.f32.mrb[0].mxu0
      %3724 = vmatprep.mubr.bf16.mxu0 0
      %3725 = vmatmul.mubr.bf16.gmra.mrb[0].mxu0 %v3555
      %v3726 = vpop.f32.mrb[0].mxu0
      %v3727 = vadd.f32 0.0, %v3726
      %v3728 = vpop.f32.mrb[0].mxu0
      %v3729 = vpop.f32.mrb[0].mxu0
      %v3730 = vadd.f32 0.0, %v3729
      %v3731 = vpop.f32.mrb[0].mxu0
      %3732 = vmatprep.mubr.bf16.mxu0 0
      %3733 = vmatmul.mubr.bf16.gmra.mrb[0].mxu0 %v3557
      %v3734 = vpop.f32.mrb[0].mxu0
      %v3735 = vadd.f32 0.0, %v3734
      %v3736 = vpop.f32.mrb[0].mxu0
      %v3737 = vpop.f32.mrb[0].mxu0
      %v3738 = vadd.f32 0.0, %v3737
      %v3739 = vpop.f32.mrb[0].mxu0
      %3740 = vmatprep.mubr.bf16.mxu0 0
      %3741 = vmatmul.mubr.bf16.gmra.mrb[0].mxu0 %v3559
      %v3742 = vpop.f32.mrb[0].mxu0
      %v3743 = vadd.f32 0.0, %v3742
      %v3744 = vpop.f32.mrb[0].mxu0
      %v3745 = vpop.f32.mrb[0].mxu0
      %v3746 = vadd.f32 0.0, %v3745
      %v3747 = vpop.f32.mrb[0].mxu0
      %3748 = vmatprep.mubr.bf16.mxu0 0
      %3749 = vmatmul.mubr.bf16.gmra.mrb[0].mxu0 %v3561
      %v3750 = vpop.f32.mrb[0].mxu0
      %v3751 = vadd.f32 0.0, %v3750
      %v3752 = vpop.f32.mrb[0].mxu0
      %v3753 = vpop.f32.mrb[0].mxu0
      %v3754 = vadd.f32 0.0, %v3753
      %v3755 = vpop.f32.mrb[0].mxu0
      %3756 = vmatprep.mubr.bf16.mxu0 0
      %3757 = vmatmul.mubr.bf16.gmra.mrb[0].mxu0 %v3563
      %v3758 = vpop.f32.mrb[0].mxu0
      %v3759 = vadd.f32 0.0, %v3758
      %v3760 = vpop.f32.mrb[0].mxu0
      %v3761 = vpop.f32.mrb[0].mxu0
      %v3762 = vadd.f32 0.0, %v3761
      %v3763 = vpop.f32.mrb[0].mxu0
      %3764 = vmatprep.mubr.bf16.mxu0 0
      %3765 = vmatmul.mubr.bf16.gmra.mrb[0].mxu0 %v3565
      %v3766 = vpop.f32.mrb[0].mxu0
      %v3767 = vadd.f32 0.0, %v3766
      %v3768 = vpop.f32.mrb[0].mxu0
      %v3769 = vpop.f32.mrb[0].mxu0
      %v3770 = vadd.f32 0.0, %v3769
      %v3771 = vpop.f32.mrb[0].mxu0
      %3772 = vmatprep.mubr.bf16.mxu0 0
      %3773 = vmatmul.mubr.bf16.gmra.mrb[0].mxu0 %v3567
      %v3774 = vpop.f32.mrb[0].mxu0
      %v3775 = vadd.f32 0.0, %v3774
      %v3776 = vpop.f32.mrb[0].mxu0
      %v3777 = vpop.f32.mrb[0].mxu0
      %v3778 = vadd.f32 0.0, %v3777
      %v3779 = vpop.f32.mrb[0].mxu0
      %3780 = vmatprep.mubr.bf16.mxu0 0
      %3781 = vmatmul.mubr.bf16.gmra.mrb[0].mxu0 %v3569
      %v3782 = vpop.f32.mrb[0].mxu0
      %v3783 = vadd.f32 0.0, %v3782
      %v3784 = vpop.f32.mrb[0].mxu0
      %v3785 = vpop.f32.mrb[0].mxu0
      %v3786 = vadd.f32 0.0, %v3785
      %v3787 = vpop.f32.mrb[0].mxu0
      %3788 = vmatprep.mubr.bf16.mxu0 0
      %3789 = vmatmul.mubr.bf16.gmra.mrb[0].mxu0 %v3571
      %v3790 = vpop.f32.mrb[0].mxu0
      %v3791 = vadd.f32 0.0, %v3790
      %v3792 = vpop.f32.mrb[0].mxu0
      %v3793 = vpop.f32.mrb[0].mxu0
      %v3794 = vadd.f32 0.0, %v3793
      %v3795 = vpop.f32.mrb[0].mxu0
      %3796 = vmatprep.mubr.bf16.mxu0 0
      %3797 = vmatmul.mubr.bf16.gmra.mrb[0].mxu0 %v3573
      %v3798 = vpop.f32.mrb[0].mxu0
      %v3799 = vadd.f32 0.0, %v3798
      %v3800 = vpop.f32.mrb[0].mxu0
      %v3801 = vpop.f32.mrb[0].mxu0
      %v3802 = vadd.f32 0.0, %v3801
      %v3803 = vpop.f32.mrb[0].mxu0
      %3804 = vmatprep.mubr.bf16.mxu0 0
      %3805 = vmatmul.mubr.bf16.gmra.mrb[0].mxu0 %v3575
      %v3806 = vpop.f32.mrb[0].mxu0
      %v3807 = vadd.f32 0.0, %v3806
      %v3808 = vpop.f32.mrb[0].mxu0
      %v3809 = vpop.f32.mrb[0].mxu0
      %v3810 = vadd.f32 0.0, %v3809
      %v3811 = vpop.f32.mrb[0].mxu0
      %3812 = vmatprep.mubr.bf16.mxu0 0
      %3813 = vmatmul.mubr.bf16.gmra.mrb[0].mxu0 %v3577
      %v3814 = vpop.f32.mrb[0].mxu0
      %v3815 = vadd.f32 0.0, %v3814
      %v3816 = vpop.f32.mrb[0].mxu0
      %v3817 = vpop.f32.mrb[0].mxu0
      %v3818 = vadd.f32 0.0, %v3817
      %v3819 = vpop.f32.mrb[0].mxu0
      %3820 = vdwg.mxu0
      %v3821 = vld [vmem:[#allocation3] sm:$0xff]
      %v3822 = vld [vmem:[#allocation3 + $0x8] sm:$0xff]
      %v3823 = vld [vmem:[#allocation3 + $0x10] sm:$0xff]
      %v3824 = vld [vmem:[#allocation3 + $0x18] sm:$0xff]
      %v3825 = vld [vmem:[#allocation3 + $0x20] sm:$0xff]
      %v3826 = vld [vmem:[#allocation3 + $0x28] sm:$0xff]
      %v3827 = vld [vmem:[#allocation3 + $0x30] sm:$0xff]
      %v3828 = vld [vmem:[#allocation3 + $0x38] sm:$0xff]
      %v3829 = vld [vmem:[#allocation3 + $0x40] sm:$0xff]
      %v3830 = vld [vmem:[#allocation3 + $0x48] sm:$0xff]
      %v3831 = vld [vmem:[#allocation3 + $0x50] sm:$0xff]
      %v3832 = vld [vmem:[#allocation3 + $0x58] sm:$0xff]
      %v3833 = vld [vmem:[#allocation3 + $0x60] sm:$0xff]
      %v3834 = vld [vmem:[#allocation3 + $0x68] sm:$0xff]
      %v3835 = vld [vmem:[#allocation3 + $0x70] sm:$0xff]
      %v3836 = vld [vmem:[#allocation3 + $0x78] sm:$0xff]
      %v3837 = vld [vmem:[#allocation3 + $0x80] sm:$0xff]
      %v3838 = vld [vmem:[#allocation3 + $0x88] sm:$0xff]
      %v3839 = vld [vmem:[#allocation3 + $0x90] sm:$0xff]
      %v3840 = vld [vmem:[#allocation3 + $0x98] sm:$0xff]
      %v3841 = vld [vmem:[#allocation3 + $0xa0] sm:$0xff]
      %v3842 = vld [vmem:[#allocation3 + $0xa8] sm:$0xff]
      %v3843 = vld [vmem:[#allocation3 + $0xb0] sm:$0xff]
      %v3844 = vld [vmem:[#allocation3 + $0xb8] sm:$0xff]
      %v3845 = vld [vmem:[#allocation3 + $0xc0] sm:$0xff]
      %v3846 = vld [vmem:[#allocation3 + $0xc8] sm:$0xff]
      %v3847 = vld [vmem:[#allocation3 + $0xd0] sm:$0xff]
      %v3848 = vld [vmem:[#allocation3 + $0xd8] sm:$0xff]
      %v3849 = vld [vmem:[#allocation3 + $0xe0] sm:$0xff]
      %v3850 = vld [vmem:[#allocation3 + $0xe8] sm:$0xff]
      %v3851 = vld [vmem:[#allocation3 + $0xf0] sm:$0xff]
      %v3852 = vld [vmem:[#allocation3 + $0xf8] sm:$0xff]
      %v3853 = vld [vmem:[#allocation3 + $0x100] sm:$0xff]
      %v3854 = vld [vmem:[#allocation3 + $0x108] sm:$0xff]
      %v3855 = vld [vmem:[#allocation3 + $0x110] sm:$0xff]
      %v3856 = vld [vmem:[#allocation3 + $0x118] sm:$0xff]
      %v3857 = vadd.f32 %v3821, %v3679
      %v3858 = vadd.f32 %v3822, %v3682
      %v3859 = vadd.f32 %v3823, %v3687
      %v3860 = vadd.f32 %v3824, %v3690
      %v3861 = vadd.f32 %v3825, %v3695
      %v3862 = vadd.f32 %v3826, %v3698
      %v3863 = vadd.f32 %v3827, %v3703
      %v3864 = vadd.f32 %v3828, %v3706
      %v3865 = vadd.f32 %v3829, %v3711
      %v3866 = vadd.f32 %v3830, %v3714
      %v3867 = vadd.f32 %v3831, %v3719
      %v3868 = vadd.f32 %v3832, %v3722
      %v3869 = vadd.f32 %v3833, %v3727
      %v3870 = vadd.f32 %v3834, %v3730
      %v3871 = vadd.f32 %v3835, %v3735
      %v3872 = vadd.f32 %v3836, %v3738
      %v3873 = vadd.f32 %v3837, %v3743
      %v3874 = vadd.f32 %v3838, %v3746
      %v3875 = vadd.f32 %v3839, %v3751
      %v3876 = vadd.f32 %v3840, %v3754
      %v3877 = vadd.f32 %v3841, %v3759
      %v3878 = vadd.f32 %v3842, %v3762
      %v3879 = vadd.f32 %v3843, %v3767
      %v3880 = vadd.f32 %v3844, %v3770
      %v3881 = vadd.f32 %v3845, %v3775
      %v3882 = vadd.f32 %v3846, %v3778
      %v3883 = vadd.f32 %v3847, %v3783
      %v3884 = vadd.f32 %v3848, %v3786
      %v3885 = vadd.f32 %v3849, %v3791
      %v3886 = vadd.f32 %v3850, %v3794
      %v3887 = vadd.f32 %v3851, %v3799
      %v3888 = vadd.f32 %v3852, %v3802
      %v3889 = vadd.f32 %v3853, %v3807
      %v3890 = vadd.f32 %v3854, %v3810
      %v3891 = vadd.f32 %v3855, %v3815
      %v3892 = vadd.f32 %v3856, %v3818
      %3893 = vst [vmem:[#allocation3] sm:$0xff] %v3857
      %3894 = vst [vmem:[#allocation3 + $0x8] sm:$0xff] %v3858
      %3895 = vst [vmem:[#allocation3 + $0x10] sm:$0xff] %v3859
      %3896 = vst [vmem:[#allocation3 + $0x18] sm:$0xff] %v3860
      %3897 = vst [vmem:[#allocation3 + $0x20] sm:$0xff] %v3861
      %3898 = vst [vmem:[#allocation3 + $0x28] sm:$0xff] %v3862
      %3899 = vst [vmem:[#allocation3 + $0x30] sm:$0xff] %v3863
      %3900 = vst [vmem:[#allocation3 + $0x38] sm:$0xff] %v3864
      %3901 = vst [vmem:[#allocation3 + $0x40] sm:$0xff] %v3865
      %3902 = vst [vmem:[#allocation3 + $0x48] sm:$0xff] %v3866
      %3903 = vst [vmem:[#allocation3 + $0x50] sm:$0xff] %v3867
      %3904 = vst [vmem:[#allocation3 + $0x58] sm:$0xff] %v3868
      %3905 = vst [vmem:[#allocation3 + $0x60] sm:$0xff] %v3869
      %3906 = vst [vmem:[#allocation3 + $0x68] sm:$0xff] %v3870
      %3907 = vst [vmem:[#allocation3 + $0x70] sm:$0xff] %v3871
      %3908 = vst [vmem:[#allocation3 + $0x78] sm:$0xff] %v3872
      %3909 = vst [vmem:[#allocation3 + $0x80] sm:$0xff] %v3873
      %3910 = vst [vmem:[#allocation3 + $0x88] sm:$0xff] %v3874
      %3911 = vst [vmem:[#allocation3 + $0x90] sm:$0xff] %v3875
      %3912 = vst [vmem:[#allocation3 + $0x98] sm:$0xff] %v3876
      %3913 = vst [vmem:[#allocation3 + $0xa0] sm:$0xff] %v3877
      %3914 = vst [vmem:[#allocation3 + $0xa8] sm:$0xff] %v3878
      %3915 = vst [vmem:[#allocation3 + $0xb0] sm:$0xff] %v3879
      %3916 = vst [vmem:[#allocation3 + $0xb8] sm:$0xff] %v3880
      %3917 = vst [vmem:[#allocation3 + $0xc0] sm:$0xff] %v3881
      %3918 = vst [vmem:[#allocation3 + $0xc8] sm:$0xff] %v3882
      %3919 = vst [vmem:[#allocation3 + $0xd0] sm:$0xff] %v3883
      %3920 = vst [vmem:[#allocation3 + $0xd8] sm:$0xff] %v3884
      %3921 = vst [vmem:[#allocation3 + $0xe0] sm:$0xff] %v3885
      %3922 = vst [vmem:[#allocation3 + $0xe8] sm:$0xff] %v3886
      %3923 = vst [vmem:[#allocation3 + $0xf0] sm:$0xff] %v3887
      %3924 = vst [vmem:[#allocation3 + $0xf8] sm:$0xff] %v3888
      %3925 = vst [vmem:[#allocation3 + $0x100] sm:$0xff] %v3889
      %3926 = vst [vmem:[#allocation3 + $0x108] sm:$0xff] %v3890
      %3927 = vst [vmem:[#allocation3 + $0x110] sm:$0xff] %v3891
      %3928 = vst [vmem:[#allocation3 + $0x118] sm:$0xff] %v3892
      %v3929 = vld [vmem:[#allocation2 + $0x8] sm:$0xc]
      %v3930 = vld [vmem:[#allocation2 + $0xc] sm:$0xf]
      %v3931 = vld [vmem:[#allocation2 + $0x10] sm:$0xf]
      %v3932 = vld [vmem:[#allocation2 + $0x14] sm:$0xf]
      %v3933 = vld [vmem:[#allocation2 + $0x18] sm:$0xf]
      %v3934 = vld [vmem:[#allocation2 + $0x1c] sm:$0xf]
      %v3935 = vld [vmem:[#allocation2 + $0x20] sm:$0xf]
      %v3936 = vld [vmem:[#allocation2 + $0x24] sm:$0xf]
      %v3937 = vld [vmem:[#allocation2 + $0x28] sm:$0xf]
      %v3938 = vld [vmem:[#allocation2 + $0x2c] sm:$0xf]
      %v3939 = vld [vmem:[#allocation2 + $0x30] sm:$0xf]
      %v3940 = vld [vmem:[#allocation2 + $0x34] sm:$0xf]
      %v3941 = vld [vmem:[#allocation2 + $0x38] sm:$0xf]
      %v3942 = vld [vmem:[#allocation2 + $0x3c] sm:$0xf]
      %v3943 = vld [vmem:[#allocation2 + $0x40] sm:$0xf]
      %v3944 = vld [vmem:[#allocation2 + $0x44] sm:$0xf]
      %v3945 = vld [vmem:[#allocation2 + $0x48] sm:$0xf]
      %v3946 = vld [vmem:[#allocation2 + $0x4c] sm:$0xf]
      %v3947 = vld [vmem:[#allocation2 + $0x50] sm:$0xf]
      %v3948 = vld [vmem:[#allocation2 + $0x54] sm:$0xf]
      %v3949 = vld [vmem:[#allocation2 + $0x58] sm:$0xf]
      %v3950 = vld [vmem:[#allocation2 + $0x5c] sm:$0xf]
      %v3951 = vld [vmem:[#allocation2 + $0x60] sm:$0xf]
      %v3952 = vld [vmem:[#allocation2 + $0x64] sm:$0xf]
      %v3953 = vld [vmem:[#allocation2 + $0x68] sm:$0xf]
      %v3954 = vld [vmem:[#allocation2 + $0x6c] sm:$0xf]
      %v3955 = vld [vmem:[#allocation2 + $0x70] sm:$0xf]
      %v3956 = vld [vmem:[#allocation2 + $0x74] sm:$0xf]
      %v3957 = vld [vmem:[#allocation2 + $0x78] sm:$0xf]
      %v3958 = vld [vmem:[#allocation2 + $0x7c] sm:$0xf]
      %v3959 = vld [vmem:[#allocation2 + $0x80] sm:$0xf]
      %v3960 = vld [vmem:[#allocation2 + $0x84] sm:$0xf]
      %v3961 = vld [vmem:[#allocation2 + $0x88] sm:$0xf]
      %v3962 = vld [vmem:[#allocation2 + $0x8c] sm:$0xf]
      %v3963 = vld [vmem:[#allocation2 + $0x90] sm:$0xf]
      %v3964 = vld [vmem:[#allocation2 + $0x94] sm:$0xf]
      %v3965 = vld [vmem:[#allocation2 + $0x98] sm:$0x7]
      %s3966 = scalar_lea.vmem %s3, 320
      %v3967 = vld [vmem:[%s3966] sm:$0xf]
      %v3968 = vld [vmem:[%s3966 + $0x4] sm:$0xf]
      %v3969 = vld [vmem:[%s3966 + $0x8] sm:$0xf]
      %v3970 = vld [vmem:[%s3966 + $0xc] sm:$0xf]
      %v3971 = vld [vmem:[%s3966 + $0x10] sm:$0xf]
      %v3972 = vld [vmem:[%s3966 + $0x14] sm:$0xf]
      %v3973 = vld [vmem:[%s3966 + $0x18] sm:$0xf]
      %v3974 = vld [vmem:[%s3966 + $0x1c] sm:$0xf]
      %v3975 = vld [vmem:[%s3966 + $0x20] sm:$0xf]
      %v3976 = vld [vmem:[%s3966 + $0x24] sm:$0xf]
      %v3977 = vld [vmem:[%s3966 + $0x28] sm:$0xf]
      %v3978 = vld [vmem:[%s3966 + $0x2c] sm:$0xf]
      %v3979 = vld [vmem:[%s3966 + $0x30] sm:$0xf]
      %v3980 = vld [vmem:[%s3966 + $0x34] sm:$0xf]
      %v3981 = vld [vmem:[%s3966 + $0x38] sm:$0xf]
      %v3982 = vld [vmem:[%s3966 + $0x3c] sm:$0xf]
      %v4020 = vunpack.c.l.b16 %v3929
      %v4021 = vunpack.c.l.b16 %v3930
      %v4022 = vunpack.c.l.b16 %v3931
      %v4023 = vunpack.c.l.b16 %v3932
      %v4024 = vunpack.c.l.b16 %v3933
      %v4025 = vunpack.c.l.b16 %v3934
      %v4026 = vunpack.c.l.b16 %v3935
      %v4027 = vunpack.c.l.b16 %v3936
      %v4028 = vunpack.c.l.b16 %v3937
      %v4029 = vunpack.c.l.b16 %v3938
      %v4030 = vunpack.c.l.b16 %v3939
      %v4031 = vunpack.c.l.b16 %v3940
      %v4032 = vunpack.c.l.b16 %v3941
      %v4033 = vunpack.c.l.b16 %v3942
      %v4034 = vunpack.c.l.b16 %v3943
      %v4035 = vunpack.c.l.b16 %v3944
      %v4036 = vunpack.c.l.b16 %v3945
      %v4037 = vunpack.c.l.b16 %v3946
      %v4038 = vunpack.c.l.b16 %v3947
      %v4039 = vunpack.c.l.b16 %v3948
      %v4040 = vunpack.c.l.b16 %v3949
      %v4041 = vunpack.c.l.b16 %v3950
      %v4042 = vunpack.c.l.b16 %v3951
      %v4043 = vunpack.c.l.b16 %v3952
      %v4044 = vunpack.c.l.b16 %v3953
      %v4045 = vunpack.c.l.b16 %v3954
      %v4046 = vunpack.c.l.b16 %v3955
      %v4047 = vunpack.c.l.b16 %v3956
      %v4048 = vunpack.c.l.b16 %v3957
      %v4049 = vunpack.c.l.b16 %v3958
      %v4050 = vunpack.c.l.b16 %v3959
      %v4051 = vunpack.c.l.b16 %v3960
      %v4052 = vunpack.c.l.b16 %v3961
      %v4053 = vunpack.c.l.b16 %v3962
      %v4054 = vunpack.c.l.b16 %v3963
      %v4055 = vunpack.c.l.b16 %v3964
      %v4056 = vunpack.c.l.b16 %v3965
      %v4057 = vpack.c.b16 %v4021, %v4020
      %v4058 = vpack.c.b16 %v4023, %v4022
      %v4059 = vpack.c.b16 %v4025, %v4024
      %v4060 = vpack.c.b16 %v4027, %v4026
      %v4061 = vpack.c.b16 %v4029, %v4028
      %v4062 = vpack.c.b16 %v4031, %v4030
      %v4063 = vpack.c.b16 %v4033, %v4032
      %v4064 = vpack.c.b16 %v4035, %v4034
      %v4065 = vpack.c.b16 %v4037, %v4036
      %v4066 = vpack.c.b16 %v4039, %v4038
      %v4067 = vpack.c.b16 %v4041, %v4040
      %v4068 = vpack.c.b16 %v4043, %v4042
      %v4069 = vpack.c.b16 %v4045, %v4044
      %v4070 = vpack.c.b16 %v4047, %v4046
      %v4071 = vpack.c.b16 %v4049, %v4048
      %v4072 = vpack.c.b16 %v4051, %v4050
      %v4073 = vpack.c.b16 %v4053, %v4052
      %v4074 = vpack.c.b16 %v4055, %v4054
      %v4075 = vpack.c.b16 %v4056, %v4056
      %vm4076 = vsmask.f32 5376
      %v4078 = vshrl.u32 %v4057, 16
      %v4080 = vrot.slane %v4078, 2
      %v4081 = vshll.u32 %v4057, 16
      %v4083 = vrot.slane %v4081, 3
      %v4084 = vor.u32 %v4080, %v4083
      %v4086 = vshrl.u32 %v4058, 16
      %v4088 = vrot.slane %v4086, 2
      %v4089 = vshll.u32 %v4058, 16
      %v4091 = vrot.slane %v4089, 3
      %v4092 = vor.u32 %v4088, %v4091
      %v4093 = vsel %vm4076, %v4084, %v4092
      %v4095 = vshrl.u32 %v4059, 16
      %v4097 = vrot.slane %v4095, 2
      %v4098 = vshll.u32 %v4059, 16
      %v4100 = vrot.slane %v4098, 3
      %v4101 = vor.u32 %v4097, %v4100
      %v4102 = vsel %vm4076, %v4092, %v4101
      %v4104 = vshrl.u32 %v4060, 16
      %v4106 = vrot.slane %v4104, 2
      %v4107 = vshll.u32 %v4060, 16
      %v4109 = vrot.slane %v4107, 3
      %v4110 = vor.u32 %v4106, %v4109
      %v4111 = vsel %vm4076, %v4101, %v4110
      %v4113 = vshrl.u32 %v4061, 16
      %v4115 = vrot.slane %v4113, 2
      %v4116 = vshll.u32 %v4061, 16
      %v4118 = vrot.slane %v4116, 3
      %v4119 = vor.u32 %v4115, %v4118
      %v4120 = vsel %vm4076, %v4110, %v4119
      %v4122 = vshrl.u32 %v4062, 16
      %v4124 = vrot.slane %v4122, 2
      %v4125 = vshll.u32 %v4062, 16
      %v4127 = vrot.slane %v4125, 3
      %v4128 = vor.u32 %v4124, %v4127
      %v4129 = vsel %vm4076, %v4119, %v4128
      %v4131 = vshrl.u32 %v4063, 16
      %v4133 = vrot.slane %v4131, 2
      %v4134 = vshll.u32 %v4063, 16
      %v4136 = vrot.slane %v4134, 3
      %v4137 = vor.u32 %v4133, %v4136
      %v4138 = vsel %vm4076, %v4128, %v4137
      %v4140 = vshrl.u32 %v4064, 16
      %v4142 = vrot.slane %v4140, 2
      %v4143 = vshll.u32 %v4064, 16
      %v4145 = vrot.slane %v4143, 3
      %v4146 = vor.u32 %v4142, %v4145
      %v4147 = vsel %vm4076, %v4137, %v4146
      %v4149 = vshrl.u32 %v4065, 16
      %v4151 = vrot.slane %v4149, 2
      %v4152 = vshll.u32 %v4065, 16
      %v4154 = vrot.slane %v4152, 3
      %v4155 = vor.u32 %v4151, %v4154
      %v4156 = vsel %vm4076, %v4146, %v4155
      %v4158 = vshrl.u32 %v4066, 16
      %v4160 = vrot.slane %v4158, 2
      %v4161 = vshll.u32 %v4066, 16
      %v4163 = vrot.slane %v4161, 3
      %v4164 = vor.u32 %v4160, %v4163
      %v4165 = vsel %vm4076, %v4155, %v4164
      %v4167 = vshrl.u32 %v4067, 16
      %v4169 = vrot.slane %v4167, 2
      %v4170 = vshll.u32 %v4067, 16
      %v4172 = vrot.slane %v4170, 3
      %v4173 = vor.u32 %v4169, %v4172
      %v4174 = vsel %vm4076, %v4164, %v4173
      %v4176 = vshrl.u32 %v4068, 16
      %v4178 = vrot.slane %v4176, 2
      %v4179 = vshll.u32 %v4068, 16
      %v4181 = vrot.slane %v4179, 3
      %v4182 = vor.u32 %v4178, %v4181
      %v4183 = vsel %vm4076, %v4173, %v4182
      %v4185 = vshrl.u32 %v4069, 16
      %v4187 = vrot.slane %v4185, 2
      %v4188 = vshll.u32 %v4069, 16
      %v4190 = vrot.slane %v4188, 3
      %v4191 = vor.u32 %v4187, %v4190
      %v4192 = vsel %vm4076, %v4182, %v4191
      %v4194 = vshrl.u32 %v4070, 16
      %v4196 = vrot.slane %v4194, 2
      %v4197 = vshll.u32 %v4070, 16
      %v4199 = vrot.slane %v4197, 3
      %v4200 = vor.u32 %v4196, %v4199
      %v4201 = vsel %vm4076, %v4191, %v4200
      %v4203 = vshrl.u32 %v4071, 16
      %v4205 = vrot.slane %v4203, 2
      %v4206 = vshll.u32 %v4071, 16
      %v4208 = vrot.slane %v4206, 3
      %v4209 = vor.u32 %v4205, %v4208
      %v4210 = vsel %vm4076, %v4200, %v4209
      %v4212 = vshrl.u32 %v4072, 16
      %v4214 = vrot.slane %v4212, 2
      %v4215 = vshll.u32 %v4072, 16
      %v4217 = vrot.slane %v4215, 3
      %v4218 = vor.u32 %v4214, %v4217
      %v4219 = vsel %vm4076, %v4209, %v4218
      %v4221 = vshrl.u32 %v4073, 16
      %v4223 = vrot.slane %v4221, 2
      %v4224 = vshll.u32 %v4073, 16
      %v4226 = vrot.slane %v4224, 3
      %v4227 = vor.u32 %v4223, %v4226
      %v4228 = vsel %vm4076, %v4218, %v4227
      %v4230 = vshrl.u32 %v4074, 16
      %v4232 = vrot.slane %v4230, 2
      %v4233 = vshll.u32 %v4074, 16
      %v4235 = vrot.slane %v4233, 3
      %v4236 = vor.u32 %v4232, %v4235
      %v4237 = vsel %vm4076, %v4227, %v4236
      %v4239 = vshrl.u32 %v4075, 16
      %v4241 = vrot.slane %v4239, 2
      %v4242 = vshll.u32 %v4075, 16
      %v4244 = vrot.slane %v4242, 3
      %v4245 = vor.u32 %v4241, %v4244
      %v4246 = vsel %vm4076, %v4236, %v4245
      %v4281 = vunpack.c.l.b16 %v3967
      %v4282 = vunpack.c.l.b16 %v3968
      %v4283 = vunpack.c.l.b16 %v3969
      %v4284 = vunpack.c.l.b16 %v3970
      %v4285 = vunpack.c.l.b16 %v3971
      %v4286 = vunpack.c.l.b16 %v3972
      %v4287 = vunpack.c.l.b16 %v3973
      %v4288 = vunpack.c.l.b16 %v3974
      %v4289 = vunpack.c.l.b16 %v3975
      %v4290 = vunpack.c.l.b16 %v3976
      %v4291 = vunpack.c.l.b16 %v3977
      %v4292 = vunpack.c.l.b16 %v3978
      %v4293 = vunpack.c.l.b16 %v3979
      %v4294 = vunpack.c.l.b16 %v3980
      %v4295 = vunpack.c.l.b16 %v3981
      %v4296 = vunpack.c.l.b16 %v3982
      %v4297 = vpack.c.b16 %v4282, %v4281
      %v4298 = vpack.c.b16 %v4284, %v4283
      %v4299 = vpack.c.b16 %v4286, %v4285
      %v4300 = vpack.c.b16 %v4288, %v4287
      %v4301 = vpack.c.b16 %v4290, %v4289
      %v4302 = vpack.c.b16 %v4292, %v4291
      %v4303 = vpack.c.b16 %v4294, %v4293
      %v4304 = vpack.c.b16 %v4296, %v4295
      %4313 = vmatprep.subr.bf16.mxu0 0
      %4314 = vmatpush1.bf16.msra.mxu0 %v4297
      %4315 = vmatprep.subr.bf16.mxu0 0
      %4316 = vmatpush1.bf16.msra.mxu0 %v4298
      %4317 = vmatprep.subr.bf16.mxu0 0
      %4318 = vmatpush1.bf16.msra.mxu0 %v4299
      %4319 = vmatprep.subr.bf16.mxu0 0
      %4320 = vmatpush1.bf16.msra.mxu0 %v4300
      %4321 = vmatprep.subr.bf16.mxu0 0
      %4322 = vmatpush1.bf16.msra.mxu0 %v4301
      %4323 = vmatprep.subr.bf16.mxu0 0
      %4324 = vmatpush1.bf16.msra.mxu0 %v4302
      %4325 = vmatprep.subr.bf16.mxu0 0
      %4326 = vmatpush1.bf16.msra.mxu0 %v4303
      %4327 = vmatprep.subr.bf16.mxu0 0
      %4328 = vmatpush1.bf16.msra.mxu0 %v4304
      %4329 = vmatprep.subr.bf16.mxu0 0
      %4330 = vmatpush1.bf16.msra.mxu0 0
      %4331 = vmatprep.subr.bf16.mxu0 0
      %4332 = vmatpush1.bf16.msra.mxu0 0
      %4333 = vmatprep.subr.bf16.mxu0 0
      %4334 = vmatpush1.bf16.msra.mxu0 0
      %4335 = vmatprep.subr.bf16.mxu0 0
      %4336 = vmatpush1.bf16.msra.mxu0 0
      %4337 = vmatprep.subr.bf16.mxu0 0
      %4338 = vmatpush1.bf16.msra.mxu0 0
      %4339 = vmatprep.subr.bf16.mxu0 0
      %4340 = vmatpush1.bf16.msra.mxu0 0
      %4341 = vmatprep.subr.bf16.mxu0 0
      %4342 = vmatpush1.bf16.msra.mxu0 0
      %4343 = vmatprep.subr.bf16.mxu0 0
      %4344 = vmatpush1.bf16.msra.mxu0 0
      %4345 = vmatprep.mubr.bf16.mxu0 0
      %4346 = vmatmul.mubr.bf16.gmra.mrb[0].mxu0 %v4093
      %v4347 = vpop.f32.mrb[0].mxu0
      %v4348 = vadd.f32 0.0, %v4347
      %v4349 = vpop.f32.mrb[0].mxu0
      %v4350 = vpop.f32.mrb[0].mxu0
      %v4351 = vadd.f32 0.0, %v4350
      %v4352 = vpop.f32.mrb[0].mxu0
      %4353 = vmatprep.mubr.bf16.mxu0 0
      %4354 = vmatmul.mubr.bf16.gmra.mrb[0].mxu0 %v4102
      %v4355 = vpop.f32.mrb[0].mxu0
      %v4356 = vadd.f32 0.0, %v4355
      %v4357 = vpop.f32.mrb[0].mxu0
      %v4358 = vpop.f32.mrb[0].mxu0
      %v4359 = vadd.f32 0.0, %v4358
      %v4360 = vpop.f32.mrb[0].mxu0
      %4361 = vmatprep.mubr.bf16.mxu0 0
      %4362 = vmatmul.mubr.bf16.gmra.mrb[0].mxu0 %v4111
      %v4363 = vpop.f32.mrb[0].mxu0
      %v4364 = vadd.f32 0.0, %v4363
      %v4365 = vpop.f32.mrb[0].mxu0
      %v4366 = vpop.f32.mrb[0].mxu0
      %v4367 = vadd.f32 0.0, %v4366
      %v4368 = vpop.f32.mrb[0].mxu0
      %4369 = vmatprep.mubr.bf16.mxu0 0
      %4370 = vmatmul.mubr.bf16.gmra.mrb[0].mxu0 %v4120
      %v4371 = vpop.f32.mrb[0].mxu0
      %v4372 = vadd.f32 0.0, %v4371
      %v4373 = vpop.f32.mrb[0].mxu0
      %v4374 = vpop.f32.mrb[0].mxu0
      %v4375 = vadd.f32 0.0, %v4374
      %v4376 = vpop.f32.mrb[0].mxu0
      %4377 = vmatprep.mubr.bf16.mxu0 0
      %4378 = vmatmul.mubr.bf16.gmra.mrb[0].mxu0 %v4129
      %v4379 = vpop.f32.mrb[0].mxu0
      %v4380 = vadd.f32 0.0, %v4379
      %v4381 = vpop.f32.mrb[0].mxu0
      %v4382 = vpop.f32.mrb[0].mxu0
      %v4383 = vadd.f32 0.0, %v4382
      %v4384 = vpop.f32.mrb[0].mxu0
      %4385 = vmatprep.mubr.bf16.mxu0 0
      %4386 = vmatmul.mubr.bf16.gmra.mrb[0].mxu0 %v4138
      %v4387 = vpop.f32.mrb[0].mxu0
      %v4388 = vadd.f32 0.0, %v4387
      %v4389 = vpop.f32.mrb[0].mxu0
      %v4390 = vpop.f32.mrb[0].mxu0
      %v4391 = vadd.f32 0.0, %v4390
      %v4392 = vpop.f32.mrb[0].mxu0
      %4393 = vmatprep.mubr.bf16.mxu0 0
      %4394 = vmatmul.mubr.bf16.gmra.mrb[0].mxu0 %v4147
      %v4395 = vpop.f32.mrb[0].mxu0
      %v4396 = vadd.f32 0.0, %v4395
      %v4397 = vpop.f32.mrb[0].mxu0
      %v4398 = vpop.f32.mrb[0].mxu0
      %v4399 = vadd.f32 0.0, %v4398
      %v4400 = vpop.f32.mrb[0].mxu0
      %4401 = vmatprep.mubr.bf16.mxu0 0
      %4402 = vmatmul.mubr.bf16.gmra.mrb[0].mxu0 %v4156
      %v4403 = vpop.f32.mrb[0].mxu0
      %v4404 = vadd.f32 0.0, %v4403
      %v4405 = vpop.f32.mrb[0].mxu0
      %v4406 = vpop.f32.mrb[0].mxu0
      %v4407 = vadd.f32 0.0, %v4406
      %v4408 = vpop.f32.mrb[0].mxu0
      %4409 = vmatprep.mubr.bf16.mxu0 0
      %4410 = vmatmul.mubr.bf16.gmra.mrb[0].mxu0 %v4165
      %v4411 = vpop.f32.mrb[0].mxu0
      %v4412 = vadd.f32 0.0, %v4411
      %v4413 = vpop.f32.mrb[0].mxu0
      %v4414 = vpop.f32.mrb[0].mxu0
      %v4415 = vadd.f32 0.0, %v4414
      %v4416 = vpop.f32.mrb[0].mxu0
      %4417 = vmatprep.mubr.bf16.mxu0 0
      %4418 = vmatmul.mubr.bf16.gmra.mrb[0].mxu0 %v4174
      %v4419 = vpop.f32.mrb[0].mxu0
      %v4420 = vadd.f32 0.0, %v4419
      %v4421 = vpop.f32.mrb[0].mxu0
      %v4422 = vpop.f32.mrb[0].mxu0
      %v4423 = vadd.f32 0.0, %v4422
      %v4424 = vpop.f32.mrb[0].mxu0
      %4425 = vmatprep.mubr.bf16.mxu0 0
      %4426 = vmatmul.mubr.bf16.gmra.mrb[0].mxu0 %v4183
      %v4427 = vpop.f32.mrb[0].mxu0
      %v4428 = vadd.f32 0.0, %v4427
      %v4429 = vpop.f32.mrb[0].mxu0
      %v4430 = vpop.f32.mrb[0].mxu0
      %v4431 = vadd.f32 0.0, %v4430
      %v4432 = vpop.f32.mrb[0].mxu0
      %4433 = vmatprep.mubr.bf16.mxu0 0
      %4434 = vmatmul.mubr.bf16.gmra.mrb[0].mxu0 %v4192
      %v4435 = vpop.f32.mrb[0].mxu0
      %v4436 = vadd.f32 0.0, %v4435
      %v4437 = vpop.f32.mrb[0].mxu0
      %v4438 = vpop.f32.mrb[0].mxu0
      %v4439 = vadd.f32 0.0, %v4438
      %v4440 = vpop.f32.mrb[0].mxu0
      %4441 = vmatprep.mubr.bf16.mxu0 0
      %4442 = vmatmul.mubr.bf16.gmra.mrb[0].mxu0 %v4201
      %v4443 = vpop.f32.mrb[0].mxu0
      %v4444 = vadd.f32 0.0, %v4443
      %v4445 = vpop.f32.mrb[0].mxu0
      %v4446 = vpop.f32.mrb[0].mxu0
      %v4447 = vadd.f32 0.0, %v4446
      %v4448 = vpop.f32.mrb[0].mxu0
      %4449 = vmatprep.mubr.bf16.mxu0 0
      %4450 = vmatmul.mubr.bf16.gmra.mrb[0].mxu0 %v4210
      %v4451 = vpop.f32.mrb[0].mxu0
      %v4452 = vadd.f32 0.0, %v4451
      %v4453 = vpop.f32.mrb[0].mxu0
      %v4454 = vpop.f32.mrb[0].mxu0
      %v4455 = vadd.f32 0.0, %v4454
      %v4456 = vpop.f32.mrb[0].mxu0
      %4457 = vmatprep.mubr.bf16.mxu0 0
      %4458 = vmatmul.mubr.bf16.gmra.mrb[0].mxu0 %v4219
      %v4459 = vpop.f32.mrb[0].mxu0
      %v4460 = vadd.f32 0.0, %v4459
      %v4461 = vpop.f32.mrb[0].mxu0
      %v4462 = vpop.f32.mrb[0].mxu0
      %v4463 = vadd.f32 0.0, %v4462
      %v4464 = vpop.f32.mrb[0].mxu0
      %4465 = vmatprep.mubr.bf16.mxu0 0
      %4466 = vmatmul.mubr.bf16.gmra.mrb[0].mxu0 %v4228
      %v4467 = vpop.f32.mrb[0].mxu0
      %v4468 = vadd.f32 0.0, %v4467
      %v4469 = vpop.f32.mrb[0].mxu0
      %v4470 = vpop.f32.mrb[0].mxu0
      %v4471 = vadd.f32 0.0, %v4470
      %v4472 = vpop.f32.mrb[0].mxu0
      %4473 = vmatprep.mubr.bf16.mxu0 0
      %4474 = vmatmul.mubr.bf16.gmra.mrb[0].mxu0 %v4237
      %v4475 = vpop.f32.mrb[0].mxu0
      %v4476 = vadd.f32 0.0, %v4475
      %v4477 = vpop.f32.mrb[0].mxu0
      %v4478 = vpop.f32.mrb[0].mxu0
      %v4479 = vadd.f32 0.0, %v4478
      %v4480 = vpop.f32.mrb[0].mxu0
      %4481 = vmatprep.mubr.bf16.mxu0 0
      %4482 = vmatmul.mubr.bf16.gmra.mrb[0].mxu0 %v4246
      %v4483 = vpop.f32.mrb[0].mxu0
      %v4484 = vadd.f32 0.0, %v4483
      %v4485 = vpop.f32.mrb[0].mxu0
      %v4486 = vpop.f32.mrb[0].mxu0
      %v4487 = vadd.f32 0.0, %v4486
      %v4488 = vpop.f32.mrb[0].mxu0
      %4489 = vdwg.mxu0
      %v4490 = vld [vmem:[#allocation3] sm:$0xff]
      %v4491 = vld [vmem:[#allocation3 + $0x8] sm:$0xff]
      %v4492 = vld [vmem:[#allocation3 + $0x10] sm:$0xff]
      %v4493 = vld [vmem:[#allocation3 + $0x18] sm:$0xff]
      %v4494 = vld [vmem:[#allocation3 + $0x20] sm:$0xff]
      %v4495 = vld [vmem:[#allocation3 + $0x28] sm:$0xff]
      %v4496 = vld [vmem:[#allocation3 + $0x30] sm:$0xff]
      %v4497 = vld [vmem:[#allocation3 + $0x38] sm:$0xff]
      %v4498 = vld [vmem:[#allocation3 + $0x40] sm:$0xff]
      %v4499 = vld [vmem:[#allocation3 + $0x48] sm:$0xff]
      %v4500 = vld [vmem:[#allocation3 + $0x50] sm:$0xff]
      %v4501 = vld [vmem:[#allocation3 + $0x58] sm:$0xff]
      %v4502 = vld [vmem:[#allocation3 + $0x60] sm:$0xff]
      %v4503 = vld [vmem:[#allocation3 + $0x68] sm:$0xff]
      %v4504 = vld [vmem:[#allocation3 + $0x70] sm:$0xff]
      %v4505 = vld [vmem:[#allocation3 + $0x78] sm:$0xff]
      %v4506 = vld [vmem:[#allocation3 + $0x80] sm:$0xff]
      %v4507 = vld [vmem:[#allocation3 + $0x88] sm:$0xff]
      %v4508 = vld [vmem:[#allocation3 + $0x90] sm:$0xff]
      %v4509 = vld [vmem:[#allocation3 + $0x98] sm:$0xff]
      %v4510 = vld [vmem:[#allocation3 + $0xa0] sm:$0xff]
      %v4511 = vld [vmem:[#allocation3 + $0xa8] sm:$0xff]
      %v4512 = vld [vmem:[#allocation3 + $0xb0] sm:$0xff]
      %v4513 = vld [vmem:[#allocation3 + $0xb8] sm:$0xff]
      %v4514 = vld [vmem:[#allocation3 + $0xc0] sm:$0xff]
      %v4515 = vld [vmem:[#allocation3 + $0xc8] sm:$0xff]
      %v4516 = vld [vmem:[#allocation3 + $0xd0] sm:$0xff]
      %v4517 = vld [vmem:[#allocation3 + $0xd8] sm:$0xff]
      %v4518 = vld [vmem:[#allocation3 + $0xe0] sm:$0xff]
      %v4519 = vld [vmem:[#allocation3 + $0xe8] sm:$0xff]
      %v4520 = vld [vmem:[#allocation3 + $0xf0] sm:$0xff]
      %v4521 = vld [vmem:[#allocation3 + $0xf8] sm:$0xff]
      %v4522 = vld [vmem:[#allocation3 + $0x100] sm:$0xff]
      %v4523 = vld [vmem:[#allocation3 + $0x108] sm:$0xff]
      %v4524 = vld [vmem:[#allocation3 + $0x110] sm:$0xff]
      %v4525 = vld [vmem:[#allocation3 + $0x118] sm:$0xff]
      %v4526 = vadd.f32 %v4490, %v4348
      %v4527 = vadd.f32 %v4491, %v4351
      %v4528 = vadd.f32 %v4492, %v4356
      %v4529 = vadd.f32 %v4493, %v4359
      %v4530 = vadd.f32 %v4494, %v4364
      %v4531 = vadd.f32 %v4495, %v4367
      %v4532 = vadd.f32 %v4496, %v4372
      %v4533 = vadd.f32 %v4497, %v4375
      %v4534 = vadd.f32 %v4498, %v4380
      %v4535 = vadd.f32 %v4499, %v4383
      %v4536 = vadd.f32 %v4500, %v4388
      %v4537 = vadd.f32 %v4501, %v4391
      %v4538 = vadd.f32 %v4502, %v4396
      %v4539 = vadd.f32 %v4503, %v4399
      %v4540 = vadd.f32 %v4504, %v4404
      %v4541 = vadd.f32 %v4505, %v4407
      %v4542 = vadd.f32 %v4506, %v4412
      %v4543 = vadd.f32 %v4507, %v4415
      %v4544 = vadd.f32 %v4508, %v4420
      %v4545 = vadd.f32 %v4509, %v4423
      %v4546 = vadd.f32 %v4510, %v4428
      %v4547 = vadd.f32 %v4511, %v4431
      %v4548 = vadd.f32 %v4512, %v4436
      %v4549 = vadd.f32 %v4513, %v4439
      %v4550 = vadd.f32 %v4514, %v4444
      %v4551 = vadd.f32 %v4515, %v4447
      %v4552 = vadd.f32 %v4516, %v4452
      %v4553 = vadd.f32 %v4517, %v4455
      %v4554 = vadd.f32 %v4518, %v4460
      %v4555 = vadd.f32 %v4519, %v4463
      %v4556 = vadd.f32 %v4520, %v4468
      %v4557 = vadd.f32 %v4521, %v4471
      %v4558 = vadd.f32 %v4522, %v4476
      %v4559 = vadd.f32 %v4523, %v4479
      %v4560 = vadd.f32 %v4524, %v4484
      %v4561 = vadd.f32 %v4525, %v4487
      %4562 = vst [vmem:[#allocation3] sm:$0xff] %v4526
      %4563 = vst [vmem:[#allocation3 + $0x8] sm:$0xff] %v4527
      %4564 = vst [vmem:[#allocation3 + $0x10] sm:$0xff] %v4528
      %4565 = vst [vmem:[#allocation3 + $0x18] sm:$0xff] %v4529
      %4566 = vst [vmem:[#allocation3 + $0x20] sm:$0xff] %v4530
      %4567 = vst [vmem:[#allocation3 + $0x28] sm:$0xff] %v4531
      %4568 = vst [vmem:[#allocation3 + $0x30] sm:$0xff] %v4532
      %4569 = vst [vmem:[#allocation3 + $0x38] sm:$0xff] %v4533
      %4570 = vst [vmem:[#allocation3 + $0x40] sm:$0xff] %v4534
      %4571 = vst [vmem:[#allocation3 + $0x48] sm:$0xff] %v4535
      %4572 = vst [vmem:[#allocation3 + $0x50] sm:$0xff] %v4536
      %4573 = vst [vmem:[#allocation3 + $0x58] sm:$0xff] %v4537
      %4574 = vst [vmem:[#allocation3 + $0x60] sm:$0xff] %v4538
      %4575 = vst [vmem:[#allocation3 + $0x68] sm:$0xff] %v4539
      %4576 = vst [vmem:[#allocation3 + $0x70] sm:$0xff] %v4540
      %4577 = vst [vmem:[#allocation3 + $0x78] sm:$0xff] %v4541
      %4578 = vst [vmem:[#allocation3 + $0x80] sm:$0xff] %v4542
      %4579 = vst [vmem:[#allocation3 + $0x88] sm:$0xff] %v4543
      %4580 = vst [vmem:[#allocation3 + $0x90] sm:$0xff] %v4544
      %4581 = vst [vmem:[#allocation3 + $0x98] sm:$0xff] %v4545
      %4582 = vst [vmem:[#allocation3 + $0xa0] sm:$0xff] %v4546
      %4583 = vst [vmem:[#allocation3 + $0xa8] sm:$0xff] %v4547
      %4584 = vst [vmem:[#allocation3 + $0xb0] sm:$0xff] %v4548
      %4585 = vst [vmem:[#allocation3 + $0xb8] sm:$0xff] %v4549
      %4586 = vst [vmem:[#allocation3 + $0xc0] sm:$0xff] %v4550
      %4587 = vst [vmem:[#allocation3 + $0xc8] sm:$0xff] %v4551
      %4588 = vst [vmem:[#allocation3 + $0xd0] sm:$0xff] %v4552
      %4589 = vst [vmem:[#allocation3 + $0xd8] sm:$0xff] %v4553
      %4590 = vst [vmem:[#allocation3 + $0xe0] sm:$0xff] %v4554
      %4591 = vst [vmem:[#allocation3 + $0xe8] sm:$0xff] %v4555
      %4592 = vst [vmem:[#allocation3 + $0xf0] sm:$0xff] %v4556
      %4593 = vst [vmem:[#allocation3 + $0xf8] sm:$0xff] %v4557
      %4594 = vst [vmem:[#allocation3 + $0x100] sm:$0xff] %v4558
      %4595 = vst [vmem:[#allocation3 + $0x108] sm:$0xff] %v4559
      %4596 = vst [vmem:[#allocation3 + $0x110] sm:$0xff] %v4560
      %4597 = vst [vmem:[#allocation3 + $0x118] sm:$0xff] %v4561
      %v4598 = vld [vmem:[#allocation2 + $0x10] sm:$0xc]
      %v4599 = vld [vmem:[#allocation2 + $0x14] sm:$0xf]
      %v4600 = vld [vmem:[#allocation2 + $0x18] sm:$0xf]
      %v4601 = vld [vmem:[#allocation2 + $0x1c] sm:$0xf]
      %v4602 = vld [vmem:[#allocation2 + $0x20] sm:$0xf]
      %v4603 = vld [vmem:[#allocation2 + $0x24] sm:$0xf]
      %v4604 = vld [vmem:[#allocation2 + $0x28] sm:$0xf]
      %v4605 = vld [vmem:[#allocation2 + $0x2c] sm:$0xf]
      %v4606 = vld [vmem:[#allocation2 + $0x30] sm:$0xf]
      %v4607 = vld [vmem:[#allocation2 + $0x34] sm:$0xf]
      %v4608 = vld [vmem:[#allocation2 + $0x38] sm:$0xf]
      %v4609 = vld [vmem:[#allocation2 + $0x3c] sm:$0xf]
      %v4610 = vld [vmem:[#allocation2 + $0x40] sm:$0xf]
      %v4611 = vld [vmem:[#allocation2 + $0x44] sm:$0xf]
      %v4612 = vld [vmem:[#allocation2 + $0x48] sm:$0xf]
      %v4613 = vld [vmem:[#allocation2 + $0x4c] sm:$0xf]
      %v4614 = vld [vmem:[#allocation2 + $0x50] sm:$0xf]
      %v4615 = vld [vmem:[#allocation2 + $0x54] sm:$0xf]
      %v4616 = vld [vmem:[#allocation2 + $0x58] sm:$0xf]
      %v4617 = vld [vmem:[#allocation2 + $0x5c] sm:$0xf]
      %v4618 = vld [vmem:[#allocation2 + $0x60] sm:$0xf]
      %v4619 = vld [vmem:[#allocation2 + $0x64] sm:$0xf]
      %v4620 = vld [vmem:[#allocation2 + $0x68] sm:$0xf]
      %v4621 = vld [vmem:[#allocation2 + $0x6c] sm:$0xf]
      %v4622 = vld [vmem:[#allocation2 + $0x70] sm:$0xf]
      %v4623 = vld [vmem:[#allocation2 + $0x74] sm:$0xf]
      %v4624 = vld [vmem:[#allocation2 + $0x78] sm:$0xf]
      %v4625 = vld [vmem:[#allocation2 + $0x7c] sm:$0xf]
      %v4626 = vld [vmem:[#allocation2 + $0x80] sm:$0xf]
      %v4627 = vld [vmem:[#allocation2 + $0x84] sm:$0xf]
      %v4628 = vld [vmem:[#allocation2 + $0x88] sm:$0xf]
      %v4629 = vld [vmem:[#allocation2 + $0x8c] sm:$0xf]
      %v4630 = vld [vmem:[#allocation2 + $0x90] sm:$0xf]
      %v4631 = vld [vmem:[#allocation2 + $0x94] sm:$0xf]
      %v4632 = vld [vmem:[#allocation2 + $0x98] sm:$0xf]
      %v4633 = vld [vmem:[#allocation2 + $0x9c] sm:$0xf]
      %v4634 = vld [vmem:[#allocation2 + $0xa0] sm:$0x7]
      %s4635 = scalar_lea.vmem %s3, 384
      %v4636 = vld [vmem:[%s4635] sm:$0xf]
      %v4637 = vld [vmem:[%s4635 + $0x4] sm:$0xf]
      %v4638 = vld [vmem:[%s4635 + $0x8] sm:$0xf]
      %v4639 = vld [vmem:[%s4635 + $0xc] sm:$0xf]
      %v4640 = vld [vmem:[%s4635 + $0x10] sm:$0xf]
      %v4641 = vld [vmem:[%s4635 + $0x14] sm:$0xf]
      %v4642 = vld [vmem:[%s4635 + $0x18] sm:$0xf]
      %v4643 = vld [vmem:[%s4635 + $0x1c] sm:$0xf]
      %v4644 = vld [vmem:[%s4635 + $0x20] sm:$0xf]
      %v4645 = vld [vmem:[%s4635 + $0x24] sm:$0xf]
      %v4646 = vld [vmem:[%s4635 + $0x28] sm:$0xf]
      %v4647 = vld [vmem:[%s4635 + $0x2c] sm:$0xf]
      %v4648 = vld [vmem:[%s4635 + $0x30] sm:$0xf]
      %v4649 = vld [vmem:[%s4635 + $0x34] sm:$0xf]
      %v4650 = vld [vmem:[%s4635 + $0x38] sm:$0xf]
      %v4651 = vld [vmem:[%s4635 + $0x3c] sm:$0xf]
      %v4689 = vunpack.c.l.b16 %v4598
      %v4690 = vunpack.c.l.b16 %v4599
      %v4691 = vunpack.c.l.b16 %v4600
      %v4692 = vunpack.c.l.b16 %v4601
      %v4693 = vunpack.c.l.b16 %v4602
      %v4694 = vunpack.c.l.b16 %v4603
      %v4695 = vunpack.c.l.b16 %v4604
      %v4696 = vunpack.c.l.b16 %v4605
      %v4697 = vunpack.c.l.b16 %v4606
      %v4698 = vunpack.c.l.b16 %v4607
      %v4699 = vunpack.c.l.b16 %v4608
      %v4700 = vunpack.c.l.b16 %v4609
      %v4701 = vunpack.c.l.b16 %v4610
      %v4702 = vunpack.c.l.b16 %v4611
      %v4703 = vunpack.c.l.b16 %v4612
      %v4704 = vunpack.c.l.b16 %v4613
      %v4705 = vunpack.c.l.b16 %v4614
      %v4706 = vunpack.c.l.b16 %v4615
      %v4707 = vunpack.c.l.b16 %v4616
      %v4708 = vunpack.c.l.b16 %v4617
      %v4709 = vunpack.c.l.b16 %v4618
      %v4710 = vunpack.c.l.b16 %v4619
      %v4711 = vunpack.c.l.b16 %v4620
      %v4712 = vunpack.c.l.b16 %v4621
      %v4713 = vunpack.c.l.b16 %v4622
      %v4714 = vunpack.c.l.b16 %v4623
      %v4715 = vunpack.c.l.b16 %v4624
      %v4716 = vunpack.c.l.b16 %v4625
      %v4717 = vunpack.c.l.b16 %v4626
      %v4718 = vunpack.c.l.b16 %v4627
      %v4719 = vunpack.c.l.b16 %v4628
      %v4720 = vunpack.c.l.b16 %v4629
      %v4721 = vunpack.c.l.b16 %v4630
      %v4722 = vunpack.c.l.b16 %v4631
      %v4723 = vunpack.c.l.b16 %v4632
      %v4724 = vunpack.c.l.b16 %v4633
      %v4725 = vunpack.c.l.b16 %v4634
      %v4726 = vpack.c.b16 %v4690, %v4689
      %v4727 = vpack.c.b16 %v4692, %v4691
      %v4728 = vpack.c.b16 %v4694, %v4693
      %v4729 = vpack.c.b16 %v4696, %v4695
      %v4730 = vpack.c.b16 %v4698, %v4697
      %v4731 = vpack.c.b16 %v4700, %v4699
      %v4732 = vpack.c.b16 %v4702, %v4701
      %v4733 = vpack.c.b16 %v4704, %v4703
      %v4734 = vpack.c.b16 %v4706, %v4705
      %v4735 = vpack.c.b16 %v4708, %v4707
      %v4736 = vpack.c.b16 %v4710, %v4709
      %v4737 = vpack.c.b16 %v4712, %v4711
      %v4738 = vpack.c.b16 %v4714, %v4713
      %v4739 = vpack.c.b16 %v4716, %v4715
      %v4740 = vpack.c.b16 %v4718, %v4717
      %v4741 = vpack.c.b16 %v4720, %v4719
      %v4742 = vpack.c.b16 %v4722, %v4721
      %v4743 = vpack.c.b16 %v4724, %v4723
      %v4744 = vpack.c.b16 %v4725, %v4725
      %v4746 = vshrl.u32 %v4726, 16
      %v4748 = vrot.slane %v4746, 2
      %v4749 = vshll.u32 %v4726, 16
      %v4751 = vrot.slane %v4749, 3
      %v4752 = vor.u32 %v4748, %v4751
      %v4754 = vshrl.u32 %v4727, 16
      %v4756 = vrot.slane %v4754, 2
      %v4757 = vshll.u32 %v4727, 16
      %v4759 = vrot.slane %v4757, 3
      %v4760 = vor.u32 %v4756, %v4759
      %v4761 = vsel %vm4076, %v4752, %v4760
      %v4763 = vshrl.u32 %v4728, 16
      %v4765 = vrot.slane %v4763, 2
      %v4766 = vshll.u32 %v4728, 16
      %v4768 = vrot.slane %v4766, 3
      %v4769 = vor.u32 %v4765, %v4768
      %v4770 = vsel %vm4076, %v4760, %v4769
      %v4772 = vshrl.u32 %v4729, 16
      %v4774 = vrot.slane %v4772, 2
      %v4775 = vshll.u32 %v4729, 16
      %v4777 = vrot.slane %v4775, 3
      %v4778 = vor.u32 %v4774, %v4777
      %v4779 = vsel %vm4076, %v4769, %v4778
      %v4781 = vshrl.u32 %v4730, 16
      %v4783 = vrot.slane %v4781, 2
      %v4784 = vshll.u32 %v4730, 16
      %v4786 = vrot.slane %v4784, 3
      %v4787 = vor.u32 %v4783, %v4786
      %v4788 = vsel %vm4076, %v4778, %v4787
      %v4790 = vshrl.u32 %v4731, 16
      %v4792 = vrot.slane %v4790, 2
      %v4793 = vshll.u32 %v4731, 16
      %v4795 = vrot.slane %v4793, 3
      %v4796 = vor.u32 %v4792, %v4795
      %v4797 = vsel %vm4076, %v4787, %v4796
      %v4799 = vshrl.u32 %v4732, 16
      %v4801 = vrot.slane %v4799, 2
      %v4802 = vshll.u32 %v4732, 16
      %v4804 = vrot.slane %v4802, 3
      %v4805 = vor.u32 %v4801, %v4804
      %v4806 = vsel %vm4076, %v4796, %v4805
      %v4808 = vshrl.u32 %v4733, 16
      %v4810 = vrot.slane %v4808, 2
      %v4811 = vshll.u32 %v4733, 16
      %v4813 = vrot.slane %v4811, 3
      %v4814 = vor.u32 %v4810, %v4813
      %v4815 = vsel %vm4076, %v4805, %v4814
      %v4817 = vshrl.u32 %v4734, 16
      %v4819 = vrot.slane %v4817, 2
      %v4820 = vshll.u32 %v4734, 16
      %v4822 = vrot.slane %v4820, 3
      %v4823 = vor.u32 %v4819, %v4822
      %v4824 = vsel %vm4076, %v4814, %v4823
      %v4826 = vshrl.u32 %v4735, 16
      %v4828 = vrot.slane %v4826, 2
      %v4829 = vshll.u32 %v4735, 16
      %v4831 = vrot.slane %v4829, 3
      %v4832 = vor.u32 %v4828, %v4831
      %v4833 = vsel %vm4076, %v4823, %v4832
      %v4835 = vshrl.u32 %v4736, 16
      %v4837 = vrot.slane %v4835, 2
      %v4838 = vshll.u32 %v4736, 16
      %v4840 = vrot.slane %v4838, 3
      %v4841 = vor.u32 %v4837, %v4840
      %v4842 = vsel %vm4076, %v4832, %v4841
      %v4844 = vshrl.u32 %v4737, 16
      %v4846 = vrot.slane %v4844, 2
      %v4847 = vshll.u32 %v4737, 16
      %v4849 = vrot.slane %v4847, 3
      %v4850 = vor.u32 %v4846, %v4849
      %v4851 = vsel %vm4076, %v4841, %v4850
      %v4853 = vshrl.u32 %v4738, 16
      %v4855 = vrot.slane %v4853, 2
      %v4856 = vshll.u32 %v4738, 16
      %v4858 = vrot.slane %v4856, 3
      %v4859 = vor.u32 %v4855, %v4858
      %v4860 = vsel %vm4076, %v4850, %v4859
      %v4862 = vshrl.u32 %v4739, 16
      %v4864 = vrot.slane %v4862, 2
      %v4865 = vshll.u32 %v4739, 16
      %v4867 = vrot.slane %v4865, 3
      %v4868 = vor.u32 %v4864, %v4867
      %v4869 = vsel %vm4076, %v4859, %v4868
      %v4871 = vshrl.u32 %v4740, 16
      %v4873 = vrot.slane %v4871, 2
      %v4874 = vshll.u32 %v4740, 16
      %v4876 = vrot.slane %v4874, 3
      %v4877 = vor.u32 %v4873, %v4876
      %v4878 = vsel %vm4076, %v4868, %v4877
      %v4880 = vshrl.u32 %v4741, 16
      %v4882 = vrot.slane %v4880, 2
      %v4883 = vshll.u32 %v4741, 16
      %v4885 = vrot.slane %v4883, 3
      %v4886 = vor.u32 %v4882, %v4885
      %v4887 = vsel %vm4076, %v4877, %v4886
      %v4889 = vshrl.u32 %v4742, 16
      %v4891 = vrot.slane %v4889, 2
      %v4892 = vshll.u32 %v4742, 16
      %v4894 = vrot.slane %v4892, 3
      %v4895 = vor.u32 %v4891, %v4894
      %v4896 = vsel %vm4076, %v4886, %v4895
      %v4898 = vshrl.u32 %v4743, 16
      %v4900 = vrot.slane %v4898, 2
      %v4901 = vshll.u32 %v4743, 16
      %v4903 = vrot.slane %v4901, 3
      %v4904 = vor.u32 %v4900, %v4903
      %v4905 = vsel %vm4076, %v4895, %v4904
      %v4907 = vshrl.u32 %v4744, 16
      %v4909 = vrot.slane %v4907, 2
      %v4910 = vshll.u32 %v4744, 16
      %v4912 = vrot.slane %v4910, 3
      %v4913 = vor.u32 %v4909, %v4912
      %v4914 = vsel %vm4076, %v4904, %v4913
      %v4949 = vunpack.c.l.b16 %v4636
      %v4950 = vunpack.c.l.b16 %v4637
      %v4951 = vunpack.c.l.b16 %v4638
      %v4952 = vunpack.c.l.b16 %v4639
      %v4953 = vunpack.c.l.b16 %v4640
      %v4954 = vunpack.c.l.b16 %v4641
      %v4955 = vunpack.c.l.b16 %v4642
      %v4956 = vunpack.c.l.b16 %v4643
      %v4957 = vunpack.c.l.b16 %v4644
      %v4958 = vunpack.c.l.b16 %v4645
      %v4959 = vunpack.c.l.b16 %v4646
      %v4960 = vunpack.c.l.b16 %v4647
      %v4961 = vunpack.c.l.b16 %v4648
      %v4962 = vunpack.c.l.b16 %v4649
      %v4963 = vunpack.c.l.b16 %v4650
      %v4964 = vunpack.c.l.b16 %v4651
      %v4965 = vpack.c.b16 %v4950, %v4949
      %v4966 = vpack.c.b16 %v4952, %v4951
      %v4967 = vpack.c.b16 %v4954, %v4953
      %v4968 = vpack.c.b16 %v4956, %v4955
      %v4969 = vpack.c.b16 %v4958, %v4957
      %v4970 = vpack.c.b16 %v4960, %v4959
      %v4971 = vpack.c.b16 %v4962, %v4961
      %v4972 = vpack.c.b16 %v4964, %v4963
      %4981 = vmatprep.subr.bf16.mxu0 0
      %4982 = vmatpush1.bf16.msra.mxu0 %v4965
      %4983 = vmatprep.subr.bf16.mxu0 0
      %4984 = vmatpush1.bf16.msra.mxu0 %v4966
      %4985 = vmatprep.subr.bf16.mxu0 0
      %4986 = vmatpush1.bf16.msra.mxu0 %v4967
      %4987 = vmatprep.subr.bf16.mxu0 0
      %4988 = vmatpush1.bf16.msra.mxu0 %v4968
      %4989 = vmatprep.subr.bf16.mxu0 0
      %4990 = vmatpush1.bf16.msra.mxu0 %v4969
      %4991 = vmatprep.subr.bf16.mxu0 0
      %4992 = vmatpush1.bf16.msra.mxu0 %v4970
      %4993 = vmatprep.subr.bf16.mxu0 0
      %4994 = vmatpush1.bf16.msra.mxu0 %v4971
      %4995 = vmatprep.subr.bf16.mxu0 0
      %4996 = vmatpush1.bf16.msra.mxu0 %v4972
      %4997 = vmatprep.subr.bf16.mxu0 0
      %4998 = vmatpush1.bf16.msra.mxu0 0
      %4999 = vmatprep.subr.bf16.mxu0 0
      %5000 = vmatpush1.bf16.msra.mxu0 0
      %5001 = vmatprep.subr.bf16.mxu0 0
      %5002 = vmatpush1.bf16.msra.mxu0 0
      %5003 = vmatprep.subr.bf16.mxu0 0
      %5004 = vmatpush1.bf16.msra.mxu0 0
      %5005 = vmatprep.subr.bf16.mxu0 0
      %5006 = vmatpush1.bf16.msra.mxu0 0
      %5007 = vmatprep.subr.bf16.mxu0 0
      %5008 = vmatpush1.bf16.msra.mxu0 0
      %5009 = vmatprep.subr.bf16.mxu0 0
      %5010 = vmatpush1.bf16.msra.mxu0 0
      %5011 = vmatprep.subr.bf16.mxu0 0
      %5012 = vmatpush1.bf16.msra.mxu0 0
      %5013 = vmatprep.mubr.bf16.mxu0 0
      %5014 = vmatmul.mubr.bf16.gmra.mrb[0].mxu0 %v4761
      %v5015 = vpop.f32.mrb[0].mxu0
      %v5016 = vadd.f32 0.0, %v5015
      %v5017 = vpop.f32.mrb[0].mxu0
      %v5018 = vpop.f32.mrb[0].mxu0
      %v5019 = vadd.f32 0.0, %v5018
      %v5020 = vpop.f32.mrb[0].mxu0
      %5021 = vmatprep.mubr.bf16.mxu0 0
      %5022 = vmatmul.mubr.bf16.gmra.mrb[0].mxu0 %v4770
      %v5023 = vpop.f32.mrb[0].mxu0
      %v5024 = vadd.f32 0.0, %v5023
      %v5025 = vpop.f32.mrb[0].mxu0
      %v5026 = vpop.f32.mrb[0].mxu0
      %v5027 = vadd.f32 0.0, %v5026
      %v5028 = vpop.f32.mrb[0].mxu0
      %5029 = vmatprep.mubr.bf16.mxu0 0
      %5030 = vmatmul.mubr.bf16.gmra.mrb[0].mxu0 %v4779
      %v5031 = vpop.f32.mrb[0].mxu0
      %v5032 = vadd.f32 0.0, %v5031
      %v5033 = vpop.f32.mrb[0].mxu0
      %v5034 = vpop.f32.mrb[0].mxu0
      %v5035 = vadd.f32 0.0, %v5034
      %v5036 = vpop.f32.mrb[0].mxu0
      %5037 = vmatprep.mubr.bf16.mxu0 0
      %5038 = vmatmul.mubr.bf16.gmra.mrb[0].mxu0 %v4788
      %v5039 = vpop.f32.mrb[0].mxu0
      %v5040 = vadd.f32 0.0, %v5039
      %v5041 = vpop.f32.mrb[0].mxu0
      %v5042 = vpop.f32.mrb[0].mxu0
      %v5043 = vadd.f32 0.0, %v5042
      %v5044 = vpop.f32.mrb[0].mxu0
      %5045 = vmatprep.mubr.bf16.mxu0 0
      %5046 = vmatmul.mubr.bf16.gmra.mrb[0].mxu0 %v4797
      %v5047 = vpop.f32.mrb[0].mxu0
      %v5048 = vadd.f32 0.0, %v5047
      %v5049 = vpop.f32.mrb[0].mxu0
      %v5050 = vpop.f32.mrb[0].mxu0
      %v5051 = vadd.f32 0.0, %v5050
      %v5052 = vpop.f32.mrb[0].mxu0
      %5053 = vmatprep.mubr.bf16.mxu0 0
      %5054 = vmatmul.mubr.bf16.gmra.mrb[0].mxu0 %v4806
      %v5055 = vpop.f32.mrb[0].mxu0
      %v5056 = vadd.f32 0.0, %v5055
      %v5057 = vpop.f32.mrb[0].mxu0
      %v5058 = vpop.f32.mrb[0].mxu0
      %v5059 = vadd.f32 0.0, %v5058
      %v5060 = vpop.f32.mrb[0].mxu0
      %5061 = vmatprep.mubr.bf16.mxu0 0
      %5062 = vmatmul.mubr.bf16.gmra.mrb[0].mxu0 %v4815
      %v5063 = vpop.f32.mrb[0].mxu0
      %v5064 = vadd.f32 0.0, %v5063
      %v5065 = vpop.f32.mrb[0].mxu0
      %v5066 = vpop.f32.mrb[0].mxu0
      %v5067 = vadd.f32 0.0, %v5066
      %v5068 = vpop.f32.mrb[0].mxu0
      %5069 = vmatprep.mubr.bf16.mxu0 0
      %5070 = vmatmul.mubr.bf16.gmra.mrb[0].mxu0 %v4824
      %v5071 = vpop.f32.mrb[0].mxu0
      %v5072 = vadd.f32 0.0, %v5071
      %v5073 = vpop.f32.mrb[0].mxu0
      %v5074 = vpop.f32.mrb[0].mxu0
      %v5075 = vadd.f32 0.0, %v5074
      %v5076 = vpop.f32.mrb[0].mxu0
      %5077 = vmatprep.mubr.bf16.mxu0 0
      %5078 = vmatmul.mubr.bf16.gmra.mrb[0].mxu0 %v4833
      %v5079 = vpop.f32.mrb[0].mxu0
      %v5080 = vadd.f32 0.0, %v5079
      %v5081 = vpop.f32.mrb[0].mxu0
      %v5082 = vpop.f32.mrb[0].mxu0
      %v5083 = vadd.f32 0.0, %v5082
      %v5084 = vpop.f32.mrb[0].mxu0
      %5085 = vmatprep.mubr.bf16.mxu0 0
      %5086 = vmatmul.mubr.bf16.gmra.mrb[0].mxu0 %v4842
      %v5087 = vpop.f32.mrb[0].mxu0
      %v5088 = vadd.f32 0.0, %v5087
      %v5089 = vpop.f32.mrb[0].mxu0
      %v5090 = vpop.f32.mrb[0].mxu0
      %v5091 = vadd.f32 0.0, %v5090
      %v5092 = vpop.f32.mrb[0].mxu0
      %5093 = vmatprep.mubr.bf16.mxu0 0
      %5094 = vmatmul.mubr.bf16.gmra.mrb[0].mxu0 %v4851
      %v5095 = vpop.f32.mrb[0].mxu0
      %v5096 = vadd.f32 0.0, %v5095
      %v5097 = vpop.f32.mrb[0].mxu0
      %v5098 = vpop.f32.mrb[0].mxu0
      %v5099 = vadd.f32 0.0, %v5098
      %v5100 = vpop.f32.mrb[0].mxu0
      %5101 = vmatprep.mubr.bf16.mxu0 0
      %5102 = vmatmul.mubr.bf16.gmra.mrb[0].mxu0 %v4860
      %v5103 = vpop.f32.mrb[0].mxu0
      %v5104 = vadd.f32 0.0, %v5103
      %v5105 = vpop.f32.mrb[0].mxu0
      %v5106 = vpop.f32.mrb[0].mxu0
      %v5107 = vadd.f32 0.0, %v5106
      %v5108 = vpop.f32.mrb[0].mxu0
      %5109 = vmatprep.mubr.bf16.mxu0 0
      %5110 = vmatmul.mubr.bf16.gmra.mrb[0].mxu0 %v4869
      %v5111 = vpop.f32.mrb[0].mxu0
      %v5112 = vadd.f32 0.0, %v5111
      %v5113 = vpop.f32.mrb[0].mxu0
      %v5114 = vpop.f32.mrb[0].mxu0
      %v5115 = vadd.f32 0.0, %v5114
      %v5116 = vpop.f32.mrb[0].mxu0
      %5117 = vmatprep.mubr.bf16.mxu0 0
      %5118 = vmatmul.mubr.bf16.gmra.mrb[0].mxu0 %v4878
      %v5119 = vpop.f32.mrb[0].mxu0
      %v5120 = vadd.f32 0.0, %v5119
      %v5121 = vpop.f32.mrb[0].mxu0
      %v5122 = vpop.f32.mrb[0].mxu0
      %v5123 = vadd.f32 0.0, %v5122
      %v5124 = vpop.f32.mrb[0].mxu0
      %5125 = vmatprep.mubr.bf16.mxu0 0
      %5126 = vmatmul.mubr.bf16.gmra.mrb[0].mxu0 %v4887
      %v5127 = vpop.f32.mrb[0].mxu0
      %v5128 = vadd.f32 0.0, %v5127
      %v5129 = vpop.f32.mrb[0].mxu0
      %v5130 = vpop.f32.mrb[0].mxu0
      %v5131 = vadd.f32 0.0, %v5130
      %v5132 = vpop.f32.mrb[0].mxu0
      %5133 = vmatprep.mubr.bf16.mxu0 0
      %5134 = vmatmul.mubr.bf16.gmra.mrb[0].mxu0 %v4896
      %v5135 = vpop.f32.mrb[0].mxu0
      %v5136 = vadd.f32 0.0, %v5135
      %v5137 = vpop.f32.mrb[0].mxu0
      %v5138 = vpop.f32.mrb[0].mxu0
      %v5139 = vadd.f32 0.0, %v5138
      %v5140 = vpop.f32.mrb[0].mxu0
      %5141 = vmatprep.mubr.bf16.mxu0 0
      %5142 = vmatmul.mubr.bf16.gmra.mrb[0].mxu0 %v4905
      %v5143 = vpop.f32.mrb[0].mxu0
      %v5144 = vadd.f32 0.0, %v5143
      %v5145 = vpop.f32.mrb[0].mxu0
      %v5146 = vpop.f32.mrb[0].mxu0
      %v5147 = vadd.f32 0.0, %v5146
      %v5148 = vpop.f32.mrb[0].mxu0
      %5149 = vmatprep.mubr.bf16.mxu0 0
      %5150 = vmatmul.mubr.bf16.gmra.mrb[0].mxu0 %v4914
      %v5151 = vpop.f32.mrb[0].mxu0
      %v5152 = vadd.f32 0.0, %v5151
      %v5153 = vpop.f32.mrb[0].mxu0
      %v5154 = vpop.f32.mrb[0].mxu0
      %v5155 = vadd.f32 0.0, %v5154
      %v5156 = vpop.f32.mrb[0].mxu0
      %5157 = vdwg.mxu0
      %v5158 = vld [vmem:[#allocation3] sm:$0xff]
      %v5159 = vld [vmem:[#allocation3 + $0x8] sm:$0xff]
      %v5160 = vld [vmem:[#allocation3 + $0x10] sm:$0xff]
      %v5161 = vld [vmem:[#allocation3 + $0x18] sm:$0xff]
      %v5162 = vld [vmem:[#allocation3 + $0x20] sm:$0xff]
      %v5163 = vld [vmem:[#allocation3 + $0x28] sm:$0xff]
      %v5164 = vld [vmem:[#allocation3 + $0x30] sm:$0xff]
      %v5165 = vld [vmem:[#allocation3 + $0x38] sm:$0xff]
      %v5166 = vld [vmem:[#allocation3 + $0x40] sm:$0xff]
      %v5167 = vld [vmem:[#allocation3 + $0x48] sm:$0xff]
      %v5168 = vld [vmem:[#allocation3 + $0x50] sm:$0xff]
      %v5169 = vld [vmem:[#allocation3 + $0x58] sm:$0xff]
      %v5170 = vld [vmem:[#allocation3 + $0x60] sm:$0xff]
      %v5171 = vld [vmem:[#allocation3 + $0x68] sm:$0xff]
      %v5172 = vld [vmem:[#allocation3 + $0x70] sm:$0xff]
      %v5173 = vld [vmem:[#allocation3 + $0x78] sm:$0xff]
      %v5174 = vld [vmem:[#allocation3 + $0x80] sm:$0xff]
      %v5175 = vld [vmem:[#allocation3 + $0x88] sm:$0xff]
      %v5176 = vld [vmem:[#allocation3 + $0x90] sm:$0xff]
      %v5177 = vld [vmem:[#allocation3 + $0x98] sm:$0xff]
      %v5178 = vld [vmem:[#allocation3 + $0xa0] sm:$0xff]
      %v5179 = vld [vmem:[#allocation3 + $0xa8] sm:$0xff]
      %v5180 = vld [vmem:[#allocation3 + $0xb0] sm:$0xff]
      %v5181 = vld [vmem:[#allocation3 + $0xb8] sm:$0xff]
      %v5182 = vld [vmem:[#allocation3 + $0xc0] sm:$0xff]
      %v5183 = vld [vmem:[#allocation3 + $0xc8] sm:$0xff]
      %v5184 = vld [vmem:[#allocation3 + $0xd0] sm:$0xff]
      %v5185 = vld [vmem:[#allocation3 + $0xd8] sm:$0xff]
      %v5186 = vld [vmem:[#allocation3 + $0xe0] sm:$0xff]
      %v5187 = vld [vmem:[#allocation3 + $0xe8] sm:$0xff]
      %v5188 = vld [vmem:[#allocation3 + $0xf0] sm:$0xff]
      %v5189 = vld [vmem:[#allocation3 + $0xf8] sm:$0xff]
      %v5190 = vld [vmem:[#allocation3 + $0x100] sm:$0xff]
      %v5191 = vld [vmem:[#allocation3 + $0x108] sm:$0xff]
      %v5192 = vld [vmem:[#allocation3 + $0x110] sm:$0xff]
      %v5193 = vld [vmem:[#allocation3 + $0x118] sm:$0xff]
      %v5194 = vadd.f32 %v5158, %v5016
      %v5195 = vadd.f32 %v5159, %v5019
      %v5196 = vadd.f32 %v5160, %v5024
      %v5197 = vadd.f32 %v5161, %v5027
      %v5198 = vadd.f32 %v5162, %v5032
      %v5199 = vadd.f32 %v5163, %v5035
      %v5200 = vadd.f32 %v5164, %v5040
      %v5201 = vadd.f32 %v5165, %v5043
      %v5202 = vadd.f32 %v5166, %v5048
      %v5203 = vadd.f32 %v5167, %v5051
      %v5204 = vadd.f32 %v5168, %v5056
      %v5205 = vadd.f32 %v5169, %v5059
      %v5206 = vadd.f32 %v5170, %v5064
      %v5207 = vadd.f32 %v5171, %v5067
      %v5208 = vadd.f32 %v5172, %v5072
      %v5209 = vadd.f32 %v5173, %v5075
      %v5210 = vadd.f32 %v5174, %v5080
      %v5211 = vadd.f32 %v5175, %v5083
      %v5212 = vadd.f32 %v5176, %v5088
      %v5213 = vadd.f32 %v5177, %v5091
      %v5214 = vadd.f32 %v5178, %v5096
      %v5215 = vadd.f32 %v5179, %v5099
      %v5216 = vadd.f32 %v5180, %v5104
      %v5217 = vadd.f32 %v5181, %v5107
      %v5218 = vadd.f32 %v5182, %v5112
      %v5219 = vadd.f32 %v5183, %v5115
      %v5220 = vadd.f32 %v5184, %v5120
      %v5221 = vadd.f32 %v5185, %v5123
      %v5222 = vadd.f32 %v5186, %v5128
      %v5223 = vadd.f32 %v5187, %v5131
      %v5224 = vadd.f32 %v5188, %v5136
      %v5225 = vadd.f32 %v5189, %v5139
      %v5226 = vadd.f32 %v5190, %v5144
      %v5227 = vadd.f32 %v5191, %v5147
      %v5228 = vadd.f32 %v5192, %v5152
      %v5229 = vadd.f32 %v5193, %v5155
      %5230 = vst [vmem:[#allocation3] sm:$0xff] %v5194
      %5231 = vst [vmem:[#allocation3 + $0x8] sm:$0xff] %v5195
      %5232 = vst [vmem:[#allocation3 + $0x10] sm:$0xff] %v5196
      %5233 = vst [vmem:[#allocation3 + $0x18] sm:$0xff] %v5197
      %5234 = vst [vmem:[#allocation3 + $0x20] sm:$0xff] %v5198
      %5235 = vst [vmem:[#allocation3 + $0x28] sm:$0xff] %v5199
      %5236 = vst [vmem:[#allocation3 + $0x30] sm:$0xff] %v5200
      %5237 = vst [vmem:[#allocation3 + $0x38] sm:$0xff] %v5201
      %5238 = vst [vmem:[#allocation3 + $0x40] sm:$0xff] %v5202
      %5239 = vst [vmem:[#allocation3 + $0x48] sm:$0xff] %v5203
      %5240 = vst [vmem:[#allocation3 + $0x50] sm:$0xff] %v5204
      %5241 = vst [vmem:[#allocation3 + $0x58] sm:$0xff] %v5205
      %5242 = vst [vmem:[#allocation3 + $0x60] sm:$0xff] %v5206
      %5243 = vst [vmem:[#allocation3 + $0x68] sm:$0xff] %v5207
      %5244 = vst [vmem:[#allocation3 + $0x70] sm:$0xff] %v5208
      %5245 = vst [vmem:[#allocation3 + $0x78] sm:$0xff] %v5209
      %5246 = vst [vmem:[#allocation3 + $0x80] sm:$0xff] %v5210
      %5247 = vst [vmem:[#allocation3 + $0x88] sm:$0xff] %v5211
      %5248 = vst [vmem:[#allocation3 + $0x90] sm:$0xff] %v5212
      %5249 = vst [vmem:[#allocation3 + $0x98] sm:$0xff] %v5213
      %5250 = vst [vmem:[#allocation3 + $0xa0] sm:$0xff] %v5214
      %5251 = vst [vmem:[#allocation3 + $0xa8] sm:$0xff] %v5215
      %5252 = vst [vmem:[#allocation3 + $0xb0] sm:$0xff] %v5216
      %5253 = vst [vmem:[#allocation3 + $0xb8] sm:$0xff] %v5217
      %5254 = vst [vmem:[#allocation3 + $0xc0] sm:$0xff] %v5218
      %5255 = vst [vmem:[#allocation3 + $0xc8] sm:$0xff] %v5219
      %5256 = vst [vmem:[#allocation3 + $0xd0] sm:$0xff] %v5220
      %5257 = vst [vmem:[#allocation3 + $0xd8] sm:$0xff] %v5221
      %5258 = vst [vmem:[#allocation3 + $0xe0] sm:$0xff] %v5222
      %5259 = vst [vmem:[#allocation3 + $0xe8] sm:$0xff] %v5223
      %5260 = vst [vmem:[#allocation3 + $0xf0] sm:$0xff] %v5224
      %5261 = vst [vmem:[#allocation3 + $0xf8] sm:$0xff] %v5225
      %5262 = vst [vmem:[#allocation3 + $0x100] sm:$0xff] %v5226
      %5263 = vst [vmem:[#allocation3 + $0x108] sm:$0xff] %v5227
      %5264 = vst [vmem:[#allocation3 + $0x110] sm:$0xff] %v5228
      %5265 = vst [vmem:[#allocation3 + $0x118] sm:$0xff] %v5229
      %v5266 = vld [vmem:[#allocation2 + $0x10] sm:$0x8]
      %v5267 = vld [vmem:[#allocation2 + $0x14] sm:$0xf]
      %v5268 = vld [vmem:[#allocation2 + $0x18] sm:$0xf]
      %v5269 = vld [vmem:[#allocation2 + $0x1c] sm:$0xf]
      %v5270 = vld [vmem:[#allocation2 + $0x20] sm:$0xf]
      %v5271 = vld [vmem:[#allocation2 + $0x24] sm:$0xf]
      %v5272 = vld [vmem:[#allocation2 + $0x28] sm:$0xf]
      %v5273 = vld [vmem:[#allocation2 + $0x2c] sm:$0xf]
      %v5274 = vld [vmem:[#allocation2 + $0x30] sm:$0xf]
      %v5275 = vld [vmem:[#allocation2 + $0x34] sm:$0xf]
      %v5276 = vld [vmem:[#allocation2 + $0x38] sm:$0xf]
      %v5277 = vld [vmem:[#allocation2 + $0x3c] sm:$0xf]
      %v5278 = vld [vmem:[#allocation2 + $0x40] sm:$0xf]
      %v5279 = vld [vmem:[#allocation2 + $0x44] sm:$0xf]
      %v5280 = vld [vmem:[#allocation2 + $0x48] sm:$0xf]
      %v5281 = vld [vmem:[#allocation2 + $0x4c] sm:$0xf]
      %v5282 = vld [vmem:[#allocation2 + $0x50] sm:$0xf]
      %v5283 = vld [vmem:[#allocation2 + $0x54] sm:$0xf]
      %v5284 = vld [vmem:[#allocation2 + $0x58] sm:$0xf]
      %v5285 = vld [vmem:[#allocation2 + $0x5c] sm:$0xf]
      %v5286 = vld [vmem:[#allocation2 + $0x60] sm:$0xf]
      %v5287 = vld [vmem:[#allocation2 + $0x64] sm:$0xf]
      %v5288 = vld [vmem:[#allocation2 + $0x68] sm:$0xf]
      %v5289 = vld [vmem:[#allocation2 + $0x6c] sm:$0xf]
      %v5290 = vld [vmem:[#allocation2 + $0x70] sm:$0xf]
      %v5291 = vld [vmem:[#allocation2 + $0x74] sm:$0xf]
      %v5292 = vld [vmem:[#allocation2 + $0x78] sm:$0xf]
      %v5293 = vld [vmem:[#allocation2 + $0x7c] sm:$0xf]
      %v5294 = vld [vmem:[#allocation2 + $0x80] sm:$0xf]
      %v5295 = vld [vmem:[#allocation2 + $0x84] sm:$0xf]
      %v5296 = vld [vmem:[#allocation2 + $0x88] sm:$0xf]
      %v5297 = vld [vmem:[#allocation2 + $0x8c] sm:$0xf]
      %v5298 = vld [vmem:[#allocation2 + $0x90] sm:$0xf]
      %v5299 = vld [vmem:[#allocation2 + $0x94] sm:$0xf]
      %v5300 = vld [vmem:[#allocation2 + $0x98] sm:$0xf]
      %v5301 = vld [vmem:[#allocation2 + $0x9c] sm:$0xf]
      %v5302 = vld [vmem:[#allocation2 + $0xa0] sm:$0x7]
      %s5303 = scalar_lea.vmem %s3, 448
      %v5304 = vld [vmem:[%s5303] sm:$0xf]
      %v5305 = vld [vmem:[%s5303 + $0x4] sm:$0xf]
      %v5306 = vld [vmem:[%s5303 + $0x8] sm:$0xf]
      %v5307 = vld [vmem:[%s5303 + $0xc] sm:$0xf]
      %v5308 = vld [vmem:[%s5303 + $0x10] sm:$0xf]
      %v5309 = vld [vmem:[%s5303 + $0x14] sm:$0xf]
      %v5310 = vld [vmem:[%s5303 + $0x18] sm:$0xf]
      %v5311 = vld [vmem:[%s5303 + $0x1c] sm:$0xf]
      %v5312 = vld [vmem:[%s5303 + $0x20] sm:$0xf]
      %v5313 = vld [vmem:[%s5303 + $0x24] sm:$0xf]
      %v5314 = vld [vmem:[%s5303 + $0x28] sm:$0xf]
      %v5315 = vld [vmem:[%s5303 + $0x2c] sm:$0xf]
      %v5316 = vld [vmem:[%s5303 + $0x30] sm:$0xf]
      %v5317 = vld [vmem:[%s5303 + $0x34] sm:$0xf]
      %v5318 = vld [vmem:[%s5303 + $0x38] sm:$0xf]
      %v5319 = vld [vmem:[%s5303 + $0x3c] sm:$0xf]
      %v5357 = vunpack.c.l.b16 %v5266
      %v5358 = vunpack.c.l.b16 %v5267
      %v5359 = vunpack.c.l.b16 %v5268
      %v5360 = vunpack.c.l.b16 %v5269
      %v5361 = vunpack.c.l.b16 %v5270
      %v5362 = vunpack.c.l.b16 %v5271
      %v5363 = vunpack.c.l.b16 %v5272
      %v5364 = vunpack.c.l.b16 %v5273
      %v5365 = vunpack.c.l.b16 %v5274
      %v5366 = vunpack.c.l.b16 %v5275
      %v5367 = vunpack.c.l.b16 %v5276
      %v5368 = vunpack.c.l.b16 %v5277
      %v5369 = vunpack.c.l.b16 %v5278
      %v5370 = vunpack.c.l.b16 %v5279
      %v5371 = vunpack.c.l.b16 %v5280
      %v5372 = vunpack.c.l.b16 %v5281
      %v5373 = vunpack.c.l.b16 %v5282
      %v5374 = vunpack.c.l.b16 %v5283
      %v5375 = vunpack.c.l.b16 %v5284
      %v5376 = vunpack.c.l.b16 %v5285
      %v5377 = vunpack.c.l.b16 %v5286
      %v5378 = vunpack.c.l.b16 %v5287
      %v5379 = vunpack.c.l.b16 %v5288
      %v5380 = vunpack.c.l.b16 %v5289
      %v5381 = vunpack.c.l.b16 %v5290
      %v5382 = vunpack.c.l.b16 %v5291
      %v5383 = vunpack.c.l.b16 %v5292
      %v5384 = vunpack.c.l.b16 %v5293
      %v5385 = vunpack.c.l.b16 %v5294
      %v5386 = vunpack.c.l.b16 %v5295
      %v5387 = vunpack.c.l.b16 %v5296
      %v5388 = vunpack.c.l.b16 %v5297
      %v5389 = vunpack.c.l.b16 %v5298
      %v5390 = vunpack.c.l.b16 %v5299
      %v5391 = vunpack.c.l.b16 %v5300
      %v5392 = vunpack.c.l.b16 %v5301
      %v5393 = vunpack.c.l.b16 %v5302
      %v5394 = vpack.c.b16 %v5358, %v5357
      %v5395 = vpack.c.b16 %v5360, %v5359
      %v5396 = vpack.c.b16 %v5362, %v5361
      %v5397 = vpack.c.b16 %v5364, %v5363
      %v5398 = vpack.c.b16 %v5366, %v5365
      %v5399 = vpack.c.b16 %v5368, %v5367
      %v5400 = vpack.c.b16 %v5370, %v5369
      %v5401 = vpack.c.b16 %v5372, %v5371
      %v5402 = vpack.c.b16 %v5374, %v5373
      %v5403 = vpack.c.b16 %v5376, %v5375
      %v5404 = vpack.c.b16 %v5378, %v5377
      %v5405 = vpack.c.b16 %v5380, %v5379
      %v5406 = vpack.c.b16 %v5382, %v5381
      %v5407 = vpack.c.b16 %v5384, %v5383
      %v5408 = vpack.c.b16 %v5386, %v5385
      %v5409 = vpack.c.b16 %v5388, %v5387
      %v5410 = vpack.c.b16 %v5390, %v5389
      %v5411 = vpack.c.b16 %v5392, %v5391
      %v5412 = vpack.c.b16 %v5393, %v5393
      %vm5413 = vcmask 1044480
      %v5414 = vrot.slane %v5394, 3
      %v5415 = vrot.slane %v5395, 3
      %v5416 = vsel %vm5413, %v5414, %v5415
      %v5417 = vrot.slane %v5396, 3
      %v5418 = vsel %vm5413, %v5415, %v5417
      %v5419 = vrot.slane %v5397, 3
      %v5420 = vsel %vm5413, %v5417, %v5419
      %v5421 = vrot.slane %v5398, 3
      %v5422 = vsel %vm5413, %v5419, %v5421
      %v5423 = vrot.slane %v5399, 3
      %v5424 = vsel %vm5413, %v5421, %v5423
      %v5425 = vrot.slane %v5400, 3
      %v5426 = vsel %vm5413, %v5423, %v5425
      %v5427 = vrot.slane %v5401, 3
      %v5428 = vsel %vm5413, %v5425, %v5427
      %v5429 = vrot.slane %v5402, 3
      %v5430 = vsel %vm5413, %v5427, %v5429
      %v5431 = vrot.slane %v5403, 3
      %v5432 = vsel %vm5413, %v5429, %v5431
      %v5433 = vrot.slane %v5404, 3
      %v5434 = vsel %vm5413, %v5431, %v5433
      %v5435 = vrot.slane %v5405, 3
      %v5436 = vsel %vm5413, %v5433, %v5435
      %v5437 = vrot.slane %v5406, 3
      %v5438 = vsel %vm5413, %v5435, %v5437
      %v5439 = vrot.slane %v5407, 3
      %v5440 = vsel %vm5413, %v5437, %v5439
      %v5441 = vrot.slane %v5408, 3
      %v5442 = vsel %vm5413, %v5439, %v5441
      %v5443 = vrot.slane %v5409, 3
      %v5444 = vsel %vm5413, %v5441, %v5443
      %v5445 = vrot.slane %v5410, 3
      %v5446 = vsel %vm5413, %v5443, %v5445
      %v5447 = vrot.slane %v5411, 3
      %v5448 = vsel %vm5413, %v5445, %v5447
      %v5449 = vrot.slane %v5412, 3
      %v5450 = vsel %vm5413, %v5447, %v5449
      %v5485 = vunpack.c.l.b16 %v5304
      %v5486 = vunpack.c.l.b16 %v5305
      %v5487 = vunpack.c.l.b16 %v5306
      %v5488 = vunpack.c.l.b16 %v5307
      %v5489 = vunpack.c.l.b16 %v5308
      %v5490 = vunpack.c.l.b16 %v5309
      %v5491 = vunpack.c.l.b16 %v5310
      %v5492 = vunpack.c.l.b16 %v5311
      %v5493 = vunpack.c.l.b16 %v5312
      %v5494 = vunpack.c.l.b16 %v5313
      %v5495 = vunpack.c.l.b16 %v5314
      %v5496 = vunpack.c.l.b16 %v5315
      %v5497 = vunpack.c.l.b16 %v5316
      %v5498 = vunpack.c.l.b16 %v5317
      %v5499 = vunpack.c.l.b16 %v5318
      %v5500 = vunpack.c.l.b16 %v5319
      %v5501 = vpack.c.b16 %v5486, %v5485
      %v5502 = vpack.c.b16 %v5488, %v5487
      %v5503 = vpack.c.b16 %v5490, %v5489
      %v5504 = vpack.c.b16 %v5492, %v5491
      %v5505 = vpack.c.b16 %v5494, %v5493
      %v5506 = vpack.c.b16 %v5496, %v5495
      %v5507 = vpack.c.b16 %v5498, %v5497
      %v5508 = vpack.c.b16 %v5500, %v5499
      %5517 = vmatprep.subr.bf16.mxu0 0
      %5518 = vmatpush1.bf16.msra.mxu0 %v5501
      %5519 = vmatprep.subr.bf16.mxu0 0
      %5520 = vmatpush1.bf16.msra.mxu0 %v5502
      %5521 = vmatprep.subr.bf16.mxu0 0
      %5522 = vmatpush1.bf16.msra.mxu0 %v5503
      %5523 = vmatprep.subr.bf16.mxu0 0
      %5524 = vmatpush1.bf16.msra.mxu0 %v5504
      %5525 = vmatprep.subr.bf16.mxu0 0
      %5526 = vmatpush1.bf16.msra.mxu0 %v5505
      %5527 = vmatprep.subr.bf16.mxu0 0
      %5528 = vmatpush1.bf16.msra.mxu0 %v5506
      %5529 = vmatprep.subr.bf16.mxu0 0
      %5530 = vmatpush1.bf16.msra.mxu0 %v5507
      %5531 = vmatprep.subr.bf16.mxu0 0
      %5532 = vmatpush1.bf16.msra.mxu0 %v5508
      %5533 = vmatprep.subr.bf16.mxu0 0
      %5534 = vmatpush1.bf16.msra.mxu0 0
      %5535 = vmatprep.subr.bf16.mxu0 0
      %5536 = vmatpush1.bf16.msra.mxu0 0
      %5537 = vmatprep.subr.bf16.mxu0 0
      %5538 = vmatpush1.bf16.msra.mxu0 0
      %5539 = vmatprep.subr.bf16.mxu0 0
      %5540 = vmatpush1.bf16.msra.mxu0 0
      %5541 = vmatprep.subr.bf16.mxu0 0
      %5542 = vmatpush1.bf16.msra.mxu0 0
      %5543 = vmatprep.subr.bf16.mxu0 0
      %5544 = vmatpush1.bf16.msra.mxu0 0
      %5545 = vmatprep.subr.bf16.mxu0 0
      %5546 = vmatpush1.bf16.msra.mxu0 0
      %5547 = vmatprep.subr.bf16.mxu0 0
      %5548 = vmatpush1.bf16.msra.mxu0 0
      %5549 = vmatprep.mubr.bf16.mxu0 0
      %5550 = vmatmul.mubr.bf16.gmra.mrb[0].mxu0 %v5416
      %v5551 = vpop.f32.mrb[0].mxu0
      %v5552 = vadd.f32 0.0, %v5551
      %v5553 = vpop.f32.mrb[0].mxu0
      %v5554 = vpop.f32.mrb[0].mxu0
      %v5555 = vadd.f32 0.0, %v5554
      %v5556 = vpop.f32.mrb[0].mxu0
      %5557 = vmatprep.mubr.bf16.mxu0 0
      %5558 = vmatmul.mubr.bf16.gmra.mrb[0].mxu0 %v5418
      %v5559 = vpop.f32.mrb[0].mxu0
      %v5560 = vadd.f32 0.0, %v5559
      %v5561 = vpop.f32.mrb[0].mxu0
      %v5562 = vpop.f32.mrb[0].mxu0
      %v5563 = vadd.f32 0.0, %v5562
      %v5564 = vpop.f32.mrb[0].mxu0
      %5565 = vmatprep.mubr.bf16.mxu0 0
      %5566 = vmatmul.mubr.bf16.gmra.mrb[0].mxu0 %v5420
      %v5567 = vpop.f32.mrb[0].mxu0
      %v5568 = vadd.f32 0.0, %v5567
      %v5569 = vpop.f32.mrb[0].mxu0
      %v5570 = vpop.f32.mrb[0].mxu0
      %v5571 = vadd.f32 0.0, %v5570
      %v5572 = vpop.f32.mrb[0].mxu0
      %5573 = vmatprep.mubr.bf16.mxu0 0
      %5574 = vmatmul.mubr.bf16.gmra.mrb[0].mxu0 %v5422
      %v5575 = vpop.f32.mrb[0].mxu0
      %v5576 = vadd.f32 0.0, %v5575
      %v5577 = vpop.f32.mrb[0].mxu0
      %v5578 = vpop.f32.mrb[0].mxu0
      %v5579 = vadd.f32 0.0, %v5578
      %v5580 = vpop.f32.mrb[0].mxu0
      %5581 = vmatprep.mubr.bf16.mxu0 0
      %5582 = vmatmul.mubr.bf16.gmra.mrb[0].mxu0 %v5424
      %v5583 = vpop.f32.mrb[0].mxu0
      %v5584 = vadd.f32 0.0, %v5583
      %v5585 = vpop.f32.mrb[0].mxu0
      %v5586 = vpop.f32.mrb[0].mxu0
      %v5587 = vadd.f32 0.0, %v5586
      %v5588 = vpop.f32.mrb[0].mxu0
      %5589 = vmatprep.mubr.bf16.mxu0 0
      %5590 = vmatmul.mubr.bf16.gmra.mrb[0].mxu0 %v5426
      %v5591 = vpop.f32.mrb[0].mxu0
      %v5592 = vadd.f32 0.0, %v5591
      %v5593 = vpop.f32.mrb[0].mxu0
      %v5594 = vpop.f32.mrb[0].mxu0
      %v5595 = vadd.f32 0.0, %v5594
      %v5596 = vpop.f32.mrb[0].mxu0
      %5597 = vmatprep.mubr.bf16.mxu0 0
      %5598 = vmatmul.mubr.bf16.gmra.mrb[0].mxu0 %v5428
      %v5599 = vpop.f32.mrb[0].mxu0
      %v5600 = vadd.f32 0.0, %v5599
      %v5601 = vpop.f32.mrb[0].mxu0
      %v5602 = vpop.f32.mrb[0].mxu0
      %v5603 = vadd.f32 0.0, %v5602
      %v5604 = vpop.f32.mrb[0].mxu0
      %5605 = vmatprep.mubr.bf16.mxu0 0
      %5606 = vmatmul.mubr.bf16.gmra.mrb[0].mxu0 %v5430
      %v5607 = vpop.f32.mrb[0].mxu0
      %v5608 = vadd.f32 0.0, %v5607
      %v5609 = vpop.f32.mrb[0].mxu0
      %v5610 = vpop.f32.mrb[0].mxu0
      %v5611 = vadd.f32 0.0, %v5610
      %v5612 = vpop.f32.mrb[0].mxu0
      %5613 = vmatprep.mubr.bf16.mxu0 0
      %5614 = vmatmul.mubr.bf16.gmra.mrb[0].mxu0 %v5432
      %v5615 = vpop.f32.mrb[0].mxu0
      %v5616 = vadd.f32 0.0, %v5615
      %v5617 = vpop.f32.mrb[0].mxu0
      %v5618 = vpop.f32.mrb[0].mxu0
      %v5619 = vadd.f32 0.0, %v5618
      %v5620 = vpop.f32.mrb[0].mxu0
      %5621 = vmatprep.mubr.bf16.mxu0 0
      %5622 = vmatmul.mubr.bf16.gmra.mrb[0].mxu0 %v5434
      %v5623 = vpop.f32.mrb[0].mxu0
      %v5624 = vadd.f32 0.0, %v5623
      %v5625 = vpop.f32.mrb[0].mxu0
      %v5626 = vpop.f32.mrb[0].mxu0
      %v5627 = vadd.f32 0.0, %v5626
      %v5628 = vpop.f32.mrb[0].mxu0
      %5629 = vmatprep.mubr.bf16.mxu0 0
      %5630 = vmatmul.mubr.bf16.gmra.mrb[0].mxu0 %v5436
      %v5631 = vpop.f32.mrb[0].mxu0
      %v5632 = vadd.f32 0.0, %v5631
      %v5633 = vpop.f32.mrb[0].mxu0
      %v5634 = vpop.f32.mrb[0].mxu0
      %v5635 = vadd.f32 0.0, %v5634
      %v5636 = vpop.f32.mrb[0].mxu0
      %5637 = vmatprep.mubr.bf16.mxu0 0
      %5638 = vmatmul.mubr.bf16.gmra.mrb[0].mxu0 %v5438
      %v5639 = vpop.f32.mrb[0].mxu0
      %v5640 = vadd.f32 0.0, %v5639
      %v5641 = vpop.f32.mrb[0].mxu0
      %v5642 = vpop.f32.mrb[0].mxu0
      %v5643 = vadd.f32 0.0, %v5642
      %v5644 = vpop.f32.mrb[0].mxu0
      %5645 = vmatprep.mubr.bf16.mxu0 0
      %5646 = vmatmul.mubr.bf16.gmra.mrb[0].mxu0 %v5440
      %v5647 = vpop.f32.mrb[0].mxu0
      %v5648 = vadd.f32 0.0, %v5647
      %v5649 = vpop.f32.mrb[0].mxu0
      %v5650 = vpop.f32.mrb[0].mxu0
      %v5651 = vadd.f32 0.0, %v5650
      %v5652 = vpop.f32.mrb[0].mxu0
      %5653 = vmatprep.mubr.bf16.mxu0 0
      %5654 = vmatmul.mubr.bf16.gmra.mrb[0].mxu0 %v5442
      %v5655 = vpop.f32.mrb[0].mxu0
      %v5656 = vadd.f32 0.0, %v5655
      %v5657 = vpop.f32.mrb[0].mxu0
      %v5658 = vpop.f32.mrb[0].mxu0
      %v5659 = vadd.f32 0.0, %v5658
      %v5660 = vpop.f32.mrb[0].mxu0
      %5661 = vmatprep.mubr.bf16.mxu0 0
      %5662 = vmatmul.mubr.bf16.gmra.mrb[0].mxu0 %v5444
      %v5663 = vpop.f32.mrb[0].mxu0
      %v5664 = vadd.f32 0.0, %v5663
      %v5665 = vpop.f32.mrb[0].mxu0
      %v5666 = vpop.f32.mrb[0].mxu0
      %v5667 = vadd.f32 0.0, %v5666
      %v5668 = vpop.f32.mrb[0].mxu0
      %5669 = vmatprep.mubr.bf16.mxu0 0
      %5670 = vmatmul.mubr.bf16.gmra.mrb[0].mxu0 %v5446
      %v5671 = vpop.f32.mrb[0].mxu0
      %v5672 = vadd.f32 0.0, %v5671
      %v5673 = vpop.f32.mrb[0].mxu0
      %v5674 = vpop.f32.mrb[0].mxu0
      %v5675 = vadd.f32 0.0, %v5674
      %v5676 = vpop.f32.mrb[0].mxu0
      %5677 = vmatprep.mubr.bf16.mxu0 0
      %5678 = vmatmul.mubr.bf16.gmra.mrb[0].mxu0 %v5448
      %v5679 = vpop.f32.mrb[0].mxu0
      %v5680 = vadd.f32 0.0, %v5679
      %v5681 = vpop.f32.mrb[0].mxu0
      %v5682 = vpop.f32.mrb[0].mxu0
      %v5683 = vadd.f32 0.0, %v5682
      %v5684 = vpop.f32.mrb[0].mxu0
      %5685 = vmatprep.mubr.bf16.mxu0 0
      %5686 = vmatmul.mubr.bf16.gmra.mrb[0].mxu0 %v5450
      %v5687 = vpop.f32.mrb[0].mxu0
      %v5688 = vadd.f32 0.0, %v5687
      %v5689 = vpop.f32.mrb[0].mxu0
      %v5690 = vpop.f32.mrb[0].mxu0
      %v5691 = vadd.f32 0.0, %v5690
      %v5692 = vpop.f32.mrb[0].mxu0
      %5693 = vdwg.mxu0
      %v5694 = vld [vmem:[#allocation3] sm:$0xff]
      %v5695 = vld [vmem:[#allocation3 + $0x8] sm:$0xff]
      %v5696 = vld [vmem:[#allocation3 + $0x10] sm:$0xff]
      %v5697 = vld [vmem:[#allocation3 + $0x18] sm:$0xff]
      %v5698 = vld [vmem:[#allocation3 + $0x20] sm:$0xff]
      %v5699 = vld [vmem:[#allocation3 + $0x28] sm:$0xff]
      %v5700 = vld [vmem:[#allocation3 + $0x30] sm:$0xff]
      %v5701 = vld [vmem:[#allocation3 + $0x38] sm:$0xff]
      %v5702 = vld [vmem:[#allocation3 + $0x40] sm:$0xff]
      %v5703 = vld [vmem:[#allocation3 + $0x48] sm:$0xff]
      %v5704 = vld [vmem:[#allocation3 + $0x50] sm:$0xff]
      %v5705 = vld [vmem:[#allocation3 + $0x58] sm:$0xff]
      %v5706 = vld [vmem:[#allocation3 + $0x60] sm:$0xff]
      %v5707 = vld [vmem:[#allocation3 + $0x68] sm:$0xff]
      %v5708 = vld [vmem:[#allocation3 + $0x70] sm:$0xff]
      %v5709 = vld [vmem:[#allocation3 + $0x78] sm:$0xff]
      %v5710 = vld [vmem:[#allocation3 + $0x80] sm:$0xff]
      %v5711 = vld [vmem:[#allocation3 + $0x88] sm:$0xff]
      %v5712 = vld [vmem:[#allocation3 + $0x90] sm:$0xff]
      %v5713 = vld [vmem:[#allocation3 + $0x98] sm:$0xff]
      %v5714 = vld [vmem:[#allocation3 + $0xa0] sm:$0xff]
      %v5715 = vld [vmem:[#allocation3 + $0xa8] sm:$0xff]
      %v5716 = vld [vmem:[#allocation3 + $0xb0] sm:$0xff]
      %v5717 = vld [vmem:[#allocation3 + $0xb8] sm:$0xff]
      %v5718 = vld [vmem:[#allocation3 + $0xc0] sm:$0xff]
      %v5719 = vld [vmem:[#allocation3 + $0xc8] sm:$0xff]
      %v5720 = vld [vmem:[#allocation3 + $0xd0] sm:$0xff]
      %v5721 = vld [vmem:[#allocation3 + $0xd8] sm:$0xff]
      %v5722 = vld [vmem:[#allocation3 + $0xe0] sm:$0xff]
      %v5723 = vld [vmem:[#allocation3 + $0xe8] sm:$0xff]
      %v5724 = vld [vmem:[#allocation3 + $0xf0] sm:$0xff]
      %v5725 = vld [vmem:[#allocation3 + $0xf8] sm:$0xff]
      %v5726 = vld [vmem:[#allocation3 + $0x100] sm:$0xff]
      %v5727 = vld [vmem:[#allocation3 + $0x108] sm:$0xff]
      %v5728 = vld [vmem:[#allocation3 + $0x110] sm:$0xff]
      %v5729 = vld [vmem:[#allocation3 + $0x118] sm:$0xff]
      %v5730 = vadd.f32 %v5694, %v5552
      %v5731 = vadd.f32 %v5695, %v5555
      %v5732 = vadd.f32 %v5696, %v5560
      %v5733 = vadd.f32 %v5697, %v5563
      %v5734 = vadd.f32 %v5698, %v5568
      %v5735 = vadd.f32 %v5699, %v5571
      %v5736 = vadd.f32 %v5700, %v5576
      %v5737 = vadd.f32 %v5701, %v5579
      %v5738 = vadd.f32 %v5702, %v5584
      %v5739 = vadd.f32 %v5703, %v5587
      %v5740 = vadd.f32 %v5704, %v5592
      %v5741 = vadd.f32 %v5705, %v5595
      %v5742 = vadd.f32 %v5706, %v5600
      %v5743 = vadd.f32 %v5707, %v5603
      %v5744 = vadd.f32 %v5708, %v5608
      %v5745 = vadd.f32 %v5709, %v5611
      %v5746 = vadd.f32 %v5710, %v5616
      %v5747 = vadd.f32 %v5711, %v5619
      %v5748 = vadd.f32 %v5712, %v5624
      %v5749 = vadd.f32 %v5713, %v5627
      %v5750 = vadd.f32 %v5714, %v5632
      %v5751 = vadd.f32 %v5715, %v5635
      %v5752 = vadd.f32 %v5716, %v5640
      %v5753 = vadd.f32 %v5717, %v5643
      %v5754 = vadd.f32 %v5718, %v5648
      %v5755 = vadd.f32 %v5719, %v5651
      %v5756 = vadd.f32 %v5720, %v5656
      %v5757 = vadd.f32 %v5721, %v5659
      %v5758 = vadd.f32 %v5722, %v5664
      %v5759 = vadd.f32 %v5723, %v5667
      %v5760 = vadd.f32 %v5724, %v5672
      %v5761 = vadd.f32 %v5725, %v5675
      %v5762 = vadd.f32 %v5726, %v5680
      %v5763 = vadd.f32 %v5727, %v5683
      %v5764 = vadd.f32 %v5728, %v5688
      %v5765 = vadd.f32 %v5729, %v5691
      %5766 = vst [vmem:[#allocation3] sm:$0xff] %v5730
      %5767 = vst [vmem:[#allocation3 + $0x8] sm:$0xff] %v5731
      %5768 = vst [vmem:[#allocation3 + $0x10] sm:$0xff] %v5732
      %5769 = vst [vmem:[#allocation3 + $0x18] sm:$0xff] %v5733
      %5770 = vst [vmem:[#allocation3 + $0x20] sm:$0xff] %v5734
      %5771 = vst [vmem:[#allocation3 + $0x28] sm:$0xff] %v5735
      %5772 = vst [vmem:[#allocation3 + $0x30] sm:$0xff] %v5736
      %5773 = vst [vmem:[#allocation3 + $0x38] sm:$0xff] %v5737
      %5774 = vst [vmem:[#allocation3 + $0x40] sm:$0xff] %v5738
      %5775 = vst [vmem:[#allocation3 + $0x48] sm:$0xff] %v5739
      %5776 = vst [vmem:[#allocation3 + $0x50] sm:$0xff] %v5740
      %5777 = vst [vmem:[#allocation3 + $0x58] sm:$0xff] %v5741
      %5778 = vst [vmem:[#allocation3 + $0x60] sm:$0xff] %v5742
      %5779 = vst [vmem:[#allocation3 + $0x68] sm:$0xff] %v5743
      %5780 = vst [vmem:[#allocation3 + $0x70] sm:$0xff] %v5744
      %5781 = vst [vmem:[#allocation3 + $0x78] sm:$0xff] %v5745
      %5782 = vst [vmem:[#allocation3 + $0x80] sm:$0xff] %v5746
      %5783 = vst [vmem:[#allocation3 + $0x88] sm:$0xff] %v5747
      %5784 = vst [vmem:[#allocation3 + $0x90] sm:$0xff] %v5748
      %5785 = vst [vmem:[#allocation3 + $0x98] sm:$0xff] %v5749
      %5786 = vst [vmem:[#allocation3 + $0xa0] sm:$0xff] %v5750
      %5787 = vst [vmem:[#allocation3 + $0xa8] sm:$0xff] %v5751
      %5788 = vst [vmem:[#allocation3 + $0xb0] sm:$0xff] %v5752
      %5789 = vst [vmem:[#allocation3 + $0xb8] sm:$0xff] %v5753
      %5790 = vst [vmem:[#allocation3 + $0xc0] sm:$0xff] %v5754
      %5791 = vst [vmem:[#allocation3 + $0xc8] sm:$0xff] %v5755
      %5792 = vst [vmem:[#allocation3 + $0xd0] sm:$0xff] %v5756
      %5793 = vst [vmem:[#allocation3 + $0xd8] sm:$0xff] %v5757
      %5794 = vst [vmem:[#allocation3 + $0xe0] sm:$0xff] %v5758
      %5795 = vst [vmem:[#allocation3 + $0xe8] sm:$0xff] %v5759
      %5796 = vst [vmem:[#allocation3 + $0xf0] sm:$0xff] %v5760
      %5797 = vst [vmem:[#allocation3 + $0xf8] sm:$0xff] %v5761
      %5798 = vst [vmem:[#allocation3 + $0x100] sm:$0xff] %v5762
      %5799 = vst [vmem:[#allocation3 + $0x108] sm:$0xff] %v5763
      %5800 = vst [vmem:[#allocation3 + $0x110] sm:$0xff] %v5764
      %5801 = vst [vmem:[#allocation3 + $0x118] sm:$0xff] %v5765
      %v5802 = vld [vmem:[#allocation2 + $0x10] sm:$0x8]
      %v5803 = vld [vmem:[#allocation2 + $0x14] sm:$0xf]
      %v5804 = vld [vmem:[#allocation2 + $0x18] sm:$0xf]
      %v5805 = vld [vmem:[#allocation2 + $0x1c] sm:$0xf]
      %v5806 = vld [vmem:[#allocation2 + $0x20] sm:$0xf]
      %v5807 = vld [vmem:[#allocation2 + $0x24] sm:$0xf]
      %v5808 = vld [vmem:[#allocation2 + $0x28] sm:$0xf]
      %v5809 = vld [vmem:[#allocation2 + $0x2c] sm:$0xf]
      %v5810 = vld [vmem:[#allocation2 + $0x30] sm:$0xf]
      %v5811 = vld [vmem:[#allocation2 + $0x34] sm:$0xf]
      %v5812 = vld [vmem:[#allocation2 + $0x38] sm:$0xf]
      %v5813 = vld [vmem:[#allocation2 + $0x3c] sm:$0xf]
      %v5814 = vld [vmem:[#allocation2 + $0x40] sm:$0xf]
      %v5815 = vld [vmem:[#allocation2 + $0x44] sm:$0xf]
      %v5816 = vld [vmem:[#allocation2 + $0x48] sm:$0xf]
      %v5817 = vld [vmem:[#allocation2 + $0x4c] sm:$0xf]
      %v5818 = vld [vmem:[#allocation2 + $0x50] sm:$0xf]
      %v5819 = vld [vmem:[#allocation2 + $0x54] sm:$0xf]
      %v5820 = vld [vmem:[#allocation2 + $0x58] sm:$0xf]
      %v5821 = vld [vmem:[#allocation2 + $0x5c] sm:$0xf]
      %v5822 = vld [vmem:[#allocation2 + $0x60] sm:$0xf]
      %v5823 = vld [vmem:[#allocation2 + $0x64] sm:$0xf]
      %v5824 = vld [vmem:[#allocation2 + $0x68] sm:$0xf]
      %v5825 = vld [vmem:[#allocation2 + $0x6c] sm:$0xf]
      %v5826 = vld [vmem:[#allocation2 + $0x70] sm:$0xf]
      %v5827 = vld [vmem:[#allocation2 + $0x74] sm:$0xf]
      %v5828 = vld [vmem:[#allocation2 + $0x78] sm:$0xf]
      %v5829 = vld [vmem:[#allocation2 + $0x7c] sm:$0xf]
      %v5830 = vld [vmem:[#allocation2 + $0x80] sm:$0xf]
      %v5831 = vld [vmem:[#allocation2 + $0x84] sm:$0xf]
      %v5832 = vld [vmem:[#allocation2 + $0x88] sm:$0xf]
      %v5833 = vld [vmem:[#allocation2 + $0x8c] sm:$0xf]
      %v5834 = vld [vmem:[#allocation2 + $0x90] sm:$0xf]
      %v5835 = vld [vmem:[#allocation2 + $0x94] sm:$0xf]
      %v5836 = vld [vmem:[#allocation2 + $0x98] sm:$0xf]
      %v5837 = vld [vmem:[#allocation2 + $0x9c] sm:$0xf]
      %v5838 = vld [vmem:[#allocation2 + $0xa0] sm:$0xf]
      %s5839 = scalar_lea.vmem %s3, 512
      %v5840 = vld [vmem:[%s5839] sm:$0xf]
      %v5841 = vld [vmem:[%s5839 + $0x4] sm:$0xf]
      %v5842 = vld [vmem:[%s5839 + $0x8] sm:$0xf]
      %v5843 = vld [vmem:[%s5839 + $0xc] sm:$0xf]
      %v5844 = vld [vmem:[%s5839 + $0x10] sm:$0xf]
      %v5845 = vld [vmem:[%s5839 + $0x14] sm:$0xf]
      %v5846 = vld [vmem:[%s5839 + $0x18] sm:$0xf]
      %v5847 = vld [vmem:[%s5839 + $0x1c] sm:$0xf]
      %v5848 = vld [vmem:[%s5839 + $0x20] sm:$0xf]
      %v5849 = vld [vmem:[%s5839 + $0x24] sm:$0xf]
      %v5850 = vld [vmem:[%s5839 + $0x28] sm:$0xf]
      %v5851 = vld [vmem:[%s5839 + $0x2c] sm:$0xf]
      %v5852 = vld [vmem:[%s5839 + $0x30] sm:$0xf]
      %v5853 = vld [vmem:[%s5839 + $0x34] sm:$0xf]
      %v5854 = vld [vmem:[%s5839 + $0x38] sm:$0xf]
      %v5855 = vld [vmem:[%s5839 + $0x3c] sm:$0xf]
      %v5893 = vunpack.c.l.b16 %v5802
      %v5894 = vunpack.c.l.b16 %v5803
      %v5895 = vunpack.c.l.b16 %v5804
      %v5896 = vunpack.c.l.b16 %v5805
      %v5897 = vunpack.c.l.b16 %v5806
      %v5898 = vunpack.c.l.b16 %v5807
      %v5899 = vunpack.c.l.b16 %v5808
      %v5900 = vunpack.c.l.b16 %v5809
      %v5901 = vunpack.c.l.b16 %v5810
      %v5902 = vunpack.c.l.b16 %v5811
      %v5903 = vunpack.c.l.b16 %v5812
      %v5904 = vunpack.c.l.b16 %v5813
      %v5905 = vunpack.c.l.b16 %v5814
      %v5906 = vunpack.c.l.b16 %v5815
      %v5907 = vunpack.c.l.b16 %v5816
      %v5908 = vunpack.c.l.b16 %v5817
      %v5909 = vunpack.c.l.b16 %v5818
      %v5910 = vunpack.c.l.b16 %v5819
      %v5911 = vunpack.c.l.b16 %v5820
      %v5912 = vunpack.c.l.b16 %v5821
      %v5913 = vunpack.c.l.b16 %v5822
      %v5914 = vunpack.c.l.b16 %v5823
      %v5915 = vunpack.c.l.b16 %v5824
      %v5916 = vunpack.c.l.b16 %v5825
      %v5917 = vunpack.c.l.b16 %v5826
      %v5918 = vunpack.c.l.b16 %v5827
      %v5919 = vunpack.c.l.b16 %v5828
      %v5920 = vunpack.c.l.b16 %v5829
      %v5921 = vunpack.c.l.b16 %v5830
      %v5922 = vunpack.c.l.b16 %v5831
      %v5923 = vunpack.c.l.b16 %v5832
      %v5924 = vunpack.c.l.b16 %v5833
      %v5925 = vunpack.c.l.b16 %v5834
      %v5926 = vunpack.c.l.b16 %v5835
      %v5927 = vunpack.c.l.b16 %v5836
      %v5928 = vunpack.c.l.b16 %v5837
      %v5929 = vunpack.c.l.b16 %v5838
      %v5930 = vpack.c.b16 %v5894, %v5893
      %v5931 = vpack.c.b16 %v5896, %v5895
      %v5932 = vpack.c.b16 %v5898, %v5897
      %v5933 = vpack.c.b16 %v5900, %v5899
      %v5934 = vpack.c.b16 %v5902, %v5901
      %v5935 = vpack.c.b16 %v5904, %v5903
      %v5936 = vpack.c.b16 %v5906, %v5905
      %v5937 = vpack.c.b16 %v5908, %v5907
      %v5938 = vpack.c.b16 %v5910, %v5909
      %v5939 = vpack.c.b16 %v5912, %v5911
      %v5940 = vpack.c.b16 %v5914, %v5913
      %v5941 = vpack.c.b16 %v5916, %v5915
      %v5942 = vpack.c.b16 %v5918, %v5917
      %v5943 = vpack.c.b16 %v5920, %v5919
      %v5944 = vpack.c.b16 %v5922, %v5921
      %v5945 = vpack.c.b16 %v5924, %v5923
      %v5946 = vpack.c.b16 %v5926, %v5925
      %v5947 = vpack.c.b16 %v5928, %v5927
      %v5948 = vpack.c.b16 %v5929, %v5929
      %vm5949 = vsmask.f32 4352
      %v5951 = vshrl.u32 %v5930, 16
      %v5953 = vrot.slane %v5951, 3
      %v5954 = vshll.u32 %v5930, 16
      %v5956 = vrot.slane %v5954, 4
      %v5957 = vor.u32 %v5953, %v5956
      %v5959 = vshrl.u32 %v5931, 16
      %v5961 = vrot.slane %v5959, 3
      %v5962 = vshll.u32 %v5931, 16
      %v5964 = vrot.slane %v5962, 4
      %v5965 = vor.u32 %v5961, %v5964
      %v5966 = vsel %vm5949, %v5957, %v5965
      %v5968 = vshrl.u32 %v5932, 16
      %v5970 = vrot.slane %v5968, 3
      %v5971 = vshll.u32 %v5932, 16
      %v5973 = vrot.slane %v5971, 4
      %v5974 = vor.u32 %v5970, %v5973
      %v5975 = vsel %vm5949, %v5965, %v5974
      %v5977 = vshrl.u32 %v5933, 16
      %v5979 = vrot.slane %v5977, 3
      %v5980 = vshll.u32 %v5933, 16
      %v5982 = vrot.slane %v5980, 4
      %v5983 = vor.u32 %v5979, %v5982
      %v5984 = vsel %vm5949, %v5974, %v5983
      %v5986 = vshrl.u32 %v5934, 16
      %v5988 = vrot.slane %v5986, 3
      %v5989 = vshll.u32 %v5934, 16
      %v5991 = vrot.slane %v5989, 4
      %v5992 = vor.u32 %v5988, %v5991
      %v5993 = vsel %vm5949, %v5983, %v5992
      %v5995 = vshrl.u32 %v5935, 16
      %v5997 = vrot.slane %v5995, 3
      %v5998 = vshll.u32 %v5935, 16
      %v6000 = vrot.slane %v5998, 4
      %v6001 = vor.u32 %v5997, %v6000
      %v6002 = vsel %vm5949, %v5992, %v6001
      %v6004 = vshrl.u32 %v5936, 16
      %v6006 = vrot.slane %v6004, 3
      %v6007 = vshll.u32 %v5936, 16
      %v6009 = vrot.slane %v6007, 4
      %v6010 = vor.u32 %v6006, %v6009
      %v6011 = vsel %vm5949, %v6001, %v6010
      %v6013 = vshrl.u32 %v5937, 16
      %v6015 = vrot.slane %v6013, 3
      %v6016 = vshll.u32 %v5937, 16
      %v6018 = vrot.slane %v6016, 4
      %v6019 = vor.u32 %v6015, %v6018
      %v6020 = vsel %vm5949, %v6010, %v6019
      %v6022 = vshrl.u32 %v5938, 16
      %v6024 = vrot.slane %v6022, 3
      %v6025 = vshll.u32 %v5938, 16
      %v6027 = vrot.slane %v6025, 4
      %v6028 = vor.u32 %v6024, %v6027
      %v6029 = vsel %vm5949, %v6019, %v6028
      %v6031 = vshrl.u32 %v5939, 16
      %v6033 = vrot.slane %v6031, 3
      %v6034 = vshll.u32 %v5939, 16
      %v6036 = vrot.slane %v6034, 4
      %v6037 = vor.u32 %v6033, %v6036
      %v6038 = vsel %vm5949, %v6028, %v6037
      %v6040 = vshrl.u32 %v5940, 16
      %v6042 = vrot.slane %v6040, 3
      %v6043 = vshll.u32 %v5940, 16
      %v6045 = vrot.slane %v6043, 4
      %v6046 = vor.u32 %v6042, %v6045
      %v6047 = vsel %vm5949, %v6037, %v6046
      %v6049 = vshrl.u32 %v5941, 16
      %v6051 = vrot.slane %v6049, 3
      %v6052 = vshll.u32 %v5941, 16
      %v6054 = vrot.slane %v6052, 4
      %v6055 = vor.u32 %v6051, %v6054
      %v6056 = vsel %vm5949, %v6046, %v6055
      %v6058 = vshrl.u32 %v5942, 16
      %v6060 = vrot.slane %v6058, 3
      %v6061 = vshll.u32 %v5942, 16
      %v6063 = vrot.slane %v6061, 4
      %v6064 = vor.u32 %v6060, %v6063
      %v6065 = vsel %vm5949, %v6055, %v6064
      %v6067 = vshrl.u32 %v5943, 16
      %v6069 = vrot.slane %v6067, 3
      %v6070 = vshll.u32 %v5943, 16
      %v6072 = vrot.slane %v6070, 4
      %v6073 = vor.u32 %v6069, %v6072
      %v6074 = vsel %vm5949, %v6064, %v6073
      %v6076 = vshrl.u32 %v5944, 16
      %v6078 = vrot.slane %v6076, 3
      %v6079 = vshll.u32 %v5944, 16
      %v6081 = vrot.slane %v6079, 4
      %v6082 = vor.u32 %v6078, %v6081
      %v6083 = vsel %vm5949, %v6073, %v6082
      %v6085 = vshrl.u32 %v5945, 16
      %v6087 = vrot.slane %v6085, 3
      %v6088 = vshll.u32 %v5945, 16
      %v6090 = vrot.slane %v6088, 4
      %v6091 = vor.u32 %v6087, %v6090
      %v6092 = vsel %vm5949, %v6082, %v6091
      %v6094 = vshrl.u32 %v5946, 16
      %v6096 = vrot.slane %v6094, 3
      %v6097 = vshll.u32 %v5946, 16
      %v6099 = vrot.slane %v6097, 4
      %v6100 = vor.u32 %v6096, %v6099
      %v6101 = vsel %vm5949, %v6091, %v6100
      %v6103 = vshrl.u32 %v5947, 16
      %v6105 = vrot.slane %v6103, 3
      %v6106 = vshll.u32 %v5947, 16
      %v6108 = vrot.slane %v6106, 4
      %v6109 = vor.u32 %v6105, %v6108
      %v6110 = vsel %vm5949, %v6100, %v6109
      %v6112 = vshrl.u32 %v5948, 16
      %v6114 = vrot.slane %v6112, 3
      %v6115 = vshll.u32 %v5948, 16
      %v6117 = vrot.slane %v6115, 4
      %v6118 = vor.u32 %v6114, %v6117
      %v6119 = vsel %vm5949, %v6109, %v6118
      %v6154 = vunpack.c.l.b16 %v5840
      %v6155 = vunpack.c.l.b16 %v5841
      %v6156 = vunpack.c.l.b16 %v5842
      %v6157 = vunpack.c.l.b16 %v5843
      %v6158 = vunpack.c.l.b16 %v5844
      %v6159 = vunpack.c.l.b16 %v5845
      %v6160 = vunpack.c.l.b16 %v5846
      %v6161 = vunpack.c.l.b16 %v5847
      %v6162 = vunpack.c.l.b16 %v5848
      %v6163 = vunpack.c.l.b16 %v5849
      %v6164 = vunpack.c.l.b16 %v5850
      %v6165 = vunpack.c.l.b16 %v5851
      %v6166 = vunpack.c.l.b16 %v5852
      %v6167 = vunpack.c.l.b16 %v5853
      %v6168 = vunpack.c.l.b16 %v5854
      %v6169 = vunpack.c.l.b16 %v5855
      %v6170 = vpack.c.b16 %v6155, %v6154
      %v6171 = vpack.c.b16 %v6157, %v6156
      %v6172 = vpack.c.b16 %v6159, %v6158
      %v6173 = vpack.c.b16 %v6161, %v6160
      %v6174 = vpack.c.b16 %v6163, %v6162
      %v6175 = vpack.c.b16 %v6165, %v6164
      %v6176 = vpack.c.b16 %v6167, %v6166
      %v6177 = vpack.c.b16 %v6169, %v6168
      %6186 = vmatprep.subr.bf16.mxu0 0
      %6187 = vmatpush1.bf16.msra.mxu0 %v6170
      %6188 = vmatprep.subr.bf16.mxu0 0
      %6189 = vmatpush1.bf16.msra.mxu0 %v6171
      %6190 = vmatprep.subr.bf16.mxu0 0
      %6191 = vmatpush1.bf16.msra.mxu0 %v6172
      %6192 = vmatprep.subr.bf16.mxu0 0
      %6193 = vmatpush1.bf16.msra.mxu0 %v6173
      %6194 = vmatprep.subr.bf16.mxu0 0
      %6195 = vmatpush1.bf16.msra.mxu0 %v6174
      %6196 = vmatprep.subr.bf16.mxu0 0
      %6197 = vmatpush1.bf16.msra.mxu0 %v6175
      %6198 = vmatprep.subr.bf16.mxu0 0
      %6199 = vmatpush1.bf16.msra.mxu0 %v6176
      %6200 = vmatprep.subr.bf16.mxu0 0
      %6201 = vmatpush1.bf16.msra.mxu0 %v6177
      %6202 = vmatprep.subr.bf16.mxu0 0
      %6203 = vmatpush1.bf16.msra.mxu0 0
      %6204 = vmatprep.subr.bf16.mxu0 0
      %6205 = vmatpush1.bf16.msra.mxu0 0
      %6206 = vmatprep.subr.bf16.mxu0 0
      %6207 = vmatpush1.bf16.msra.mxu0 0
      %6208 = vmatprep.subr.bf16.mxu0 0
      %6209 = vmatpush1.bf16.msra.mxu0 0
      %6210 = vmatprep.subr.bf16.mxu0 0
      %6211 = vmatpush1.bf16.msra.mxu0 0
      %6212 = vmatprep.subr.bf16.mxu0 0
      %6213 = vmatpush1.bf16.msra.mxu0 0
      %6214 = vmatprep.subr.bf16.mxu0 0
      %6215 = vmatpush1.bf16.msra.mxu0 0
      %6216 = vmatprep.subr.bf16.mxu0 0
      %6217 = vmatpush1.bf16.msra.mxu0 0
      %6218 = vmatprep.mubr.bf16.mxu0 0
      %6219 = vmatmul.mubr.bf16.gmra.mrb[0].mxu0 %v5966
      %v6220 = vpop.f32.mrb[0].mxu0
      %v6221 = vadd.f32 0.0, %v6220
      %v6222 = vpop.f32.mrb[0].mxu0
      %v6223 = vpop.f32.mrb[0].mxu0
      %v6224 = vadd.f32 0.0, %v6223
      %v6225 = vpop.f32.mrb[0].mxu0
      %6226 = vmatprep.mubr.bf16.mxu0 0
      %6227 = vmatmul.mubr.bf16.gmra.mrb[0].mxu0 %v5975
      %v6228 = vpop.f32.mrb[0].mxu0
      %v6229 = vadd.f32 0.0, %v6228
      %v6230 = vpop.f32.mrb[0].mxu0
      %v6231 = vpop.f32.mrb[0].mxu0
      %v6232 = vadd.f32 0.0, %v6231
      %v6233 = vpop.f32.mrb[0].mxu0
      %6234 = vmatprep.mubr.bf16.mxu0 0
      %6235 = vmatmul.mubr.bf16.gmra.mrb[0].mxu0 %v5984
      %v6236 = vpop.f32.mrb[0].mxu0
      %v6237 = vadd.f32 0.0, %v6236
      %v6238 = vpop.f32.mrb[0].mxu0
      %v6239 = vpop.f32.mrb[0].mxu0
      %v6240 = vadd.f32 0.0, %v6239
      %v6241 = vpop.f32.mrb[0].mxu0
      %6242 = vmatprep.mubr.bf16.mxu0 0
      %6243 = vmatmul.mubr.bf16.gmra.mrb[0].mxu0 %v5993
      %v6244 = vpop.f32.mrb[0].mxu0
      %v6245 = vadd.f32 0.0, %v6244
      %v6246 = vpop.f32.mrb[0].mxu0
      %v6247 = vpop.f32.mrb[0].mxu0
      %v6248 = vadd.f32 0.0, %v6247
      %v6249 = vpop.f32.mrb[0].mxu0
      %6250 = vmatprep.mubr.bf16.mxu0 0
      %6251 = vmatmul.mubr.bf16.gmra.mrb[0].mxu0 %v6002
      %v6252 = vpop.f32.mrb[0].mxu0
      %v6253 = vadd.f32 0.0, %v6252
      %v6254 = vpop.f32.mrb[0].mxu0
      %v6255 = vpop.f32.mrb[0].mxu0
      %v6256 = vadd.f32 0.0, %v6255
      %v6257 = vpop.f32.mrb[0].mxu0
      %6258 = vmatprep.mubr.bf16.mxu0 0
      %6259 = vmatmul.mubr.bf16.gmra.mrb[0].mxu0 %v6011
      %v6260 = vpop.f32.mrb[0].mxu0
      %v6261 = vadd.f32 0.0, %v6260
      %v6262 = vpop.f32.mrb[0].mxu0
      %v6263 = vpop.f32.mrb[0].mxu0
      %v6264 = vadd.f32 0.0, %v6263
      %v6265 = vpop.f32.mrb[0].mxu0
      %6266 = vmatprep.mubr.bf16.mxu0 0
      %6267 = vmatmul.mubr.bf16.gmra.mrb[0].mxu0 %v6020
      %v6268 = vpop.f32.mrb[0].mxu0
      %v6269 = vadd.f32 0.0, %v6268
      %v6270 = vpop.f32.mrb[0].mxu0
      %v6271 = vpop.f32.mrb[0].mxu0
      %v6272 = vadd.f32 0.0, %v6271
      %v6273 = vpop.f32.mrb[0].mxu0
      %6274 = vmatprep.mubr.bf16.mxu0 0
      %6275 = vmatmul.mubr.bf16.gmra.mrb[0].mxu0 %v6029
      %v6276 = vpop.f32.mrb[0].mxu0
      %v6277 = vadd.f32 0.0, %v6276
      %v6278 = vpop.f32.mrb[0].mxu0
      %v6279 = vpop.f32.mrb[0].mxu0
      %v6280 = vadd.f32 0.0, %v6279
      %v6281 = vpop.f32.mrb[0].mxu0
      %6282 = vmatprep.mubr.bf16.mxu0 0
      %6283 = vmatmul.mubr.bf16.gmra.mrb[0].mxu0 %v6038
      %v6284 = vpop.f32.mrb[0].mxu0
      %v6285 = vadd.f32 0.0, %v6284
      %v6286 = vpop.f32.mrb[0].mxu0
      %v6287 = vpop.f32.mrb[0].mxu0
      %v6288 = vadd.f32 0.0, %v6287
      %v6289 = vpop.f32.mrb[0].mxu0
      %6290 = vmatprep.mubr.bf16.mxu0 0
      %6291 = vmatmul.mubr.bf16.gmra.mrb[0].mxu0 %v6047
      %v6292 = vpop.f32.mrb[0].mxu0
      %v6293 = vadd.f32 0.0, %v6292
      %v6294 = vpop.f32.mrb[0].mxu0
      %v6295 = vpop.f32.mrb[0].mxu0
      %v6296 = vadd.f32 0.0, %v6295
      %v6297 = vpop.f32.mrb[0].mxu0
      %6298 = vmatprep.mubr.bf16.mxu0 0
      %6299 = vmatmul.mubr.bf16.gmra.mrb[0].mxu0 %v6056
      %v6300 = vpop.f32.mrb[0].mxu0
      %v6301 = vadd.f32 0.0, %v6300
      %v6302 = vpop.f32.mrb[0].mxu0
      %v6303 = vpop.f32.mrb[0].mxu0
      %v6304 = vadd.f32 0.0, %v6303
      %v6305 = vpop.f32.mrb[0].mxu0
      %6306 = vmatprep.mubr.bf16.mxu0 0
      %6307 = vmatmul.mubr.bf16.gmra.mrb[0].mxu0 %v6065
      %v6308 = vpop.f32.mrb[0].mxu0
      %v6309 = vadd.f32 0.0, %v6308
      %v6310 = vpop.f32.mrb[0].mxu0
      %v6311 = vpop.f32.mrb[0].mxu0
      %v6312 = vadd.f32 0.0, %v6311
      %v6313 = vpop.f32.mrb[0].mxu0
      %6314 = vmatprep.mubr.bf16.mxu0 0
      %6315 = vmatmul.mubr.bf16.gmra.mrb[0].mxu0 %v6074
      %v6316 = vpop.f32.mrb[0].mxu0
      %v6317 = vadd.f32 0.0, %v6316
      %v6318 = vpop.f32.mrb[0].mxu0
      %v6319 = vpop.f32.mrb[0].mxu0
      %v6320 = vadd.f32 0.0, %v6319
      %v6321 = vpop.f32.mrb[0].mxu0
      %6322 = vmatprep.mubr.bf16.mxu0 0
      %6323 = vmatmul.mubr.bf16.gmra.mrb[0].mxu0 %v6083
      %v6324 = vpop.f32.mrb[0].mxu0
      %v6325 = vadd.f32 0.0, %v6324
      %v6326 = vpop.f32.mrb[0].mxu0
      %v6327 = vpop.f32.mrb[0].mxu0
      %v6328 = vadd.f32 0.0, %v6327
      %v6329 = vpop.f32.mrb[0].mxu0
      %6330 = vmatprep.mubr.bf16.mxu0 0
      %6331 = vmatmul.mubr.bf16.gmra.mrb[0].mxu0 %v6092
      %v6332 = vpop.f32.mrb[0].mxu0
      %v6333 = vadd.f32 0.0, %v6332
      %v6334 = vpop.f32.mrb[0].mxu0
      %v6335 = vpop.f32.mrb[0].mxu0
      %v6336 = vadd.f32 0.0, %v6335
      %v6337 = vpop.f32.mrb[0].mxu0
      %6338 = vmatprep.mubr.bf16.mxu0 0
      %6339 = vmatmul.mubr.bf16.gmra.mrb[0].mxu0 %v6101
      %v6340 = vpop.f32.mrb[0].mxu0
      %v6341 = vadd.f32 0.0, %v6340
      %v6342 = vpop.f32.mrb[0].mxu0
      %v6343 = vpop.f32.mrb[0].mxu0
      %v6344 = vadd.f32 0.0, %v6343
      %v6345 = vpop.f32.mrb[0].mxu0
      %6346 = vmatprep.mubr.bf16.mxu0 0
      %6347 = vmatmul.mubr.bf16.gmra.mrb[0].mxu0 %v6110
      %v6348 = vpop.f32.mrb[0].mxu0
      %v6349 = vadd.f32 0.0, %v6348
      %v6350 = vpop.f32.mrb[0].mxu0
      %v6351 = vpop.f32.mrb[0].mxu0
      %v6352 = vadd.f32 0.0, %v6351
      %v6353 = vpop.f32.mrb[0].mxu0
      %6354 = vmatprep.mubr.bf16.mxu0 0
      %6355 = vmatmul.mubr.bf16.gmra.mrb[0].mxu0 %v6119
      %v6356 = vpop.f32.mrb[0].mxu0
      %v6357 = vadd.f32 0.0, %v6356
      %v6358 = vpop.f32.mrb[0].mxu0
      %v6359 = vpop.f32.mrb[0].mxu0
      %v6360 = vadd.f32 0.0, %v6359
      %v6361 = vpop.f32.mrb[0].mxu0
      %6362 = vdwg.mxu0
      %v6363 = vld [vmem:[#allocation3] sm:$0xff]
      %v6364 = vld [vmem:[#allocation3 + $0x8] sm:$0xff]
      %v6365 = vld [vmem:[#allocation3 + $0x10] sm:$0xff]
      %v6366 = vld [vmem:[#allocation3 + $0x18] sm:$0xff]
      %v6367 = vld [vmem:[#allocation3 + $0x20] sm:$0xff]
      %v6368 = vld [vmem:[#allocation3 + $0x28] sm:$0xff]
      %v6369 = vld [vmem:[#allocation3 + $0x30] sm:$0xff]
      %v6370 = vld [vmem:[#allocation3 + $0x38] sm:$0xff]
      %v6371 = vld [vmem:[#allocation3 + $0x40] sm:$0xff]
      %v6372 = vld [vmem:[#allocation3 + $0x48] sm:$0xff]
      %v6373 = vld [vmem:[#allocation3 + $0x50] sm:$0xff]
      %v6374 = vld [vmem:[#allocation3 + $0x58] sm:$0xff]
      %v6375 = vld [vmem:[#allocation3 + $0x60] sm:$0xff]
      %v6376 = vld [vmem:[#allocation3 + $0x68] sm:$0xff]
      %v6377 = vld [vmem:[#allocation3 + $0x70] sm:$0xff]
      %v6378 = vld [vmem:[#allocation3 + $0x78] sm:$0xff]
      %v6379 = vld [vmem:[#allocation3 + $0x80] sm:$0xff]
      %v6380 = vld [vmem:[#allocation3 + $0x88] sm:$0xff]
      %v6381 = vld [vmem:[#allocation3 + $0x90] sm:$0xff]
      %v6382 = vld [vmem:[#allocation3 + $0x98] sm:$0xff]
      %v6383 = vld [vmem:[#allocation3 + $0xa0] sm:$0xff]
      %v6384 = vld [vmem:[#allocation3 + $0xa8] sm:$0xff]
      %v6385 = vld [vmem:[#allocation3 + $0xb0] sm:$0xff]
      %v6386 = vld [vmem:[#allocation3 + $0xb8] sm:$0xff]
      %v6387 = vld [vmem:[#allocation3 + $0xc0] sm:$0xff]
      %v6388 = vld [vmem:[#allocation3 + $0xc8] sm:$0xff]
      %v6389 = vld [vmem:[#allocation3 + $0xd0] sm:$0xff]
      %v6390 = vld [vmem:[#allocation3 + $0xd8] sm:$0xff]
      %v6391 = vld [vmem:[#allocation3 + $0xe0] sm:$0xff]
      %v6392 = vld [vmem:[#allocation3 + $0xe8] sm:$0xff]
      %v6393 = vld [vmem:[#allocation3 + $0xf0] sm:$0xff]
      %v6394 = vld [vmem:[#allocation3 + $0xf8] sm:$0xff]
      %v6395 = vld [vmem:[#allocation3 + $0x100] sm:$0xff]
      %v6396 = vld [vmem:[#allocation3 + $0x108] sm:$0xff]
      %v6397 = vld [vmem:[#allocation3 + $0x110] sm:$0xff]
      %v6398 = vld [vmem:[#allocation3 + $0x118] sm:$0xff]
      %v6399 = vadd.f32 %v6363, %v6221
      %v6400 = vadd.f32 %v6364, %v6224
      %v6401 = vadd.f32 %v6365, %v6229
      %v6402 = vadd.f32 %v6366, %v6232
      %v6403 = vadd.f32 %v6367, %v6237
      %v6404 = vadd.f32 %v6368, %v6240
      %v6405 = vadd.f32 %v6369, %v6245
      %v6406 = vadd.f32 %v6370, %v6248
      %v6407 = vadd.f32 %v6371, %v6253
      %v6408 = vadd.f32 %v6372, %v6256
      %v6409 = vadd.f32 %v6373, %v6261
      %v6410 = vadd.f32 %v6374, %v6264
      %v6411 = vadd.f32 %v6375, %v6269
      %v6412 = vadd.f32 %v6376, %v6272
      %v6413 = vadd.f32 %v6377, %v6277
      %v6414 = vadd.f32 %v6378, %v6280
      %v6415 = vadd.f32 %v6379, %v6285
      %v6416 = vadd.f32 %v6380, %v6288
      %v6417 = vadd.f32 %v6381, %v6293
      %v6418 = vadd.f32 %v6382, %v6296
      %v6419 = vadd.f32 %v6383, %v6301
      %v6420 = vadd.f32 %v6384, %v6304
      %v6421 = vadd.f32 %v6385, %v6309
      %v6422 = vadd.f32 %v6386, %v6312
      %v6423 = vadd.f32 %v6387, %v6317
      %v6424 = vadd.f32 %v6388, %v6320
      %v6425 = vadd.f32 %v6389, %v6325
      %v6426 = vadd.f32 %v6390, %v6328
      %v6427 = vadd.f32 %v6391, %v6333
      %v6428 = vadd.f32 %v6392, %v6336
      %v6429 = vadd.f32 %v6393, %v6341
      %v6430 = vadd.f32 %v6394, %v6344
      %v6431 = vadd.f32 %v6395, %v6349
      %v6432 = vadd.f32 %v6396, %v6352
      %v6433 = vadd.f32 %v6397, %v6357
      %v6434 = vadd.f32 %v6398, %v6360
      %6435 = vst [vmem:[#allocation3] sm:$0xff] %v6399
      %6436 = vst [vmem:[#allocation3 + $0x8] sm:$0xff] %v6400
      %6437 = vst [vmem:[#allocation3 + $0x10] sm:$0xff] %v6401
      %6438 = vst [vmem:[#allocation3 + $0x18] sm:$0xff] %v6402
      %6439 = vst [vmem:[#allocation3 + $0x20] sm:$0xff] %v6403
      %6440 = vst [vmem:[#allocation3 + $0x28] sm:$0xff] %v6404
      %6441 = vst [vmem:[#allocation3 + $0x30] sm:$0xff] %v6405
      %6442 = vst [vmem:[#allocation3 + $0x38] sm:$0xff] %v6406
      %6443 = vst [vmem:[#allocation3 + $0x40] sm:$0xff] %v6407
      %6444 = vst [vmem:[#allocation3 + $0x48] sm:$0xff] %v6408
      %6445 = vst [vmem:[#allocation3 + $0x50] sm:$0xff] %v6409
      %6446 = vst [vmem:[#allocation3 + $0x58] sm:$0xff] %v6410
      %6447 = vst [vmem:[#allocation3 + $0x60] sm:$0xff] %v6411
      %6448 = vst [vmem:[#allocation3 + $0x68] sm:$0xff] %v6412
      %6449 = vst [vmem:[#allocation3 + $0x70] sm:$0xff] %v6413
      %6450 = vst [vmem:[#allocation3 + $0x78] sm:$0xff] %v6414
      %6451 = vst [vmem:[#allocation3 + $0x80] sm:$0xff] %v6415
      %6452 = vst [vmem:[#allocation3 + $0x88] sm:$0xff] %v6416
      %6453 = vst [vmem:[#allocation3 + $0x90] sm:$0xff] %v6417
      %6454 = vst [vmem:[#allocation3 + $0x98] sm:$0xff] %v6418
      %6455 = vst [vmem:[#allocation3 + $0xa0] sm:$0xff] %v6419
      %6456 = vst [vmem:[#allocation3 + $0xa8] sm:$0xff] %v6420
      %6457 = vst [vmem:[#allocation3 + $0xb0] sm:$0xff] %v6421
      %6458 = vst [vmem:[#allocation3 + $0xb8] sm:$0xff] %v6422
      %6459 = vst [vmem:[#allocation3 + $0xc0] sm:$0xff] %v6423
      %6460 = vst [vmem:[#allocation3 + $0xc8] sm:$0xff] %v6424
      %6461 = vst [vmem:[#allocation3 + $0xd0] sm:$0xff] %v6425
      %6462 = vst [vmem:[#allocation3 + $0xd8] sm:$0xff] %v6426
      %6463 = vst [vmem:[#allocation3 + $0xe0] sm:$0xff] %v6427
      %6464 = vst [vmem:[#allocation3 + $0xe8] sm:$0xff] %v6428
      %6465 = vst [vmem:[#allocation3 + $0xf0] sm:$0xff] %v6429
      %6466 = vst [vmem:[#allocation3 + $0xf8] sm:$0xff] %v6430
      %6467 = vst [vmem:[#allocation3 + $0x100] sm:$0xff] %v6431
      %6468 = vst [vmem:[#allocation3 + $0x108] sm:$0xff] %v6432
      %6469 = vst [vmem:[#allocation3 + $0x110] sm:$0xff] %v6433
      %6470 = vst [vmem:[#allocation3 + $0x118] sm:$0xff] %v6434
      %v6471 = vld [vmem:[#allocation3] sm:$0xff]
      %v6472 = vld [vmem:[#allocation3 + $0x8] sm:$0xff]
      %v6473 = vld [vmem:[#allocation3 + $0x10] sm:$0xff]
      %v6474 = vld [vmem:[#allocation3 + $0x18] sm:$0xff]
      %v6475 = vld [vmem:[#allocation3 + $0x20] sm:$0xff]
      %v6476 = vld [vmem:[#allocation3 + $0x28] sm:$0xff]
      %v6477 = vld [vmem:[#allocation3 + $0x30] sm:$0xff]
      %v6478 = vld [vmem:[#allocation3 + $0x38] sm:$0xff]
      %v6479 = vld [vmem:[#allocation3 + $0x40] sm:$0xff]
      %v6480 = vld [vmem:[#allocation3 + $0x48] sm:$0xff]
      %v6481 = vld [vmem:[#allocation3 + $0x50] sm:$0xff]
      %v6482 = vld [vmem:[#allocation3 + $0x58] sm:$0xff]
      %v6483 = vld [vmem:[#allocation3 + $0x60] sm:$0xff]
      %v6484 = vld [vmem:[#allocation3 + $0x68] sm:$0xff]
      %v6485 = vld [vmem:[#allocation3 + $0x70] sm:$0xff]
      %v6486 = vld [vmem:[#allocation3 + $0x78] sm:$0xff]
      %v6487 = vld [vmem:[#allocation3 + $0x80] sm:$0xff]
      %v6488 = vld [vmem:[#allocation3 + $0x88] sm:$0xff]
      %v6489 = vld [vmem:[#allocation3 + $0x90] sm:$0xff]
      %v6490 = vld [vmem:[#allocation3 + $0x98] sm:$0xff]
      %v6491 = vld [vmem:[#allocation3 + $0xa0] sm:$0xff]
      %v6492 = vld [vmem:[#allocation3 + $0xa8] sm:$0xff]
      %v6493 = vld [vmem:[#allocation3 + $0xb0] sm:$0xff]
      %v6494 = vld [vmem:[#allocation3 + $0xb8] sm:$0xff]
      %v6495 = vld [vmem:[#allocation3 + $0xc0] sm:$0xff]
      %v6496 = vld [vmem:[#allocation3 + $0xc8] sm:$0xff]
      %v6497 = vld [vmem:[#allocation3 + $0xd0] sm:$0xff]
      %v6498 = vld [vmem:[#allocation3 + $0xd8] sm:$0xff]
      %v6499 = vld [vmem:[#allocation3 + $0xe0] sm:$0xff]
      %v6500 = vld [vmem:[#allocation3 + $0xe8] sm:$0xff]
      %v6501 = vld [vmem:[#allocation3 + $0xf0] sm:$0xff]
      %v6502 = vld [vmem:[#allocation3 + $0xf8] sm:$0xff]
      %v6503 = vld [vmem:[#allocation3 + $0x100] sm:$0xff]
      %v6504 = vld [vmem:[#allocation3 + $0x108] sm:$0xff]
      %v6505 = vld [vmem:[#allocation3 + $0x110] sm:$0xff]
      %v6506 = vld [vmem:[#allocation3 + $0x118] sm:$0xff]
      %v6507 = vld [vmem:[%s4] sm:$0x1]
      %v6509 = vlaneseq
      %v6510 = vshrl.u32 %v6509, 7
      %v6511 = vsub.s32 0, %v6510
      %v6512 = vrot.slane %v6507, %v6511
      %v6514 = vadd.f32 %v6471, %v6512
      %v6515 = vadd.f32 %v6472, %v6512
      %v6516 = vadd.f32 %v6473, %v6512
      %v6517 = vadd.f32 %v6474, %v6512
      %v6518 = vadd.f32 %v6475, %v6512
      %v6519 = vadd.f32 %v6476, %v6512
      %v6520 = vadd.f32 %v6477, %v6512
      %v6521 = vadd.f32 %v6478, %v6512
      %v6522 = vadd.f32 %v6479, %v6512
      %v6523 = vadd.f32 %v6480, %v6512
      %v6524 = vadd.f32 %v6481, %v6512
      %v6525 = vadd.f32 %v6482, %v6512
      %v6526 = vadd.f32 %v6483, %v6512
      %v6527 = vadd.f32 %v6484, %v6512
      %v6528 = vadd.f32 %v6485, %v6512
      %v6529 = vadd.f32 %v6486, %v6512
      %v6530 = vadd.f32 %v6487, %v6512
      %v6531 = vadd.f32 %v6488, %v6512
      %v6532 = vadd.f32 %v6489, %v6512
      %v6533 = vadd.f32 %v6490, %v6512
      %v6534 = vadd.f32 %v6491, %v6512
      %v6535 = vadd.f32 %v6492, %v6512
      %v6536 = vadd.f32 %v6493, %v6512
      %v6537 = vadd.f32 %v6494, %v6512
      %v6538 = vadd.f32 %v6495, %v6512
      %v6539 = vadd.f32 %v6496, %v6512
      %v6540 = vadd.f32 %v6497, %v6512
      %v6541 = vadd.f32 %v6498, %v6512
      %v6542 = vadd.f32 %v6499, %v6512
      %v6543 = vadd.f32 %v6500, %v6512
      %v6544 = vadd.f32 %v6501, %v6512
      %v6545 = vadd.f32 %v6502, %v6512
      %v6546 = vadd.f32 %v6503, %v6512
      %v6547 = vadd.f32 %v6504, %v6512
      %v6548 = vadd.f32 %v6505, %v6512
      %v6549 = vadd.f32 %v6506, %v6512
      %v6550 = vmax.f32 %v6514, 0.0
      %v6551 = vmax.f32 %v6515, 0.0
      %v6552 = vmax.f32 %v6516, 0.0
      %v6553 = vmax.f32 %v6517, 0.0
      %v6554 = vmax.f32 %v6518, 0.0
      %v6555 = vmax.f32 %v6519, 0.0
      %v6556 = vmax.f32 %v6520, 0.0
      %v6557 = vmax.f32 %v6521, 0.0
      %v6558 = vmax.f32 %v6522, 0.0
      %v6559 = vmax.f32 %v6523, 0.0
      %v6560 = vmax.f32 %v6524, 0.0
      %v6561 = vmax.f32 %v6525, 0.0
      %v6562 = vmax.f32 %v6526, 0.0
      %v6563 = vmax.f32 %v6527, 0.0
      %v6564 = vmax.f32 %v6528, 0.0
      %v6565 = vmax.f32 %v6529, 0.0
      %v6566 = vmax.f32 %v6530, 0.0
      %v6567 = vmax.f32 %v6531, 0.0
      %v6568 = vmax.f32 %v6532, 0.0
      %v6569 = vmax.f32 %v6533, 0.0
      %v6570 = vmax.f32 %v6534, 0.0
      %v6571 = vmax.f32 %v6535, 0.0
      %v6572 = vmax.f32 %v6536, 0.0
      %v6573 = vmax.f32 %v6537, 0.0
      %v6574 = vmax.f32 %v6538, 0.0
      %v6575 = vmax.f32 %v6539, 0.0
      %v6576 = vmax.f32 %v6540, 0.0
      %v6577 = vmax.f32 %v6541, 0.0
      %v6578 = vmax.f32 %v6542, 0.0
      %v6579 = vmax.f32 %v6543, 0.0
      %v6580 = vmax.f32 %v6544, 0.0
      %v6581 = vmax.f32 %v6545, 0.0
      %v6582 = vmax.f32 %v6546, 0.0
      %v6583 = vmax.f32 %v6547, 0.0
      %v6584 = vmax.f32 %v6548, 0.0
      %v6585 = vmax.f32 %v6549, 0.0
      %v6586 = vpack.c.bf16 %v6551, %v6550
      %v6587 = vpack.c.bf16 %v6553, %v6552
      %v6588 = vpack.c.bf16 %v6555, %v6554
      %v6589 = vpack.c.bf16 %v6557, %v6556
      %v6590 = vpack.c.bf16 %v6559, %v6558
      %v6591 = vpack.c.bf16 %v6561, %v6560
      %v6592 = vpack.c.bf16 %v6563, %v6562
      %v6593 = vpack.c.bf16 %v6565, %v6564
      %v6594 = vpack.c.bf16 %v6567, %v6566
      %v6595 = vpack.c.bf16 %v6569, %v6568
      %v6596 = vpack.c.bf16 %v6571, %v6570
      %v6597 = vpack.c.bf16 %v6573, %v6572
      %v6598 = vpack.c.bf16 %v6575, %v6574
      %v6599 = vpack.c.bf16 %v6577, %v6576
      %v6600 = vpack.c.bf16 %v6579, %v6578
      %v6601 = vpack.c.bf16 %v6581, %v6580
      %v6602 = vpack.c.bf16 %v6583, %v6582
      %v6603 = vpack.c.bf16 %v6585, %v6584
      %v6604 = vld [vmem:[%s5] sm:$0xf]
      %v6605 = vld [vmem:[%s5 + $0x4] sm:$0xf]
      %v6606 = vld [vmem:[%s5 + $0x8] sm:$0xf]
      %v6607 = vld [vmem:[%s5 + $0xc] sm:$0xf]
      %v6608 = vld [vmem:[%s5 + $0x10] sm:$0xf]
      %v6609 = vld [vmem:[%s5 + $0x14] sm:$0xf]
      %v6610 = vld [vmem:[%s5 + $0x18] sm:$0xf]
      %v6611 = vld [vmem:[%s5 + $0x1c] sm:$0xf]
      %v6612 = vld [vmem:[%s5 + $0x20] sm:$0xf]
      %v6613 = vld [vmem:[%s5 + $0x24] sm:$0xf]
      %v6614 = vld [vmem:[%s5 + $0x28] sm:$0xf]
      %v6615 = vld [vmem:[%s5 + $0x2c] sm:$0xf]
      %v6616 = vld [vmem:[%s5 + $0x30] sm:$0xf]
      %v6617 = vld [vmem:[%s5 + $0x34] sm:$0xf]
      %v6618 = vld [vmem:[%s5 + $0x38] sm:$0xf]
      %v6619 = vld [vmem:[%s5 + $0x3c] sm:$0xf]
      %v6620 = vld [vmem:[%s6] sm:$0x1]
      %v6622 = vlaneseq
      %v6623 = vshrl.u32 %v6622, 7
      %v6624 = vsub.s32 0, %v6623
      %v6625 = vrot.slane %v6620, %v6624
      %v6643 = vunpack.c.l.b16 %v6604
      %v6644 = vunpack.c.l.b16 %v6605
      %v6645 = vunpack.c.l.b16 %v6606
      %v6646 = vunpack.c.l.b16 %v6607
      %v6647 = vunpack.c.l.b16 %v6608
      %v6648 = vunpack.c.l.b16 %v6609
      %v6649 = vunpack.c.l.b16 %v6610
      %v6650 = vunpack.c.l.b16 %v6611
      %v6651 = vunpack.c.l.b16 %v6612
      %v6652 = vunpack.c.l.b16 %v6613
      %v6653 = vunpack.c.l.b16 %v6614
      %v6654 = vunpack.c.l.b16 %v6615
      %v6655 = vunpack.c.l.b16 %v6616
      %v6656 = vunpack.c.l.b16 %v6617
      %v6657 = vunpack.c.l.b16 %v6618
      %v6658 = vunpack.c.l.b16 %v6619
      %v6659 = vpack.c.b16 %v6644, %v6643
      %v6660 = vpack.c.b16 %v6646, %v6645
      %v6661 = vpack.c.b16 %v6648, %v6647
      %v6662 = vpack.c.b16 %v6650, %v6649
      %v6663 = vpack.c.b16 %v6652, %v6651
      %v6664 = vpack.c.b16 %v6654, %v6653
      %v6665 = vpack.c.b16 %v6656, %v6655
      %v6666 = vpack.c.b16 %v6658, %v6657
      %6675 = vmatprep.subr.bf16.mxu0 0
      %6676 = vmatpush1.bf16.msra.mxu0 %v6659
      %6677 = vmatprep.subr.bf16.mxu0 0
      %6678 = vmatpush1.bf16.msra.mxu0 %v6660
      %6679 = vmatprep.subr.bf16.mxu0 0
      %6680 = vmatpush1.bf16.msra.mxu0 %v6661
      %6681 = vmatprep.subr.bf16.mxu0 0
      %6682 = vmatpush1.bf16.msra.mxu0 %v6662
      %6683 = vmatprep.subr.bf16.mxu0 0
      %6684 = vmatpush1.bf16.msra.mxu0 %v6663
      %6685 = vmatprep.subr.bf16.mxu0 0
      %6686 = vmatpush1.bf16.msra.mxu0 %v6664
      %6687 = vmatprep.subr.bf16.mxu0 0
      %6688 = vmatpush1.bf16.msra.mxu0 %v6665
      %6689 = vmatprep.subr.bf16.mxu0 0
      %6690 = vmatpush1.bf16.msra.mxu0 %v6666
      %6691 = vmatprep.subr.bf16.mxu0 0
      %6692 = vmatpush1.bf16.msra.mxu0 0
      %6693 = vmatprep.subr.bf16.mxu0 0
      %6694 = vmatpush1.bf16.msra.mxu0 0
      %6695 = vmatprep.subr.bf16.mxu0 0
      %6696 = vmatpush1.bf16.msra.mxu0 0
      %6697 = vmatprep.subr.bf16.mxu0 0
      %6698 = vmatpush1.bf16.msra.mxu0 0
      %6699 = vmatprep.subr.bf16.mxu0 0
      %6700 = vmatpush1.bf16.msra.mxu0 0
      %6701 = vmatprep.subr.bf16.mxu0 0
      %6702 = vmatpush1.bf16.msra.mxu0 0
      %6703 = vmatprep.subr.bf16.mxu0 0
      %6704 = vmatpush1.bf16.msra.mxu0 0
      %6705 = vmatprep.subr.bf16.mxu0 0
      %6706 = vmatpush1.bf16.msra.mxu0 0
      %6707 = vmatprep.mubr.bf16.mxu0 0
      %6708 = vmatmul.mubr.bf16.gmra.mrb[0].mxu0 %v6586
      %v6709 = vpop.f32.mrb[0].mxu0
      %v6710 = vadd.f32 %v6625, %v6709
      %v6711 = vpop.f32.mrb[0].mxu0
      %v6712 = vpop.f32.mrb[0].mxu0
      %v6713 = vadd.f32 %v6625, %v6712
      %v6714 = vpop.f32.mrb[0].mxu0
      %6715 = vmatprep.mubr.bf16.mxu0 0
      %6716 = vmatmul.mubr.bf16.gmra.mrb[0].mxu0 %v6587
      %v6717 = vpop.f32.mrb[0].mxu0
      %v6718 = vadd.f32 %v6625, %v6717
      %v6719 = vpop.f32.mrb[0].mxu0
      %v6720 = vpop.f32.mrb[0].mxu0
      %v6721 = vadd.f32 %v6625, %v6720
      %v6722 = vpop.f32.mrb[0].mxu0
      %6723 = vmatprep.mubr.bf16.mxu0 0
      %6724 = vmatmul.mubr.bf16.gmra.mrb[0].mxu0 %v6588
      %v6725 = vpop.f32.mrb[0].mxu0
      %v6726 = vadd.f32 %v6625, %v6725
      %v6727 = vpop.f32.mrb[0].mxu0
      %v6728 = vpop.f32.mrb[0].mxu0
      %v6729 = vadd.f32 %v6625, %v6728
      %v6730 = vpop.f32.mrb[0].mxu0
      %6731 = vmatprep.mubr.bf16.mxu0 0
      %6732 = vmatmul.mubr.bf16.gmra.mrb[0].mxu0 %v6589
      %v6733 = vpop.f32.mrb[0].mxu0
      %v6734 = vadd.f32 %v6625, %v6733
      %v6735 = vpop.f32.mrb[0].mxu0
      %v6736 = vpop.f32.mrb[0].mxu0
      %v6737 = vadd.f32 %v6625, %v6736
      %v6738 = vpop.f32.mrb[0].mxu0
      %6739 = vmatprep.mubr.bf16.mxu0 0
      %6740 = vmatmul.mubr.bf16.gmra.mrb[0].mxu0 %v6590
      %v6741 = vpop.f32.mrb[0].mxu0
      %v6742 = vadd.f32 %v6625, %v6741
      %v6743 = vpop.f32.mrb[0].mxu0
      %v6744 = vpop.f32.mrb[0].mxu0
      %v6745 = vadd.f32 %v6625, %v6744
      %v6746 = vpop.f32.mrb[0].mxu0
      %6747 = vmatprep.mubr.bf16.mxu0 0
      %6748 = vmatmul.mubr.bf16.gmra.mrb[0].mxu0 %v6591
      %v6749 = vpop.f32.mrb[0].mxu0
      %v6750 = vadd.f32 %v6625, %v6749
      %v6751 = vpop.f32.mrb[0].mxu0
      %v6752 = vpop.f32.mrb[0].mxu0
      %v6753 = vadd.f32 %v6625, %v6752
      %v6754 = vpop.f32.mrb[0].mxu0
      %6755 = vmatprep.mubr.bf16.mxu0 0
      %6756 = vmatmul.mubr.bf16.gmra.mrb[0].mxu0 %v6592
      %v6757 = vpop.f32.mrb[0].mxu0
      %v6758 = vadd.f32 %v6625, %v6757
      %v6759 = vpop.f32.mrb[0].mxu0
      %v6760 = vpop.f32.mrb[0].mxu0
      %v6761 = vadd.f32 %v6625, %v6760
      %v6762 = vpop.f32.mrb[0].mxu0
      %6763 = vmatprep.mubr.bf16.mxu0 0
      %6764 = vmatmul.mubr.bf16.gmra.mrb[0].mxu0 %v6593
      %v6765 = vpop.f32.mrb[0].mxu0
      %v6766 = vadd.f32 %v6625, %v6765
      %v6767 = vpop.f32.mrb[0].mxu0
      %v6768 = vpop.f32.mrb[0].mxu0
      %v6769 = vadd.f32 %v6625, %v6768
      %v6770 = vpop.f32.mrb[0].mxu0
      %6771 = vmatprep.mubr.bf16.mxu0 0
      %6772 = vmatmul.mubr.bf16.gmra.mrb[0].mxu0 %v6594
      %v6773 = vpop.f32.mrb[0].mxu0
      %v6774 = vadd.f32 %v6625, %v6773
      %v6775 = vpop.f32.mrb[0].mxu0
      %v6776 = vpop.f32.mrb[0].mxu0
      %v6777 = vadd.f32 %v6625, %v6776
      %v6778 = vpop.f32.mrb[0].mxu0
      %6779 = vmatprep.mubr.bf16.mxu0 0
      %6780 = vmatmul.mubr.bf16.gmra.mrb[0].mxu0 %v6595
      %v6781 = vpop.f32.mrb[0].mxu0
      %v6782 = vadd.f32 %v6625, %v6781
      %v6783 = vpop.f32.mrb[0].mxu0
      %v6784 = vpop.f32.mrb[0].mxu0
      %v6785 = vadd.f32 %v6625, %v6784
      %v6786 = vpop.f32.mrb[0].mxu0
      %6787 = vmatprep.mubr.bf16.mxu0 0
      %6788 = vmatmul.mubr.bf16.gmra.mrb[0].mxu0 %v6596
      %v6789 = vpop.f32.mrb[0].mxu0
      %v6790 = vadd.f32 %v6625, %v6789
      %v6791 = vpop.f32.mrb[0].mxu0
      %v6792 = vpop.f32.mrb[0].mxu0
      %v6793 = vadd.f32 %v6625, %v6792
      %v6794 = vpop.f32.mrb[0].mxu0
      %6795 = vmatprep.mubr.bf16.mxu0 0
      %6796 = vmatmul.mubr.bf16.gmra.mrb[0].mxu0 %v6597
      %v6797 = vpop.f32.mrb[0].mxu0
      %v6798 = vadd.f32 %v6625, %v6797
      %v6799 = vpop.f32.mrb[0].mxu0
      %v6800 = vpop.f32.mrb[0].mxu0
      %v6801 = vadd.f32 %v6625, %v6800
      %v6802 = vpop.f32.mrb[0].mxu0
      %6803 = vmatprep.mubr.bf16.mxu0 0
      %6804 = vmatmul.mubr.bf16.gmra.mrb[0].mxu0 %v6598
      %v6805 = vpop.f32.mrb[0].mxu0
      %v6806 = vadd.f32 %v6625, %v6805
      %v6807 = vpop.f32.mrb[0].mxu0
      %v6808 = vpop.f32.mrb[0].mxu0
      %v6809 = vadd.f32 %v6625, %v6808
      %v6810 = vpop.f32.mrb[0].mxu0
      %6811 = vmatprep.mubr.bf16.mxu0 0
      %6812 = vmatmul.mubr.bf16.gmra.mrb[0].mxu0 %v6599
      %v6813 = vpop.f32.mrb[0].mxu0
      %v6814 = vadd.f32 %v6625, %v6813
      %v6815 = vpop.f32.mrb[0].mxu0
      %v6816 = vpop.f32.mrb[0].mxu0
      %v6817 = vadd.f32 %v6625, %v6816
      %v6818 = vpop.f32.mrb[0].mxu0
      %6819 = vmatprep.mubr.bf16.mxu0 0
      %6820 = vmatmul.mubr.bf16.gmra.mrb[0].mxu0 %v6600
      %v6821 = vpop.f32.mrb[0].mxu0
      %v6822 = vadd.f32 %v6625, %v6821
      %v6823 = vpop.f32.mrb[0].mxu0
      %v6824 = vpop.f32.mrb[0].mxu0
      %v6825 = vadd.f32 %v6625, %v6824
      %v6826 = vpop.f32.mrb[0].mxu0
      %6827 = vmatprep.mubr.bf16.mxu0 0
      %6828 = vmatmul.mubr.bf16.gmra.mrb[0].mxu0 %v6601
      %v6829 = vpop.f32.mrb[0].mxu0
      %v6830 = vadd.f32 %v6625, %v6829
      %v6831 = vpop.f32.mrb[0].mxu0
      %v6832 = vpop.f32.mrb[0].mxu0
      %v6833 = vadd.f32 %v6625, %v6832
      %v6834 = vpop.f32.mrb[0].mxu0
      %6835 = vmatprep.mubr.bf16.mxu0 0
      %6836 = vmatmul.mubr.bf16.gmra.mrb[0].mxu0 %v6602
      %v6837 = vpop.f32.mrb[0].mxu0
      %v6838 = vadd.f32 %v6625, %v6837
      %v6839 = vpop.f32.mrb[0].mxu0
      %v6840 = vpop.f32.mrb[0].mxu0
      %v6841 = vadd.f32 %v6625, %v6840
      %v6842 = vpop.f32.mrb[0].mxu0
      %6843 = vmatprep.mubr.bf16.mxu0 0
      %6844 = vmatmul.mubr.bf16.gmra.mrb[0].mxu0 %v6603
      %v6845 = vpop.f32.mrb[0].mxu0
      %v6846 = vadd.f32 %v6625, %v6845
      %v6847 = vpop.f32.mrb[0].mxu0
      %v6848 = vpop.f32.mrb[0].mxu0
      %v6849 = vadd.f32 %v6625, %v6848
      %v6850 = vpop.f32.mrb[0].mxu0
      %6851 = vdwg.mxu0
      %v6852 = vld [vmem:[%s273] sm:$0xf]
      %v6853 = vld [vmem:[%s273 + $0x4] sm:$0xf]
      %v6854 = vunpack.c.l.bf16 %v6852
      %v6855 = vunpack.c.l.bf16 %v6853
      %v6856 = vadd.f32 %v6710, %v6854
      %v6857 = vadd.f32 %v6713, %v6855
      %v6858 = vmax.f32 %v6856, 0.0
      %v6859 = vmax.f32 %v6857, 0.0
      %6860 = vst [vmem:[%s278] sm:$0xff] %v6858
      %6861 = vst [vmem:[%s278 + $0x8] sm:$0xff] %v6859
      %v6862 = vld [vmem:[%s273 + $0x8] sm:$0xf]
      %v6863 = vld [vmem:[%s273 + $0xc] sm:$0xf]
      %v6864 = vunpack.c.l.bf16 %v6862
      %v6865 = vunpack.c.l.bf16 %v6863
      %vm6868 = vcmask 1041408
      %v6869 = vrot.slane %v6864, 6
      %v6870 = vrot.slane %v6865, 6
      %v6871 = vsel %vm6868, %v6869, %v6870
      %v6875 = vadd.f32 %v6718, %v6869
      %v6876 = vadd.f32 %v6721, %v6871
      %v6877 = vadd.f32 %v6726, %v6870
      %v6878 = vmax.f32 %v6875, 0.0
      %v6879 = vmax.f32 %v6876, 0.0
      %v6880 = vmax.f32 %v6877, 0.0
      %6881 = vst [vmem:[%s278 + $0xe] sm:$0xfc] %v6878
      %6882 = vst [vmem:[%s278 + $0x16] sm:$0xff] %v6879
      %6883 = vst [vmem:[%s278 + $0x1e] sm:$0x3] %v6880
      %v6884 = vld [vmem:[%s273 + $0x10] sm:$0xf]
      %v6885 = vld [vmem:[%s273 + $0x14] sm:$0xf]
      %v6886 = vunpack.c.l.bf16 %v6884
      %v6887 = vunpack.c.l.bf16 %v6885
      %vm6890 = vcmask 1043456
      %v6891 = vrot.slane %v6886, 4
      %v6892 = vrot.slane %v6887, 4
      %v6893 = vsel %vm6890, %v6891, %v6892
      %v6897 = vadd.f32 %v6726, %v6891
      %v6898 = vadd.f32 %v6729, %v6893
      %v6899 = vadd.f32 %v6734, %v6892
      %v6900 = vmax.f32 %v6897, 0.0
      %v6901 = vmax.f32 %v6898, 0.0
      %v6902 = vmax.f32 %v6899, 0.0
      %6903 = vst [vmem:[%s278 + $0x1c] sm:$0xf0] %v6900
      %6904 = vst [vmem:[%s278 + $0x24] sm:$0xff] %v6901
      %6905 = vst [vmem:[%s278 + $0x2c] sm:$0xf] %v6902
      %v6906 = vld [vmem:[%s273 + $0x18] sm:$0xf]
      %v6907 = vld [vmem:[%s273 + $0x1c] sm:$0xf]
      %v6908 = vunpack.c.l.bf16 %v6906
      %v6909 = vunpack.c.l.bf16 %v6907
      %vm6912 = vcmask 1045504
      %v6913 = vrot.slane %v6908, 2
      %v6914 = vrot.slane %v6909, 2
      %v6915 = vsel %vm6912, %v6913, %v6914
      %v6919 = vadd.f32 %v6734, %v6913
      %v6920 = vadd.f32 %v6737, %v6915
      %v6921 = vadd.f32 %v6742, %v6914
      %v6922 = vmax.f32 %v6919, 0.0
      %v6923 = vmax.f32 %v6920, 0.0
      %v6924 = vmax.f32 %v6921, 0.0
      %6925 = vst [vmem:[%s278 + $0x2a] sm:$0xc0] %v6922
      %6926 = vst [vmem:[%s278 + $0x32] sm:$0xff] %v6923
      %6927 = vst [vmem:[%s278 + $0x3a] sm:$0x3f] %v6924
      %v6928 = vld [vmem:[%s273 + $0x20] sm:$0xf]
      %v6929 = vld [vmem:[%s273 + $0x24] sm:$0xf]
      %v6930 = vunpack.c.l.bf16 %v6928
      %v6931 = vunpack.c.l.bf16 %v6929
      %v6932 = vadd.f32 %v6745, %v6930
      %v6933 = vadd.f32 %v6750, %v6931
      %v6934 = vmax.f32 %v6932, 0.0
      %v6935 = vmax.f32 %v6933, 0.0
      %6936 = vst [vmem:[%s278 + $0x40] sm:$0xff] %v6934
      %6937 = vst [vmem:[%s278 + $0x48] sm:$0xff] %v6935
      %v6938 = vld [vmem:[%s273 + $0x28] sm:$0xf]
      %v6939 = vld [vmem:[%s273 + $0x2c] sm:$0xf]
      %v6940 = vunpack.c.l.bf16 %v6938
      %v6941 = vunpack.c.l.bf16 %v6939
      %v6944 = vrot.slane %v6940, 6
      %v6945 = vrot.slane %v6941, 6
      %v6946 = vsel %vm6868, %v6944, %v6945
      %v6950 = vadd.f32 %v6753, %v6944
      %v6951 = vadd.f32 %v6758, %v6946
      %v6952 = vadd.f32 %v6761, %v6945
      %v6953 = vmax.f32 %v6950, 0.0
      %v6954 = vmax.f32 %v6951, 0.0
      %v6955 = vmax.f32 %v6952, 0.0
      %6956 = vst [vmem:[%s278 + $0x4e] sm:$0xfc] %v6953
      %6957 = vst [vmem:[%s278 + $0x56] sm:$0xff] %v6954
      %6958 = vst [vmem:[%s278 + $0x5e] sm:$0x3] %v6955
      %v6959 = vld [vmem:[%s273 + $0x30] sm:$0xf]
      %v6960 = vld [vmem:[%s273 + $0x34] sm:$0xf]
      %v6961 = vunpack.c.l.bf16 %v6959
      %v6962 = vunpack.c.l.bf16 %v6960
      %v6965 = vrot.slane %v6961, 4
      %v6966 = vrot.slane %v6962, 4
      %v6967 = vsel %vm6890, %v6965, %v6966
      %v6971 = vadd.f32 %v6761, %v6965
      %v6972 = vadd.f32 %v6766, %v6967
      %v6973 = vadd.f32 %v6769, %v6966
      %v6974 = vmax.f32 %v6971, 0.0
      %v6975 = vmax.f32 %v6972, 0.0
      %v6976 = vmax.f32 %v6973, 0.0
      %6977 = vst [vmem:[%s278 + $0x5c] sm:$0xf0] %v6974
      %6978 = vst [vmem:[%s278 + $0x64] sm:$0xff] %v6975
      %6979 = vst [vmem:[%s278 + $0x6c] sm:$0xf] %v6976
      %v6980 = vld [vmem:[%s273 + $0x38] sm:$0xf]
      %v6981 = vld [vmem:[%s273 + $0x3c] sm:$0xf]
      %v6982 = vunpack.c.l.bf16 %v6980
      %v6983 = vunpack.c.l.bf16 %v6981
      %v6986 = vrot.slane %v6982, 2
      %v6987 = vrot.slane %v6983, 2
      %v6988 = vsel %vm6912, %v6986, %v6987
      %v6992 = vadd.f32 %v6769, %v6986
      %v6993 = vadd.f32 %v6774, %v6988
      %v6994 = vadd.f32 %v6777, %v6987
      %v6995 = vmax.f32 %v6992, 0.0
      %v6996 = vmax.f32 %v6993, 0.0
      %v6997 = vmax.f32 %v6994, 0.0
      %6998 = vst [vmem:[%s278 + $0x6a] sm:$0xc0] %v6995
      %6999 = vst [vmem:[%s278 + $0x72] sm:$0xff] %v6996
      %7000 = vst [vmem:[%s278 + $0x7a] sm:$0x3f] %v6997
      %v7001 = vld [vmem:[%s273 + $0x40] sm:$0xf]
      %v7002 = vld [vmem:[%s273 + $0x44] sm:$0xf]
      %v7003 = vunpack.c.l.bf16 %v7001
      %v7004 = vunpack.c.l.bf16 %v7002
      %v7005 = vadd.f32 %v6782, %v7003
      %v7006 = vadd.f32 %v6785, %v7004
      %v7007 = vmax.f32 %v7005, 0.0
      %v7008 = vmax.f32 %v7006, 0.0
      %7009 = vst [vmem:[%s278 + $0x80] sm:$0xff] %v7007
      %7010 = vst [vmem:[%s278 + $0x88] sm:$0xff] %v7008
      %v7011 = vld [vmem:[%s273 + $0x48] sm:$0xf]
      %v7012 = vld [vmem:[%s273 + $0x4c] sm:$0xf]
      %v7013 = vunpack.c.l.bf16 %v7011
      %v7014 = vunpack.c.l.bf16 %v7012
      %v7017 = vrot.slane %v7013, 6
      %v7018 = vrot.slane %v7014, 6
      %v7019 = vsel %vm6868, %v7017, %v7018
      %v7023 = vadd.f32 %v6790, %v7017
      %v7024 = vadd.f32 %v6793, %v7019
      %v7025 = vadd.f32 %v6798, %v7018
      %v7026 = vmax.f32 %v7023, 0.0
      %v7027 = vmax.f32 %v7024, 0.0
      %v7028 = vmax.f32 %v7025, 0.0
      %7029 = vst [vmem:[%s278 + $0x8e] sm:$0xfc] %v7026
      %7030 = vst [vmem:[%s278 + $0x96] sm:$0xff] %v7027
      %7031 = vst [vmem:[%s278 + $0x9e] sm:$0x3] %v7028
      %v7032 = vld [vmem:[%s273 + $0x50] sm:$0xf]
      %v7033 = vld [vmem:[%s273 + $0x54] sm:$0xf]
      %v7034 = vunpack.c.l.bf16 %v7032
      %v7035 = vunpack.c.l.bf16 %v7033
      %v7038 = vrot.slane %v7034, 4
      %v7039 = vrot.slane %v7035, 4
      %v7040 = vsel %vm6890, %v7038, %v7039
      %v7044 = vadd.f32 %v6798, %v7038
      %v7045 = vadd.f32 %v6801, %v7040
      %v7046 = vadd.f32 %v6806, %v7039
      %v7047 = vmax.f32 %v7044, 0.0
      %v7048 = vmax.f32 %v7045, 0.0
      %v7049 = vmax.f32 %v7046, 0.0
      %7050 = vst [vmem:[%s278 + $0x9c] sm:$0xf0] %v7047
      %7051 = vst [vmem:[%s278 + $0xa4] sm:$0xff] %v7048
      %7052 = vst [vmem:[%s278 + $0xac] sm:$0xf] %v7049
      %v7053 = vld [vmem:[%s273 + $0x58] sm:$0xf]
      %v7054 = vld [vmem:[%s273 + $0x5c] sm:$0xf]
      %v7055 = vunpack.c.l.bf16 %v7053
      %v7056 = vunpack.c.l.bf16 %v7054
      %v7059 = vrot.slane %v7055, 2
      %v7060 = vrot.slane %v7056, 2
      %v7061 = vsel %vm6912, %v7059, %v7060
      %v7065 = vadd.f32 %v6806, %v7059
      %v7066 = vadd.f32 %v6809, %v7061
      %v7067 = vadd.f32 %v6814, %v7060
      %v7068 = vmax.f32 %v7065, 0.0
      %v7069 = vmax.f32 %v7066, 0.0
      %v7070 = vmax.f32 %v7067, 0.0
      %7071 = vst [vmem:[%s278 + $0xaa] sm:$0xc0] %v7068
      %7072 = vst [vmem:[%s278 + $0xb2] sm:$0xff] %v7069
      %7073 = vst [vmem:[%s278 + $0xba] sm:$0x3f] %v7070
      %v7074 = vld [vmem:[%s273 + $0x60] sm:$0xf]
      %v7075 = vld [vmem:[%s273 + $0x64] sm:$0xf]
      %v7076 = vunpack.c.l.bf16 %v7074
      %v7077 = vunpack.c.l.bf16 %v7075
      %v7078 = vadd.f32 %v6817, %v7076
      %v7079 = vadd.f32 %v6822, %v7077
      %v7080 = vmax.f32 %v7078, 0.0
      %v7081 = vmax.f32 %v7079, 0.0
      %7082 = vst [vmem:[%s278 + $0xc0] sm:$0xff] %v7080
      %7083 = vst [vmem:[%s278 + $0xc8] sm:$0xff] %v7081
      %v7084 = vld [vmem:[%s273 + $0x68] sm:$0xf]
      %v7085 = vld [vmem:[%s273 + $0x6c] sm:$0xf]
      %v7086 = vunpack.c.l.bf16 %v7084
      %v7087 = vunpack.c.l.bf16 %v7085
      %v7090 = vrot.slane %v7086, 6
      %v7091 = vrot.slane %v7087, 6
      %v7092 = vsel %vm6868, %v7090, %v7091
      %v7096 = vadd.f32 %v6825, %v7090
      %v7097 = vadd.f32 %v6830, %v7092
      %v7098 = vadd.f32 %v6833, %v7091
      %v7099 = vmax.f32 %v7096, 0.0
      %v7100 = vmax.f32 %v7097, 0.0
      %v7101 = vmax.f32 %v7098, 0.0
      %7102 = vst [vmem:[%s278 + $0xce] sm:$0xfc] %v7099
      %7103 = vst [vmem:[%s278 + $0xd6] sm:$0xff] %v7100
      %7104 = vst [vmem:[%s278 + $0xde] sm:$0x3] %v7101
      %v7105 = vld [vmem:[%s273 + $0x70] sm:$0xf]
      %v7106 = vld [vmem:[%s273 + $0x74] sm:$0xf]
      %v7107 = vunpack.c.l.bf16 %v7105
      %v7108 = vunpack.c.l.bf16 %v7106
      %v7111 = vrot.slane %v7107, 4
      %v7112 = vrot.slane %v7108, 4
      %v7113 = vsel %vm6890, %v7111, %v7112
      %v7117 = vadd.f32 %v6833, %v7111
      %v7118 = vadd.f32 %v6838, %v7113
      %v7119 = vadd.f32 %v6841, %v7112
      %v7120 = vmax.f32 %v7117, 0.0
      %v7121 = vmax.f32 %v7118, 0.0
      %v7122 = vmax.f32 %v7119, 0.0
      %7123 = vst [vmem:[%s278 + $0xdc] sm:$0xf0] %v7120
      %7124 = vst [vmem:[%s278 + $0xe4] sm:$0xff] %v7121
      %7125 = vst [vmem:[%s278 + $0xec] sm:$0xf] %v7122
      %v7126 = vld [vmem:[%s273 + $0x78] sm:$0xf]
      %v7127 = vld [vmem:[%s273 + $0x7c] sm:$0xf]
      %v7128 = vunpack.c.l.bf16 %v7126
      %v7129 = vunpack.c.l.bf16 %v7127
      %v7132 = vrot.slane %v7128, 2
      %v7133 = vrot.slane %v7129, 2
      %v7134 = vsel %vm6912, %v7132, %v7133
      %v7138 = vadd.f32 %v6841, %v7132
      %v7139 = vadd.f32 %v6846, %v7134
      %v7140 = vadd.f32 %v6849, %v7133
      %v7141 = vmax.f32 %v7138, 0.0
      %v7142 = vmax.f32 %v7139, 0.0
      %v7143 = vmax.f32 %v7140, 0.0
      %7144 = vst [vmem:[%s278 + $0xea] sm:$0xc0] %v7141
      %7145 = vst [vmem:[%s278 + $0xf2] sm:$0xff] %v7142
      %7146 = vst [vmem:[%s278 + $0xfa] sm:$0x3f] %v7143
      %p7147 = scmp.lt.s32.totalorder %s18, 1
      %s7148 = scalar_select %p7147, %s18, 1
      %s7149 = smul.addr %s7148, 32
      %s7150 = smul.addr %s7149, 8
      %s7151 = scalar_lea.vmem %s7, %s7150
      // Predicated region
      $region49: #{bottleneck_forward.1} parent=47 // pred_check
        %p7152 = pneg %p188
      $region50: #{bottleneck_forward.1} parent=47 // pred_check_branch
        %7154 = sbr.rel (%p7152) target = $region52
      $region51: #{bottleneck_forward.1} parent=47 // pred_region
        _
      $region52: #{bottleneck_forward.1} parent=47 // pred_fallthru
        _
    $region48: #{bottleneck_forward.1} parent=5 // pred_fallthru
      _
    %p7155 = scmp.le.s32.totalorder 2, %s13
    // Predicated region
    $region53: #{bottleneck_forward.1} parent=5 // pred_check
      %p7156 = pneg %p7155
    $region54: #{bottleneck_forward.1} parent=5 // pred_check_branch
      %7158 = sbr.rel (%p7156) target = $region56
    $region55: #{bottleneck_forward.1} parent=5 // pred_region
      %s7159 = ssub.s32 %s13, 2
      // Predicated region
      $region57: #{bottleneck_forward.1} parent=55 // pred_check
        %p7160 = pneg %p194
      $region58: #{bottleneck_forward.1} parent=55 // pred_check_branch
        %7162 = sbr.rel (%p7160) target = $region60
      $region59: #{bottleneck_forward.1} parent=55 // pred_region
        %p7163 = scmp.lt.s32.totalorder %s19, 1
        %s7164 = scalar_select %p7163, %s19, 1
        %s7165 = smul.addr %s7164, 32
        %s7166 = smul.addr %s7165, 8
        %s7167 = scalar_lea.vmem %s7, %s7166
      $region60: #{bottleneck_forward.1} parent=55 // pred_fallthru
        _
    $region56: #{bottleneck_forward.1} parent=5 // pred_fallthru
      _
  $region6: #{bottleneck_forward.1} parent=0 // loop_footer
    %s17 = sadd.s32 1, %s13
  $region7: #{bottleneck_forward.1} parent=0 // loop_footer_branch
    %12 = sbr.rel target = $region3
  $region8: #{bottleneck_forward.1} parent=0 // loop_exit
    _

</llo_original>
